<compile_context>
chip_gen: v6e
topology: v6e:2x2x1
jax: 0.10.0
libtpu: 0.0.40
codegen_flags: <defaults>
</compile_context>

<pallas_src>
import functools

import jax
import jax.numpy as jnp
from jax.experimental import pallas as pl
from jax.experimental.pallas import tpu as pltpu


# ----------------------------- in-kernel helpers ------------------------------
def _gn_silu(x2, gamma, beta, num_groups, eps):
    """GroupNorm (single-pass stats) + SiLU on a flattened (H*W, C) f32 tile."""
    HW, C = x2.shape
    cg = C // num_groups
    inv_n = 1.0 / float(HW * cg)
    ch_sum = jnp.sum(x2, axis=0, keepdims=True)            # (1, C) sublane reduce
    ch_sq = jnp.sum(x2 * x2, axis=0, keepdims=True)        # (1, C)
    st = jnp.concatenate([ch_sum, ch_sq], axis=0)          # (2, C)
    # Per-group reduce + broadcast-back in one tiny matmul against an iota-built
    # same-group mask (replaces the per-group slice/broadcast/concat Python loop).
    ci_r = jax.lax.broadcasted_iota(jnp.int32, (C, C), 0).astype(jnp.float32)
    ci_c = jax.lax.broadcasted_iota(jnp.int32, (C, C), 1).astype(jnp.float32)
    gid_r = jnp.floor((ci_r + 0.5) * (1.0 / cg))           # robust float "// cg"
    gid_c = jnp.floor((ci_c + 0.5) * (1.0 / cg))
    same = (gid_r == gid_c).astype(jnp.float32) * inv_n    # (C, C)
    gstats = jnp.dot(st, same, preferred_element_type=jnp.float32)  # (2, C): E[x], E[x^2]
    mean_c = gstats[0:1, :]
    # TODO(synk): single-pass E[x^2]-E[x]^2 in f32; switch to shifted/two-pass stats if the
    # activations ever carry a large DC offset (cancellation risk).
    var_c = gstats[1:2, :] - mean_c * mean_c
    rstd_c = jax.lax.rsqrt(var_c + eps)
    y = (x2 - mean_c) * (rstd_c * gamma) + beta
    # SiLU: y * sigmoid(y); reciprocal on the EUP slot (approx) instead of a VPU divide.
    return y * pl.reciprocal(1.0 + jnp.exp(-y), approx=True)


def _conv3x3(pad_ref, a_bf16, w3_ref, bias):
    """3x3 'same' conv as 3 accumulated row-shifted (H*W, 3*Cin) MXU matmuls (bf16 in, f32 acc).

    pad_ref : (H+2, W+2, Cin) bf16 VMEM halo scratch (border zeroed here, interior written once)
    a_bf16  : (H, W, Cin)     bf16 activation
    w3_ref  : (3, 3*Cin, Cout) bf16 weight ref; within each dy rows are ordered (dx, ci)
    bias    : (1, Cout) f32
    -> (H*W, Cout) f32
    """
    H, W, Cin = a_bf16.shape
    Cout = w3_ref.shape[-1]
    # 1-pixel zero halo: zero only the border (cheap, re-done each step -> megacore safe).
    pad_ref[0:1, :, :] = jnp.zeros((1, W + 2, Cin), jnp.bfloat16)
    pad_ref[H + 1:H + 2, :, :] = jnp.zeros((1, W + 2, Cin), jnp.bfloat16)
    pad_ref[:, 0:1, :] = jnp.zeros((H + 2, 1, Cin), jnp.bfloat16)
    pad_ref[:, W + 1:W + 2, :] = jnp.zeros((H + 2, 1, Cin), jnp.bfloat16)
    pad_ref[1:H + 1, 1:W + 1, :] = a_bf16
    acc = jnp.zeros((H * W, Cout), jnp.float32)
    for dy in range(3):                                    # static loop: 3 MXU-fat matmuls
        slab = jnp.concatenate(
            [pad_ref[dy:dy + H, dx:dx + W, :] for dx in range(3)], axis=-1,
        ).reshape(H * W, 3 * Cin)                          # (H*W, 3*Cin) bf16
        acc = acc + jnp.dot(slab, w3_ref[dy], preferred_element_type=jnp.float32)
    return acc + bias


# --------------------------------- kernels ------------------------------------
def _block1_kernel(x_ref, g1_ref, be1_ref, w1_ref, cb1_ref, h_ref, pad1_ref,
                   *, num_groups, eps):
    # Fused: GroupNorm1 -> SiLU -> Conv3x3 (one batch element per grid step).
    x = x_ref[0].astype(jnp.float32)                       # (H, W, Cin)
    H, W, Cin = x.shape
    a = _gn_silu(x.reshape(H * W, Cin), g1_ref[...], be1_ref[...], num_groups, eps)
    y = _conv3x3(pad1_ref, a.reshape(H, W, Cin).astype(jnp.bfloat16),
                 w1_ref, cb1_ref[...])                     # (H*W, Cout) f32
    Cout = y.shape[-1]
    h_ref[...] = y.reshape(1, H, W, Cout).astype(h_ref.dtype)   # bf16 intermediate


def _block2_kernel(h_ref, x_ref, g2_ref, be2_ref, w2_ref, cb2_ref, *rest,
                   num_groups, eps, shortcut_mode):
    # Fused: GroupNorm2 -> SiLU -> (dropout = identity, eval) -> Conv3x3 -> + shortcut(x).
    if shortcut_mode == "identity":
        o_ref, pad2_ref = rest
        wsc_ref = bsc_ref = padsc_ref = None
    elif shortcut_mode == "nin":
        wsc_ref, bsc_ref, o_ref, pad2_ref = rest
        padsc_ref = None
    else:  # "conv"
        wsc_ref, bsc_ref, o_ref, pad2_ref, padsc_ref = rest

    h = h_ref[0].astype(jnp.float32)                       # (H, W, C) from bf16
    H, W, C = h.shape
    a = _gn_silu(h.reshape(H * W, C), g2_ref[...], be2_ref[...], num_groups, eps)
    # TODO(synk): dropout is identity at inference (eval mode); training-mode dropout not implemented.
    y = _conv3x3(pad2_ref, a.reshape(H, W, C).astype(jnp.bfloat16),
                 w2_ref, cb2_ref[...])                     # (H*W, C) f32

    if shortcut_mode == "identity":
        sc = x_ref[0].astype(jnp.float32).reshape(H * W, C)
    elif shortcut_mode == "nin":
        xb = x_ref[0].astype(jnp.bfloat16)                 # (H, W, Cin)
        Cin = xb.shape[-1]
        sc = jnp.dot(xb.reshape(H * W, Cin), wsc_ref[...],
                     preferred_element_type=jnp.float32) + bsc_ref[...]
    else:  # "conv": 3x3 conv shortcut
        xb = x_ref[0].astype(jnp.bfloat16)
        sc = _conv3x3(padsc_ref, xb, wsc_ref, bsc_ref[...])

    o_ref[...] = (y + sc).reshape(1, H, W, C).astype(o_ref.dtype)


# --------------------------------- wrappers ------------------------------------
def _cparams(H, W, cin, cout):
    """Derive a VMEM limit from the real per-step footprint + headroom, clamped to [32,100] MiB."""
    blocks = 2 * (H * W * cin * 4           # double-buffered input image block(s) (<= f32)
                  + H * W * cout * 4        # double-buffered output block (<= f32)
                  + 9 * cin * cout * 2)     # conv weights (bf16)
    temps = (3 * H * W * cin * 4            # f32 GN/SiLU working values
             + (H + 2) * (W + 2) * cin * 2  # bf16 halo scratch
             + 3 * H * W * cin * 2          # widest bf16 im2col slab (3*Cin columns)
             + H * W * cout * 4             # f32 conv accumulator
             + cin * cin * 4)               # group-mask matrix
    limit = int(1.5 * (blocks + temps))
    limit = max(32 << 20, min(limit, 100 << 20))
    return pltpu.CompilerParams(
        dimension_semantics=("parallel",),
        vmem_limit_bytes=limit,
    )


def gn_silu_conv3x3(x, gamma, beta, w_hwio, bias, num_groups, eps=1e-6):
    """Fused GroupNorm -> SiLU -> Conv3x3(pad=1).  x: (N,H,W,Cin) -> (N,H,W,Cout) bf16."""
    N, H, W, Cin = x.shape
    Cout = w_hwio.shape[-1]
    w3 = w_hwio.reshape(3, 3 * Cin, Cout).astype(jnp.bfloat16)   # per-dy tap-major, bf16
    gamma2 = gamma.reshape(1, Cin).astype(jnp.float32)
    beta2 = beta.reshape(1, Cin).astype(jnp.float32)
    b2 = bias.reshape(1, Cout).astype(jnp.float32)
    return pl.pallas_call(
        functools.partial(_block1_kernel, num_groups=num_groups, eps=eps),
        out_shape=jax.ShapeDtypeStruct((N, H, W, Cout), jnp.bfloat16),
        grid=(N,),
        in_specs=[
            pl.BlockSpec((1, H, W, Cin), lambda n: (n, 0, 0, 0)),
            pl.BlockSpec((1, Cin), lambda n: (0, 0)),
            pl.BlockSpec((1, Cin), lambda n: (0, 0)),
            pl.BlockSpec((3, 3 * Cin, Cout), lambda n: (0, 0, 0)),
            pl.BlockSpec((1, Cout), lambda n: (0, 0)),
        ],
        out_specs=pl.BlockSpec((1, H, W, Cout), lambda n: (n, 0, 0, 0)),
        scratch_shapes=[pltpu.VMEM((H + 2, W + 2, Cin), jnp.bfloat16)],
        compiler_params=_cparams(H, W, Cin, Cout),
    )(x, gamma2, beta2, w3, b2)


def gn_silu_conv3x3_add(h, x, gamma, beta, w_hwio, bias, num_groups,
                        shortcut_mode="identity", w_sc=None, b_sc=None,
                        out_dtype=jnp.float32, eps=1e-6):
    """Fused GroupNorm -> SiLU -> Conv3x3 -> (+ shortcut(x)).  All NHWC."""
    N, H, W, C = h.shape
    Cin = x.shape[-1]
    w3 = w_hwio.reshape(3, 3 * C, C).astype(jnp.bfloat16)
    gamma2 = gamma.reshape(1, C).astype(jnp.float32)
    beta2 = beta.reshape(1, C).astype(jnp.float32)
    b2 = bias.reshape(1, C).astype(jnp.float32)

    in_specs = [
        pl.BlockSpec((1, H, W, C), lambda n: (n, 0, 0, 0)),
        pl.BlockSpec((1, H, W, Cin), lambda n: (n, 0, 0, 0)),
        pl.BlockSpec((1, C), lambda n: (0, 0)),
        pl.BlockSpec((1, C), lambda n: (0, 0)),
        pl.BlockSpec((3, 3 * C, C), lambda n: (0, 0, 0)),
        pl.BlockSpec((1, C), lambda n: (0, 0)),
    ]
    args = [h, x, gamma2, beta2, w3, b2]
    scratch = [pltpu.VMEM((H + 2, W + 2, C), jnp.bfloat16)]
    if shortcut_mode == "nin":
        args += [w_sc.reshape(Cin, C).astype(jnp.bfloat16),
                 b_sc.reshape(1, C).astype(jnp.float32)]
        in_specs += [pl.BlockSpec((Cin, C), lambda n: (0, 0)),
                     pl.BlockSpec((1, C), lambda n: (0, 0))]
    elif shortcut_mode == "conv":
        args += [w_sc.reshape(3, 3 * Cin, C).astype(jnp.bfloat16),
                 b_sc.reshape(1, C).astype(jnp.float32)]
        in_specs += [pl.BlockSpec((3, 3 * Cin, C), lambda n: (0, 0, 0)),
                     pl.BlockSpec((1, C), lambda n: (0, 0))]
        scratch += [pltpu.VMEM((H + 2, W + 2, Cin), jnp.bfloat16)]

    return pl.pallas_call(
        functools.partial(_block2_kernel, num_groups=num_groups, eps=eps,
                          shortcut_mode=shortcut_mode),
        out_shape=jax.ShapeDtypeStruct((N, H, W, C), out_dtype),
        grid=(N,),
        in_specs=in_specs,
        out_specs=pl.BlockSpec((1, H, W, C), lambda n: (n, 0, 0, 0)),
        scratch_shapes=scratch,
        compiler_params=_cparams(H, W, C + Cin, C),
    )(*args)


# ------------------------------- ResnetBlock ----------------------------------
def init_resnet_block_params(key, in_channels, out_channels, conv_shortcut=False):
    """Deterministic init: GroupNorm gamma=1, beta=0; conv weights U(-1/sqrt(fan_in), +). HWIO."""
    ks = jax.random.split(key, 6)

    def conv_w(k, kh, kw, cin, cout):
        bound = 1.0 / (cin * kh * kw) ** 0.5
        return jax.random.uniform(k, (kh, kw, cin, cout), jnp.float32, -bound, bound)

    def conv_b(k, fan_in, cout):
        bound = 1.0 / fan_in ** 0.5
        return jax.random.uniform(k, (cout,), jnp.float32, -bound, bound)

    p = {
        "gamma1": jnp.ones((in_channels,), jnp.float32),
        "beta1": jnp.zeros((in_channels,), jnp.float32),
        "w1": conv_w(ks[0], 3, 3, in_channels, out_channels),
        "b1": conv_b(ks[1], in_channels * 9, out_channels),
        "gamma2": jnp.ones((out_channels,), jnp.float32),
        "beta2": jnp.zeros((out_channels,), jnp.float32),
        "w2": conv_w(ks[2], 3, 3, out_channels, out_channels),
        "b2": conv_b(ks[3], out_channels * 9, out_channels),
    }
    if in_channels != out_channels:
        if conv_shortcut:
            p["w_sc"] = conv_w(ks[4], 3, 3, in_channels, out_channels)
            p["b_sc"] = conv_b(ks[5], in_channels * 9, out_channels)
        else:
            p["w_nin"] = conv_w(ks[4], 1, 1, in_channels, out_channels)[0, 0]  # (Cin, Cout)
            p["b_nin"] = conv_b(ks[5], in_channels, out_channels)
    return p


def resnet_block_forward_nhwc(x, params, *, in_channels, out_channels,
                              norm_groups, conv_shortcut=False):
    """NHWC forward (preferred: keeps the activation in the kernel layout, no transposes)."""
    h = gn_silu_conv3x3(x, params["gamma1"], params["beta1"],
                        params["w1"], params["b1"], norm_groups)
    if in_channels != out_channels:
        if conv_shortcut:
            mode, w_sc, b_sc = "conv", params["w_sc"], params["b_sc"]
        else:
            mode, w_sc, b_sc = "nin", params["w_nin"], params["b_nin"]
    else:
        mode, w_sc, b_sc = "identity", None, None
    return gn_silu_conv3x3_add(h, x, params["gamma2"], params["beta2"],
                               params["w2"], params["b2"], norm_groups,
                               shortcut_mode=mode, w_sc=w_sc, b_sc=b_sc,
                               out_dtype=x.dtype)


def resnet_block_forward(x_nchw, params, *, in_channels, out_channels,
                         norm_groups, conv_shortcut=False):
    # NCHW (PyTorch) <-> NHWC boundary adapter. Each transpose is a full HBM pass;
    # in a full NHWC network call resnet_block_forward_nhwc directly and drop both.
    x = jnp.transpose(x_nchw, (0, 2, 3, 1))
    out = resnet_block_forward_nhwc(x, params, in_channels=in_channels,
                                    out_channels=out_channels,
                                    norm_groups=norm_groups,
                                    conv_shortcut=conv_shortcut)
    return jnp.transpose(out, (0, 3, 1, 2))


# ------------------------------ pure-JAX reference -----------------------------
def _ref_groupnorm(x, gamma, beta, groups, eps=1e-6):
    N, H, W, C = x.shape
    xg = x.reshape(N, H, W, groups, C // groups)
    mean = xg.mean(axis=(1, 2, 4), keepdims=True)
    var = xg.var(axis=(1, 2, 4), keepdims=True)
    xn = ((xg - mean) * jax.lax.rsqrt(var + eps)).reshape(N, H, W, C)
    return xn * gamma + beta


def _ref_conv3x3(x, w_hwio, b):
    y = jax.lax.conv_general_dilated(
        x, w_hwio, window_strides=(1, 1), padding="SAME",
        dimension_numbers=("NHWC", "HWIO", "NHWC"))
    return y + b


def _ref_resnet_block(x, p, *, groups, cin, cout, conv_shortcut):
    h = _ref_groupnorm(x, p["gamma1"], p["beta1"], groups)
    h = h * jax.nn.sigmoid(h)
    h = _ref_conv3x3(h, p["w1"], p["b1"])
    h = _ref_groupnorm(h, p["gamma2"], p["beta2"], groups)
    h = h * jax.nn.sigmoid(h)
    h = _ref_conv3x3(h, p["w2"], p["b2"])
    if cin != cout:
        if conv_shortcut:
            x = _ref_conv3x3(x, p["w_sc"], p["b_sc"])
        else:
            x = jnp.einsum("nhwc,cd->nhwd", x, p["w_nin"]) + p["b_nin"]
    return x + h


# ----------------------------------- demo --------------------------------------
if __name__ == "__main__":
    key = jax.random.PRNGKey(0)
    k_x, k_p1, k_p2, k_p3 = jax.random.split(key, 4)

    N, H, W = 2, 16, 16
    C_IN, C_OUT, GROUPS = 32, 64, 8

    x_nchw = jax.random.normal(k_x, (N, C_IN, H, W), jnp.float32)   # PyTorch NCHW input
    x_nhwc = jnp.transpose(x_nchw, (0, 2, 3, 1))

    cases = [
        ("nin_shortcut", C_IN, C_OUT, False, k_p1),      # in != out, 1x1 nin shortcut
        ("identity_shortcut", C_IN, C_IN, False, k_p2),  # in == out, identity shortcut
        ("conv_shortcut", C_IN, C_OUT, True, k_p3),      # in != out, 3x3 conv shortcut
    ]
    for name, cin, cout, csc, kp in cases:
        params = init_resnet_block_params(kp, cin, cout, conv_shortcut=csc)
        fwd = jax.jit(functools.partial(
            resnet_block_forward, in_channels=cin, out_channels=cout,
            norm_groups=GROUPS, conv_shortcut=csc))
        out = fwd(x_nchw, params)
        jax.block_until_ready(out)
        assert out.shape == (N, cout, H, W), (name, out.shape)
        assert bool(jnp.isfinite(out).all()), name

        ref = _ref_resnet_block(x_nhwc, params, groups=GROUPS, cin=cin, cout=cout,
                                conv_shortcut=csc)
        ref_nchw = jnp.transpose(ref, (0, 3, 1, 2))
        err = float(jnp.max(jnp.abs(out - ref_nchw)))
        # bf16 MXU operands + bf16 intermediate h -> small, bounded numeric delta vs f32 ref.
        assert err < 0.15, (name, err)

    print("KERNEL_OK")
</pallas_src>

<mosaic_0001>
module attributes {stable_mosaic.version = 11 : i64} {
  func.func @_block1_kernel(%arg0: i32, %arg1: memref<1x16x16x32xf32, #tpu.memory_space<vmem>>, %arg2: memref<1x32xf32, #tpu.memory_space<vmem>>, %arg3: memref<1x32xf32, #tpu.memory_space<vmem>>, %arg4: memref<3x96x64xbf16, #tpu.memory_space<vmem>>, %arg5: memref<1x64xf32, #tpu.memory_space<vmem>>, %arg6: memref<1x16x16x64xbf16, #tpu.memory_space<vmem>>, %arg7: memref<18x18x32xbf16, #tpu.memory_space<vmem>>) attributes {dimension_semantics = [#tpu.dimension_semantics<parallel>], iteration_bounds = array<i64: 2>, scalar_prefetch = 0 : i64, scratch_operands = 1 : i64, tpu.core_type = #tpu.core_type<tc>, window_params = [{transform_indices = @transform_0, window_bounds = array<i64: 1, 16, 16, 32>}, {pipeline_mode = #tpu.pipeline_mode<synchronous>, transform_indices = @transform_1, window_bounds = array<i64: 1, 32>}, {pipeline_mode = #tpu.pipeline_mode<synchronous>, transform_indices = @transform_2, window_bounds = array<i64: 1, 32>}, {pipeline_mode = #tpu.pipeline_mode<synchronous>, transform_indices = @transform_3, window_bounds = array<i64: 3, 96, 64>}, {pipeline_mode = #tpu.pipeline_mode<synchronous>, transform_indices = @transform_4, window_bounds = array<i64: 1, 64>}, {transform_indices = @transform_5, window_bounds = array<i64: 1, 16, 16, 64>}]} {
    %c0 = arith.constant 0 : index
    %c0_0 = arith.constant 0 : index
    %c0_1 = arith.constant 0 : index
    %c0_2 = arith.constant 0 : index
    %0 = vector.load %arg1[%c0, %c0_0, %c0_1, %c0_2] : memref<1x16x16x32xf32, #tpu.memory_space<vmem>>, vector<1x16x16x32xf32>
    %1 = vector.shape_cast %0 : vector<1x16x16x32xf32> to vector<16x16x32xf32>
    %2 = vector.shape_cast %1 : vector<16x16x32xf32> to vector<256x32xf32>
    %c0_3 = arith.constant 0 : index
    %c0_4 = arith.constant 0 : index
    %3 = vector.load %arg2[%c0_3, %c0_4] : memref<1x32xf32, #tpu.memory_space<vmem>>, vector<1x32xf32>
    %c0_5 = arith.constant 0 : index
    %c0_6 = arith.constant 0 : index
    %4 = vector.load %arg3[%c0_5, %c0_6] : memref<1x32xf32, #tpu.memory_space<vmem>>, vector<1x32xf32>
    %cst = arith.constant dense<0.000000e+00> : vector<32xf32>
    %5 = vector.multi_reduction <add>, %2, %cst [0] : vector<256x32xf32> to vector<32xf32>
    %6 = vector.shape_cast %5 : vector<32xf32> to vector<1x32xf32>
    %7 = arith.mulf %2, %2 : vector<256x32xf32>
    %cst_7 = arith.constant dense<0.000000e+00> : vector<32xf32>
    %8 = vector.multi_reduction <add>, %7, %cst_7 [0] : vector<256x32xf32> to vector<32xf32>
    %9 = vector.shape_cast %8 : vector<32xf32> to vector<1x32xf32>
    %10 = tpu.concatenate %6, %9 in 0 : vector<1x32xf32>, vector<1x32xf32> -> vector<2x32xf32>
    %11 = tpu.iota {dimensions = array<i32: 0>} : vector<32x32xi32>
    %12 = arith.sitofp %11 : vector<32x32xi32> to vector<32x32xf32>
    %13 = tpu.iota {dimensions = array<i32: 1>} : vector<32x32xi32>
    %14 = arith.sitofp %13 : vector<32x32xi32> to vector<32x32xf32>
    %cst_8 = arith.constant 5.000000e-01 : f32
    %15 = vector.broadcast %cst_8 : f32 to vector<32x32xf32>
    %16 = arith.addf %12, %15 : vector<32x32xf32>
    %cst_9 = arith.constant 2.500000e-01 : f32
    %17 = vector.broadcast %cst_9 : f32 to vector<32x32xf32>
    %18 = arith.mulf %16, %17 : vector<32x32xf32>
    %19 = math.floor %18 : vector<32x32xf32>
    %cst_10 = arith.constant 5.000000e-01 : f32
    %20 = vector.broadcast %cst_10 : f32 to vector<32x32xf32>
    %21 = arith.addf %14, %20 : vector<32x32xf32>
    %cst_11 = arith.constant 2.500000e-01 : f32
    %22 = vector.broadcast %cst_11 : f32 to vector<32x32xf32>
    %23 = arith.mulf %21, %22 : vector<32x32xf32>
    %24 = math.floor %23 : vector<32x32xf32>
    %25 = arith.cmpf oeq, %19, %24 : vector<32x32xf32>
    %26 = arith.extui %25 : vector<32x32xi1> to vector<32x32xi32>
    %27 = arith.sitofp %26 : vector<32x32xi32> to vector<32x32xf32>
    %cst_12 = arith.constant 9.765625E-4 : f32
    %28 = vector.broadcast %cst_12 : f32 to vector<32x32xf32>
    %29 = arith.mulf %27, %28 : vector<32x32xf32>
    %cst_13 = arith.constant dense<0.000000e+00> : vector<2x32xf32>
    %30 = tpu.matmul %10, %29, %cst_13 {dimension_numbers = #tpu.dot_dimension_numbers<[1], [0], [0], [1], [0, 0, 1, 1], [], []>} : vector<2x32xf32>, vector<32x32xf32>, vector<2x32xf32> -> vector<2x32xf32>
    %31 = vector.extract_strided_slice %30 {offsets = [0, 0], sizes = [1, 32], strides = [1, 1]} : vector<2x32xf32> to vector<1x32xf32>
    %32 = vector.extract_strided_slice %30 {offsets = [1, 0], sizes = [1, 32], strides = [1, 1]} : vector<2x32xf32> to vector<1x32xf32>
    %33 = arith.mulf %31, %31 : vector<1x32xf32>
    %34 = arith.subf %32, %33 : vector<1x32xf32>
    %cst_14 = arith.constant 9.99999997E-7 : f32
    %35 = vector.broadcast %cst_14 : f32 to vector<1x32xf32>
    %36 = arith.addf %34, %35 : vector<1x32xf32>
    %37 = math.rsqrt %36 : vector<1x32xf32>
    %38 = vector.broadcast %31 : vector<1x32xf32> to vector<256x32xf32>
    %39 = arith.subf %2, %38 : vector<256x32xf32>
    %40 = arith.mulf %37, %3 : vector<1x32xf32>
    %41 = vector.broadcast %40 : vector<1x32xf32> to vector<256x32xf32>
    %42 = arith.mulf %39, %41 : vector<256x32xf32>
    %43 = vector.broadcast %4 : vector<1x32xf32> to vector<256x32xf32>
    %44 = arith.addf %42, %43 : vector<256x32xf32>
    %cst_15 = arith.constant 0.000000e+00 : f32
    %45 = vector.broadcast %cst_15 : f32 to vector<256x32xf32>
    %46 = arith.subf %45, %44 : vector<256x32xf32>
    %47 = math.exp %46 : vector<256x32xf32>
    %cst_16 = arith.constant 1.000000e+00 : f32
    %48 = vector.broadcast %cst_16 : f32 to vector<256x32xf32>
    %49 = arith.addf %48, %47 : vector<256x32xf32>
    %50 = tpu.reciprocal %49 {approx = true} : vector<256x32xf32> -> vector<256x32xf32>
    %51 = arith.mulf %44, %50 : vector<256x32xf32>
    %52 = vector.shape_cast %51 : vector<256x32xf32> to vector<16x16x32xf32>
    %53 = arith.truncf %52 : vector<16x16x32xf32> to vector<16x16x32xbf16>
    %c0_17 = arith.constant 0 : index
    %c0_18 = arith.constant 0 : index
    %54 = vector.load %arg5[%c0_17, %c0_18] : memref<1x64xf32, #tpu.memory_space<vmem>>, vector<1x64xf32>
    %cst_19 = arith.constant 0.000000e+00 : bf16
    %55 = vector.broadcast %cst_19 : bf16 to vector<1x18x32xbf16>
    %c0_20 = arith.constant 0 : index
    %c0_21 = arith.constant 0 : index
    %c0_22 = arith.constant 0 : index
    %56 = vector.load %arg7[%c0_20, %c0_21, %c0_22] : memref<18x18x32xbf16, #tpu.memory_space<vmem>>, vector<1x18x32xbf16>
    tpu.vector_store %arg7[%c0_20, %c0_21, %c0_22], %55 {strides = array<i32>} : memref<18x18x32xbf16, #tpu.memory_space<vmem>>, vector<1x18x32xbf16>,
    %cst_23 = arith.constant 0.000000e+00 : bf16
    %57 = vector.broadcast %cst_23 : bf16 to vector<1x18x32xbf16>
    %c17 = arith.constant 17 : index
    %c0_24 = arith.constant 0 : index
    %c0_25 = arith.constant 0 : index
    %58 = vector.load %arg7[%c17, %c0_24, %c0_25] : memref<18x18x32xbf16, #tpu.memory_space<vmem>>, vector<1x18x32xbf16>
    tpu.vector_store %arg7[%c17, %c0_24, %c0_25], %57 {strides = array<i32>} : memref<18x18x32xbf16, #tpu.memory_space<vmem>>, vector<1x18x32xbf16>,
    %cst_26 = arith.constant 0.000000e+00 : bf16
    %59 = vector.broadcast %cst_26 : bf16 to vector<18x1x32xbf16>
    %c0_27 = arith.constant 0 : index
    %c0_28 = arith.constant 0 : index
    %c0_29 = arith.constant 0 : index
    %60 = vector.load %arg7[%c0_27, %c0_28, %c0_29] : memref<18x18x32xbf16, #tpu.memory_space<vmem>>, vector<18x1x32xbf16>
    tpu.vector_store %arg7[%c0_27, %c0_28, %c0_29], %59 {strides = array<i32>} : memref<18x18x32xbf16, #tpu.memory_space<vmem>>, vector<18x1x32xbf16>,
    %cst_30 = arith.constant 0.000000e+00 : bf16
    %61 = vector.broadcast %cst_30 : bf16 to vector<18x1x32xbf16>
    %c0_31 = arith.constant 0 : index
    %c17_32 = arith.constant 17 : index
    %c0_33 = arith.constant 0 : index
    %62 = vector.load %arg7[%c0_31, %c17_32, %c0_33] : memref<18x18x32xbf16, #tpu.memory_space<vmem>>, vector<18x1x32xbf16>
    tpu.vector_store %arg7[%c0_31, %c17_32, %c0_33], %61 {strides = array<i32>} : memref<18x18x32xbf16, #tpu.memory_space<vmem>>, vector<18x1x32xbf16>,
    %c1 = arith.constant 1 : index
    %c1_34 = arith.constant 1 : index
    %c0_35 = arith.constant 0 : index
    %63 = vector.load %arg7[%c1, %c1_34, %c0_35] : memref<18x18x32xbf16, #tpu.memory_space<vmem>>, vector<16x16x32xbf16>
    tpu.vector_store %arg7[%c1, %c1_34, %c0_35], %53 {strides = array<i32>} : memref<18x18x32xbf16, #tpu.memory_space<vmem>>, vector<16x16x32xbf16>,
    %cst_36 = arith.constant 0.000000e+00 : f32
    %64 = vector.broadcast %cst_36 : f32 to vector<256x64xf32>
    %c0_37 = arith.constant 0 : index
    %c0_38 = arith.constant 0 : index
    %c0_39 = arith.constant 0 : index
    %65 = vector.load %arg7[%c0_37, %c0_38, %c0_39] : memref<18x18x32xbf16, #tpu.memory_space<vmem>>, vector<16x16x32xbf16>
    %c0_40 = arith.constant 0 : index
    %c1_41 = arith.constant 1 : index
    %c0_42 = arith.constant 0 : index
    %66 = vector.load %arg7[%c0_40, %c1_41, %c0_42] : memref<18x18x32xbf16, #tpu.memory_space<vmem>>, vector<16x16x32xbf16>
    %c0_43 = arith.constant 0 : index
    %c2 = arith.constant 2 : index
    %c0_44 = arith.constant 0 : index
    %67 = vector.load %arg7[%c0_43, %c2, %c0_44] : memref<18x18x32xbf16, #tpu.memory_space<vmem>>, vector<16x16x32xbf16>
    %68 = tpu.concatenate %65, %66, %67 in 2 : vector<16x16x32xbf16>, vector<16x16x32xbf16>, vector<16x16x32xbf16> -> vector<16x16x96xbf16>
    %69 = vector.shape_cast %68 : vector<16x16x96xbf16> to vector<256x96xbf16>
    %c0_45 = arith.constant 0 : index
    %c0_46 = arith.constant 0 : index
    %c0_47 = arith.constant 0 : index
    %70 = vector.load %arg4[%c0_45, %c0_46, %c0_47] : memref<3x96x64xbf16, #tpu.memory_space<vmem>>, vector<1x96x64xbf16>
    %71 = vector.shape_cast %70 : vector<1x96x64xbf16> to vector<96x64xbf16>
    %cst_48 = arith.constant dense<0.000000e+00> : vector<256x64xf32>
    %72 = tpu.matmul %69, %71, %cst_48 {dimension_numbers = #tpu.dot_dimension_numbers<[1], [0], [0], [1], [0, 0, 1, 1], [], []>} : vector<256x96xbf16>, vector<96x64xbf16>, vector<256x64xf32> -> vector<256x64xf32>
    %73 = arith.addf %64, %72 : vector<256x64xf32>
    %c1_49 = arith.constant 1 : index
    %c0_50 = arith.constant 0 : index
    %c0_51 = arith.constant 0 : index
    %74 = vector.load %arg7[%c1_49, %c0_50, %c0_51] : memref<18x18x32xbf16, #tpu.memory_space<vmem>>, vector<16x16x32xbf16>
    %c1_52 = arith.constant 1 : index
    %c1_53 = arith.constant 1 : index
    %c0_54 = arith.constant 0 : index
    %75 = vector.load %arg7[%c1_52, %c1_53, %c0_54] : memref<18x18x32xbf16, #tpu.memory_space<vmem>>, vector<16x16x32xbf16>
    %c1_55 = arith.constant 1 : index
    %c2_56 = arith.constant 2 : index
    %c0_57 = arith.constant 0 : index
    %76 = vector.load %arg7[%c1_55, %c2_56, %c0_57] : memref<18x18x32xbf16, #tpu.memory_space<vmem>>, vector<16x16x32xbf16>
    %77 = tpu.concatenate %74, %75, %76 in 2 : vector<16x16x32xbf16>, vector<16x16x32xbf16>, vector<16x16x32xbf16> -> vector<16x16x96xbf16>
    %78 = vector.shape_cast %77 : vector<16x16x96xbf16> to vector<256x96xbf16>
    %c1_58 = arith.constant 1 : index
    %c0_59 = arith.constant 0 : index
    %c0_60 = arith.constant 0 : index
    %79 = vector.load %arg4[%c1_58, %c0_59, %c0_60] : memref<3x96x64xbf16, #tpu.memory_space<vmem>>, vector<1x96x64xbf16>
    %80 = vector.shape_cast %79 : vector<1x96x64xbf16> to vector<96x64xbf16>
    %cst_61 = arith.constant dense<0.000000e+00> : vector<256x64xf32>
    %81 = tpu.matmul %78, %80, %cst_61 {dimension_numbers = #tpu.dot_dimension_numbers<[1], [0], [0], [1], [0, 0, 1, 1], [], []>} : vector<256x96xbf16>, vector<96x64xbf16>, vector<256x64xf32> -> vector<256x64xf32>
    %82 = arith.addf %73, %81 : vector<256x64xf32>
    %c2_62 = arith.constant 2 : index
    %c0_63 = arith.constant 0 : index
    %c0_64 = arith.constant 0 : index
    %83 = vector.load %arg7[%c2_62, %c0_63, %c0_64] : memref<18x18x32xbf16, #tpu.memory_space<vmem>>, vector<16x16x32xbf16>
    %c2_65 = arith.constant 2 : index
    %c1_66 = arith.constant 1 : index
    %c0_67 = arith.constant 0 : index
    %84 = vector.load %arg7[%c2_65, %c1_66, %c0_67] : memref<18x18x32xbf16, #tpu.memory_space<vmem>>, vector<16x16x32xbf16>
    %c2_68 = arith.constant 2 : index
    %c2_69 = arith.constant 2 : index
    %c0_70 = arith.constant 0 : index
    %85 = vector.load %arg7[%c2_68, %c2_69, %c0_70] : memref<18x18x32xbf16, #tpu.memory_space<vmem>>, vector<16x16x32xbf16>
    %86 = tpu.concatenate %83, %84, %85 in 2 : vector<16x16x32xbf16>, vector<16x16x32xbf16>, vector<16x16x32xbf16> -> vector<16x16x96xbf16>
    %87 = vector.shape_cast %86 : vector<16x16x96xbf16> to vector<256x96xbf16>
    %c2_71 = arith.constant 2 : index
    %c0_72 = arith.constant 0 : index
    %c0_73 = arith.constant 0 : index
    %88 = vector.load %arg4[%c2_71, %c0_72, %c0_73] : memref<3x96x64xbf16, #tpu.memory_space<vmem>>, vector<1x96x64xbf16>
    %89 = vector.shape_cast %88 : vector<1x96x64xbf16> to vector<96x64xbf16>
    %cst_74 = arith.constant dense<0.000000e+00> : vector<256x64xf32>
    %90 = tpu.matmul %87, %89, %cst_74 {dimension_numbers = #tpu.dot_dimension_numbers<[1], [0], [0], [1], [0, 0, 1, 1], [], []>} : vector<256x96xbf16>, vector<96x64xbf16>, vector<256x64xf32> -> vector<256x64xf32>
    %91 = arith.addf %82, %90 : vector<256x64xf32>
    %92 = vector.broadcast %54 : vector<1x64xf32> to vector<256x64xf32>
    %93 = arith.addf %91, %92 : vector<256x64xf32>
    %94 = vector.shape_cast %93 : vector<256x64xf32> to vector<1x16x16x64xf32>
    %95 = arith.truncf %94 : vector<1x16x16x64xf32> to vector<1x16x16x64xbf16>
    %c0_75 = arith.constant 0 : index
    %c0_76 = arith.constant 0 : index
    %c0_77 = arith.constant 0 : index
    %c0_78 = arith.constant 0 : index
    %96 = vector.load %arg6[%c0_75, %c0_76, %c0_77, %c0_78] : memref<1x16x16x64xbf16, #tpu.memory_space<vmem>>, vector<1x16x16x64xbf16>
    tpu.vector_store %arg6[%c0_75, %c0_76, %c0_77, %c0_78], %95 {strides = array<i32>} : memref<1x16x16x64xbf16, #tpu.memory_space<vmem>>, vector<1x16x16x64xbf16>,
    return
  }
  func.func @transform_0(%arg0: i32) -> (i32, i32, i32, i32) {
    %c0_i32 = arith.constant 0 : i32
    %c0_i32_0 = arith.constant 0 : i32
    %c0_i32_1 = arith.constant 0 : i32
    %c0_i32_2 = arith.constant 0 : i32
    return %arg0, %c0_i32, %c0_i32_0, %c0_i32_1 : i32, i32, i32, i32
  }
  func.func @transform_1(%arg0: i32) -> (i32, i32) {
    %c0_i32 = arith.constant 0 : i32
    %c0_i32_0 = arith.constant 0 : i32
    %c0_i32_1 = arith.constant 0 : i32
    return %c0_i32, %c0_i32_0 : i32, i32
  }
  func.func @transform_2(%arg0: i32) -> (i32, i32) {
    %c0_i32 = arith.constant 0 : i32
    %c0_i32_0 = arith.constant 0 : i32
    %c0_i32_1 = arith.constant 0 : i32
    return %c0_i32, %c0_i32_0 : i32, i32
  }
  func.func @transform_3(%arg0: i32) -> (i32, i32, i32) {
    %c0_i32 = arith.constant 0 : i32
    %c0_i32_0 = arith.constant 0 : i32
    %c0_i32_1 = arith.constant 0 : i32
    %c0_i32_2 = arith.constant 0 : i32
    return %c0_i32, %c0_i32_0, %c0_i32_1 : i32, i32, i32
  }
  func.func @transform_4(%arg0: i32) -> (i32, i32) {
    %c0_i32 = arith.constant 0 : i32
    %c0_i32_0 = arith.constant 0 : i32
    %c0_i32_1 = arith.constant 0 : i32
    return %c0_i32, %c0_i32_0 : i32, i32
  }
  func.func @transform_5(%arg0: i32) -> (i32, i32, i32, i32) {
    %c0_i32 = arith.constant 0 : i32
    %c0_i32_0 = arith.constant 0 : i32
    %c0_i32_1 = arith.constant 0 : i32
    %c0_i32_2 = arith.constant 0 : i32
    return %arg0, %c0_i32, %c0_i32_0, %c0_i32_1 : i32, i32, i32, i32
  }
}

module attributes {stable_mosaic.version = 11 : i64} {
  func.func @_block2_kernel(%arg0: i32, %arg1: memref<1x16x16x64xbf16, #tpu.memory_space<vmem>>, %arg2: memref<1x16x16x32xf32, #tpu.memory_space<vmem>>, %arg3: memref<1x64xf32, #tpu.memory_space<vmem>>, %arg4: memref<1x64xf32, #tpu.memory_space<vmem>>, %arg5: memref<3x192x64xbf16, #tpu.memory_space<vmem>>, %arg6: memref<1x64xf32, #tpu.memory_space<vmem>>, %arg7: memref<32x64xbf16, #tpu.memory_space<vmem>>, %arg8: memref<1x64xf32, #tpu.memory_space<vmem>>, %arg9: memref<1x16x16x64xf32, #tpu.memory_space<vmem>>, %arg10: memref<18x18x64xbf16, #tpu.memory_space<vmem>>) attributes {dimension_semantics = [#tpu.dimension_semantics<parallel>], iteration_bounds = array<i64: 2>, scalar_prefetch = 0 : i64, scratch_operands = 1 : i64, tpu.core_type = #tpu.core_type<tc>, window_params = [{transform_indices = @transform_0, window_bounds = array<i64: 1, 16, 16, 64>}, {transform_indices = @transform_1, window_bounds = array<i64: 1, 16, 16, 32>}, {pipeline_mode = #tpu.pipeline_mode<synchronous>, transform_indices = @transform_2, window_bounds = array<i64: 1, 64>}, {pipeline_mode = #tpu.pipeline_mode<synchronous>, transform_indices = @transform_3, window_bounds = array<i64: 1, 64>}, {pipeline_mode = #tpu.pipeline_mode<synchronous>, transform_indices = @transform_4, window_bounds = array<i64: 3, 192, 64>}, {pipeline_mode = #tpu.pipeline_mode<synchronous>, transform_indices = @transform_5, window_bounds = array<i64: 1, 64>}, {pipeline_mode = #tpu.pipeline_mode<synchronous>, transform_indices = @transform_6, window_bounds = array<i64: 32, 64>}, {pipeline_mode = #tpu.pipeline_mode<synchronous>, transform_indices = @transform_7, window_bounds = array<i64: 1, 64>}, {transform_indices = @transform_8, window_bounds = array<i64: 1, 16, 16, 64>}]} {
    %c0 = arith.constant 0 : index
    %c0_0 = arith.constant 0 : index
    %c0_1 = arith.constant 0 : index
    %c0_2 = arith.constant 0 : index
    %0 = vector.load %arg1[%c0, %c0_0, %c0_1, %c0_2] : memref<1x16x16x64xbf16, #tpu.memory_space<vmem>>, vector<1x16x16x64xbf16>
    %1 = vector.shape_cast %0 : vector<1x16x16x64xbf16> to vector<16x16x64xbf16>
    %2 = arith.extf %1 : vector<16x16x64xbf16> to vector<16x16x64xf32>
    %3 = vector.shape_cast %2 : vector<16x16x64xf32> to vector<256x64xf32>
    %c0_3 = arith.constant 0 : index
    %c0_4 = arith.constant 0 : index
    %4 = vector.load %arg3[%c0_3, %c0_4] : memref<1x64xf32, #tpu.memory_space<vmem>>, vector<1x64xf32>
    %c0_5 = arith.constant 0 : index
    %c0_6 = arith.constant 0 : index
    %5 = vector.load %arg4[%c0_5, %c0_6] : memref<1x64xf32, #tpu.memory_space<vmem>>, vector<1x64xf32>
    %cst = arith.constant dense<0.000000e+00> : vector<64xf32>
    %6 = vector.multi_reduction <add>, %3, %cst [0] : vector<256x64xf32> to vector<64xf32>
    %7 = vector.shape_cast %6 : vector<64xf32> to vector<1x64xf32>
    %8 = arith.mulf %3, %3 : vector<256x64xf32>
    %cst_7 = arith.constant dense<0.000000e+00> : vector<64xf32>
    %9 = vector.multi_reduction <add>, %8, %cst_7 [0] : vector<256x64xf32> to vector<64xf32>
    %10 = vector.shape_cast %9 : vector<64xf32> to vector<1x64xf32>
    %11 = tpu.concatenate %7, %10 in 0 : vector<1x64xf32>, vector<1x64xf32> -> vector<2x64xf32>
    %12 = tpu.iota {dimensions = array<i32: 0>} : vector<64x64xi32>
    %13 = arith.sitofp %12 : vector<64x64xi32> to vector<64x64xf32>
    %14 = tpu.iota {dimensions = array<i32: 1>} : vector<64x64xi32>
    %15 = arith.sitofp %14 : vector<64x64xi32> to vector<64x64xf32>
    %cst_8 = arith.constant 5.000000e-01 : f32
    %16 = vector.broadcast %cst_8 : f32 to vector<64x64xf32>
    %17 = arith.addf %13, %16 : vector<64x64xf32>
    %cst_9 = arith.constant 1.250000e-01 : f32
    %18 = vector.broadcast %cst_9 : f32 to vector<64x64xf32>
    %19 = arith.mulf %17, %18 : vector<64x64xf32>
    %20 = math.floor %19 : vector<64x64xf32>
    %cst_10 = arith.constant 5.000000e-01 : f32
    %21 = vector.broadcast %cst_10 : f32 to vector<64x64xf32>
    %22 = arith.addf %15, %21 : vector<64x64xf32>
    %cst_11 = arith.constant 1.250000e-01 : f32
    %23 = vector.broadcast %cst_11 : f32 to vector<64x64xf32>
    %24 = arith.mulf %22, %23 : vector<64x64xf32>
    %25 = math.floor %24 : vector<64x64xf32>
    %26 = arith.cmpf oeq, %20, %25 : vector<64x64xf32>
    %27 = arith.extui %26 : vector<64x64xi1> to vector<64x64xi32>
    %28 = arith.sitofp %27 : vector<64x64xi32> to vector<64x64xf32>
    %cst_12 = arith.constant 4.8828125E-4 : f32
    %29 = vector.broadcast %cst_12 : f32 to vector<64x64xf32>
    %30 = arith.mulf %28, %29 : vector<64x64xf32>
    %cst_13 = arith.constant dense<0.000000e+00> : vector<2x64xf32>
    %31 = tpu.matmul %11, %30, %cst_13 {dimension_numbers = #tpu.dot_dimension_numbers<[1], [0], [0], [1], [0, 0, 1, 1], [], []>} : vector<2x64xf32>, vector<64x64xf32>, vector<2x64xf32> -> vector<2x64xf32>
    %32 = vector.extract_strided_slice %31 {offsets = [0, 0], sizes = [1, 64], strides = [1, 1]} : vector<2x64xf32> to vector<1x64xf32>
    %33 = vector.extract_strided_slice %31 {offsets = [1, 0], sizes = [1, 64], strides = [1, 1]} : vector<2x64xf32> to vector<1x64xf32>
    %34 = arith.mulf %32, %32 : vector<1x64xf32>
    %35 = arith.subf %33, %34 : vector<1x64xf32>
    %cst_14 = arith.constant 9.99999997E-7 : f32
    %36 = vector.broadcast %cst_14 : f32 to vector<1x64xf32>
    %37 = arith.addf %35, %36 : vector<1x64xf32>
    %38 = math.rsqrt %37 : vector<1x64xf32>
    %39 = vector.broadcast %32 : vector<1x64xf32> to vector<256x64xf32>
    %40 = arith.subf %3, %39 : vector<256x64xf32>
    %41 = arith.mulf %38, %4 : vector<1x64xf32>
    %42 = vector.broadcast %41 : vector<1x64xf32> to vector<256x64xf32>
    %43 = arith.mulf %40, %42 : vector<256x64xf32>
    %44 = vector.broadcast %5 : vector<1x64xf32> to vector<256x64xf32>
    %45 = arith.addf %43, %44 : vector<256x64xf32>
    %cst_15 = arith.constant 0.000000e+00 : f32
    %46 = vector.broadcast %cst_15 : f32 to vector<256x64xf32>
    %47 = arith.subf %46, %45 : vector<256x64xf32>
    %48 = math.exp %47 : vector<256x64xf32>
    %cst_16 = arith.constant 1.000000e+00 : f32
    %49 = vector.broadcast %cst_16 : f32 to vector<256x64xf32>
    %50 = arith.addf %49, %48 : vector<256x64xf32>
    %51 = tpu.reciprocal %50 {approx = true} : vector<256x64xf32> -> vector<256x64xf32>
    %52 = arith.mulf %45, %51 : vector<256x64xf32>
    %53 = vector.shape_cast %52 : vector<256x64xf32> to vector<16x16x64xf32>
    %54 = arith.truncf %53 : vector<16x16x64xf32> to vector<16x16x64xbf16>
    %c0_17 = arith.constant 0 : index
    %c0_18 = arith.constant 0 : index
    %55 = vector.load %arg6[%c0_17, %c0_18] : memref<1x64xf32, #tpu.memory_space<vmem>>, vector<1x64xf32>
    %cst_19 = arith.constant 0.000000e+00 : bf16
    %56 = vector.broadcast %cst_19 : bf16 to vector<1x18x64xbf16>
    %c0_20 = arith.constant 0 : index
    %c0_21 = arith.constant 0 : index
    %c0_22 = arith.constant 0 : index
    %57 = vector.load %arg10[%c0_20, %c0_21, %c0_22] : memref<18x18x64xbf16, #tpu.memory_space<vmem>>, vector<1x18x64xbf16>
    tpu.vector_store %arg10[%c0_20, %c0_21, %c0_22], %56 {strides = array<i32>} : memref<18x18x64xbf16, #tpu.memory_space<vmem>>, vector<1x18x64xbf16>,
    %cst_23 = arith.constant 0.000000e+00 : bf16
    %58 = vector.broadcast %cst_23 : bf16 to vector<1x18x64xbf16>
    %c17 = arith.constant 17 : index
    %c0_24 = arith.constant 0 : index
    %c0_25 = arith.constant 0 : index
    %59 = vector.load %arg10[%c17, %c0_24, %c0_25] : memref<18x18x64xbf16, #tpu.memory_space<vmem>>, vector<1x18x64xbf16>
    tpu.vector_store %arg10[%c17, %c0_24, %c0_25], %58 {strides = array<i32>} : memref<18x18x64xbf16, #tpu.memory_space<vmem>>, vector<1x18x64xbf16>,
    %cst_26 = arith.constant 0.000000e+00 : bf16
    %60 = vector.broadcast %cst_26 : bf16 to vector<18x1x64xbf16>
    %c0_27 = arith.constant 0 : index
    %c0_28 = arith.constant 0 : index
    %c0_29 = arith.constant 0 : index
    %61 = vector.load %arg10[%c0_27, %c0_28, %c0_29] : memref<18x18x64xbf16, #tpu.memory_space<vmem>>, vector<18x1x64xbf16>
    tpu.vector_store %arg10[%c0_27, %c0_28, %c0_29], %60 {strides = array<i32>} : memref<18x18x64xbf16, #tpu.memory_space<vmem>>, vector<18x1x64xbf16>,
    %cst_30 = arith.constant 0.000000e+00 : bf16
    %62 = vector.broadcast %cst_30 : bf16 to vector<18x1x64xbf16>
    %c0_31 = arith.constant 0 : index
    %c17_32 = arith.constant 17 : index
    %c0_33 = arith.constant 0 : index
    %63 = vector.load %arg10[%c0_31, %c17_32, %c0_33] : memref<18x18x64xbf16, #tpu.memory_space<vmem>>, vector<18x1x64xbf16>
    tpu.vector_store %arg10[%c0_31, %c17_32, %c0_33], %62 {strides = array<i32>} : memref<18x18x64xbf16, #tpu.memory_space<vmem>>, vector<18x1x64xbf16>,
    %c1 = arith.constant 1 : index
    %c1_34 = arith.constant 1 : index
    %c0_35 = arith.constant 0 : index
    %64 = vector.load %arg10[%c1, %c1_34, %c0_35] : memref<18x18x64xbf16, #tpu.memory_space<vmem>>, vector<16x16x64xbf16>
    tpu.vector_store %arg10[%c1, %c1_34, %c0_35], %54 {strides = array<i32>} : memref<18x18x64xbf16, #tpu.memory_space<vmem>>, vector<16x16x64xbf16>,
    %cst_36 = arith.constant 0.000000e+00 : f32
    %65 = vector.broadcast %cst_36 : f32 to vector<256x64xf32>
    %c0_37 = arith.constant 0 : index
    %c0_38 = arith.constant 0 : index
    %c0_39 = arith.constant 0 : index
    %66 = vector.load %arg10[%c0_37, %c0_38, %c0_39] : memref<18x18x64xbf16, #tpu.memory_space<vmem>>, vector<16x16x64xbf16>
    %c0_40 = arith.constant 0 : index
    %c1_41 = arith.constant 1 : index
    %c0_42 = arith.constant 0 : index
    %67 = vector.load %arg10[%c0_40, %c1_41, %c0_42] : memref<18x18x64xbf16, #tpu.memory_space<vmem>>, vector<16x16x64xbf16>
    %c0_43 = arith.constant 0 : index
    %c2 = arith.constant 2 : index
    %c0_44 = arith.constant 0 : index
    %68 = vector.load %arg10[%c0_43, %c2, %c0_44] : memref<18x18x64xbf16, #tpu.memory_space<vmem>>, vector<16x16x64xbf16>
    %69 = tpu.concatenate %66, %67, %68 in 2 : vector<16x16x64xbf16>, vector<16x16x64xbf16>, vector<16x16x64xbf16> -> vector<16x16x192xbf16>
    %70 = vector.shape_cast %69 : vector<16x16x192xbf16> to vector<256x192xbf16>
    %c0_45 = arith.constant 0 : index
    %c0_46 = arith.constant 0 : index
    %c0_47 = arith.constant 0 : index
    %71 = vector.load %arg5[%c0_45, %c0_46, %c0_47] : memref<3x192x64xbf16, #tpu.memory_space<vmem>>, vector<1x192x64xbf16>
    %72 = vector.shape_cast %71 : vector<1x192x64xbf16> to vector<192x64xbf16>
    %cst_48 = arith.constant dense<0.000000e+00> : vector<256x64xf32>
    %73 = tpu.matmul %70, %72, %cst_48 {dimension_numbers = #tpu.dot_dimension_numbers<[1], [0], [0], [1], [0, 0, 1, 1], [], []>} : vector<256x192xbf16>, vector<192x64xbf16>, vector<256x64xf32> -> vector<256x64xf32>
    %74 = arith.addf %65, %73 : vector<256x64xf32>
    %c1_49 = arith.constant 1 : index
    %c0_50 = arith.constant 0 : index
    %c0_51 = arith.constant 0 : index
    %75 = vector.load %arg10[%c1_49, %c0_50, %c0_51] : memref<18x18x64xbf16, #tpu.memory_space<vmem>>, vector<16x16x64xbf16>
    %c1_52 = arith.constant 1 : index
    %c1_53 = arith.constant 1 : index
    %c0_54 = arith.constant 0 : index
    %76 = vector.load %arg10[%c1_52, %c1_53, %c0_54] : memref<18x18x64xbf16, #tpu.memory_space<vmem>>, vector<16x16x64xbf16>
    %c1_55 = arith.constant 1 : index
    %c2_56 = arith.constant 2 : index
    %c0_57 = arith.constant 0 : index
    %77 = vector.load %arg10[%c1_55, %c2_56, %c0_57] : memref<18x18x64xbf16, #tpu.memory_space<vmem>>, vector<16x16x64xbf16>
    %78 = tpu.concatenate %75, %76, %77 in 2 : vector<16x16x64xbf16>, vector<16x16x64xbf16>, vector<16x16x64xbf16> -> vector<16x16x192xbf16>
    %79 = vector.shape_cast %78 : vector<16x16x192xbf16> to vector<256x192xbf16>
    %c1_58 = arith.constant 1 : index
    %c0_59 = arith.constant 0 : index
    %c0_60 = arith.constant 0 : index
    %80 = vector.load %arg5[%c1_58, %c0_59, %c0_60] : memref<3x192x64xbf16, #tpu.memory_space<vmem>>, vector<1x192x64xbf16>
    %81 = vector.shape_cast %80 : vector<1x192x64xbf16> to vector<192x64xbf16>
    %cst_61 = arith.constant dense<0.000000e+00> : vector<256x64xf32>
    %82 = tpu.matmul %79, %81, %cst_61 {dimension_numbers = #tpu.dot_dimension_numbers<[1], [0], [0], [1], [0, 0, 1, 1], [], []>} : vector<256x192xbf16>, vector<192x64xbf16>, vector<256x64xf32> -> vector<256x64xf32>
    %83 = arith.addf %74, %82 : vector<256x64xf32>
    %c2_62 = arith.constant 2 : index
    %c0_63 = arith.constant 0 : index
    %c0_64 = arith.constant 0 : index
    %84 = vector.load %arg10[%c2_62, %c0_63, %c0_64] : memref<18x18x64xbf16, #tpu.memory_space<vmem>>, vector<16x16x64xbf16>
    %c2_65 = arith.constant 2 : index
    %c1_66 = arith.constant 1 : index
    %c0_67 = arith.constant 0 : index
    %85 = vector.load %arg10[%c2_65, %c1_66, %c0_67] : memref<18x18x64xbf16, #tpu.memory_space<vmem>>, vector<16x16x64xbf16>
    %c2_68 = arith.constant 2 : index
    %c2_69 = arith.constant 2 : index
    %c0_70 = arith.constant 0 : index
    %86 = vector.load %arg10[%c2_68, %c2_69, %c0_70] : memref<18x18x64xbf16, #tpu.memory_space<vmem>>, vector<16x16x64xbf16>
    %87 = tpu.concatenate %84, %85, %86 in 2 : vector<16x16x64xbf16>, vector<16x16x64xbf16>, vector<16x16x64xbf16> -> vector<16x16x192xbf16>
    %88 = vector.shape_cast %87 : vector<16x16x192xbf16> to vector<256x192xbf16>
    %c2_71 = arith.constant 2 : index
    %c0_72 = arith.constant 0 : index
    %c0_73 = arith.constant 0 : index
    %89 = vector.load %arg5[%c2_71, %c0_72, %c0_73] : memref<3x192x64xbf16, #tpu.memory_space<vmem>>, vector<1x192x64xbf16>
    %90 = vector.shape_cast %89 : vector<1x192x64xbf16> to vector<192x64xbf16>
    %cst_74 = arith.constant dense<0.000000e+00> : vector<256x64xf32>
    %91 = tpu.matmul %88, %90, %cst_74 {dimension_numbers = #tpu.dot_dimension_numbers<[1], [0], [0], [1], [0, 0, 1, 1], [], []>} : vector<256x192xbf16>, vector<192x64xbf16>, vector<256x64xf32> -> vector<256x64xf32>
    %92 = arith.addf %83, %91 : vector<256x64xf32>
    %93 = vector.broadcast %55 : vector<1x64xf32> to vector<256x64xf32>
    %94 = arith.addf %92, %93 : vector<256x64xf32>
    %c0_75 = arith.constant 0 : index
    %c0_76 = arith.constant 0 : index
    %c0_77 = arith.constant 0 : index
    %c0_78 = arith.constant 0 : index
    %95 = vector.load %arg2[%c0_75, %c0_76, %c0_77, %c0_78] : memref<1x16x16x32xf32, #tpu.memory_space<vmem>>, vector<1x16x16x32xf32>
    %96 = vector.shape_cast %95 : vector<1x16x16x32xf32> to vector<16x16x32xf32>
    %97 = arith.truncf %96 : vector<16x16x32xf32> to vector<16x16x32xbf16>
    %98 = vector.shape_cast %97 : vector<16x16x32xbf16> to vector<256x32xbf16>
    %c0_79 = arith.constant 0 : index
    %c0_80 = arith.constant 0 : index
    %99 = vector.load %arg7[%c0_79, %c0_80] : memref<32x64xbf16, #tpu.memory_space<vmem>>, vector<32x64xbf16>
    %cst_81 = arith.constant dense<0.000000e+00> : vector<256x64xf32>
    %100 = tpu.matmul %98, %99, %cst_81 {dimension_numbers = #tpu.dot_dimension_numbers<[1], [0], [0], [1], [0, 0, 1, 1], [], []>} : vector<256x32xbf16>, vector<32x64xbf16>, vector<256x64xf32> -> vector<256x64xf32>
    %c0_82 = arith.constant 0 : index
    %c0_83 = arith.constant 0 : index
    %101 = vector.load %arg8[%c0_82, %c0_83] : memref<1x64xf32, #tpu.memory_space<vmem>>, vector<1x64xf32>
    %102 = vector.broadcast %101 : vector<1x64xf32> to vector<256x64xf32>
    %103 = arith.addf %100, %102 : vector<256x64xf32>
    %104 = arith.addf %94, %103 : vector<256x64xf32>
    %105 = vector.shape_cast %104 : vector<256x64xf32> to vector<1x16x16x64xf32>
    %c0_84 = arith.constant 0 : index
    %c0_85 = arith.constant 0 : index
    %c0_86 = arith.constant 0 : index
    %c0_87 = arith.constant 0 : index
    %106 = vector.load %arg9[%c0_84, %c0_85, %c0_86, %c0_87] : memref<1x16x16x64xf32, #tpu.memory_space<vmem>>, vector<1x16x16x64xf32>
    tpu.vector_store %arg9[%c0_84, %c0_85, %c0_86, %c0_87], %105 {strides = array<i32>} : memref<1x16x16x64xf32, #tpu.memory_space<vmem>>, vector<1x16x16x64xf32>,
    return
  }
  func.func @transform_0(%arg0: i32) -> (i32, i32, i32, i32) {
    %c0_i32 = arith.constant 0 : i32
    %c0_i32_0 = arith.constant 0 : i32
    %c0_i32_1 = arith.constant 0 : i32
    %c0_i32_2 = arith.constant 0 : i32
    return %arg0, %c0_i32, %c0_i32_0, %c0_i32_1 : i32, i32, i32, i32
  }
  func.func @transform_1(%arg0: i32) -> (i32, i32, i32, i32) {
    %c0_i32 = arith.constant 0 : i32
    %c0_i32_0 = arith.constant 0 : i32
    %c0_i32_1 = arith.constant 0 : i32
    %c0_i32_2 = arith.constant 0 : i32
    return %arg0, %c0_i32, %c0_i32_0, %c0_i32_1 : i32, i32, i32, i32
  }
  func.func @transform_2(%arg0: i32) -> (i32, i32) {
    %c0_i32 = arith.constant 0 : i32
    %c0_i32_0 = arith.constant 0 : i32
    %c0_i32_1 = arith.constant 0 : i32
    return %c0_i32, %c0_i32_0 : i32, i32
  }
  func.func @transform_3(%arg0: i32) -> (i32, i32) {
    %c0_i32 = arith.constant 0 : i32
    %c0_i32_0 = arith.constant 0 : i32
    %c0_i32_1 = arith.constant 0 : i32
    return %c0_i32, %c0_i32_0 : i32, i32
  }
  func.func @transform_4(%arg0: i32) -> (i32, i32, i32) {
    %c0_i32 = arith.constant 0 : i32
    %c0_i32_0 = arith.constant 0 : i32
    %c0_i32_1 = arith.constant 0 : i32
    %c0_i32_2 = arith.constant 0 : i32
    return %c0_i32, %c0_i32_0, %c0_i32_1 : i32, i32, i32
  }
  func.func @transform_5(%arg0: i32) -> (i32, i32) {
    %c0_i32 = arith.constant 0 : i32
    %c0_i32_0 = arith.constant 0 : i32
    %c0_i32_1 = arith.constant 0 : i32
    return %c0_i32, %c0_i32_0 : i32, i32
  }
  func.func @transform_6(%arg0: i32) -> (i32, i32) {
    %c0_i32 = arith.constant 0 : i32
    %c0_i32_0 = arith.constant 0 : i32
    %c0_i32_1 = arith.constant 0 : i32
    return %c0_i32, %c0_i32_0 : i32, i32
  }
  func.func @transform_7(%arg0: i32) -> (i32, i32) {
    %c0_i32 = arith.constant 0 : i32
    %c0_i32_0 = arith.constant 0 : i32
    %c0_i32_1 = arith.constant 0 : i32
    return %c0_i32, %c0_i32_0 : i32, i32
  }
  func.func @transform_8(%arg0: i32) -> (i32, i32, i32, i32) {
    %c0_i32 = arith.constant 0 : i32
    %c0_i32_0 = arith.constant 0 : i32
    %c0_i32_1 = arith.constant 0 : i32
    %c0_i32_2 = arith.constant 0 : i32
    return %arg0, %c0_i32, %c0_i32_0, %c0_i32_1 : i32, i32, i32, i32
  }
}

</mosaic_0001>

<llo_original>
// kernel: resnet_block_forward.2
$region0: #{resnet_block_forward.2}
  #allocation0 [shape = 'u32[]', space=smem, size = 0x4, offset = 0x4, fixed_abs, tag = 'smem constant byte address 0x4 - core index']
  #allocation1 [shape = 'u32[144,128]{1,0:T(1,128)}', space=vmem, size = 0x12000, scoped, tag = 'internal scratch']
  #allocation2 [shape = 'bf16[18,18,32]{2,1,0:T(8,128)(2,1)}', space=vmem, size = 0x1b000, scoped, tag = 'scratch operand']
  %s0 = inlined_call_operand.hbm [shape: f32[2,16,16,32], index: 0, kind: input, shape index: {}]
  %s1 = inlined_call_operand.vmem [shape: f32[1,32], index: 1, kind: input, shape index: {}]
  %s2 = inlined_call_operand.vmem [shape: f32[1,32], index: 2, kind: input, shape index: {}]
  %s3 = inlined_call_operand.vmem [shape: bf16[3,96,64], index: 3, kind: input, shape index: {}]
  %s4 = inlined_call_operand.vmem [shape: f32[1,64], index: 4, kind: input, shape index: {}]
  %s5 = inlined_call_operand.vmem [shape: bf16[2,16,16,64], index: 5, kind: output, shape index: {}]
  %s6 = sld [smem:[#allocation0]]
  $region57: #{resnet_block_forward.2} parent=0
    _
  %s8 = ssub.s32 1, %s6
  %s9 = scalar_select 0, %s8, %s6
  $region1: #{resnet_block_forward.2} parent=0
    #allocation3 [shape = 'u8[262144]{0}', space=vmem, size = 0x40000, scoped, tag = 'input window, operand 0']
    #allocation4 [shape = 's32[2]{0}', space=sflag, size = 0x8, scoped, tag = 'scoped memory for resnet_block_forward.2']
    %10 = vsyncpa [#allocation4], 0
    %s11 = scalar_lea.sflag [#allocation4], 1
    %12 = vsyncpa %s11, 0
    loop: start=0, step=1, limit=4
    $region2: #{resnet_block_forward.2} parent=1 // loop_pre_header
      _
    $region3: #{resnet_block_forward.2} parent=1 // loop_header
      %s14 = sphi 0, %s18
      %p15 = scmp.ge.s32.totalorder %s14, 4
      %s24 = sphi 0, %s26
      %s27 = sphi 0, %s24
      %s28 = sphi 0, %s27
      %s44 = sphi 0, %s28
      %s48 = sphi 0, %s48
      %s50 = sphi 0, %s48
      %s51 = sphi 0, %s50
      %s65 = sphi 0, %s51
      %s69 = sphi 0, %s69
      %s71 = sphi 0, %s69
      %s72 = sphi 0, %s71
      %s86 = sphi 0, %s72
      %s90 = sphi 0, %s90
      %s92 = sphi 0, %s90
      %s93 = sphi 0, %s92
      %s107 = sphi 0, %s93
      %s111 = sphi 0, %s111
      %s113 = sphi 0, %s111
      %s114 = sphi 0, %s113
      %s128 = sphi 0, %s114
      %s134 = sphi 0, %s136
      %s137 = sphi 0, %s134
      %s138 = sphi 0, %s137
      %s154 = sphi 0, %s138
    $region4: #{resnet_block_forward.2} parent=1 // loop_header_branch
      %17 = sbr.rel (%p15) target = $region8
    $region5: #{resnet_block_forward.2} parent=1 // loop_body
      %s19 = ssub.s32 %s14, 1
      %s20 = ssub.s32 %s14, 2
      %s21 = sadd.s32 %s14, 1
      %s22 = ssub.s32 %s14, %s21
      %p23 = scmp.eq.s32.totalorder %s22, 0
      %s25 = sadd.s32 %s24, 1
      %s26 = scalar_select %p23, %s24, %s25
      %p29 = pneg %p23
      %p30 = scmp.eq.s32.totalorder %s14, 1
      %p31 = por %p29, %p30
      %p32 = scmp.ne.s32.totalorder %s24, %s27
      %p33 = scmp.eq.s32.totalorder %s14, 0
      %p34 = por %p32, %p33
      %p35 = scmp.ne.s32.totalorder %s24, %s27
      %p36 = scmp.eq.s32.totalorder %s19, 1
      %p37 = por %p35, %p36
      %p38 = scmp.ne.s32.totalorder %s27, %s28
      %p39 = scmp.eq.s32.totalorder %s19, 0
      %p40 = por %p38, %p39
      %p41 = scmp.ne.s32.totalorder %s27, %s28
      %p42 = scmp.eq.s32.totalorder %s20, 1
      %p43 = por %p41, %p42
      %p45 = scmp.ne.s32.totalorder %s28, %s44
      %p46 = scmp.eq.s32.totalorder %s20, 0
      %p47 = por %p45, %p46
      %s49 = sadd.s32 %s48, 1
      %p52 = scmp.eq.s32.totalorder %s14, 1
      %p53 = scmp.ne.s32.totalorder %s48, %s50
      %p54 = scmp.eq.s32.totalorder %s14, 0
      %p55 = por %p53, %p54
      %p56 = scmp.ne.s32.totalorder %s48, %s50
      %p57 = scmp.eq.s32.totalorder %s19, 1
      %p58 = por %p56, %p57
      %p59 = scmp.ne.s32.totalorder %s50, %s51
      %p60 = scmp.eq.s32.totalorder %s19, 0
      %p61 = por %p59, %p60
      %p62 = scmp.ne.s32.totalorder %s50, %s51
      %p63 = scmp.eq.s32.totalorder %s20, 1
      %p64 = por %p62, %p63
      %p66 = scmp.ne.s32.totalorder %s51, %s65
      %p67 = scmp.eq.s32.totalorder %s20, 0
      %p68 = por %p66, %p67
      %s70 = sadd.s32 %s69, 1
      %p73 = scmp.eq.s32.totalorder %s14, 1
      %p74 = scmp.ne.s32.totalorder %s69, %s71
      %p75 = scmp.eq.s32.totalorder %s14, 0
      %p76 = por %p74, %p75
      %p77 = scmp.ne.s32.totalorder %s69, %s71
      %p78 = scmp.eq.s32.totalorder %s19, 1
      %p79 = por %p77, %p78
      %p80 = scmp.ne.s32.totalorder %s71, %s72
      %p81 = scmp.eq.s32.totalorder %s19, 0
      %p82 = por %p80, %p81
      %p83 = scmp.ne.s32.totalorder %s71, %s72
      %p84 = scmp.eq.s32.totalorder %s20, 1
      %p85 = por %p83, %p84
      %p87 = scmp.ne.s32.totalorder %s72, %s86
      %p88 = scmp.eq.s32.totalorder %s20, 0
      %p89 = por %p87, %p88
      %s91 = sadd.s32 %s90, 1
      %p94 = scmp.eq.s32.totalorder %s14, 1
      %p95 = scmp.ne.s32.totalorder %s90, %s92
      %p96 = scmp.eq.s32.totalorder %s14, 0
      %p97 = por %p95, %p96
      %p98 = scmp.ne.s32.totalorder %s90, %s92
      %p99 = scmp.eq.s32.totalorder %s19, 1
      %p100 = por %p98, %p99
      %p101 = scmp.ne.s32.totalorder %s92, %s93
      %p102 = scmp.eq.s32.totalorder %s19, 0
      %p103 = por %p101, %p102
      %p104 = scmp.ne.s32.totalorder %s92, %s93
      %p105 = scmp.eq.s32.totalorder %s20, 1
      %p106 = por %p104, %p105
      %p108 = scmp.ne.s32.totalorder %s93, %s107
      %p109 = scmp.eq.s32.totalorder %s20, 0
      %p110 = por %p108, %p109
      %s112 = sadd.s32 %s111, 1
      %p115 = scmp.eq.s32.totalorder %s14, 1
      %p116 = scmp.ne.s32.totalorder %s111, %s113
      %p117 = scmp.eq.s32.totalorder %s14, 0
      %p118 = por %p116, %p117
      %p119 = scmp.ne.s32.totalorder %s111, %s113
      %p120 = scmp.eq.s32.totalorder %s19, 1
      %p121 = por %p119, %p120
      %p122 = scmp.ne.s32.totalorder %s113, %s114
      %p123 = scmp.eq.s32.totalorder %s19, 0
      %p124 = por %p122, %p123
      %p125 = scmp.ne.s32.totalorder %s113, %s114
      %p126 = scmp.eq.s32.totalorder %s20, 1
      %p127 = por %p125, %p126
      %p129 = scmp.ne.s32.totalorder %s114, %s128
      %p130 = scmp.eq.s32.totalorder %s20, 0
      %p131 = por %p129, %p130
      %s132 = ssub.s32 %s14, %s21
      %p133 = scmp.eq.s32.totalorder %s132, 0
      %s135 = sadd.s32 %s134, 1
      %s136 = scalar_select %p133, %s134, %s135
      %p139 = pneg %p133
      %p140 = scmp.eq.s32.totalorder %s14, 1
      %p141 = por %p139, %p140
      %p142 = scmp.ne.s32.totalorder %s134, %s137
      %p143 = scmp.eq.s32.totalorder %s14, 0
      %p144 = por %p142, %p143
      %p145 = scmp.ne.s32.totalorder %s134, %s137
      %p146 = scmp.eq.s32.totalorder %s19, 1
      %p147 = por %p145, %p146
      %p148 = scmp.ne.s32.totalorder %s137, %s138
      %p149 = scmp.eq.s32.totalorder %s19, 0
      %p150 = por %p148, %p149
      %p151 = scmp.ne.s32.totalorder %s137, %s138
      %p152 = scmp.eq.s32.totalorder %s20, 1
      %p153 = por %p151, %p152
      %p155 = scmp.ne.s32.totalorder %s138, %s154
      %p156 = scmp.eq.s32.totalorder %s20, 0
      %p157 = por %p155, %p156
      %p158 = scmp.le.s32.totalorder 1, %s14
      %p159 = scmp.lt.s32.totalorder %s14, 3
      %p160 = pnand %p158, %p159
      %p161 = pneg %p160
      // Predicated region
      $region9: #{resnet_block_forward.2} parent=5 // pred_check
        _
      $region10: #{resnet_block_forward.2} parent=5 // pred_check_branch
        %163 = sbr.rel (%p160) target = $region12
      $region11: #{resnet_block_forward.2} parent=5 // pred_region
        %s164 = ssub.s32 %s14, 1
        // Predicated region
        $region13: #{resnet_block_forward.2} parent=11 // pred_check
          %p165 = pneg %p61
        $region14: #{resnet_block_forward.2} parent=11 // pred_check_branch
          %167 = sbr.rel (%p165) target = $region16
        $region15: #{resnet_block_forward.2} parent=11 // pred_region
          _
        $region16: #{resnet_block_forward.2} parent=11 // pred_fallthru
          _
        // Predicated region
        $region17: #{resnet_block_forward.2} parent=11 // pred_check
          %p168 = pneg %p82
        $region18: #{resnet_block_forward.2} parent=11 // pred_check_branch
          %170 = sbr.rel (%p168) target = $region20
        $region19: #{resnet_block_forward.2} parent=11 // pred_region
          _
        $region20: #{resnet_block_forward.2} parent=11 // pred_fallthru
          _
        // Predicated region
        $region21: #{resnet_block_forward.2} parent=11 // pred_check
          %p171 = pneg %p103
        $region22: #{resnet_block_forward.2} parent=11 // pred_check_branch
          %173 = sbr.rel (%p171) target = $region24
        $region23: #{resnet_block_forward.2} parent=11 // pred_region
          _
        $region24: #{resnet_block_forward.2} parent=11 // pred_fallthru
          _
        // Predicated region
        $region25: #{resnet_block_forward.2} parent=11 // pred_check
          %p174 = pneg %p124
        $region26: #{resnet_block_forward.2} parent=11 // pred_check_branch
          %176 = sbr.rel (%p174) target = $region28
        $region27: #{resnet_block_forward.2} parent=11 // pred_region
          _
        $region28: #{resnet_block_forward.2} parent=11 // pred_fallthru
          _
      $region12: #{resnet_block_forward.2} parent=5 // pred_fallthru
        _
      %p177 = scmp.lt.s32.totalorder %s14, 2
      // Predicated region
      $region29: #{resnet_block_forward.2} parent=5 // pred_check
        %p178 = pneg %p177
      $region30: #{resnet_block_forward.2} parent=5 // pred_check_branch
        %180 = sbr.rel (%p178) target = $region32
      $region31: #{resnet_block_forward.2} parent=5 // pred_region
        // Predicated region
        $region33: #{resnet_block_forward.2} parent=31 // pred_check
          %p181 = pneg %p34
        $region34: #{resnet_block_forward.2} parent=31 // pred_check_branch
          %183 = sbr.rel (%p181) target = $region36
        $region35: #{resnet_block_forward.2} parent=31 // pred_region
          %s184 = sand.u32 %s24, 1
          %s185 = scalar_lea.sflag [#allocation4], %s184
          %s186 = sand.u32 %s24, 1
          %s187 = smul.addr %s186, 256
          %s188 = scalar_lea.vmem [#allocation3], %s187
          %s190 = ssub.s32 4096, 4096
          %191 = vsyncadd %s185, %s190
          %s192 = smul.addr %s14, 32
          %s193 = smul.addr %s192, 128
          %s194 = scalar_lea.hbm %s0, %s193
          %s195 = sshll.u32 %s188, 4
          %s196 = int_to_ptr.vmem [resolvable:$true] %s195
          %201 = dma.hbm_to_vmem [thread:$0]  %s194, 4096, %s196, %s185, 128, 128, 8
        $region36: #{resnet_block_forward.2} parent=31 // pred_fallthru
          _
      $region32: #{resnet_block_forward.2} parent=5 // pred_fallthru
        _
      %p202 = scmp.le.s32.totalorder 1, %s14
      %p203 = scmp.lt.s32.totalorder %s14, 3
      %p204 = pnand %p202, %p203
      %p205 = pneg %p204
      // Predicated region
      $region37: #{resnet_block_forward.2} parent=5 // pred_check
        _
      $region38: #{resnet_block_forward.2} parent=5 // pred_check_branch
        %207 = sbr.rel (%p204) target = $region40
      $region39: #{resnet_block_forward.2} parent=5 // pred_region
        %s208 = ssub.s32 %s14, 1
        %s209 = sand.u32 %s27, 1
        %s210 = scalar_lea.sflag [#allocation4], %s209
        %s211 = sand.u32 %s27, 1
        %s212 = smul.addr %s211, 256
        %s213 = scalar_lea.vmem [#allocation3], %s212
        // Predicated region
        $region41: #{resnet_block_forward.2} parent=39 // pred_check
          %p214 = pneg %p40
        $region42: #{resnet_block_forward.2} parent=39 // pred_check_branch
          %216 = sbr.rel (%p214) target = $region44
        $region43: #{resnet_block_forward.2} parent=39 // pred_region
          %217 = dma.done %s210, 4096
        $region44: #{resnet_block_forward.2} parent=39 // pred_fallthru
          _
        %s218 = sand.u32 %s27, 1
        %s219 = scalar_lea.sflag [#allocation4], %s218
        %s220 = sand.u32 %s27, 1
        %s221 = smul.addr %s220, 256
        %s222 = scalar_lea.vmem [#allocation3], %s221
        %p223 = pneg %p40
        %p224 = pneg %p37
        %p225 = pneg %p61
        %p226 = pneg %p58
        %p227 = pneg %p82
        %p228 = pneg %p79
        %p229 = pneg %p103
        %p230 = pneg %p100
        %p231 = pneg %p124
        %p232 = pneg %p121
        %p233 = pneg %p150
        %p234 = pneg %p147
        %p235 = scmp.lt.s32.totalorder %s19, 1
        %s236 = scalar_select %p235, %s19, 1
        %s237 = smul.addr %s236, 32
        %s238 = smul.addr %s237, 4
        %s239 = scalar_lea.vmem %s5, %s238
        %p240 = scmp.lt.s32.totalorder %s19, 1
        %s241 = scalar_select %p240, %s19, 1
        %s242 = smul.addr %s241, 32
        %s243 = smul.addr %s242, 4
        %s244 = scalar_lea.vmem %s5, %s243
        %v246 = vld [vmem:[%s213] sm:$0xff]
        %v247 = vld [vmem:[%s213 + $0x8] sm:$0xff]
        %v248 = vld [vmem:[%s213 + $0x10] sm:$0xff]
        %v249 = vld [vmem:[%s213 + $0x18] sm:$0xff]
        %v250 = vld [vmem:[%s213 + $0x20] sm:$0xff]
        %v251 = vld [vmem:[%s213 + $0x28] sm:$0xff]
        %v252 = vld [vmem:[%s213 + $0x30] sm:$0xff]
        %v253 = vld [vmem:[%s213 + $0x38] sm:$0xff]
        %v254 = vld [vmem:[%s213 + $0x40] sm:$0xff]
        %v255 = vld [vmem:[%s213 + $0x48] sm:$0xff]
        %v256 = vld [vmem:[%s213 + $0x50] sm:$0xff]
        %v257 = vld [vmem:[%s213 + $0x58] sm:$0xff]
        %v258 = vld [vmem:[%s213 + $0x60] sm:$0xff]
        %v259 = vld [vmem:[%s213 + $0x68] sm:$0xff]
        %v260 = vld [vmem:[%s213 + $0x70] sm:$0xff]
        %v261 = vld [vmem:[%s213 + $0x78] sm:$0xff]
        %v262 = vld [vmem:[%s213 + $0x80] sm:$0xff]
        %v263 = vld [vmem:[%s213 + $0x88] sm:$0xff]
        %v264 = vld [vmem:[%s213 + $0x90] sm:$0xff]
        %v265 = vld [vmem:[%s213 + $0x98] sm:$0xff]
        %v266 = vld [vmem:[%s213 + $0xa0] sm:$0xff]
        %v267 = vld [vmem:[%s213 + $0xa8] sm:$0xff]
        %v268 = vld [vmem:[%s213 + $0xb0] sm:$0xff]
        %v269 = vld [vmem:[%s213 + $0xb8] sm:$0xff]
        %v270 = vld [vmem:[%s213 + $0xc0] sm:$0xff]
        %v271 = vld [vmem:[%s213 + $0xc8] sm:$0xff]
        %v272 = vld [vmem:[%s213 + $0xd0] sm:$0xff]
        %v273 = vld [vmem:[%s213 + $0xd8] sm:$0xff]
        %v274 = vld [vmem:[%s213 + $0xe0] sm:$0xff]
        %v275 = vld [vmem:[%s213 + $0xe8] sm:$0xff]
        %v276 = vld [vmem:[%s213 + $0xf0] sm:$0xff]
        %v277 = vld [vmem:[%s213 + $0xf8] sm:$0xff]
        %v278 = vld [vmem:[%s1] sm:$0x1]
        %v279 = vld [vmem:[%s2] sm:$0x1]
        %vm280 = vcmask 261120
        %v281 = vsel %vm280, %v246, 0.0
        %v282 = vsel %vm280, %v247, 0.0
        %v283 = vadd.f32 %v281, %v282
        %v284 = vsel %vm280, %v248, 0.0
        %v285 = vadd.f32 %v283, %v284
        %v286 = vsel %vm280, %v249, 0.0
        %v287 = vadd.f32 %v285, %v286
        %v288 = vsel %vm280, %v250, 0.0
        %v289 = vadd.f32 %v287, %v288
        %v290 = vsel %vm280, %v251, 0.0
        %v291 = vadd.f32 %v289, %v290
        %v292 = vsel %vm280, %v252, 0.0
        %v293 = vadd.f32 %v291, %v292
        %v294 = vsel %vm280, %v253, 0.0
        %v295 = vadd.f32 %v293, %v294
        %v296 = vsel %vm280, %v254, 0.0
        %v297 = vadd.f32 %v295, %v296
        %v298 = vsel %vm280, %v255, 0.0
        %v299 = vadd.f32 %v297, %v298
        %v300 = vsel %vm280, %v256, 0.0
        %v301 = vadd.f32 %v299, %v300
        %v302 = vsel %vm280, %v257, 0.0
        %v303 = vadd.f32 %v301, %v302
        %v304 = vsel %vm280, %v258, 0.0
        %v305 = vadd.f32 %v303, %v304
        %v306 = vsel %vm280, %v259, 0.0
        %v307 = vadd.f32 %v305, %v306
        %v308 = vsel %vm280, %v260, 0.0
        %v309 = vadd.f32 %v307, %v308
        %v310 = vsel %vm280, %v261, 0.0
        %v311 = vadd.f32 %v309, %v310
        %v312 = vsel %vm280, %v262, 0.0
        %v313 = vadd.f32 %v311, %v312
        %v314 = vsel %vm280, %v263, 0.0
        %v315 = vadd.f32 %v313, %v314
        %v316 = vsel %vm280, %v264, 0.0
        %v317 = vadd.f32 %v315, %v316
        %v318 = vsel %vm280, %v265, 0.0
        %v319 = vadd.f32 %v317, %v318
        %v320 = vsel %vm280, %v266, 0.0
        %v321 = vadd.f32 %v319, %v320
        %v322 = vsel %vm280, %v267, 0.0
        %v323 = vadd.f32 %v321, %v322
        %v324 = vsel %vm280, %v268, 0.0
        %v325 = vadd.f32 %v323, %v324
        %v326 = vsel %vm280, %v269, 0.0
        %v327 = vadd.f32 %v325, %v326
        %v328 = vsel %vm280, %v270, 0.0
        %v329 = vadd.f32 %v327, %v328
        %v330 = vsel %vm280, %v271, 0.0
        %v331 = vadd.f32 %v329, %v330
        %v332 = vsel %vm280, %v272, 0.0
        %v333 = vadd.f32 %v331, %v332
        %v334 = vsel %vm280, %v273, 0.0
        %v335 = vadd.f32 %v333, %v334
        %v336 = vsel %vm280, %v274, 0.0
        %v337 = vadd.f32 %v335, %v336
        %v338 = vsel %vm280, %v275, 0.0
        %v339 = vadd.f32 %v337, %v338
        %v340 = vsel %vm280, %v276, 0.0
        %v341 = vadd.f32 %v339, %v340
        %v342 = vsel %vm280, %v277, 0.0
        %v343 = vadd.f32 %v341, %v342
        %v344 = vrot.slane %v343, 4
        %v345 = vadd.f32 %v343, %v344
        %v346 = vrot.slane %v345, 2
        %v347 = vadd.f32 %v345, %v346
        %v348 = vrot.slane %v347, 1
        %v349 = vadd.f32 %v347, %v348
        %v350 = vmul.f32 %v246, %v246
        %v351 = vmul.f32 %v247, %v247
        %v352 = vmul.f32 %v248, %v248
        %v353 = vmul.f32 %v249, %v249
        %v354 = vmul.f32 %v250, %v250
        %v355 = vmul.f32 %v251, %v251
        %v356 = vmul.f32 %v252, %v252
        %v357 = vmul.f32 %v253, %v253
        %v358 = vmul.f32 %v254, %v254
        %v359 = vmul.f32 %v255, %v255
        %v360 = vmul.f32 %v256, %v256
        %v361 = vmul.f32 %v257, %v257
        %v362 = vmul.f32 %v258, %v258
        %v363 = vmul.f32 %v259, %v259
        %v364 = vmul.f32 %v260, %v260
        %v365 = vmul.f32 %v261, %v261
        %v366 = vmul.f32 %v262, %v262
        %v367 = vmul.f32 %v263, %v263
        %v368 = vmul.f32 %v264, %v264
        %v369 = vmul.f32 %v265, %v265
        %v370 = vmul.f32 %v266, %v266
        %v371 = vmul.f32 %v267, %v267
        %v372 = vmul.f32 %v268, %v268
        %v373 = vmul.f32 %v269, %v269
        %v374 = vmul.f32 %v270, %v270
        %v375 = vmul.f32 %v271, %v271
        %v376 = vmul.f32 %v272, %v272
        %v377 = vmul.f32 %v273, %v273
        %v378 = vmul.f32 %v274, %v274
        %v379 = vmul.f32 %v275, %v275
        %v380 = vmul.f32 %v276, %v276
        %v381 = vmul.f32 %v277, %v277
        %v382 = vsel %vm280, %v350, 0.0
        %v383 = vsel %vm280, %v351, 0.0
        %v384 = vadd.f32 %v382, %v383
        %v385 = vsel %vm280, %v352, 0.0
        %v386 = vadd.f32 %v384, %v385
        %v387 = vsel %vm280, %v353, 0.0
        %v388 = vadd.f32 %v386, %v387
        %v389 = vsel %vm280, %v354, 0.0
        %v390 = vadd.f32 %v388, %v389
        %v391 = vsel %vm280, %v355, 0.0
        %v392 = vadd.f32 %v390, %v391
        %v393 = vsel %vm280, %v356, 0.0
        %v394 = vadd.f32 %v392, %v393
        %v395 = vsel %vm280, %v357, 0.0
        %v396 = vadd.f32 %v394, %v395
        %v397 = vsel %vm280, %v358, 0.0
        %v398 = vadd.f32 %v396, %v397
        %v399 = vsel %vm280, %v359, 0.0
        %v400 = vadd.f32 %v398, %v399
        %v401 = vsel %vm280, %v360, 0.0
        %v402 = vadd.f32 %v400, %v401
        %v403 = vsel %vm280, %v361, 0.0
        %v404 = vadd.f32 %v402, %v403
        %v405 = vsel %vm280, %v362, 0.0
        %v406 = vadd.f32 %v404, %v405
        %v407 = vsel %vm280, %v363, 0.0
        %v408 = vadd.f32 %v406, %v407
        %v409 = vsel %vm280, %v364, 0.0
        %v410 = vadd.f32 %v408, %v409
        %v411 = vsel %vm280, %v365, 0.0
        %v412 = vadd.f32 %v410, %v411
        %v413 = vsel %vm280, %v366, 0.0
        %v414 = vadd.f32 %v412, %v413
        %v415 = vsel %vm280, %v367, 0.0
        %v416 = vadd.f32 %v414, %v415
        %v417 = vsel %vm280, %v368, 0.0
        %v418 = vadd.f32 %v416, %v417
        %v419 = vsel %vm280, %v369, 0.0
        %v420 = vadd.f32 %v418, %v419
        %v421 = vsel %vm280, %v370, 0.0
        %v422 = vadd.f32 %v420, %v421
        %v423 = vsel %vm280, %v371, 0.0
        %v424 = vadd.f32 %v422, %v423
        %v425 = vsel %vm280, %v372, 0.0
        %v426 = vadd.f32 %v424, %v425
        %v427 = vsel %vm280, %v373, 0.0
        %v428 = vadd.f32 %v426, %v427
        %v429 = vsel %vm280, %v374, 0.0
        %v430 = vadd.f32 %v428, %v429
        %v431 = vsel %vm280, %v375, 0.0
        %v432 = vadd.f32 %v430, %v431
        %v433 = vsel %vm280, %v376, 0.0
        %v434 = vadd.f32 %v432, %v433
        %v435 = vsel %vm280, %v377, 0.0
        %v436 = vadd.f32 %v434, %v435
        %v437 = vsel %vm280, %v378, 0.0
        %v438 = vadd.f32 %v436, %v437
        %v439 = vsel %vm280, %v379, 0.0
        %v440 = vadd.f32 %v438, %v439
        %v441 = vsel %vm280, %v380, 0.0
        %v442 = vadd.f32 %v440, %v441
        %v443 = vsel %vm280, %v381, 0.0
        %v444 = vadd.f32 %v442, %v443
        %v445 = vrot.slane %v444, 4
        %v446 = vadd.f32 %v444, %v445
        %v447 = vrot.slane %v446, 2
        %v448 = vadd.f32 %v446, %v447
        %v449 = vrot.slane %v448, 1
        %v450 = vadd.f32 %v448, %v449
        %vm451 = vcmask 1040384
        %v452 = vsel %vm451, %v349, %v450
        %v453 = vlaneseq
        %v454 = vshrl.u32 %v453, 7
        %v455 = vadd.s32 %v454, 8
        %v456 = vadd.s32 %v454, 16
        %v457 = vadd.s32 %v454, 24
        %v458 = vcvt.s32.f32 %v454
        %v459 = vcvt.s32.f32 %v455
        %v460 = vcvt.s32.f32 %v456
        %v461 = vcvt.s32.f32 %v457
        %v462 = vlaneseq
        %v463 = vand.u32 %v462, 127
        %v464 = vcvt.s32.f32 %v463
        %v465 = vadd.f32 %v458, 0.5
        %v466 = vadd.f32 %v459, 0.5
        %v467 = vadd.f32 %v460, 0.5
        %v468 = vadd.f32 %v461, 0.5
        %v469 = vmul.f32 %v465, 0.25
        %v470 = vmul.f32 %v466, 0.25
        %v471 = vmul.f32 %v467, 0.25
        %v472 = vmul.f32 %v468, 0.25
        %v473 = vfloor.f32 %v469
        %v474 = vfloor.f32 %v470
        %v475 = vfloor.f32 %v471
        %v476 = vfloor.f32 %v472
        %v477 = vadd.f32 %v464, 0.5
        %v478 = vmul.f32 %v477, 0.25
        %v479 = vfloor.f32 %v478
        %vm480 = vcmp.eq.f32.partialorder %v473, %v479
        %vm481 = vcmp.eq.f32.partialorder %v474, %v479
        %vm482 = vcmp.eq.f32.partialorder %v475, %v479
        %vm483 = vcmp.eq.f32.partialorder %v476, %v479
        %v484 = vsel %vm480, 1, 0
        %v485 = vsel %vm481, 1, 0
        %v486 = vsel %vm482, 1, 0
        %v487 = vsel %vm483, 1, 0
        %v488 = vcvt.s32.f32 %v484
        %v489 = vcvt.s32.f32 %v485
        %v490 = vcvt.s32.f32 %v486
        %v491 = vcvt.s32.f32 %v487
        %v492 = vmul.f32 %v488, 0.0009765625
        %v493 = vmul.f32 %v489, 0.0009765625
        %v494 = vmul.f32 %v490, 0.0009765625
        %v495 = vmul.f32 %v491, 0.0009765625
        %v497 = vsel %vm280, %v452, 0
        %499 = vmatprep.subr.mxu0 0.0
        %500 = vmatpush1.msra.mxu0 0.0
        %501 = vmatprep.subr.mxu0 0.0
        %502 = vmatpush1.msra.mxu0 0.0
        %503 = vmatprep.subr.mxu0 0.0
        %504 = vmatpush1.msra.mxu0 0.0
        %505 = vmatprep.subr.mxu0 0.0
        %506 = vmatpush1.msra.mxu0 0.0
        %507 = vmatprep.subr.mxu0 0.0
        %508 = vmatpush1.msra.mxu0 0.0
        %509 = vmatprep.subr.mxu0 0.0
        %510 = vmatpush1.msra.mxu0 0.0
        %511 = vmatprep.subr.mxu0 0.0
        %512 = vmatpush1.msra.mxu0 0.0
        %513 = vmatprep.subr.mxu0 0.0
        %514 = vmatpush1.msra.mxu0 0.0
        %515 = vmatprep.subr.mxu0 0.0
        %516 = vmatpush1.msra.mxu0 0.0
        %517 = vmatprep.subr.mxu0 0.0
        %518 = vmatpush1.msra.mxu0 0.0
        %519 = vmatprep.subr.mxu0 0.0
        %520 = vmatpush1.msra.mxu0 0.0
        %521 = vmatprep.subr.mxu0 0.0
        %522 = vmatpush1.msra.mxu0 0.0
        %523 = vmatprep.subr.mxu0 0.0
        %524 = vmatpush1.msra.mxu0 %v495
        %525 = vmatprep.subr.mxu0 0.0
        %526 = vmatpush1.msra.mxu0 %v494
        %527 = vmatprep.subr.mxu0 0.0
        %528 = vmatpush1.msra.mxu0 %v493
        %529 = vmatprep.subr.mxu0 0.0
        %530 = vmatpush1.msra.mxu0 %v492
        %531 = vmatprep.subr.mxu0 0.0
        %532 = vmatpush2.msra.mxu0 0.0
        %533 = vmatprep.subr.mxu0 0.0
        %534 = vmatpush2.msra.mxu0 0.0
        %535 = vmatprep.subr.mxu0 0.0
        %536 = vmatpush2.msra.mxu0 0.0
        %537 = vmatprep.subr.mxu0 0.0
        %538 = vmatpush2.msra.mxu0 0.0
        %539 = vmatprep.subr.mxu0 0.0
        %540 = vmatpush2.msra.mxu0 0.0
        %541 = vmatprep.subr.mxu0 0.0
        %542 = vmatpush2.msra.mxu0 0.0
        %543 = vmatprep.subr.mxu0 0.0
        %544 = vmatpush2.msra.mxu0 0.0
        %545 = vmatprep.subr.mxu0 0.0
        %546 = vmatpush2.msra.mxu0 0.0
        %547 = vmatprep.subr.mxu0 0.0
        %548 = vmatpush2.msra.mxu0 0.0
        %549 = vmatprep.subr.mxu0 0.0
        %550 = vmatpush2.msra.mxu0 0.0
        %551 = vmatprep.subr.mxu0 0.0
        %552 = vmatpush2.msra.mxu0 0.0
        %553 = vmatprep.subr.mxu0 0.0
        %554 = vmatpush2.msra.mxu0 0.0
        %555 = vmatprep.subr.mxu0 0.0
        %556 = vmatpush2.msra.mxu0 0.0
        %557 = vmatprep.subr.mxu0 0.0
        %558 = vmatpush2.msra.mxu0 0.0
        %559 = vmatprep.subr.mxu0 0.0
        %560 = vmatpush2.msra.mxu0 0.0
        %561 = vmatprep.subr.mxu0 0.0
        %562 = vmatpush2.msra.mxu0 0.0
        %563 = vmatprep.mubr.f32.mxu0 0.0
        %564 = vmatmul.mubr.f32.gmra.mxu0 %v497
        %v565 = vpop.f32.mrf.mxu0
        %v566 = vadd.f32 0.0, %v565
        %v567 = vpop.f32.mrf.mxu0
        %568 = vdwg.mxu0
        %v569 = vmul.f32 %v566, %v566
        %v571 = vrot.slane %v569, 7
        %v573 = vsub.f32 %v566, %v571
        %v574 = vadd.f32 %v573, 1e-06
        %v575 = vrsqrt.pop %v574
        %v576 = vlaneseq
        %v577 = vshrl.u32 %v576, 7
        %v578 = vsub.s32 0, %v577
        %v579 = vrot.slane %v566, %v578
        %v580 = vsub.f32 %v246, %v579
        %v581 = vsub.f32 %v247, %v579
        %v582 = vsub.f32 %v248, %v579
        %v583 = vsub.f32 %v249, %v579
        %v584 = vsub.f32 %v250, %v579
        %v585 = vsub.f32 %v251, %v579
        %v586 = vsub.f32 %v252, %v579
        %v587 = vsub.f32 %v253, %v579
        %v588 = vsub.f32 %v254, %v579
        %v589 = vsub.f32 %v255, %v579
        %v590 = vsub.f32 %v256, %v579
        %v591 = vsub.f32 %v257, %v579
        %v592 = vsub.f32 %v258, %v579
        %v593 = vsub.f32 %v259, %v579
        %v594 = vsub.f32 %v260, %v579
        %v595 = vsub.f32 %v261, %v579
        %v596 = vsub.f32 %v262, %v579
        %v597 = vsub.f32 %v263, %v579
        %v598 = vsub.f32 %v264, %v579
        %v599 = vsub.f32 %v265, %v579
        %v600 = vsub.f32 %v266, %v579
        %v601 = vsub.f32 %v267, %v579
        %v602 = vsub.f32 %v268, %v579
        %v603 = vsub.f32 %v269, %v579
        %v604 = vsub.f32 %v270, %v579
        %v605 = vsub.f32 %v271, %v579
        %v606 = vsub.f32 %v272, %v579
        %v607 = vsub.f32 %v273, %v579
        %v608 = vsub.f32 %v274, %v579
        %v609 = vsub.f32 %v275, %v579
        %v610 = vsub.f32 %v276, %v579
        %v611 = vsub.f32 %v277, %v579
        %v613 = vlaneseq
        %v614 = vshrl.u32 %v613, 7
        %v615 = vsub.s32 0, %v614
        %v616 = vrot.slane %v278, %v615
        %v618 = vmul.f32 %v575, %v616
        %v619 = vlaneseq
        %v620 = vshrl.u32 %v619, 7
        %v621 = vsub.s32 1, %v620
        %v622 = vrot.slane %v618, %v621
        %v623 = vmul.f32 %v580, %v622
        %v624 = vmul.f32 %v581, %v622
        %v625 = vmul.f32 %v582, %v622
        %v626 = vmul.f32 %v583, %v622
        %v627 = vmul.f32 %v584, %v622
        %v628 = vmul.f32 %v585, %v622
        %v629 = vmul.f32 %v586, %v622
        %v630 = vmul.f32 %v587, %v622
        %v631 = vmul.f32 %v588, %v622
        %v632 = vmul.f32 %v589, %v622
        %v633 = vmul.f32 %v590, %v622
        %v634 = vmul.f32 %v591, %v622
        %v635 = vmul.f32 %v592, %v622
        %v636 = vmul.f32 %v593, %v622
        %v637 = vmul.f32 %v594, %v622
        %v638 = vmul.f32 %v595, %v622
        %v639 = vmul.f32 %v596, %v622
        %v640 = vmul.f32 %v597, %v622
        %v641 = vmul.f32 %v598, %v622
        %v642 = vmul.f32 %v599, %v622
        %v643 = vmul.f32 %v600, %v622
        %v644 = vmul.f32 %v601, %v622
        %v645 = vmul.f32 %v602, %v622
        %v646 = vmul.f32 %v603, %v622
        %v647 = vmul.f32 %v604, %v622
        %v648 = vmul.f32 %v605, %v622
        %v649 = vmul.f32 %v606, %v622
        %v650 = vmul.f32 %v607, %v622
        %v651 = vmul.f32 %v608, %v622
        %v652 = vmul.f32 %v609, %v622
        %v653 = vmul.f32 %v610, %v622
        %v654 = vmul.f32 %v611, %v622
        %v656 = vlaneseq
        %v657 = vshrl.u32 %v656, 7
        %v658 = vsub.s32 0, %v657
        %v659 = vrot.slane %v279, %v658
        %v661 = vadd.f32 %v623, %v659
        %v662 = vadd.f32 %v624, %v659
        %v663 = vadd.f32 %v625, %v659
        %v664 = vadd.f32 %v626, %v659
        %v665 = vadd.f32 %v627, %v659
        %v666 = vadd.f32 %v628, %v659
        %v667 = vadd.f32 %v629, %v659
        %v668 = vadd.f32 %v630, %v659
        %v669 = vadd.f32 %v631, %v659
        %v670 = vadd.f32 %v632, %v659
        %v671 = vadd.f32 %v633, %v659
        %v672 = vadd.f32 %v634, %v659
        %v673 = vadd.f32 %v635, %v659
        %v674 = vadd.f32 %v636, %v659
        %v675 = vadd.f32 %v637, %v659
        %v676 = vadd.f32 %v638, %v659
        %v677 = vadd.f32 %v639, %v659
        %v678 = vadd.f32 %v640, %v659
        %v679 = vadd.f32 %v641, %v659
        %v680 = vadd.f32 %v642, %v659
        %v681 = vadd.f32 %v643, %v659
        %v682 = vadd.f32 %v644, %v659
        %v683 = vadd.f32 %v645, %v659
        %v684 = vadd.f32 %v646, %v659
        %v685 = vadd.f32 %v647, %v659
        %v686 = vadd.f32 %v648, %v659
        %v687 = vadd.f32 %v649, %v659
        %v688 = vadd.f32 %v650, %v659
        %v689 = vadd.f32 %v651, %v659
        %v690 = vadd.f32 %v652, %v659
        %v691 = vadd.f32 %v653, %v659
        %v692 = vadd.f32 %v654, %v659
        %v693 = vsub.f32 0.0, %v661
        %v694 = vsub.f32 0.0, %v662
        %v695 = vsub.f32 0.0, %v663
        %v696 = vsub.f32 0.0, %v664
        %v697 = vsub.f32 0.0, %v665
        %v698 = vsub.f32 0.0, %v666
        %v699 = vsub.f32 0.0, %v667
        %v700 = vsub.f32 0.0, %v668
        %v701 = vsub.f32 0.0, %v669
        %v702 = vsub.f32 0.0, %v670
        %v703 = vsub.f32 0.0, %v671
        %v704 = vsub.f32 0.0, %v672
        %v705 = vsub.f32 0.0, %v673
        %v706 = vsub.f32 0.0, %v674
        %v707 = vsub.f32 0.0, %v675
        %v708 = vsub.f32 0.0, %v676
        %v709 = vsub.f32 0.0, %v677
        %v710 = vsub.f32 0.0, %v678
        %v711 = vsub.f32 0.0, %v679
        %v712 = vsub.f32 0.0, %v680
        %v713 = vsub.f32 0.0, %v681
        %v714 = vsub.f32 0.0, %v682
        %v715 = vsub.f32 0.0, %v683
        %v716 = vsub.f32 0.0, %v684
        %v717 = vsub.f32 0.0, %v685
        %v718 = vsub.f32 0.0, %v686
        %v719 = vsub.f32 0.0, %v687
        %v720 = vsub.f32 0.0, %v688
        %v721 = vsub.f32 0.0, %v689
        %v722 = vsub.f32 0.0, %v690
        %v723 = vsub.f32 0.0, %v691
        %v724 = vsub.f32 0.0, %v692
        %v725 = vmul.f32 %v693, 1.442695
        %v726 = vpow.pop %v725
        %v727 = vmul.f32 %v694, 1.442695
        %v728 = vpow.pop %v727
        %v729 = vmul.f32 %v695, 1.442695
        %v730 = vpow.pop %v729
        %v731 = vmul.f32 %v696, 1.442695
        %v732 = vpow.pop %v731
        %v733 = vmul.f32 %v697, 1.442695
        %v734 = vpow.pop %v733
        %v735 = vmul.f32 %v698, 1.442695
        %v736 = vpow.pop %v735
        %v737 = vmul.f32 %v699, 1.442695
        %v738 = vpow.pop %v737
        %v739 = vmul.f32 %v700, 1.442695
        %v740 = vpow.pop %v739
        %v741 = vmul.f32 %v701, 1.442695
        %v742 = vpow.pop %v741
        %v743 = vmul.f32 %v702, 1.442695
        %v744 = vpow.pop %v743
        %v745 = vmul.f32 %v703, 1.442695
        %v746 = vpow.pop %v745
        %v747 = vmul.f32 %v704, 1.442695
        %v748 = vpow.pop %v747
        %v749 = vmul.f32 %v705, 1.442695
        %v750 = vpow.pop %v749
        %v751 = vmul.f32 %v706, 1.442695
        %v752 = vpow.pop %v751
        %v753 = vmul.f32 %v707, 1.442695
        %v754 = vpow.pop %v753
        %v755 = vmul.f32 %v708, 1.442695
        %v756 = vpow.pop %v755
        %v757 = vmul.f32 %v709, 1.442695
        %v758 = vpow.pop %v757
        %v759 = vmul.f32 %v710, 1.442695
        %v760 = vpow.pop %v759
        %v761 = vmul.f32 %v711, 1.442695
        %v762 = vpow.pop %v761
        %v763 = vmul.f32 %v712, 1.442695
        %v764 = vpow.pop %v763
        %v765 = vmul.f32 %v713, 1.442695
        %v766 = vpow.pop %v765
        %v767 = vmul.f32 %v714, 1.442695
        %v768 = vpow.pop %v767
        %v769 = vmul.f32 %v715, 1.442695
        %v770 = vpow.pop %v769
        %v771 = vmul.f32 %v716, 1.442695
        %v772 = vpow.pop %v771
        %v773 = vmul.f32 %v717, 1.442695
        %v774 = vpow.pop %v773
        %v775 = vmul.f32 %v718, 1.442695
        %v776 = vpow.pop %v775
        %v777 = vmul.f32 %v719, 1.442695
        %v778 = vpow.pop %v777
        %v779 = vmul.f32 %v720, 1.442695
        %v780 = vpow.pop %v779
        %v781 = vmul.f32 %v721, 1.442695
        %v782 = vpow.pop %v781
        %v783 = vmul.f32 %v722, 1.442695
        %v784 = vpow.pop %v783
        %v785 = vmul.f32 %v723, 1.442695
        %v786 = vpow.pop %v785
        %v787 = vmul.f32 %v724, 1.442695
        %v788 = vpow.pop %v787
        %v789 = vadd.f32 %v726, 1.0
        %v790 = vadd.f32 %v728, 1.0
        %v791 = vadd.f32 %v730, 1.0
        %v792 = vadd.f32 %v732, 1.0
        %v793 = vadd.f32 %v734, 1.0
        %v794 = vadd.f32 %v736, 1.0
        %v795 = vadd.f32 %v738, 1.0
        %v796 = vadd.f32 %v740, 1.0
        %v797 = vadd.f32 %v742, 1.0
        %v798 = vadd.f32 %v744, 1.0
        %v799 = vadd.f32 %v746, 1.0
        %v800 = vadd.f32 %v748, 1.0
        %v801 = vadd.f32 %v750, 1.0
        %v802 = vadd.f32 %v752, 1.0
        %v803 = vadd.f32 %v754, 1.0
        %v804 = vadd.f32 %v756, 1.0
        %v805 = vadd.f32 %v758, 1.0
        %v806 = vadd.f32 %v760, 1.0
        %v807 = vadd.f32 %v762, 1.0
        %v808 = vadd.f32 %v764, 1.0
        %v809 = vadd.f32 %v766, 1.0
        %v810 = vadd.f32 %v768, 1.0
        %v811 = vadd.f32 %v770, 1.0
        %v812 = vadd.f32 %v772, 1.0
        %v813 = vadd.f32 %v774, 1.0
        %v814 = vadd.f32 %v776, 1.0
        %v815 = vadd.f32 %v778, 1.0
        %v816 = vadd.f32 %v780, 1.0
        %v817 = vadd.f32 %v782, 1.0
        %v818 = vadd.f32 %v784, 1.0
        %v819 = vadd.f32 %v786, 1.0
        %v820 = vadd.f32 %v788, 1.0
        %v821 = vrcp.pop %v789
        %v822 = vrcp.pop %v790
        %v823 = vrcp.pop %v791
        %v824 = vrcp.pop %v792
        %v825 = vrcp.pop %v793
        %v826 = vrcp.pop %v794
        %v827 = vrcp.pop %v795
        %v828 = vrcp.pop %v796
        %v829 = vrcp.pop %v797
        %v830 = vrcp.pop %v798
        %v831 = vrcp.pop %v799
        %v832 = vrcp.pop %v800
        %v833 = vrcp.pop %v801
        %v834 = vrcp.pop %v802
        %v835 = vrcp.pop %v803
        %v836 = vrcp.pop %v804
        %v837 = vrcp.pop %v805
        %v838 = vrcp.pop %v806
        %v839 = vrcp.pop %v807
        %v840 = vrcp.pop %v808
        %v841 = vrcp.pop %v809
        %v842 = vrcp.pop %v810
        %v843 = vrcp.pop %v811
        %v844 = vrcp.pop %v812
        %v845 = vrcp.pop %v813
        %v846 = vrcp.pop %v814
        %v847 = vrcp.pop %v815
        %v848 = vrcp.pop %v816
        %v849 = vrcp.pop %v817
        %v850 = vrcp.pop %v818
        %v851 = vrcp.pop %v819
        %v852 = vrcp.pop %v820
        %v853 = vmul.f32 %v661, %v821
        %v854 = vmul.f32 %v662, %v822
        %v855 = vmul.f32 %v663, %v823
        %v856 = vmul.f32 %v664, %v824
        %v857 = vmul.f32 %v665, %v825
        %v858 = vmul.f32 %v666, %v826
        %v859 = vmul.f32 %v667, %v827
        %v860 = vmul.f32 %v668, %v828
        %v861 = vmul.f32 %v669, %v829
        %v862 = vmul.f32 %v670, %v830
        %v863 = vmul.f32 %v671, %v831
        %v864 = vmul.f32 %v672, %v832
        %v865 = vmul.f32 %v673, %v833
        %v866 = vmul.f32 %v674, %v834
        %v867 = vmul.f32 %v675, %v835
        %v868 = vmul.f32 %v676, %v836
        %v869 = vmul.f32 %v677, %v837
        %v870 = vmul.f32 %v678, %v838
        %v871 = vmul.f32 %v679, %v839
        %v872 = vmul.f32 %v680, %v840
        %v873 = vmul.f32 %v681, %v841
        %v874 = vmul.f32 %v682, %v842
        %v875 = vmul.f32 %v683, %v843
        %v876 = vmul.f32 %v684, %v844
        %v877 = vmul.f32 %v685, %v845
        %v878 = vmul.f32 %v686, %v846
        %v879 = vmul.f32 %v687, %v847
        %v880 = vmul.f32 %v688, %v848
        %v881 = vmul.f32 %v689, %v849
        %v882 = vmul.f32 %v690, %v850
        %v883 = vmul.f32 %v691, %v851
        %v884 = vmul.f32 %v692, %v852
        %v885 = vpack.c.bf16 %v854, %v853
        %v886 = vpack.c.bf16 %v856, %v855
        %v887 = vpack.c.bf16 %v858, %v857
        %v888 = vpack.c.bf16 %v860, %v859
        %v889 = vpack.c.bf16 %v862, %v861
        %v890 = vpack.c.bf16 %v864, %v863
        %v891 = vpack.c.bf16 %v866, %v865
        %v892 = vpack.c.bf16 %v868, %v867
        %v893 = vpack.c.bf16 %v870, %v869
        %v894 = vpack.c.bf16 %v872, %v871
        %v895 = vpack.c.bf16 %v874, %v873
        %v896 = vpack.c.bf16 %v876, %v875
        %v897 = vpack.c.bf16 %v878, %v877
        %v898 = vpack.c.bf16 %v880, %v879
        %v899 = vpack.c.bf16 %v882, %v881
        %v900 = vpack.c.bf16 %v884, %v883
        %v901 = vld [vmem:[%s4] sm:$0x1]
        %vm902 = vcmask 257024
        %903 = vst.msk [vmem:[#allocation2] sm:$0xf] %vm902, 0
        %904 = vst.msk [vmem:[#allocation2 + $0x4] sm:$0xf] %vm902, 0
        %vm905 = vcmask 253952
        %906 = vst.msk [vmem:[#allocation2 + $0x8] sm:$0x1] %vm905, 0
        %s907 = scalar_lea.vmem [#allocation2], 204
        %908 = vst.msk [vmem:[%s907] sm:$0xf] %vm902, 0
        %909 = vst.msk [vmem:[%s907 + $0x4] sm:$0xf] %vm902, 0
        %910 = vst.msk [vmem:[%s907 + $0x8] sm:$0x1] %vm905, 0
        %vm911 = vcmask 253952
        %vm912 = vsmask.f32 256
        %vm913 = vmand %vm911, %vm912
        %v914 = vld [vmem:[#allocation2] sm:$0x1]
        %v915 = vsel %vm913, 0, %v914
        %916 = vst [vmem:[#allocation2] sm:$0x1] %v915
        %v917 = vld [vmem:[#allocation2 + $0xc] sm:$0x1]
        %v918 = vsel %vm913, 0, %v917
        %919 = vst [vmem:[#allocation2 + $0xc] sm:$0x1] %v918
        %v920 = vld [vmem:[#allocation2 + $0x18] sm:$0x1]
        %v921 = vsel %vm913, 0, %v920
        %922 = vst [vmem:[#allocation2 + $0x18] sm:$0x1] %v921
        %v923 = vld [vmem:[#allocation2 + $0x24] sm:$0x1]
        %v924 = vsel %vm913, 0, %v923
        %925 = vst [vmem:[#allocation2 + $0x24] sm:$0x1] %v924
        %v926 = vld [vmem:[#allocation2 + $0x30] sm:$0x1]
        %v927 = vsel %vm913, 0, %v926
        %928 = vst [vmem:[#allocation2 + $0x30] sm:$0x1] %v927
        %v929 = vld [vmem:[#allocation2 + $0x3c] sm:$0x1]
        %v930 = vsel %vm913, 0, %v929
        %931 = vst [vmem:[#allocation2 + $0x3c] sm:$0x1] %v930
        %v932 = vld [vmem:[#allocation2 + $0x48] sm:$0x1]
        %v933 = vsel %vm913, 0, %v932
        %934 = vst [vmem:[#allocation2 + $0x48] sm:$0x1] %v933
        %v935 = vld [vmem:[#allocation2 + $0x54] sm:$0x1]
        %v936 = vsel %vm913, 0, %v935
        %937 = vst [vmem:[#allocation2 + $0x54] sm:$0x1] %v936
        %v938 = vld [vmem:[#allocation2 + $0x60] sm:$0x1]
        %v939 = vsel %vm913, 0, %v938
        %940 = vst [vmem:[#allocation2 + $0x60] sm:$0x1] %v939
        %v941 = vld [vmem:[#allocation2 + $0x6c] sm:$0x1]
        %v942 = vsel %vm913, 0, %v941
        %943 = vst [vmem:[#allocation2 + $0x6c] sm:$0x1] %v942
        %v944 = vld [vmem:[#allocation2 + $0x78] sm:$0x1]
        %v945 = vsel %vm913, 0, %v944
        %946 = vst [vmem:[#allocation2 + $0x78] sm:$0x1] %v945
        %v947 = vld [vmem:[#allocation2 + $0x84] sm:$0x1]
        %v948 = vsel %vm913, 0, %v947
        %949 = vst [vmem:[#allocation2 + $0x84] sm:$0x1] %v948
        %v950 = vld [vmem:[#allocation2 + $0x90] sm:$0x1]
        %v951 = vsel %vm913, 0, %v950
        %952 = vst [vmem:[#allocation2 + $0x90] sm:$0x1] %v951
        %v953 = vld [vmem:[#allocation2 + $0x9c] sm:$0x1]
        %v954 = vsel %vm913, 0, %v953
        %955 = vst [vmem:[#allocation2 + $0x9c] sm:$0x1] %v954
        %v956 = vld [vmem:[#allocation2 + $0xa8] sm:$0x1]
        %v957 = vsel %vm913, 0, %v956
        %958 = vst [vmem:[#allocation2 + $0xa8] sm:$0x1] %v957
        %v959 = vld [vmem:[#allocation2 + $0xb4] sm:$0x1]
        %v960 = vsel %vm913, 0, %v959
        %961 = vst [vmem:[#allocation2 + $0xb4] sm:$0x1] %v960
        %v962 = vld [vmem:[#allocation2 + $0xc0] sm:$0x1]
        %v963 = vsel %vm913, 0, %v962
        %964 = vst [vmem:[#allocation2 + $0xc0] sm:$0x1] %v963
        %v965 = vld [vmem:[#allocation2 + $0xcc] sm:$0x1]
        %v966 = vsel %vm913, 0, %v965
        %967 = vst [vmem:[#allocation2 + $0xcc] sm:$0x1] %v966
        %vm968 = vsmask.f32 7938
        %vm969 = vmand %vm911, %vm968
        %v970 = vld [vmem:[#allocation2 + $0x8] sm:$0x1]
        %v971 = vsel %vm969, 0, %v970
        %972 = vst [vmem:[#allocation2 + $0x8] sm:$0x1] %v971
        %v973 = vld [vmem:[#allocation2 + $0x14] sm:$0x1]
        %v974 = vsel %vm969, 0, %v973
        %975 = vst [vmem:[#allocation2 + $0x14] sm:$0x1] %v974
        %v976 = vld [vmem:[#allocation2 + $0x20] sm:$0x1]
        %v977 = vsel %vm969, 0, %v976
        %978 = vst [vmem:[#allocation2 + $0x20] sm:$0x1] %v977
        %v979 = vld [vmem:[#allocation2 + $0x2c] sm:$0x1]
        %v980 = vsel %vm969, 0, %v979
        %981 = vst [vmem:[#allocation2 + $0x2c] sm:$0x1] %v980
        %v982 = vld [vmem:[#allocation2 + $0x38] sm:$0x1]
        %v983 = vsel %vm969, 0, %v982
        %984 = vst [vmem:[#allocation2 + $0x38] sm:$0x1] %v983
        %v985 = vld [vmem:[#allocation2 + $0x44] sm:$0x1]
        %v986 = vsel %vm969, 0, %v985
        %987 = vst [vmem:[#allocation2 + $0x44] sm:$0x1] %v986
        %v988 = vld [vmem:[#allocation2 + $0x50] sm:$0x1]
        %v989 = vsel %vm969, 0, %v988
        %990 = vst [vmem:[#allocation2 + $0x50] sm:$0x1] %v989
        %v991 = vld [vmem:[#allocation2 + $0x5c] sm:$0x1]
        %v992 = vsel %vm969, 0, %v991
        %993 = vst [vmem:[#allocation2 + $0x5c] sm:$0x1] %v992
        %v994 = vld [vmem:[#allocation2 + $0x68] sm:$0x1]
        %v995 = vsel %vm969, 0, %v994
        %996 = vst [vmem:[#allocation2 + $0x68] sm:$0x1] %v995
        %v997 = vld [vmem:[#allocation2 + $0x74] sm:$0x1]
        %v998 = vsel %vm969, 0, %v997
        %999 = vst [vmem:[#allocation2 + $0x74] sm:$0x1] %v998
        %v1000 = vld [vmem:[#allocation2 + $0x80] sm:$0x1]
        %v1001 = vsel %vm969, 0, %v1000
        %1002 = vst [vmem:[#allocation2 + $0x80] sm:$0x1] %v1001
        %v1003 = vld [vmem:[#allocation2 + $0x8c] sm:$0x1]
        %v1004 = vsel %vm969, 0, %v1003
        %1005 = vst [vmem:[#allocation2 + $0x8c] sm:$0x1] %v1004
        %v1006 = vld [vmem:[#allocation2 + $0x98] sm:$0x1]
        %v1007 = vsel %vm969, 0, %v1006
        %1008 = vst [vmem:[#allocation2 + $0x98] sm:$0x1] %v1007
        %v1009 = vld [vmem:[#allocation2 + $0xa4] sm:$0x1]
        %v1010 = vsel %vm969, 0, %v1009
        %1011 = vst [vmem:[#allocation2 + $0xa4] sm:$0x1] %v1010
        %v1012 = vld [vmem:[#allocation2 + $0xb0] sm:$0x1]
        %v1013 = vsel %vm969, 0, %v1012
        %1014 = vst [vmem:[#allocation2 + $0xb0] sm:$0x1] %v1013
        %v1015 = vld [vmem:[#allocation2 + $0xbc] sm:$0x1]
        %v1016 = vsel %vm969, 0, %v1015
        %1017 = vst [vmem:[#allocation2 + $0xbc] sm:$0x1] %v1016
        %v1018 = vld [vmem:[#allocation2 + $0xc8] sm:$0x1]
        %v1019 = vsel %vm969, 0, %v1018
        %1020 = vst [vmem:[#allocation2 + $0xc8] sm:$0x1] %v1019
        %v1021 = vld [vmem:[#allocation2 + $0xd4] sm:$0x1]
        %v1022 = vsel %vm969, 0, %v1021
        %1023 = vst [vmem:[#allocation2 + $0xd4] sm:$0x1] %v1022
        %v1040 = vunpack.c.l.b16 %v885
        %v1041 = vunpack.c.h.b16 %v885
        %v1042 = vunpack.c.l.b16 %v886
        %v1043 = vunpack.c.h.b16 %v886
        %v1044 = vunpack.c.l.b16 %v887
        %v1045 = vunpack.c.h.b16 %v887
        %v1046 = vunpack.c.l.b16 %v888
        %v1047 = vunpack.c.h.b16 %v888
        %v1048 = vunpack.c.l.b16 %v889
        %v1049 = vunpack.c.h.b16 %v889
        %v1050 = vunpack.c.l.b16 %v890
        %v1051 = vunpack.c.h.b16 %v890
        %v1052 = vunpack.c.l.b16 %v891
        %v1053 = vunpack.c.h.b16 %v891
        %v1054 = vunpack.c.l.b16 %v892
        %v1055 = vunpack.c.h.b16 %v892
        %v1056 = vunpack.c.l.b16 %v893
        %v1057 = vunpack.c.h.b16 %v893
        %v1058 = vunpack.c.l.b16 %v894
        %v1059 = vunpack.c.h.b16 %v894
        %v1060 = vunpack.c.l.b16 %v895
        %v1061 = vunpack.c.h.b16 %v895
        %v1062 = vunpack.c.l.b16 %v896
        %v1063 = vunpack.c.h.b16 %v896
        %v1064 = vunpack.c.l.b16 %v897
        %v1065 = vunpack.c.h.b16 %v897
        %v1066 = vunpack.c.l.b16 %v898
        %v1067 = vunpack.c.h.b16 %v898
        %v1068 = vunpack.c.l.b16 %v899
        %v1069 = vunpack.c.h.b16 %v899
        %v1070 = vunpack.c.l.b16 %v900
        %v1071 = vunpack.c.h.b16 %v900
        %v1072 = vpack.c.b16 %v1040, %v1040
        %v1073 = vpack.c.b16 %v1041, %v1041
        %v1074 = vpack.c.b16 %v1042, %v1042
        %v1075 = vpack.c.b16 %v1043, %v1043
        %v1076 = vpack.c.b16 %v1044, %v1044
        %v1077 = vpack.c.b16 %v1045, %v1045
        %v1078 = vpack.c.b16 %v1046, %v1046
        %v1079 = vpack.c.b16 %v1047, %v1047
        %v1080 = vpack.c.b16 %v1048, %v1048
        %v1081 = vpack.c.b16 %v1049, %v1049
        %v1082 = vpack.c.b16 %v1050, %v1050
        %v1083 = vpack.c.b16 %v1051, %v1051
        %v1084 = vpack.c.b16 %v1052, %v1052
        %v1085 = vpack.c.b16 %v1053, %v1053
        %v1086 = vpack.c.b16 %v1054, %v1054
        %v1087 = vpack.c.b16 %v1055, %v1055
        %v1088 = vpack.c.b16 %v1056, %v1056
        %v1089 = vpack.c.b16 %v1057, %v1057
        %v1090 = vpack.c.b16 %v1058, %v1058
        %v1091 = vpack.c.b16 %v1059, %v1059
        %v1092 = vpack.c.b16 %v1060, %v1060
        %v1093 = vpack.c.b16 %v1061, %v1061
        %v1094 = vpack.c.b16 %v1062, %v1062
        %v1095 = vpack.c.b16 %v1063, %v1063
        %v1096 = vpack.c.b16 %v1064, %v1064
        %v1097 = vpack.c.b16 %v1065, %v1065
        %v1098 = vpack.c.b16 %v1066, %v1066
        %v1099 = vpack.c.b16 %v1067, %v1067
        %v1100 = vpack.c.b16 %v1068, %v1068
        %v1101 = vpack.c.b16 %v1069, %v1069
        %v1102 = vpack.c.b16 %v1070, %v1070
        %v1103 = vpack.c.b16 %v1071, %v1071
        %vm1104 = vsmask.f32 4368
        %vm1105 = vmor %vm912, %vm1104
        %v1107 = vshrl.u32 %v1072, 16
        %v1109 = vrot.slane %v1107, 7
        %v1110 = vshll.u32 %v1072, 16
        %v1112 = vor.u32 %v1109, %v1110
        %v1113 = vrot.slane %v1109, 4
        %v1115 = vshrl.u32 %v1073, 16
        %v1117 = vrot.slane %v1115, 7
        %v1118 = vshll.u32 %v1073, 16
        %v1120 = vor.u32 %v1117, %v1118
        %v1121 = vsel %vm1105, %v1113, %v1120
        %v1122 = vrot.slane %v1117, 4
        %v1124 = vshrl.u32 %v1074, 16
        %v1126 = vrot.slane %v1124, 7
        %v1127 = vshll.u32 %v1074, 16
        %v1129 = vor.u32 %v1126, %v1127
        %v1130 = vrot.slane %v1126, 4
        %v1132 = vshrl.u32 %v1075, 16
        %v1134 = vrot.slane %v1132, 7
        %v1135 = vshll.u32 %v1075, 16
        %v1137 = vor.u32 %v1134, %v1135
        %v1138 = vsel %vm1105, %v1130, %v1137
        %v1139 = vrot.slane %v1134, 4
        %v1141 = vshrl.u32 %v1076, 16
        %v1143 = vrot.slane %v1141, 7
        %v1144 = vshll.u32 %v1076, 16
        %v1146 = vor.u32 %v1143, %v1144
        %v1147 = vrot.slane %v1143, 4
        %v1149 = vshrl.u32 %v1077, 16
        %v1151 = vrot.slane %v1149, 7
        %v1152 = vshll.u32 %v1077, 16
        %v1154 = vor.u32 %v1151, %v1152
        %v1155 = vsel %vm1105, %v1147, %v1154
        %v1156 = vrot.slane %v1151, 4
        %v1158 = vshrl.u32 %v1078, 16
        %v1160 = vrot.slane %v1158, 7
        %v1161 = vshll.u32 %v1078, 16
        %v1163 = vor.u32 %v1160, %v1161
        %v1164 = vrot.slane %v1160, 4
        %v1166 = vshrl.u32 %v1079, 16
        %v1168 = vrot.slane %v1166, 7
        %v1169 = vshll.u32 %v1079, 16
        %v1171 = vor.u32 %v1168, %v1169
        %v1172 = vsel %vm1105, %v1164, %v1171
        %v1173 = vrot.slane %v1168, 4
        %v1175 = vshrl.u32 %v1080, 16
        %v1177 = vrot.slane %v1175, 7
        %v1178 = vshll.u32 %v1080, 16
        %v1180 = vor.u32 %v1177, %v1178
        %v1181 = vrot.slane %v1177, 4
        %v1183 = vshrl.u32 %v1081, 16
        %v1185 = vrot.slane %v1183, 7
        %v1186 = vshll.u32 %v1081, 16
        %v1188 = vor.u32 %v1185, %v1186
        %v1189 = vsel %vm1105, %v1181, %v1188
        %v1190 = vrot.slane %v1185, 4
        %v1192 = vshrl.u32 %v1082, 16
        %v1194 = vrot.slane %v1192, 7
        %v1195 = vshll.u32 %v1082, 16
        %v1197 = vor.u32 %v1194, %v1195
        %v1198 = vrot.slane %v1194, 4
        %v1200 = vshrl.u32 %v1083, 16
        %v1202 = vrot.slane %v1200, 7
        %v1203 = vshll.u32 %v1083, 16
        %v1205 = vor.u32 %v1202, %v1203
        %v1206 = vsel %vm1105, %v1198, %v1205
        %v1207 = vrot.slane %v1202, 4
        %v1209 = vshrl.u32 %v1084, 16
        %v1211 = vrot.slane %v1209, 7
        %v1212 = vshll.u32 %v1084, 16
        %v1214 = vor.u32 %v1211, %v1212
        %v1215 = vrot.slane %v1211, 4
        %v1217 = vshrl.u32 %v1085, 16
        %v1219 = vrot.slane %v1217, 7
        %v1220 = vshll.u32 %v1085, 16
        %v1222 = vor.u32 %v1219, %v1220
        %v1223 = vsel %vm1105, %v1215, %v1222
        %v1224 = vrot.slane %v1219, 4
        %v1226 = vshrl.u32 %v1086, 16
        %v1228 = vrot.slane %v1226, 7
        %v1229 = vshll.u32 %v1086, 16
        %v1231 = vor.u32 %v1228, %v1229
        %v1232 = vrot.slane %v1228, 4
        %v1234 = vshrl.u32 %v1087, 16
        %v1236 = vrot.slane %v1234, 7
        %v1237 = vshll.u32 %v1087, 16
        %v1239 = vor.u32 %v1236, %v1237
        %v1240 = vsel %vm1105, %v1232, %v1239
        %v1241 = vrot.slane %v1236, 4
        %v1243 = vshrl.u32 %v1088, 16
        %v1245 = vrot.slane %v1243, 7
        %v1246 = vshll.u32 %v1088, 16
        %v1248 = vor.u32 %v1245, %v1246
        %v1249 = vrot.slane %v1245, 4
        %v1251 = vshrl.u32 %v1089, 16
        %v1253 = vrot.slane %v1251, 7
        %v1254 = vshll.u32 %v1089, 16
        %v1256 = vor.u32 %v1253, %v1254
        %v1257 = vsel %vm1105, %v1249, %v1256
        %v1258 = vrot.slane %v1253, 4
        %v1260 = vshrl.u32 %v1090, 16
        %v1262 = vrot.slane %v1260, 7
        %v1263 = vshll.u32 %v1090, 16
        %v1265 = vor.u32 %v1262, %v1263
        %v1266 = vrot.slane %v1262, 4
        %v1268 = vshrl.u32 %v1091, 16
        %v1270 = vrot.slane %v1268, 7
        %v1271 = vshll.u32 %v1091, 16
        %v1273 = vor.u32 %v1270, %v1271
        %v1274 = vsel %vm1105, %v1266, %v1273
        %v1275 = vrot.slane %v1270, 4
        %v1277 = vshrl.u32 %v1092, 16
        %v1279 = vrot.slane %v1277, 7
        %v1280 = vshll.u32 %v1092, 16
        %v1282 = vor.u32 %v1279, %v1280
        %v1283 = vrot.slane %v1279, 4
        %v1285 = vshrl.u32 %v1093, 16
        %v1287 = vrot.slane %v1285, 7
        %v1288 = vshll.u32 %v1093, 16
        %v1290 = vor.u32 %v1287, %v1288
        %v1291 = vsel %vm1105, %v1283, %v1290
        %v1292 = vrot.slane %v1287, 4
        %v1294 = vshrl.u32 %v1094, 16
        %v1296 = vrot.slane %v1294, 7
        %v1297 = vshll.u32 %v1094, 16
        %v1299 = vor.u32 %v1296, %v1297
        %v1300 = vrot.slane %v1296, 4
        %v1302 = vshrl.u32 %v1095, 16
        %v1304 = vrot.slane %v1302, 7
        %v1305 = vshll.u32 %v1095, 16
        %v1307 = vor.u32 %v1304, %v1305
        %v1308 = vsel %vm1105, %v1300, %v1307
        %v1309 = vrot.slane %v1304, 4
        %v1311 = vshrl.u32 %v1096, 16
        %v1313 = vrot.slane %v1311, 7
        %v1314 = vshll.u32 %v1096, 16
        %v1316 = vor.u32 %v1313, %v1314
        %v1317 = vrot.slane %v1313, 4
        %v1319 = vshrl.u32 %v1097, 16
        %v1321 = vrot.slane %v1319, 7
        %v1322 = vshll.u32 %v1097, 16
        %v1324 = vor.u32 %v1321, %v1322
        %v1325 = vsel %vm1105, %v1317, %v1324
        %v1326 = vrot.slane %v1321, 4
        %v1328 = vshrl.u32 %v1098, 16
        %v1330 = vrot.slane %v1328, 7
        %v1331 = vshll.u32 %v1098, 16
        %v1333 = vor.u32 %v1330, %v1331
        %v1334 = vrot.slane %v1330, 4
        %v1336 = vshrl.u32 %v1099, 16
        %v1338 = vrot.slane %v1336, 7
        %v1339 = vshll.u32 %v1099, 16
        %v1341 = vor.u32 %v1338, %v1339
        %v1342 = vsel %vm1105, %v1334, %v1341
        %v1343 = vrot.slane %v1338, 4
        %v1345 = vshrl.u32 %v1100, 16
        %v1347 = vrot.slane %v1345, 7
        %v1348 = vshll.u32 %v1100, 16
        %v1350 = vor.u32 %v1347, %v1348
        %v1351 = vrot.slane %v1347, 4
        %v1353 = vshrl.u32 %v1101, 16
        %v1355 = vrot.slane %v1353, 7
        %v1356 = vshll.u32 %v1101, 16
        %v1358 = vor.u32 %v1355, %v1356
        %v1359 = vsel %vm1105, %v1351, %v1358
        %v1360 = vrot.slane %v1355, 4
        %v1362 = vshrl.u32 %v1102, 16
        %v1364 = vrot.slane %v1362, 7
        %v1365 = vshll.u32 %v1102, 16
        %v1367 = vor.u32 %v1364, %v1365
        %v1368 = vrot.slane %v1364, 4
        %v1370 = vshrl.u32 %v1103, 16
        %v1372 = vrot.slane %v1370, 7
        %v1373 = vshll.u32 %v1103, 16
        %v1375 = vor.u32 %v1372, %v1373
        %v1376 = vsel %vm1105, %v1368, %v1375
        %v1377 = vrot.slane %v1372, 4
        %s1426 = scalar_lea.vmem [#allocation2], 12
        %vm1427 = vcmask 257024
        %vm1428 = vmand %vm1427, %vm968
        %v1429 = vld [vmem:[%s1426] sm:$0xf]
        %v1430 = vsel %vm1428, %v1112, %v1429
        %1431 = vst [vmem:[%s1426] sm:$0xf] %v1430
        %1432 = vst.msk [vmem:[%s1426 + $0x4] sm:$0xf] %vm902, %v1121
        %v1433 = vld [vmem:[%s1426 + $0x8] sm:$0x1]
        %v1434 = vsel %vm913, %v1122, %v1433
        %1435 = vst [vmem:[%s1426 + $0x8] sm:$0x1] %v1434
        %v1436 = vld [vmem:[%s1426 + $0xc] sm:$0xf]
        %v1437 = vsel %vm1428, %v1129, %v1436
        %1438 = vst [vmem:[%s1426 + $0xc] sm:$0xf] %v1437
        %1439 = vst.msk [vmem:[%s1426 + $0x10] sm:$0xf] %vm902, %v1138
        %v1440 = vld [vmem:[%s1426 + $0x14] sm:$0x1]
        %v1441 = vsel %vm913, %v1139, %v1440
        %1442 = vst [vmem:[%s1426 + $0x14] sm:$0x1] %v1441
        %v1443 = vld [vmem:[%s1426 + $0x18] sm:$0xf]
        %v1444 = vsel %vm1428, %v1146, %v1443
        %1445 = vst [vmem:[%s1426 + $0x18] sm:$0xf] %v1444
        %1446 = vst.msk [vmem:[%s1426 + $0x1c] sm:$0xf] %vm902, %v1155
        %v1447 = vld [vmem:[%s1426 + $0x20] sm:$0x1]
        %v1448 = vsel %vm913, %v1156, %v1447
        %1449 = vst [vmem:[%s1426 + $0x20] sm:$0x1] %v1448
        %v1450 = vld [vmem:[%s1426 + $0x24] sm:$0xf]
        %v1451 = vsel %vm1428, %v1163, %v1450
        %1452 = vst [vmem:[%s1426 + $0x24] sm:$0xf] %v1451
        %1453 = vst.msk [vmem:[%s1426 + $0x28] sm:$0xf] %vm902, %v1172
        %v1454 = vld [vmem:[%s1426 + $0x2c] sm:$0x1]
        %v1455 = vsel %vm913, %v1173, %v1454
        %1456 = vst [vmem:[%s1426 + $0x2c] sm:$0x1] %v1455
        %v1457 = vld [vmem:[%s1426 + $0x30] sm:$0xf]
        %v1458 = vsel %vm1428, %v1180, %v1457
        %1459 = vst [vmem:[%s1426 + $0x30] sm:$0xf] %v1458
        %1460 = vst.msk [vmem:[%s1426 + $0x34] sm:$0xf] %vm902, %v1189
        %v1461 = vld [vmem:[%s1426 + $0x38] sm:$0x1]
        %v1462 = vsel %vm913, %v1190, %v1461
        %1463 = vst [vmem:[%s1426 + $0x38] sm:$0x1] %v1462
        %v1464 = vld [vmem:[%s1426 + $0x3c] sm:$0xf]
        %v1465 = vsel %vm1428, %v1197, %v1464
        %1466 = vst [vmem:[%s1426 + $0x3c] sm:$0xf] %v1465
        %1467 = vst.msk [vmem:[%s1426 + $0x40] sm:$0xf] %vm902, %v1206
        %v1468 = vld [vmem:[%s1426 + $0x44] sm:$0x1]
        %v1469 = vsel %vm913, %v1207, %v1468
        %1470 = vst [vmem:[%s1426 + $0x44] sm:$0x1] %v1469
        %v1471 = vld [vmem:[%s1426 + $0x48] sm:$0xf]
        %v1472 = vsel %vm1428, %v1214, %v1471
        %1473 = vst [vmem:[%s1426 + $0x48] sm:$0xf] %v1472
        %1474 = vst.msk [vmem:[%s1426 + $0x4c] sm:$0xf] %vm902, %v1223
        %v1475 = vld [vmem:[%s1426 + $0x50] sm:$0x1]
        %v1476 = vsel %vm913, %v1224, %v1475
        %1477 = vst [vmem:[%s1426 + $0x50] sm:$0x1] %v1476
        %v1478 = vld [vmem:[%s1426 + $0x54] sm:$0xf]
        %v1479 = vsel %vm1428, %v1231, %v1478
        %1480 = vst [vmem:[%s1426 + $0x54] sm:$0xf] %v1479
        %1481 = vst.msk [vmem:[%s1426 + $0x58] sm:$0xf] %vm902, %v1240
        %v1482 = vld [vmem:[%s1426 + $0x5c] sm:$0x1]
        %v1483 = vsel %vm913, %v1241, %v1482
        %1484 = vst [vmem:[%s1426 + $0x5c] sm:$0x1] %v1483
        %v1485 = vld [vmem:[%s1426 + $0x60] sm:$0xf]
        %v1486 = vsel %vm1428, %v1248, %v1485
        %1487 = vst [vmem:[%s1426 + $0x60] sm:$0xf] %v1486
        %1488 = vst.msk [vmem:[%s1426 + $0x64] sm:$0xf] %vm902, %v1257
        %v1489 = vld [vmem:[%s1426 + $0x68] sm:$0x1]
        %v1490 = vsel %vm913, %v1258, %v1489
        %1491 = vst [vmem:[%s1426 + $0x68] sm:$0x1] %v1490
        %v1492 = vld [vmem:[%s1426 + $0x6c] sm:$0xf]
        %v1493 = vsel %vm1428, %v1265, %v1492
        %1494 = vst [vmem:[%s1426 + $0x6c] sm:$0xf] %v1493
        %1495 = vst.msk [vmem:[%s1426 + $0x70] sm:$0xf] %vm902, %v1274
        %v1496 = vld [vmem:[%s1426 + $0x74] sm:$0x1]
        %v1497 = vsel %vm913, %v1275, %v1496
        %1498 = vst [vmem:[%s1426 + $0x74] sm:$0x1] %v1497
        %v1499 = vld [vmem:[%s1426 + $0x78] sm:$0xf]
        %v1500 = vsel %vm1428, %v1282, %v1499
        %1501 = vst [vmem:[%s1426 + $0x78] sm:$0xf] %v1500
        %1502 = vst.msk [vmem:[%s1426 + $0x7c] sm:$0xf] %vm902, %v1291
        %v1503 = vld [vmem:[%s1426 + $0x80] sm:$0x1]
        %v1504 = vsel %vm913, %v1292, %v1503
        %1505 = vst [vmem:[%s1426 + $0x80] sm:$0x1] %v1504
        %v1506 = vld [vmem:[%s1426 + $0x84] sm:$0xf]
        %v1507 = vsel %vm1428, %v1299, %v1506
        %1508 = vst [vmem:[%s1426 + $0x84] sm:$0xf] %v1507
        %1509 = vst.msk [vmem:[%s1426 + $0x88] sm:$0xf] %vm902, %v1308
        %v1510 = vld [vmem:[%s1426 + $0x8c] sm:$0x1]
        %v1511 = vsel %vm913, %v1309, %v1510
        %1512 = vst [vmem:[%s1426 + $0x8c] sm:$0x1] %v1511
        %v1513 = vld [vmem:[%s1426 + $0x90] sm:$0xf]
        %v1514 = vsel %vm1428, %v1316, %v1513
        %1515 = vst [vmem:[%s1426 + $0x90] sm:$0xf] %v1514
        %1516 = vst.msk [vmem:[%s1426 + $0x94] sm:$0xf] %vm902, %v1325
        %v1517 = vld [vmem:[%s1426 + $0x98] sm:$0x1]
        %v1518 = vsel %vm913, %v1326, %v1517
        %1519 = vst [vmem:[%s1426 + $0x98] sm:$0x1] %v1518
        %v1520 = vld [vmem:[%s1426 + $0x9c] sm:$0xf]
        %v1521 = vsel %vm1428, %v1333, %v1520
        %1522 = vst [vmem:[%s1426 + $0x9c] sm:$0xf] %v1521
        %1523 = vst.msk [vmem:[%s1426 + $0xa0] sm:$0xf] %vm902, %v1342
        %v1524 = vld [vmem:[%s1426 + $0xa4] sm:$0x1]
        %v1525 = vsel %vm913, %v1343, %v1524
        %1526 = vst [vmem:[%s1426 + $0xa4] sm:$0x1] %v1525
        %v1527 = vld [vmem:[%s1426 + $0xa8] sm:$0xf]
        %v1528 = vsel %vm1428, %v1350, %v1527
        %1529 = vst [vmem:[%s1426 + $0xa8] sm:$0xf] %v1528
        %1530 = vst.msk [vmem:[%s1426 + $0xac] sm:$0xf] %vm902, %v1359
        %v1531 = vld [vmem:[%s1426 + $0xb0] sm:$0x1]
        %v1532 = vsel %vm913, %v1360, %v1531
        %1533 = vst [vmem:[%s1426 + $0xb0] sm:$0x1] %v1532
        %v1534 = vld [vmem:[%s1426 + $0xb4] sm:$0xf]
        %v1535 = vsel %vm1428, %v1367, %v1534
        %1536 = vst [vmem:[%s1426 + $0xb4] sm:$0xf] %v1535
        %1537 = vst.msk [vmem:[%s1426 + $0xb8] sm:$0xf] %vm902, %v1376
        %v1538 = vld [vmem:[%s1426 + $0xbc] sm:$0x1]
        %v1539 = vsel %vm913, %v1377, %v1538
        %1540 = vst [vmem:[%s1426 + $0xbc] sm:$0x1] %v1539
        %v1541 = vld [vmem:[#allocation2] sm:$0xf]
        %v1542 = vld [vmem:[#allocation2 + $0x4] sm:$0xf]
        %v1543 = vld [vmem:[#allocation2 + $0xc] sm:$0xf]
        %v1544 = vld [vmem:[#allocation2 + $0x10] sm:$0xf]
        %v1545 = vld [vmem:[#allocation2 + $0x18] sm:$0xf]
        %v1546 = vld [vmem:[#allocation2 + $0x1c] sm:$0xf]
        %v1547 = vld [vmem:[#allocation2 + $0x24] sm:$0xf]
        %v1548 = vld [vmem:[#allocation2 + $0x28] sm:$0xf]
        %v1549 = vld [vmem:[#allocation2 + $0x30] sm:$0xf]
        %v1550 = vld [vmem:[#allocation2 + $0x34] sm:$0xf]
        %v1551 = vld [vmem:[#allocation2 + $0x3c] sm:$0xf]
        %v1552 = vld [vmem:[#allocation2 + $0x40] sm:$0xf]
        %v1553 = vld [vmem:[#allocation2 + $0x48] sm:$0xf]
        %v1554 = vld [vmem:[#allocation2 + $0x4c] sm:$0xf]
        %v1555 = vld [vmem:[#allocation2 + $0x54] sm:$0xf]
        %v1556 = vld [vmem:[#allocation2 + $0x58] sm:$0xf]
        %v1557 = vld [vmem:[#allocation2 + $0x60] sm:$0xf]
        %v1558 = vld [vmem:[#allocation2 + $0x64] sm:$0xf]
        %v1559 = vld [vmem:[#allocation2 + $0x6c] sm:$0xf]
        %v1560 = vld [vmem:[#allocation2 + $0x70] sm:$0xf]
        %v1561 = vld [vmem:[#allocation2 + $0x78] sm:$0xf]
        %v1562 = vld [vmem:[#allocation2 + $0x7c] sm:$0xf]
        %v1563 = vld [vmem:[#allocation2 + $0x84] sm:$0xf]
        %v1564 = vld [vmem:[#allocation2 + $0x88] sm:$0xf]
        %v1565 = vld [vmem:[#allocation2 + $0x90] sm:$0xf]
        %v1566 = vld [vmem:[#allocation2 + $0x94] sm:$0xf]
        %v1567 = vld [vmem:[#allocation2 + $0x9c] sm:$0xf]
        %v1568 = vld [vmem:[#allocation2 + $0xa0] sm:$0xf]
        %v1569 = vld [vmem:[#allocation2 + $0xa8] sm:$0xf]
        %v1570 = vld [vmem:[#allocation2 + $0xac] sm:$0xf]
        %v1571 = vld [vmem:[#allocation2 + $0xb4] sm:$0xf]
        %v1572 = vld [vmem:[#allocation2 + $0xb8] sm:$0xf]
        %v1573 = vld [vmem:[#allocation2 + $0x8] sm:$0x1]
        %v1574 = vld [vmem:[#allocation2 + $0x14] sm:$0x1]
        %v1575 = vld [vmem:[#allocation2 + $0x20] sm:$0x1]
        %v1576 = vld [vmem:[#allocation2 + $0x2c] sm:$0x1]
        %v1577 = vld [vmem:[#allocation2 + $0x38] sm:$0x1]
        %v1578 = vld [vmem:[#allocation2 + $0x44] sm:$0x1]
        %v1579 = vld [vmem:[#allocation2 + $0x50] sm:$0x1]
        %v1580 = vld [vmem:[#allocation2 + $0x5c] sm:$0x1]
        %v1581 = vld [vmem:[#allocation2 + $0x68] sm:$0x1]
        %v1582 = vld [vmem:[#allocation2 + $0x74] sm:$0x1]
        %v1583 = vld [vmem:[#allocation2 + $0x80] sm:$0x1]
        %v1584 = vld [vmem:[#allocation2 + $0x8c] sm:$0x1]
        %v1585 = vld [vmem:[#allocation2 + $0x98] sm:$0x1]
        %v1586 = vld [vmem:[#allocation2 + $0xa4] sm:$0x1]
        %v1587 = vld [vmem:[#allocation2 + $0xb0] sm:$0x1]
        %v1588 = vld [vmem:[#allocation2 + $0xbc] sm:$0x1]
        %v1589 = vld [vmem:[#allocation2] sm:$0xe]
        %v1590 = vld [vmem:[#allocation2 + $0xc] sm:$0xe]
        %v1591 = vld [vmem:[#allocation2 + $0x18] sm:$0xe]
        %v1592 = vld [vmem:[#allocation2 + $0x24] sm:$0xe]
        %v1593 = vld [vmem:[#allocation2 + $0x30] sm:$0xe]
        %v1594 = vld [vmem:[#allocation2 + $0x3c] sm:$0xe]
        %v1595 = vld [vmem:[#allocation2 + $0x48] sm:$0xe]
        %v1596 = vld [vmem:[#allocation2 + $0x54] sm:$0xe]
        %v1597 = vld [vmem:[#allocation2 + $0x60] sm:$0xe]
        %v1598 = vld [vmem:[#allocation2 + $0x6c] sm:$0xe]
        %v1599 = vld [vmem:[#allocation2 + $0x78] sm:$0xe]
        %v1600 = vld [vmem:[#allocation2 + $0x84] sm:$0xe]
        %v1601 = vld [vmem:[#allocation2 + $0x90] sm:$0xe]
        %v1602 = vld [vmem:[#allocation2 + $0x9c] sm:$0xe]
        %v1603 = vld [vmem:[#allocation2 + $0xa8] sm:$0xe]
        %v1604 = vld [vmem:[#allocation2 + $0xb4] sm:$0xe]
        %v1637 = vunpack.c.l.b16 %v1541
        %v1638 = vunpack.c.l.b16 %v1542
        %v1639 = vunpack.c.l.b16 %v1543
        %v1640 = vunpack.c.l.b16 %v1544
        %v1641 = vunpack.c.l.b16 %v1545
        %v1642 = vunpack.c.l.b16 %v1546
        %v1643 = vunpack.c.l.b16 %v1547
        %v1644 = vunpack.c.l.b16 %v1548
        %v1645 = vunpack.c.l.b16 %v1549
        %v1646 = vunpack.c.l.b16 %v1550
        %v1647 = vunpack.c.l.b16 %v1551
        %v1648 = vunpack.c.l.b16 %v1552
        %v1649 = vunpack.c.l.b16 %v1553
        %v1650 = vunpack.c.l.b16 %v1554
        %v1651 = vunpack.c.l.b16 %v1555
        %v1652 = vunpack.c.l.b16 %v1556
        %v1653 = vunpack.c.l.b16 %v1557
        %v1654 = vunpack.c.l.b16 %v1558
        %v1655 = vunpack.c.l.b16 %v1559
        %v1656 = vunpack.c.l.b16 %v1560
        %v1657 = vunpack.c.l.b16 %v1561
        %v1658 = vunpack.c.l.b16 %v1562
        %v1659 = vunpack.c.l.b16 %v1563
        %v1660 = vunpack.c.l.b16 %v1564
        %v1661 = vunpack.c.l.b16 %v1565
        %v1662 = vunpack.c.l.b16 %v1566
        %v1663 = vunpack.c.l.b16 %v1567
        %v1664 = vunpack.c.l.b16 %v1568
        %v1665 = vunpack.c.l.b16 %v1569
        %v1666 = vunpack.c.l.b16 %v1570
        %v1667 = vunpack.c.l.b16 %v1571
        %v1668 = vunpack.c.l.b16 %v1572
        %v1669 = vpack.c.b16 %v1638, %v1637
        %v1670 = vpack.c.b16 %v1640, %v1639
        %v1671 = vpack.c.b16 %v1642, %v1641
        %v1672 = vpack.c.b16 %v1644, %v1643
        %v1673 = vpack.c.b16 %v1646, %v1645
        %v1674 = vpack.c.b16 %v1648, %v1647
        %v1675 = vpack.c.b16 %v1650, %v1649
        %v1676 = vpack.c.b16 %v1652, %v1651
        %v1677 = vpack.c.b16 %v1654, %v1653
        %v1678 = vpack.c.b16 %v1656, %v1655
        %v1679 = vpack.c.b16 %v1658, %v1657
        %v1680 = vpack.c.b16 %v1660, %v1659
        %v1681 = vpack.c.b16 %v1662, %v1661
        %v1682 = vpack.c.b16 %v1664, %v1663
        %v1683 = vpack.c.b16 %v1666, %v1665
        %v1684 = vpack.c.b16 %v1668, %v1667
        %v1701 = vunpack.c.l.b16 %v1573
        %v1702 = vunpack.c.l.b16 %v1574
        %v1703 = vunpack.c.l.b16 %v1575
        %v1704 = vunpack.c.l.b16 %v1576
        %v1705 = vunpack.c.l.b16 %v1577
        %v1706 = vunpack.c.l.b16 %v1578
        %v1707 = vunpack.c.l.b16 %v1579
        %v1708 = vunpack.c.l.b16 %v1580
        %v1709 = vunpack.c.l.b16 %v1581
        %v1710 = vunpack.c.l.b16 %v1582
        %v1711 = vunpack.c.l.b16 %v1583
        %v1712 = vunpack.c.l.b16 %v1584
        %v1713 = vunpack.c.l.b16 %v1585
        %v1714 = vunpack.c.l.b16 %v1586
        %v1715 = vunpack.c.l.b16 %v1587
        %v1716 = vunpack.c.l.b16 %v1588
        %v1717 = vpack.c.b16 %v1701, %v1701
        %v1718 = vpack.c.b16 %v1702, %v1702
        %v1719 = vpack.c.b16 %v1703, %v1703
        %v1720 = vpack.c.b16 %v1704, %v1704
        %v1721 = vpack.c.b16 %v1705, %v1705
        %v1722 = vpack.c.b16 %v1706, %v1706
        %v1723 = vpack.c.b16 %v1707, %v1707
        %v1724 = vpack.c.b16 %v1708, %v1708
        %v1725 = vpack.c.b16 %v1709, %v1709
        %v1726 = vpack.c.b16 %v1710, %v1710
        %v1727 = vpack.c.b16 %v1711, %v1711
        %v1728 = vpack.c.b16 %v1712, %v1712
        %v1729 = vpack.c.b16 %v1713, %v1713
        %v1730 = vpack.c.b16 %v1714, %v1714
        %v1731 = vpack.c.b16 %v1715, %v1715
        %v1732 = vpack.c.b16 %v1716, %v1716
        %vm1733 = vsmask.f32 7424
        %v1735 = vshrl.u32 %v1669, 16
        %v1737 = vshll.u32 %v1669, 16
        %v1739 = vrot.slane %v1737, 1
        %v1740 = vor.u32 %v1735, %v1739
        %v1742 = vshll.u32 %v1717, 16
        %v1744 = vrot.slane %v1742, 1
        %v1745 = vsel %vm1733, %v1740, %v1744
        %v1747 = vshrl.u32 %v1670, 16
        %v1749 = vshll.u32 %v1670, 16
        %v1751 = vrot.slane %v1749, 1
        %v1752 = vor.u32 %v1747, %v1751
        %v1754 = vshll.u32 %v1718, 16
        %v1756 = vrot.slane %v1754, 1
        %v1757 = vsel %vm1733, %v1752, %v1756
        %v1759 = vshrl.u32 %v1671, 16
        %v1761 = vshll.u32 %v1671, 16
        %v1763 = vrot.slane %v1761, 1
        %v1764 = vor.u32 %v1759, %v1763
        %v1766 = vshll.u32 %v1719, 16
        %v1768 = vrot.slane %v1766, 1
        %v1769 = vsel %vm1733, %v1764, %v1768
        %v1771 = vshrl.u32 %v1672, 16
        %v1773 = vshll.u32 %v1672, 16
        %v1775 = vrot.slane %v1773, 1
        %v1776 = vor.u32 %v1771, %v1775
        %v1778 = vshll.u32 %v1720, 16
        %v1780 = vrot.slane %v1778, 1
        %v1781 = vsel %vm1733, %v1776, %v1780
        %v1783 = vshrl.u32 %v1673, 16
        %v1785 = vshll.u32 %v1673, 16
        %v1787 = vrot.slane %v1785, 1
        %v1788 = vor.u32 %v1783, %v1787
        %v1790 = vshll.u32 %v1721, 16
        %v1792 = vrot.slane %v1790, 1
        %v1793 = vsel %vm1733, %v1788, %v1792
        %v1795 = vshrl.u32 %v1674, 16
        %v1797 = vshll.u32 %v1674, 16
        %v1799 = vrot.slane %v1797, 1
        %v1800 = vor.u32 %v1795, %v1799
        %v1802 = vshll.u32 %v1722, 16
        %v1804 = vrot.slane %v1802, 1
        %v1805 = vsel %vm1733, %v1800, %v1804
        %v1807 = vshrl.u32 %v1675, 16
        %v1809 = vshll.u32 %v1675, 16
        %v1811 = vrot.slane %v1809, 1
        %v1812 = vor.u32 %v1807, %v1811
        %v1814 = vshll.u32 %v1723, 16
        %v1816 = vrot.slane %v1814, 1
        %v1817 = vsel %vm1733, %v1812, %v1816
        %v1819 = vshrl.u32 %v1676, 16
        %v1821 = vshll.u32 %v1676, 16
        %v1823 = vrot.slane %v1821, 1
        %v1824 = vor.u32 %v1819, %v1823
        %v1826 = vshll.u32 %v1724, 16
        %v1828 = vrot.slane %v1826, 1
        %v1829 = vsel %vm1733, %v1824, %v1828
        %v1831 = vshrl.u32 %v1677, 16
        %v1833 = vshll.u32 %v1677, 16
        %v1835 = vrot.slane %v1833, 1
        %v1836 = vor.u32 %v1831, %v1835
        %v1838 = vshll.u32 %v1725, 16
        %v1840 = vrot.slane %v1838, 1
        %v1841 = vsel %vm1733, %v1836, %v1840
        %v1843 = vshrl.u32 %v1678, 16
        %v1845 = vshll.u32 %v1678, 16
        %v1847 = vrot.slane %v1845, 1
        %v1848 = vor.u32 %v1843, %v1847
        %v1850 = vshll.u32 %v1726, 16
        %v1852 = vrot.slane %v1850, 1
        %v1853 = vsel %vm1733, %v1848, %v1852
        %v1855 = vshrl.u32 %v1679, 16
        %v1857 = vshll.u32 %v1679, 16
        %v1859 = vrot.slane %v1857, 1
        %v1860 = vor.u32 %v1855, %v1859
        %v1862 = vshll.u32 %v1727, 16
        %v1864 = vrot.slane %v1862, 1
        %v1865 = vsel %vm1733, %v1860, %v1864
        %v1867 = vshrl.u32 %v1680, 16
        %v1869 = vshll.u32 %v1680, 16
        %v1871 = vrot.slane %v1869, 1
        %v1872 = vor.u32 %v1867, %v1871
        %v1874 = vshll.u32 %v1728, 16
        %v1876 = vrot.slane %v1874, 1
        %v1877 = vsel %vm1733, %v1872, %v1876
        %v1879 = vshrl.u32 %v1681, 16
        %v1881 = vshll.u32 %v1681, 16
        %v1883 = vrot.slane %v1881, 1
        %v1884 = vor.u32 %v1879, %v1883
        %v1886 = vshll.u32 %v1729, 16
        %v1888 = vrot.slane %v1886, 1
        %v1889 = vsel %vm1733, %v1884, %v1888
        %v1891 = vshrl.u32 %v1682, 16
        %v1893 = vshll.u32 %v1682, 16
        %v1895 = vrot.slane %v1893, 1
        %v1896 = vor.u32 %v1891, %v1895
        %v1898 = vshll.u32 %v1730, 16
        %v1900 = vrot.slane %v1898, 1
        %v1901 = vsel %vm1733, %v1896, %v1900
        %v1903 = vshrl.u32 %v1683, 16
        %v1905 = vshll.u32 %v1683, 16
        %v1907 = vrot.slane %v1905, 1
        %v1908 = vor.u32 %v1903, %v1907
        %v1910 = vshll.u32 %v1731, 16
        %v1912 = vrot.slane %v1910, 1
        %v1913 = vsel %vm1733, %v1908, %v1912
        %v1915 = vshrl.u32 %v1684, 16
        %v1917 = vshll.u32 %v1684, 16
        %v1919 = vrot.slane %v1917, 1
        %v1920 = vor.u32 %v1915, %v1919
        %v1922 = vshll.u32 %v1732, 16
        %v1924 = vrot.slane %v1922, 1
        %v1925 = vsel %vm1733, %v1920, %v1924
        %1926 = vrot.lane.b32.xlu0 %v1745, 32
        %v1927 = vpop.permute.xlu0 %1926
        %1928 = vrot.lane.b32.xlu0 %v1757, 32
        %v1929 = vpop.permute.xlu0 %1928
        %1930 = vrot.lane.b32.xlu0 %v1769, 32
        %v1931 = vpop.permute.xlu0 %1930
        %1932 = vrot.lane.b32.xlu0 %v1781, 32
        %v1933 = vpop.permute.xlu0 %1932
        %1934 = vrot.lane.b32.xlu0 %v1793, 32
        %v1935 = vpop.permute.xlu0 %1934
        %1936 = vrot.lane.b32.xlu0 %v1805, 32
        %v1937 = vpop.permute.xlu0 %1936
        %1938 = vrot.lane.b32.xlu0 %v1817, 32
        %v1939 = vpop.permute.xlu0 %1938
        %1940 = vrot.lane.b32.xlu0 %v1829, 32
        %v1941 = vpop.permute.xlu0 %1940
        %1942 = vrot.lane.b32.xlu0 %v1841, 32
        %v1943 = vpop.permute.xlu0 %1942
        %1944 = vrot.lane.b32.xlu0 %v1853, 32
        %v1945 = vpop.permute.xlu0 %1944
        %1946 = vrot.lane.b32.xlu0 %v1865, 32
        %v1947 = vpop.permute.xlu0 %1946
        %1948 = vrot.lane.b32.xlu0 %v1877, 32
        %v1949 = vpop.permute.xlu0 %1948
        %1950 = vrot.lane.b32.xlu0 %v1889, 32
        %v1951 = vpop.permute.xlu0 %1950
        %1952 = vrot.lane.b32.xlu0 %v1901, 32
        %v1953 = vpop.permute.xlu0 %1952
        %1954 = vrot.lane.b32.xlu0 %v1913, 32
        %v1955 = vpop.permute.xlu0 %1954
        %1956 = vrot.lane.b32.xlu0 %v1925, 32
        %v1957 = vpop.permute.xlu0 %1956
        %v1974 = vunpack.c.l.b16 %v1589
        %v1975 = vunpack.c.l.b16 %v1590
        %v1976 = vunpack.c.l.b16 %v1591
        %v1977 = vunpack.c.l.b16 %v1592
        %v1978 = vunpack.c.l.b16 %v1593
        %v1979 = vunpack.c.l.b16 %v1594
        %v1980 = vunpack.c.l.b16 %v1595
        %v1981 = vunpack.c.l.b16 %v1596
        %v1982 = vunpack.c.l.b16 %v1597
        %v1983 = vunpack.c.l.b16 %v1598
        %v1984 = vunpack.c.l.b16 %v1599
        %v1985 = vunpack.c.l.b16 %v1600
        %v1986 = vunpack.c.l.b16 %v1601
        %v1987 = vunpack.c.l.b16 %v1602
        %v1988 = vunpack.c.l.b16 %v1603
        %v1989 = vunpack.c.l.b16 %v1604
        %v1990 = vpack.c.b16 %v1638, %v1974
        %v1991 = vpack.c.b16 %v1640, %v1975
        %v1992 = vpack.c.b16 %v1642, %v1976
        %v1993 = vpack.c.b16 %v1644, %v1977
        %v1994 = vpack.c.b16 %v1646, %v1978
        %v1995 = vpack.c.b16 %v1648, %v1979
        %v1996 = vpack.c.b16 %v1650, %v1980
        %v1997 = vpack.c.b16 %v1652, %v1981
        %v1998 = vpack.c.b16 %v1654, %v1982
        %v1999 = vpack.c.b16 %v1656, %v1983
        %v2000 = vpack.c.b16 %v1658, %v1984
        %v2001 = vpack.c.b16 %v1660, %v1985
        %v2002 = vpack.c.b16 %v1662, %v1986
        %v2003 = vpack.c.b16 %v1664, %v1987
        %v2004 = vpack.c.b16 %v1666, %v1988
        %v2005 = vpack.c.b16 %v1668, %v1989
        %vm2006 = vcmask 1046528
        %v2007 = vrot.slane %v1990, 1
        %v2008 = vrot.slane %v1717, 1
        %v2009 = vsel %vm2006, %v2007, %v2008
        %v2010 = vrot.slane %v1991, 1
        %v2011 = vrot.slane %v1718, 1
        %v2012 = vsel %vm2006, %v2010, %v2011
        %v2013 = vrot.slane %v1992, 1
        %v2014 = vrot.slane %v1719, 1
        %v2015 = vsel %vm2006, %v2013, %v2014
        %v2016 = vrot.slane %v1993, 1
        %v2017 = vrot.slane %v1720, 1
        %v2018 = vsel %vm2006, %v2016, %v2017
        %v2019 = vrot.slane %v1994, 1
        %v2020 = vrot.slane %v1721, 1
        %v2021 = vsel %vm2006, %v2019, %v2020
        %v2022 = vrot.slane %v1995, 1
        %v2023 = vrot.slane %v1722, 1
        %v2024 = vsel %vm2006, %v2022, %v2023
        %v2025 = vrot.slane %v1996, 1
        %v2026 = vrot.slane %v1723, 1
        %v2027 = vsel %vm2006, %v2025, %v2026
        %v2028 = vrot.slane %v1997, 1
        %v2029 = vrot.slane %v1724, 1
        %v2030 = vsel %vm2006, %v2028, %v2029
        %v2031 = vrot.slane %v1998, 1
        %v2032 = vrot.slane %v1725, 1
        %v2033 = vsel %vm2006, %v2031, %v2032
        %v2034 = vrot.slane %v1999, 1
        %v2035 = vrot.slane %v1726, 1
        %v2036 = vsel %vm2006, %v2034, %v2035
        %v2037 = vrot.slane %v2000, 1
        %v2038 = vrot.slane %v1727, 1
        %v2039 = vsel %vm2006, %v2037, %v2038
        %v2040 = vrot.slane %v2001, 1
        %v2041 = vrot.slane %v1728, 1
        %v2042 = vsel %vm2006, %v2040, %v2041
        %v2043 = vrot.slane %v2002, 1
        %v2044 = vrot.slane %v1729, 1
        %v2045 = vsel %vm2006, %v2043, %v2044
        %v2046 = vrot.slane %v2003, 1
        %v2047 = vrot.slane %v1730, 1
        %v2048 = vsel %vm2006, %v2046, %v2047
        %v2049 = vrot.slane %v2004, 1
        %v2050 = vrot.slane %v1731, 1
        %v2051 = vsel %vm2006, %v2049, %v2050
        %v2052 = vrot.slane %v2005, 1
        %v2053 = vrot.slane %v1732, 1
        %v2054 = vsel %vm2006, %v2052, %v2053
        %2055 = vrot.lane.b32.xlu0 %v2009, 64
        %v2056 = vpop.permute.xlu0 %2055
        %2057 = vrot.lane.b32.xlu0 %v2012, 64
        %v2058 = vpop.permute.xlu0 %2057
        %2059 = vrot.lane.b32.xlu0 %v2015, 64
        %v2060 = vpop.permute.xlu0 %2059
        %2061 = vrot.lane.b32.xlu0 %v2018, 64
        %v2062 = vpop.permute.xlu0 %2061
        %2063 = vrot.lane.b32.xlu0 %v2021, 64
        %v2064 = vpop.permute.xlu0 %2063
        %2065 = vrot.lane.b32.xlu0 %v2024, 64
        %v2066 = vpop.permute.xlu0 %2065
        %2067 = vrot.lane.b32.xlu0 %v2027, 64
        %v2068 = vpop.permute.xlu0 %2067
        %2069 = vrot.lane.b32.xlu0 %v2030, 64
        %v2070 = vpop.permute.xlu0 %2069
        %2071 = vrot.lane.b32.xlu0 %v2033, 64
        %v2072 = vpop.permute.xlu0 %2071
        %2073 = vrot.lane.b32.xlu0 %v2036, 64
        %v2074 = vpop.permute.xlu0 %2073
        %2075 = vrot.lane.b32.xlu0 %v2039, 64
        %v2076 = vpop.permute.xlu0 %2075
        %2077 = vrot.lane.b32.xlu0 %v2042, 64
        %v2078 = vpop.permute.xlu0 %2077
        %2079 = vrot.lane.b32.xlu0 %v2045, 64
        %v2080 = vpop.permute.xlu0 %2079
        %2081 = vrot.lane.b32.xlu0 %v2048, 64
        %v2082 = vpop.permute.xlu0 %2081
        %2083 = vrot.lane.b32.xlu0 %v2051, 64
        %v2084 = vpop.permute.xlu0 %2083
        %2085 = vrot.lane.b32.xlu0 %v2054, 64
        %v2086 = vpop.permute.xlu0 %2085
        %v2088 = vsel %vm280, %v1669, %v1927
        %v2090 = vsel %vm280, %v1670, %v1929
        %v2092 = vsel %vm280, %v1671, %v1931
        %v2094 = vsel %vm280, %v1672, %v1933
        %v2096 = vsel %vm280, %v1673, %v1935
        %v2098 = vsel %vm280, %v1674, %v1937
        %v2100 = vsel %vm280, %v1675, %v1939
        %v2102 = vsel %vm280, %v1676, %v1941
        %v2104 = vsel %vm280, %v1677, %v1943
        %v2106 = vsel %vm280, %v1678, %v1945
        %v2108 = vsel %vm280, %v1679, %v1947
        %v2110 = vsel %vm280, %v1680, %v1949
        %v2112 = vsel %vm280, %v1681, %v1951
        %v2114 = vsel %vm280, %v1682, %v1953
        %v2116 = vsel %vm280, %v1683, %v1955
        %v2118 = vsel %vm280, %v1684, %v1957
        %vm2119 = vcmask 523264
        %v2121 = vsel %vm2119, %v2088, %v2056
        %v2123 = vsel %vm2119, %v2090, %v2058
        %v2125 = vsel %vm2119, %v2092, %v2060
        %v2127 = vsel %vm2119, %v2094, %v2062
        %v2129 = vsel %vm2119, %v2096, %v2064
        %v2131 = vsel %vm2119, %v2098, %v2066
        %v2133 = vsel %vm2119, %v2100, %v2068
        %v2135 = vsel %vm2119, %v2102, %v2070
        %v2137 = vsel %vm2119, %v2104, %v2072
        %v2139 = vsel %vm2119, %v2106, %v2074
        %v2141 = vsel %vm2119, %v2108, %v2076
        %v2143 = vsel %vm2119, %v2110, %v2078
        %v2145 = vsel %vm2119, %v2112, %v2080
        %v2147 = vsel %vm2119, %v2114, %v2082
        %v2149 = vsel %vm2119, %v2116, %v2084
        %v2151 = vsel %vm2119, %v2118, %v2086
        %v2152 = vld [vmem:[%s3] sm:$0xf]
        %v2153 = vld [vmem:[%s3 + $0x4] sm:$0xf]
        %v2154 = vld [vmem:[%s3 + $0x8] sm:$0xf]
        %v2155 = vld [vmem:[%s3 + $0xc] sm:$0xf]
        %v2156 = vld [vmem:[%s3 + $0x10] sm:$0xf]
        %v2157 = vld [vmem:[%s3 + $0x14] sm:$0xf]
        %v2158 = vld [vmem:[%s3 + $0x18] sm:$0xf]
        %v2159 = vld [vmem:[%s3 + $0x1c] sm:$0xf]
        %v2160 = vld [vmem:[%s3 + $0x20] sm:$0xf]
        %v2161 = vld [vmem:[%s3 + $0x24] sm:$0xf]
        %v2162 = vld [vmem:[%s3 + $0x28] sm:$0xf]
        %v2163 = vld [vmem:[%s3 + $0x2c] sm:$0xf]
        %v2164 = vld [vmem:[%s1426] sm:$0xf]
        %v2165 = vld [vmem:[%s1426 + $0x4] sm:$0xf]
        %v2166 = vld [vmem:[%s1426 + $0xc] sm:$0xf]
        %v2167 = vld [vmem:[%s1426 + $0x10] sm:$0xf]
        %v2168 = vld [vmem:[%s1426 + $0x18] sm:$0xf]
        %v2169 = vld [vmem:[%s1426 + $0x1c] sm:$0xf]
        %v2170 = vld [vmem:[%s1426 + $0x24] sm:$0xf]
        %v2171 = vld [vmem:[%s1426 + $0x28] sm:$0xf]
        %v2172 = vld [vmem:[%s1426 + $0x30] sm:$0xf]
        %v2173 = vld [vmem:[%s1426 + $0x34] sm:$0xf]
        %v2174 = vld [vmem:[%s1426 + $0x3c] sm:$0xf]
        %v2175 = vld [vmem:[%s1426 + $0x40] sm:$0xf]
        %v2176 = vld [vmem:[%s1426 + $0x48] sm:$0xf]
        %v2177 = vld [vmem:[%s1426 + $0x4c] sm:$0xf]
        %v2178 = vld [vmem:[%s1426 + $0x54] sm:$0xf]
        %v2179 = vld [vmem:[%s1426 + $0x58] sm:$0xf]
        %v2180 = vld [vmem:[%s1426 + $0x60] sm:$0xf]
        %v2181 = vld [vmem:[%s1426 + $0x64] sm:$0xf]
        %v2182 = vld [vmem:[%s1426 + $0x6c] sm:$0xf]
        %v2183 = vld [vmem:[%s1426 + $0x70] sm:$0xf]
        %v2184 = vld [vmem:[%s1426 + $0x78] sm:$0xf]
        %v2185 = vld [vmem:[%s1426 + $0x7c] sm:$0xf]
        %v2186 = vld [vmem:[%s1426 + $0x84] sm:$0xf]
        %v2187 = vld [vmem:[%s1426 + $0x88] sm:$0xf]
        %v2188 = vld [vmem:[%s1426 + $0x90] sm:$0xf]
        %v2189 = vld [vmem:[%s1426 + $0x94] sm:$0xf]
        %v2190 = vld [vmem:[%s1426 + $0x9c] sm:$0xf]
        %v2191 = vld [vmem:[%s1426 + $0xa0] sm:$0xf]
        %v2192 = vld [vmem:[%s1426 + $0xa8] sm:$0xf]
        %v2193 = vld [vmem:[%s1426 + $0xac] sm:$0xf]
        %v2194 = vld [vmem:[%s1426 + $0xb4] sm:$0xf]
        %v2195 = vld [vmem:[%s1426 + $0xb8] sm:$0xf]
        %v2196 = vld [vmem:[%s1426 + $0x8] sm:$0x1]
        %v2197 = vld [vmem:[%s1426 + $0x14] sm:$0x1]
        %v2198 = vld [vmem:[%s1426 + $0x20] sm:$0x1]
        %v2199 = vld [vmem:[%s1426 + $0x2c] sm:$0x1]
        %v2200 = vld [vmem:[%s1426 + $0x38] sm:$0x1]
        %v2201 = vld [vmem:[%s1426 + $0x44] sm:$0x1]
        %v2202 = vld [vmem:[%s1426 + $0x50] sm:$0x1]
        %v2203 = vld [vmem:[%s1426 + $0x5c] sm:$0x1]
        %v2204 = vld [vmem:[%s1426 + $0x68] sm:$0x1]
        %v2205 = vld [vmem:[%s1426 + $0x74] sm:$0x1]
        %v2206 = vld [vmem:[%s1426 + $0x80] sm:$0x1]
        %v2207 = vld [vmem:[%s1426 + $0x8c] sm:$0x1]
        %v2208 = vld [vmem:[%s1426 + $0x98] sm:$0x1]
        %v2209 = vld [vmem:[%s1426 + $0xa4] sm:$0x1]
        %v2210 = vld [vmem:[%s1426 + $0xb0] sm:$0x1]
        %v2211 = vld [vmem:[%s1426 + $0xbc] sm:$0x1]
        %v2212 = vld [vmem:[%s1426] sm:$0xe]
        %v2213 = vld [vmem:[%s1426 + $0xc] sm:$0xe]
        %v2214 = vld [vmem:[%s1426 + $0x18] sm:$0xe]
        %v2215 = vld [vmem:[%s1426 + $0x24] sm:$0xe]
        %v2216 = vld [vmem:[%s1426 + $0x30] sm:$0xe]
        %v2217 = vld [vmem:[%s1426 + $0x3c] sm:$0xe]
        %v2218 = vld [vmem:[%s1426 + $0x48] sm:$0xe]
        %v2219 = vld [vmem:[%s1426 + $0x54] sm:$0xe]
        %v2220 = vld [vmem:[%s1426 + $0x60] sm:$0xe]
        %v2221 = vld [vmem:[%s1426 + $0x6c] sm:$0xe]
        %v2222 = vld [vmem:[%s1426 + $0x78] sm:$0xe]
        %v2223 = vld [vmem:[%s1426 + $0x84] sm:$0xe]
        %v2224 = vld [vmem:[%s1426 + $0x90] sm:$0xe]
        %v2225 = vld [vmem:[%s1426 + $0x9c] sm:$0xe]
        %v2226 = vld [vmem:[%s1426 + $0xa8] sm:$0xe]
        %v2227 = vld [vmem:[%s1426 + $0xb4] sm:$0xe]
        %v2260 = vunpack.c.l.b16 %v2164
        %v2261 = vunpack.c.l.b16 %v2165
        %v2262 = vunpack.c.l.b16 %v2166
        %v2263 = vunpack.c.l.b16 %v2167
        %v2264 = vunpack.c.l.b16 %v2168
        %v2265 = vunpack.c.l.b16 %v2169
        %v2266 = vunpack.c.l.b16 %v2170
        %v2267 = vunpack.c.l.b16 %v2171
        %v2268 = vunpack.c.l.b16 %v2172
        %v2269 = vunpack.c.l.b16 %v2173
        %v2270 = vunpack.c.l.b16 %v2174
        %v2271 = vunpack.c.l.b16 %v2175
        %v2272 = vunpack.c.l.b16 %v2176
        %v2273 = vunpack.c.l.b16 %v2177
        %v2274 = vunpack.c.l.b16 %v2178
        %v2275 = vunpack.c.l.b16 %v2179
        %v2276 = vunpack.c.l.b16 %v2180
        %v2277 = vunpack.c.l.b16 %v2181
        %v2278 = vunpack.c.l.b16 %v2182
        %v2279 = vunpack.c.l.b16 %v2183
        %v2280 = vunpack.c.l.b16 %v2184
        %v2281 = vunpack.c.l.b16 %v2185
        %v2282 = vunpack.c.l.b16 %v2186
        %v2283 = vunpack.c.l.b16 %v2187
        %v2284 = vunpack.c.l.b16 %v2188
        %v2285 = vunpack.c.l.b16 %v2189
        %v2286 = vunpack.c.l.b16 %v2190
        %v2287 = vunpack.c.l.b16 %v2191
        %v2288 = vunpack.c.l.b16 %v2192
        %v2289 = vunpack.c.l.b16 %v2193
        %v2290 = vunpack.c.l.b16 %v2194
        %v2291 = vunpack.c.l.b16 %v2195
        %v2292 = vpack.c.b16 %v2261, %v2260
        %v2293 = vpack.c.b16 %v2263, %v2262
        %v2294 = vpack.c.b16 %v2265, %v2264
        %v2295 = vpack.c.b16 %v2267, %v2266
        %v2296 = vpack.c.b16 %v2269, %v2268
        %v2297 = vpack.c.b16 %v2271, %v2270
        %v2298 = vpack.c.b16 %v2273, %v2272
        %v2299 = vpack.c.b16 %v2275, %v2274
        %v2300 = vpack.c.b16 %v2277, %v2276
        %v2301 = vpack.c.b16 %v2279, %v2278
        %v2302 = vpack.c.b16 %v2281, %v2280
        %v2303 = vpack.c.b16 %v2283, %v2282
        %v2304 = vpack.c.b16 %v2285, %v2284
        %v2305 = vpack.c.b16 %v2287, %v2286
        %v2306 = vpack.c.b16 %v2289, %v2288
        %v2307 = vpack.c.b16 %v2291, %v2290
        %v2324 = vunpack.c.l.b16 %v2196
        %v2325 = vunpack.c.l.b16 %v2197
        %v2326 = vunpack.c.l.b16 %v2198
        %v2327 = vunpack.c.l.b16 %v2199
        %v2328 = vunpack.c.l.b16 %v2200
        %v2329 = vunpack.c.l.b16 %v2201
        %v2330 = vunpack.c.l.b16 %v2202
        %v2331 = vunpack.c.l.b16 %v2203
        %v2332 = vunpack.c.l.b16 %v2204
        %v2333 = vunpack.c.l.b16 %v2205
        %v2334 = vunpack.c.l.b16 %v2206
        %v2335 = vunpack.c.l.b16 %v2207
        %v2336 = vunpack.c.l.b16 %v2208
        %v2337 = vunpack.c.l.b16 %v2209
        %v2338 = vunpack.c.l.b16 %v2210
        %v2339 = vunpack.c.l.b16 %v2211
        %v2340 = vpack.c.b16 %v2324, %v2324
        %v2341 = vpack.c.b16 %v2325, %v2325
        %v2342 = vpack.c.b16 %v2326, %v2326
        %v2343 = vpack.c.b16 %v2327, %v2327
        %v2344 = vpack.c.b16 %v2328, %v2328
        %v2345 = vpack.c.b16 %v2329, %v2329
        %v2346 = vpack.c.b16 %v2330, %v2330
        %v2347 = vpack.c.b16 %v2331, %v2331
        %v2348 = vpack.c.b16 %v2332, %v2332
        %v2349 = vpack.c.b16 %v2333, %v2333
        %v2350 = vpack.c.b16 %v2334, %v2334
        %v2351 = vpack.c.b16 %v2335, %v2335
        %v2352 = vpack.c.b16 %v2336, %v2336
        %v2353 = vpack.c.b16 %v2337, %v2337
        %v2354 = vpack.c.b16 %v2338, %v2338
        %v2355 = vpack.c.b16 %v2339, %v2339
        %v2357 = vshrl.u32 %v2292, 16
        %v2359 = vshll.u32 %v2292, 16
        %v2361 = vrot.slane %v2359, 1
        %v2362 = vor.u32 %v2357, %v2361
        %v2364 = vshll.u32 %v2340, 16
        %v2366 = vrot.slane %v2364, 1
        %v2367 = vsel %vm1733, %v2362, %v2366
        %v2369 = vshrl.u32 %v2293, 16
        %v2371 = vshll.u32 %v2293, 16
        %v2373 = vrot.slane %v2371, 1
        %v2374 = vor.u32 %v2369, %v2373
        %v2376 = vshll.u32 %v2341, 16
        %v2378 = vrot.slane %v2376, 1
        %v2379 = vsel %vm1733, %v2374, %v2378
        %v2381 = vshrl.u32 %v2294, 16
        %v2383 = vshll.u32 %v2294, 16
        %v2385 = vrot.slane %v2383, 1
        %v2386 = vor.u32 %v2381, %v2385
        %v2388 = vshll.u32 %v2342, 16
        %v2390 = vrot.slane %v2388, 1
        %v2391 = vsel %vm1733, %v2386, %v2390
        %v2393 = vshrl.u32 %v2295, 16
        %v2395 = vshll.u32 %v2295, 16
        %v2397 = vrot.slane %v2395, 1
        %v2398 = vor.u32 %v2393, %v2397
        %v2400 = vshll.u32 %v2343, 16
        %v2402 = vrot.slane %v2400, 1
        %v2403 = vsel %vm1733, %v2398, %v2402
        %v2405 = vshrl.u32 %v2296, 16
        %v2407 = vshll.u32 %v2296, 16
        %v2409 = vrot.slane %v2407, 1
        %v2410 = vor.u32 %v2405, %v2409
        %v2412 = vshll.u32 %v2344, 16
        %v2414 = vrot.slane %v2412, 1
        %v2415 = vsel %vm1733, %v2410, %v2414
        %v2417 = vshrl.u32 %v2297, 16
        %v2419 = vshll.u32 %v2297, 16
        %v2421 = vrot.slane %v2419, 1
        %v2422 = vor.u32 %v2417, %v2421
        %v2424 = vshll.u32 %v2345, 16
        %v2426 = vrot.slane %v2424, 1
        %v2427 = vsel %vm1733, %v2422, %v2426
        %v2429 = vshrl.u32 %v2298, 16
        %v2431 = vshll.u32 %v2298, 16
        %v2433 = vrot.slane %v2431, 1
        %v2434 = vor.u32 %v2429, %v2433
        %v2436 = vshll.u32 %v2346, 16
        %v2438 = vrot.slane %v2436, 1
        %v2439 = vsel %vm1733, %v2434, %v2438
        %v2441 = vshrl.u32 %v2299, 16
        %v2443 = vshll.u32 %v2299, 16
        %v2445 = vrot.slane %v2443, 1
        %v2446 = vor.u32 %v2441, %v2445
        %v2448 = vshll.u32 %v2347, 16
        %v2450 = vrot.slane %v2448, 1
        %v2451 = vsel %vm1733, %v2446, %v2450
        %v2453 = vshrl.u32 %v2300, 16
        %v2455 = vshll.u32 %v2300, 16
        %v2457 = vrot.slane %v2455, 1
        %v2458 = vor.u32 %v2453, %v2457
        %v2460 = vshll.u32 %v2348, 16
        %v2462 = vrot.slane %v2460, 1
        %v2463 = vsel %vm1733, %v2458, %v2462
        %v2465 = vshrl.u32 %v2301, 16
        %v2467 = vshll.u32 %v2301, 16
        %v2469 = vrot.slane %v2467, 1
        %v2470 = vor.u32 %v2465, %v2469
        %v2472 = vshll.u32 %v2349, 16
        %v2474 = vrot.slane %v2472, 1
        %v2475 = vsel %vm1733, %v2470, %v2474
        %v2477 = vshrl.u32 %v2302, 16
        %v2479 = vshll.u32 %v2302, 16
        %v2481 = vrot.slane %v2479, 1
        %v2482 = vor.u32 %v2477, %v2481
        %v2484 = vshll.u32 %v2350, 16
        %v2486 = vrot.slane %v2484, 1
        %v2487 = vsel %vm1733, %v2482, %v2486
        %v2489 = vshrl.u32 %v2303, 16
        %v2491 = vshll.u32 %v2303, 16
        %v2493 = vrot.slane %v2491, 1
        %v2494 = vor.u32 %v2489, %v2493
        %v2496 = vshll.u32 %v2351, 16
        %v2498 = vrot.slane %v2496, 1
        %v2499 = vsel %vm1733, %v2494, %v2498
        %v2501 = vshrl.u32 %v2304, 16
        %v2503 = vshll.u32 %v2304, 16
        %v2505 = vrot.slane %v2503, 1
        %v2506 = vor.u32 %v2501, %v2505
        %v2508 = vshll.u32 %v2352, 16
        %v2510 = vrot.slane %v2508, 1
        %v2511 = vsel %vm1733, %v2506, %v2510
        %v2513 = vshrl.u32 %v2305, 16
        %v2515 = vshll.u32 %v2305, 16
        %v2517 = vrot.slane %v2515, 1
        %v2518 = vor.u32 %v2513, %v2517
        %v2520 = vshll.u32 %v2353, 16
        %v2522 = vrot.slane %v2520, 1
        %v2523 = vsel %vm1733, %v2518, %v2522
        %v2525 = vshrl.u32 %v2306, 16
        %v2527 = vshll.u32 %v2306, 16
        %v2529 = vrot.slane %v2527, 1
        %v2530 = vor.u32 %v2525, %v2529
        %v2532 = vshll.u32 %v2354, 16
        %v2534 = vrot.slane %v2532, 1
        %v2535 = vsel %vm1733, %v2530, %v2534
        %v2537 = vshrl.u32 %v2307, 16
        %v2539 = vshll.u32 %v2307, 16
        %v2541 = vrot.slane %v2539, 1
        %v2542 = vor.u32 %v2537, %v2541
        %v2544 = vshll.u32 %v2355, 16
        %v2546 = vrot.slane %v2544, 1
        %v2547 = vsel %vm1733, %v2542, %v2546
        %2548 = vrot.lane.b32.xlu0 %v2367, 32
        %v2549 = vpop.permute.xlu0 %2548
        %2550 = vrot.lane.b32.xlu0 %v2379, 32
        %v2551 = vpop.permute.xlu0 %2550
        %2552 = vrot.lane.b32.xlu0 %v2391, 32
        %v2553 = vpop.permute.xlu0 %2552
        %2554 = vrot.lane.b32.xlu0 %v2403, 32
        %v2555 = vpop.permute.xlu0 %2554
        %2556 = vrot.lane.b32.xlu0 %v2415, 32
        %v2557 = vpop.permute.xlu0 %2556
        %2558 = vrot.lane.b32.xlu0 %v2427, 32
        %v2559 = vpop.permute.xlu0 %2558
        %2560 = vrot.lane.b32.xlu0 %v2439, 32
        %v2561 = vpop.permute.xlu0 %2560
        %2562 = vrot.lane.b32.xlu0 %v2451, 32
        %v2563 = vpop.permute.xlu0 %2562
        %2564 = vrot.lane.b32.xlu0 %v2463, 32
        %v2565 = vpop.permute.xlu0 %2564
        %2566 = vrot.lane.b32.xlu0 %v2475, 32
        %v2567 = vpop.permute.xlu0 %2566
        %2568 = vrot.lane.b32.xlu0 %v2487, 32
        %v2569 = vpop.permute.xlu0 %2568
        %2570 = vrot.lane.b32.xlu0 %v2499, 32
        %v2571 = vpop.permute.xlu0 %2570
        %2572 = vrot.lane.b32.xlu0 %v2511, 32
        %v2573 = vpop.permute.xlu0 %2572
        %2574 = vrot.lane.b32.xlu0 %v2523, 32
        %v2575 = vpop.permute.xlu0 %2574
        %2576 = vrot.lane.b32.xlu0 %v2535, 32
        %v2577 = vpop.permute.xlu0 %2576
        %2578 = vrot.lane.b32.xlu0 %v2547, 32
        %v2579 = vpop.permute.xlu0 %2578
        %v2596 = vunpack.c.l.b16 %v2212
        %v2597 = vunpack.c.l.b16 %v2213
        %v2598 = vunpack.c.l.b16 %v2214
        %v2599 = vunpack.c.l.b16 %v2215
        %v2600 = vunpack.c.l.b16 %v2216
        %v2601 = vunpack.c.l.b16 %v2217
        %v2602 = vunpack.c.l.b16 %v2218
        %v2603 = vunpack.c.l.b16 %v2219
        %v2604 = vunpack.c.l.b16 %v2220
        %v2605 = vunpack.c.l.b16 %v2221
        %v2606 = vunpack.c.l.b16 %v2222
        %v2607 = vunpack.c.l.b16 %v2223
        %v2608 = vunpack.c.l.b16 %v2224
        %v2609 = vunpack.c.l.b16 %v2225
        %v2610 = vunpack.c.l.b16 %v2226
        %v2611 = vunpack.c.l.b16 %v2227
        %v2612 = vpack.c.b16 %v2261, %v2596
        %v2613 = vpack.c.b16 %v2263, %v2597
        %v2614 = vpack.c.b16 %v2265, %v2598
        %v2615 = vpack.c.b16 %v2267, %v2599
        %v2616 = vpack.c.b16 %v2269, %v2600
        %v2617 = vpack.c.b16 %v2271, %v2601
        %v2618 = vpack.c.b16 %v2273, %v2602
        %v2619 = vpack.c.b16 %v2275, %v2603
        %v2620 = vpack.c.b16 %v2277, %v2604
        %v2621 = vpack.c.b16 %v2279, %v2605
        %v2622 = vpack.c.b16 %v2281, %v2606
        %v2623 = vpack.c.b16 %v2283, %v2607
        %v2624 = vpack.c.b16 %v2285, %v2608
        %v2625 = vpack.c.b16 %v2287, %v2609
        %v2626 = vpack.c.b16 %v2289, %v2610
        %v2627 = vpack.c.b16 %v2291, %v2611
        %v2628 = vrot.slane %v2612, 1
        %v2629 = vrot.slane %v2340, 1
        %v2630 = vsel %vm2006, %v2628, %v2629
        %v2631 = vrot.slane %v2613, 1
        %v2632 = vrot.slane %v2341, 1
        %v2633 = vsel %vm2006, %v2631, %v2632
        %v2634 = vrot.slane %v2614, 1
        %v2635 = vrot.slane %v2342, 1
        %v2636 = vsel %vm2006, %v2634, %v2635
        %v2637 = vrot.slane %v2615, 1
        %v2638 = vrot.slane %v2343, 1
        %v2639 = vsel %vm2006, %v2637, %v2638
        %v2640 = vrot.slane %v2616, 1
        %v2641 = vrot.slane %v2344, 1
        %v2642 = vsel %vm2006, %v2640, %v2641
        %v2643 = vrot.slane %v2617, 1
        %v2644 = vrot.slane %v2345, 1
        %v2645 = vsel %vm2006, %v2643, %v2644
        %v2646 = vrot.slane %v2618, 1
        %v2647 = vrot.slane %v2346, 1
        %v2648 = vsel %vm2006, %v2646, %v2647
        %v2649 = vrot.slane %v2619, 1
        %v2650 = vrot.slane %v2347, 1
        %v2651 = vsel %vm2006, %v2649, %v2650
        %v2652 = vrot.slane %v2620, 1
        %v2653 = vrot.slane %v2348, 1
        %v2654 = vsel %vm2006, %v2652, %v2653
        %v2655 = vrot.slane %v2621, 1
        %v2656 = vrot.slane %v2349, 1
        %v2657 = vsel %vm2006, %v2655, %v2656
        %v2658 = vrot.slane %v2622, 1
        %v2659 = vrot.slane %v2350, 1
        %v2660 = vsel %vm2006, %v2658, %v2659
        %v2661 = vrot.slane %v2623, 1
        %v2662 = vrot.slane %v2351, 1
        %v2663 = vsel %vm2006, %v2661, %v2662
        %v2664 = vrot.slane %v2624, 1
        %v2665 = vrot.slane %v2352, 1
        %v2666 = vsel %vm2006, %v2664, %v2665
        %v2667 = vrot.slane %v2625, 1
        %v2668 = vrot.slane %v2353, 1
        %v2669 = vsel %vm2006, %v2667, %v2668
        %v2670 = vrot.slane %v2626, 1
        %v2671 = vrot.slane %v2354, 1
        %v2672 = vsel %vm2006, %v2670, %v2671
        %v2673 = vrot.slane %v2627, 1
        %v2674 = vrot.slane %v2355, 1
        %v2675 = vsel %vm2006, %v2673, %v2674
        %2676 = vrot.lane.b32.xlu0 %v2630, 64
        %v2677 = vpop.permute.xlu0 %2676
        %2678 = vrot.lane.b32.xlu0 %v2633, 64
        %v2679 = vpop.permute.xlu0 %2678
        %2680 = vrot.lane.b32.xlu0 %v2636, 64
        %v2681 = vpop.permute.xlu0 %2680
        %2682 = vrot.lane.b32.xlu0 %v2639, 64
        %v2683 = vpop.permute.xlu0 %2682
        %2684 = vrot.lane.b32.xlu0 %v2642, 64
        %v2685 = vpop.permute.xlu0 %2684
        %2686 = vrot.lane.b32.xlu0 %v2645, 64
        %v2687 = vpop.permute.xlu0 %2686
        %2688 = vrot.lane.b32.xlu0 %v2648, 64
        %v2689 = vpop.permute.xlu0 %2688
        %2690 = vrot.lane.b32.xlu0 %v2651, 64
        %v2691 = vpop.permute.xlu0 %2690
        %2692 = vrot.lane.b32.xlu0 %v2654, 64
        %v2693 = vpop.permute.xlu0 %2692
        %2694 = vrot.lane.b32.xlu0 %v2657, 64
        %v2695 = vpop.permute.xlu0 %2694
        %2696 = vrot.lane.b32.xlu0 %v2660, 64
        %v2697 = vpop.permute.xlu0 %2696
        %2698 = vrot.lane.b32.xlu0 %v2663, 64
        %v2699 = vpop.permute.xlu0 %2698
        %2700 = vrot.lane.b32.xlu0 %v2666, 64
        %v2701 = vpop.permute.xlu0 %2700
        %2702 = vrot.lane.b32.xlu0 %v2669, 64
        %v2703 = vpop.permute.xlu0 %2702
        %2704 = vrot.lane.b32.xlu0 %v2672, 64
        %v2705 = vpop.permute.xlu0 %2704
        %2706 = vrot.lane.b32.xlu0 %v2675, 64
        %v2707 = vpop.permute.xlu0 %2706
        %v2709 = vsel %vm280, %v2292, %v2549
        %v2711 = vsel %vm280, %v2293, %v2551
        %v2713 = vsel %vm280, %v2294, %v2553
        %v2715 = vsel %vm280, %v2295, %v2555
        %v2717 = vsel %vm280, %v2296, %v2557
        %v2719 = vsel %vm280, %v2297, %v2559
        %v2721 = vsel %vm280, %v2298, %v2561
        %v2723 = vsel %vm280, %v2299, %v2563
        %v2725 = vsel %vm280, %v2300, %v2565
        %v2727 = vsel %vm280, %v2301, %v2567
        %v2729 = vsel %vm280, %v2302, %v2569
        %v2731 = vsel %vm280, %v2303, %v2571
        %v2733 = vsel %vm280, %v2304, %v2573
        %v2735 = vsel %vm280, %v2305, %v2575
        %v2737 = vsel %vm280, %v2306, %v2577
        %v2739 = vsel %vm280, %v2307, %v2579
        %v2741 = vsel %vm2119, %v2709, %v2677
        %v2743 = vsel %vm2119, %v2711, %v2679
        %v2745 = vsel %vm2119, %v2713, %v2681
        %v2747 = vsel %vm2119, %v2715, %v2683
        %v2749 = vsel %vm2119, %v2717, %v2685
        %v2751 = vsel %vm2119, %v2719, %v2687
        %v2753 = vsel %vm2119, %v2721, %v2689
        %v2755 = vsel %vm2119, %v2723, %v2691
        %v2757 = vsel %vm2119, %v2725, %v2693
        %v2759 = vsel %vm2119, %v2727, %v2695
        %v2761 = vsel %vm2119, %v2729, %v2697
        %v2763 = vsel %vm2119, %v2731, %v2699
        %v2765 = vsel %vm2119, %v2733, %v2701
        %v2767 = vsel %vm2119, %v2735, %v2703
        %v2769 = vsel %vm2119, %v2737, %v2705
        %v2771 = vsel %vm2119, %v2739, %v2707
        %s2772 = scalar_lea.vmem %s3, 48
        %v2773 = vld [vmem:[%s2772] sm:$0xf]
        %v2774 = vld [vmem:[%s2772 + $0x4] sm:$0xf]
        %v2775 = vld [vmem:[%s2772 + $0x8] sm:$0xf]
        %v2776 = vld [vmem:[%s2772 + $0xc] sm:$0xf]
        %v2777 = vld [vmem:[%s2772 + $0x10] sm:$0xf]
        %v2778 = vld [vmem:[%s2772 + $0x14] sm:$0xf]
        %v2779 = vld [vmem:[%s2772 + $0x18] sm:$0xf]
        %v2780 = vld [vmem:[%s2772 + $0x1c] sm:$0xf]
        %v2781 = vld [vmem:[%s2772 + $0x20] sm:$0xf]
        %v2782 = vld [vmem:[%s2772 + $0x24] sm:$0xf]
        %v2783 = vld [vmem:[%s2772 + $0x28] sm:$0xf]
        %v2784 = vld [vmem:[%s2772 + $0x2c] sm:$0xf]
        %v2797 = vunpack.c.l.b16 %v2773
        %v2798 = vunpack.c.l.b16 %v2774
        %v2799 = vunpack.c.l.b16 %v2775
        %v2800 = vunpack.c.l.b16 %v2776
        %v2801 = vunpack.c.l.b16 %v2777
        %v2802 = vunpack.c.l.b16 %v2778
        %v2803 = vunpack.c.l.b16 %v2779
        %v2804 = vunpack.c.l.b16 %v2780
        %v2805 = vunpack.c.l.b16 %v2781
        %v2806 = vunpack.c.l.b16 %v2782
        %v2807 = vunpack.c.l.b16 %v2783
        %v2808 = vunpack.c.l.b16 %v2784
        %v2809 = vpack.c.b16 %v2798, %v2797
        %v2810 = vpack.c.b16 %v2800, %v2799
        %v2811 = vpack.c.b16 %v2802, %v2801
        %v2812 = vpack.c.b16 %v2804, %v2803
        %v2813 = vpack.c.b16 %v2806, %v2805
        %v2814 = vpack.c.b16 %v2808, %v2807
        %vm2821 = vcmask 785408
        %v2822 = vsel %vm2821, %v2741, 0
        %v2824 = vsel %vm2821, %v2743, 0
        %v2826 = vsel %vm2821, %v2745, 0
        %v2828 = vsel %vm2821, %v2747, 0
        %v2830 = vsel %vm2821, %v2749, 0
        %v2832 = vsel %vm2821, %v2751, 0
        %v2834 = vsel %vm2821, %v2753, 0
        %v2836 = vsel %vm2821, %v2755, 0
        %v2838 = vsel %vm2821, %v2757, 0
        %v2840 = vsel %vm2821, %v2759, 0
        %v2842 = vsel %vm2821, %v2761, 0
        %v2844 = vsel %vm2821, %v2763, 0
        %v2846 = vsel %vm2821, %v2765, 0
        %v2848 = vsel %vm2821, %v2767, 0
        %v2850 = vsel %vm2821, %v2769, 0
        %v2852 = vsel %vm2821, %v2771, 0
        %2854 = vmatprep.subr.bf16.mxu0 0
        %2855 = vmatpush1.bf16.msra.mxu0 0
        %2856 = vmatprep.subr.bf16.mxu0 0
        %2857 = vmatpush1.bf16.msra.mxu0 0
        %2858 = vmatprep.subr.bf16.mxu0 0
        %2859 = vmatpush1.bf16.msra.mxu0 %v2814
        %2860 = vmatprep.subr.bf16.mxu0 0
        %2861 = vmatpush1.bf16.msra.mxu0 %v2813
        %2862 = vmatprep.subr.bf16.mxu0 0
        %2863 = vmatpush1.bf16.msra.mxu0 %v2812
        %2864 = vmatprep.subr.bf16.mxu0 0
        %2865 = vmatpush1.bf16.msra.mxu0 %v2811
        %2866 = vmatprep.subr.bf16.mxu0 0
        %2867 = vmatpush1.bf16.msra.mxu0 %v2810
        %2868 = vmatprep.subr.bf16.mxu0 0
        %2869 = vmatpush1.bf16.msra.mxu0 %v2809
        %2870 = vmatprep.subr.bf16.mxu0 0
        %2871 = vmatpush2.bf16.msra.mxu0 0
        %2872 = vmatprep.subr.bf16.mxu0 0
        %2873 = vmatpush2.bf16.msra.mxu0 0
        %2874 = vmatprep.subr.bf16.mxu0 0
        %2875 = vmatpush2.bf16.msra.mxu0 0
        %2876 = vmatprep.subr.bf16.mxu0 0
        %2877 = vmatpush2.bf16.msra.mxu0 0
        %2878 = vmatprep.subr.bf16.mxu0 0
        %2879 = vmatpush2.bf16.msra.mxu0 0
        %2880 = vmatprep.subr.bf16.mxu0 0
        %2881 = vmatpush2.bf16.msra.mxu0 0
        %2882 = vmatprep.subr.bf16.mxu0 0
        %2883 = vmatpush2.bf16.msra.mxu0 0
        %2884 = vmatprep.subr.bf16.mxu0 0
        %2885 = vmatpush2.bf16.msra.mxu0 0
        %2886 = vmatprep.mubr.bf16.mxu0 0
        %2887 = vmatmul.mubr.bf16.gmra.mxu0 %v2822
        %v2888 = vpop.f32.mrf.mxu0
        %v2889 = vadd.f32 0.0, %v2888
        %v2890 = vpop.f32.mrf.mxu0
        %v2891 = vpop.f32.mrf.mxu0
        %v2892 = vadd.f32 0.0, %v2891
        %v2893 = vpop.f32.mrf.mxu0
        %2894 = vmatprep.mubr.bf16.mxu0 0
        %2895 = vmatmul.mubr.bf16.gmra.mxu0 %v2824
        %v2896 = vpop.f32.mrf.mxu0
        %v2897 = vadd.f32 0.0, %v2896
        %v2898 = vpop.f32.mrf.mxu0
        %v2899 = vpop.f32.mrf.mxu0
        %v2900 = vadd.f32 0.0, %v2899
        %v2901 = vpop.f32.mrf.mxu0
        %2902 = vmatprep.mubr.bf16.mxu0 0
        %2903 = vmatmul.mubr.bf16.gmra.mxu0 %v2826
        %v2904 = vpop.f32.mrf.mxu0
        %v2905 = vadd.f32 0.0, %v2904
        %v2906 = vpop.f32.mrf.mxu0
        %v2907 = vpop.f32.mrf.mxu0
        %v2908 = vadd.f32 0.0, %v2907
        %v2909 = vpop.f32.mrf.mxu0
        %2910 = vmatprep.mubr.bf16.mxu0 0
        %2911 = vmatmul.mubr.bf16.gmra.mxu0 %v2828
        %v2912 = vpop.f32.mrf.mxu0
        %v2913 = vadd.f32 0.0, %v2912
        %v2914 = vpop.f32.mrf.mxu0
        %v2915 = vpop.f32.mrf.mxu0
        %v2916 = vadd.f32 0.0, %v2915
        %v2917 = vpop.f32.mrf.mxu0
        %2918 = vmatprep.mubr.bf16.mxu0 0
        %2919 = vmatmul.mubr.bf16.gmra.mxu0 %v2830
        %v2920 = vpop.f32.mrf.mxu0
        %v2921 = vadd.f32 0.0, %v2920
        %v2922 = vpop.f32.mrf.mxu0
        %v2923 = vpop.f32.mrf.mxu0
        %v2924 = vadd.f32 0.0, %v2923
        %v2925 = vpop.f32.mrf.mxu0
        %2926 = vmatprep.mubr.bf16.mxu0 0
        %2927 = vmatmul.mubr.bf16.gmra.mxu0 %v2832
        %v2928 = vpop.f32.mrf.mxu0
        %v2929 = vadd.f32 0.0, %v2928
        %v2930 = vpop.f32.mrf.mxu0
        %v2931 = vpop.f32.mrf.mxu0
        %v2932 = vadd.f32 0.0, %v2931
        %v2933 = vpop.f32.mrf.mxu0
        %2934 = vmatprep.mubr.bf16.mxu0 0
        %2935 = vmatmul.mubr.bf16.gmra.mxu0 %v2834
        %v2936 = vpop.f32.mrf.mxu0
        %v2937 = vadd.f32 0.0, %v2936
        %v2938 = vpop.f32.mrf.mxu0
        %v2939 = vpop.f32.mrf.mxu0
        %v2940 = vadd.f32 0.0, %v2939
        %v2941 = vpop.f32.mrf.mxu0
        %2942 = vmatprep.mubr.bf16.mxu0 0
        %2943 = vmatmul.mubr.bf16.gmra.mxu0 %v2836
        %v2944 = vpop.f32.mrf.mxu0
        %v2945 = vadd.f32 0.0, %v2944
        %v2946 = vpop.f32.mrf.mxu0
        %v2947 = vpop.f32.mrf.mxu0
        %v2948 = vadd.f32 0.0, %v2947
        %v2949 = vpop.f32.mrf.mxu0
        %2950 = vmatprep.mubr.bf16.mxu0 0
        %2951 = vmatmul.mubr.bf16.gmra.mxu0 %v2838
        %v2952 = vpop.f32.mrf.mxu0
        %v2953 = vadd.f32 0.0, %v2952
        %v2954 = vpop.f32.mrf.mxu0
        %v2955 = vpop.f32.mrf.mxu0
        %v2956 = vadd.f32 0.0, %v2955
        %v2957 = vpop.f32.mrf.mxu0
        %2958 = vmatprep.mubr.bf16.mxu0 0
        %2959 = vmatmul.mubr.bf16.gmra.mxu0 %v2840
        %v2960 = vpop.f32.mrf.mxu0
        %v2961 = vadd.f32 0.0, %v2960
        %v2962 = vpop.f32.mrf.mxu0
        %v2963 = vpop.f32.mrf.mxu0
        %v2964 = vadd.f32 0.0, %v2963
        %v2965 = vpop.f32.mrf.mxu0
        %2966 = vmatprep.mubr.bf16.mxu0 0
        %2967 = vmatmul.mubr.bf16.gmra.mxu0 %v2842
        %v2968 = vpop.f32.mrf.mxu0
        %v2969 = vadd.f32 0.0, %v2968
        %v2970 = vpop.f32.mrf.mxu0
        %v2971 = vpop.f32.mrf.mxu0
        %v2972 = vadd.f32 0.0, %v2971
        %v2973 = vpop.f32.mrf.mxu0
        %2974 = vmatprep.mubr.bf16.mxu0 0
        %2975 = vmatmul.mubr.bf16.gmra.mxu0 %v2844
        %v2976 = vpop.f32.mrf.mxu0
        %v2977 = vadd.f32 0.0, %v2976
        %v2978 = vpop.f32.mrf.mxu0
        %v2979 = vpop.f32.mrf.mxu0
        %v2980 = vadd.f32 0.0, %v2979
        %v2981 = vpop.f32.mrf.mxu0
        %2982 = vmatprep.mubr.bf16.mxu0 0
        %2983 = vmatmul.mubr.bf16.gmra.mxu0 %v2846
        %v2984 = vpop.f32.mrf.mxu0
        %v2985 = vadd.f32 0.0, %v2984
        %v2986 = vpop.f32.mrf.mxu0
        %v2987 = vpop.f32.mrf.mxu0
        %v2988 = vadd.f32 0.0, %v2987
        %v2989 = vpop.f32.mrf.mxu0
        %2990 = vmatprep.mubr.bf16.mxu0 0
        %2991 = vmatmul.mubr.bf16.gmra.mxu0 %v2848
        %v2992 = vpop.f32.mrf.mxu0
        %v2993 = vadd.f32 0.0, %v2992
        %v2994 = vpop.f32.mrf.mxu0
        %v2995 = vpop.f32.mrf.mxu0
        %v2996 = vadd.f32 0.0, %v2995
        %v2997 = vpop.f32.mrf.mxu0
        %2998 = vmatprep.mubr.bf16.mxu0 0
        %2999 = vmatmul.mubr.bf16.gmra.mxu0 %v2850
        %v3000 = vpop.f32.mrf.mxu0
        %v3001 = vadd.f32 0.0, %v3000
        %v3002 = vpop.f32.mrf.mxu0
        %v3003 = vpop.f32.mrf.mxu0
        %v3004 = vadd.f32 0.0, %v3003
        %v3005 = vpop.f32.mrf.mxu0
        %3006 = vmatprep.mubr.bf16.mxu0 0
        %3007 = vmatmul.mubr.bf16.gmra.mxu0 %v2852
        %v3008 = vpop.f32.mrf.mxu0
        %v3009 = vadd.f32 0.0, %v3008
        %v3010 = vpop.f32.mrf.mxu0
        %v3011 = vpop.f32.mrf.mxu0
        %v3012 = vadd.f32 0.0, %v3011
        %v3013 = vpop.f32.mrf.mxu0
        %3014 = vdwg.mxu0
        %v3027 = vunpack.c.l.b16 %v2152
        %v3028 = vunpack.c.l.b16 %v2153
        %v3029 = vunpack.c.l.b16 %v2154
        %v3030 = vunpack.c.l.b16 %v2155
        %v3031 = vunpack.c.l.b16 %v2156
        %v3032 = vunpack.c.l.b16 %v2157
        %v3033 = vunpack.c.l.b16 %v2158
        %v3034 = vunpack.c.l.b16 %v2159
        %v3035 = vunpack.c.l.b16 %v2160
        %v3036 = vunpack.c.l.b16 %v2161
        %v3037 = vunpack.c.l.b16 %v2162
        %v3038 = vunpack.c.l.b16 %v2163
        %v3039 = vpack.c.b16 %v3028, %v3027
        %v3040 = vpack.c.b16 %v3030, %v3029
        %v3041 = vpack.c.b16 %v3032, %v3031
        %v3042 = vpack.c.b16 %v3034, %v3033
        %v3043 = vpack.c.b16 %v3036, %v3035
        %v3044 = vpack.c.b16 %v3038, %v3037
        %v3051 = vsel %vm2821, %v2121, 0
        %v3053 = vsel %vm2821, %v2123, 0
        %v3055 = vsel %vm2821, %v2125, 0
        %v3057 = vsel %vm2821, %v2127, 0
        %v3059 = vsel %vm2821, %v2129, 0
        %v3061 = vsel %vm2821, %v2131, 0
        %v3063 = vsel %vm2821, %v2133, 0
        %v3065 = vsel %vm2821, %v2135, 0
        %v3067 = vsel %vm2821, %v2137, 0
        %v3069 = vsel %vm2821, %v2139, 0
        %v3071 = vsel %vm2821, %v2141, 0
        %v3073 = vsel %vm2821, %v2143, 0
        %v3075 = vsel %vm2821, %v2145, 0
        %v3077 = vsel %vm2821, %v2147, 0
        %v3079 = vsel %vm2821, %v2149, 0
        %v3081 = vsel %vm2821, %v2151, 0
        %3083 = vmatprep.subr.bf16.mxu0 0
        %3084 = vmatpush1.bf16.msra.mxu0 0
        %3085 = vmatprep.subr.bf16.mxu0 0
        %3086 = vmatpush1.bf16.msra.mxu0 0
        %3087 = vmatprep.subr.bf16.mxu0 0
        %3088 = vmatpush1.bf16.msra.mxu0 %v3044
        %3089 = vmatprep.subr.bf16.mxu0 0
        %3090 = vmatpush1.bf16.msra.mxu0 %v3043
        %3091 = vmatprep.subr.bf16.mxu0 0
        %3092 = vmatpush1.bf16.msra.mxu0 %v3042
        %3093 = vmatprep.subr.bf16.mxu0 0
        %3094 = vmatpush1.bf16.msra.mxu0 %v3041
        %3095 = vmatprep.subr.bf16.mxu0 0
        %3096 = vmatpush1.bf16.msra.mxu0 %v3040
        %3097 = vmatprep.subr.bf16.mxu0 0
        %3098 = vmatpush1.bf16.msra.mxu0 %v3039
        %3099 = vmatprep.subr.bf16.mxu0 0
        %3100 = vmatpush2.bf16.msra.mxu0 0
        %3101 = vmatprep.subr.bf16.mxu0 0
        %3102 = vmatpush2.bf16.msra.mxu0 0
        %3103 = vmatprep.subr.bf16.mxu0 0
        %3104 = vmatpush2.bf16.msra.mxu0 0
        %3105 = vmatprep.subr.bf16.mxu0 0
        %3106 = vmatpush2.bf16.msra.mxu0 0
        %3107 = vmatprep.subr.bf16.mxu0 0
        %3108 = vmatpush2.bf16.msra.mxu0 0
        %3109 = vmatprep.subr.bf16.mxu0 0
        %3110 = vmatpush2.bf16.msra.mxu0 0
        %3111 = vmatprep.subr.bf16.mxu0 0
        %3112 = vmatpush2.bf16.msra.mxu0 0
        %3113 = vmatprep.subr.bf16.mxu0 0
        %3114 = vmatpush2.bf16.msra.mxu0 0
        %3115 = vmatprep.mubr.bf16.mxu0 0
        %3116 = vmatmul.mubr.bf16.gmra.mxu0 %v3051
        %v3117 = vpop.f32.mrf.mxu0
        %v3118 = vadd.f32 %v2889, %v3117
        %v3119 = vpop.f32.mrf.mxu0
        %v3120 = vpop.f32.mrf.mxu0
        %v3121 = vadd.f32 %v2892, %v3120
        %v3122 = vpop.f32.mrf.mxu0
        %3123 = vmatprep.mubr.bf16.mxu0 0
        %3124 = vmatmul.mubr.bf16.gmra.mxu0 %v3053
        %v3125 = vpop.f32.mrf.mxu0
        %v3126 = vadd.f32 %v2897, %v3125
        %v3127 = vpop.f32.mrf.mxu0
        %v3128 = vpop.f32.mrf.mxu0
        %v3129 = vadd.f32 %v2900, %v3128
        %v3130 = vpop.f32.mrf.mxu0
        %3131 = vmatprep.mubr.bf16.mxu0 0
        %3132 = vmatmul.mubr.bf16.gmra.mxu0 %v3055
        %v3133 = vpop.f32.mrf.mxu0
        %v3134 = vadd.f32 %v2905, %v3133
        %v3135 = vpop.f32.mrf.mxu0
        %v3136 = vpop.f32.mrf.mxu0
        %v3137 = vadd.f32 %v2908, %v3136
        %v3138 = vpop.f32.mrf.mxu0
        %3139 = vmatprep.mubr.bf16.mxu0 0
        %3140 = vmatmul.mubr.bf16.gmra.mxu0 %v3057
        %v3141 = vpop.f32.mrf.mxu0
        %v3142 = vadd.f32 %v2913, %v3141
        %v3143 = vpop.f32.mrf.mxu0
        %v3144 = vpop.f32.mrf.mxu0
        %v3145 = vadd.f32 %v2916, %v3144
        %v3146 = vpop.f32.mrf.mxu0
        %3147 = vmatprep.mubr.bf16.mxu0 0
        %3148 = vmatmul.mubr.bf16.gmra.mxu0 %v3059
        %v3149 = vpop.f32.mrf.mxu0
        %v3150 = vadd.f32 %v2921, %v3149
        %v3151 = vpop.f32.mrf.mxu0
        %v3152 = vpop.f32.mrf.mxu0
        %v3153 = vadd.f32 %v2924, %v3152
        %v3154 = vpop.f32.mrf.mxu0
        %3155 = vmatprep.mubr.bf16.mxu0 0
        %3156 = vmatmul.mubr.bf16.gmra.mxu0 %v3061
        %v3157 = vpop.f32.mrf.mxu0
        %v3158 = vadd.f32 %v2929, %v3157
        %v3159 = vpop.f32.mrf.mxu0
        %v3160 = vpop.f32.mrf.mxu0
        %v3161 = vadd.f32 %v2932, %v3160
        %v3162 = vpop.f32.mrf.mxu0
        %3163 = vmatprep.mubr.bf16.mxu0 0
        %3164 = vmatmul.mubr.bf16.gmra.mxu0 %v3063
        %v3165 = vpop.f32.mrf.mxu0
        %v3166 = vadd.f32 %v2937, %v3165
        %v3167 = vpop.f32.mrf.mxu0
        %v3168 = vpop.f32.mrf.mxu0
        %v3169 = vadd.f32 %v2940, %v3168
        %v3170 = vpop.f32.mrf.mxu0
        %3171 = vmatprep.mubr.bf16.mxu0 0
        %3172 = vmatmul.mubr.bf16.gmra.mxu0 %v3065
        %v3173 = vpop.f32.mrf.mxu0
        %v3174 = vadd.f32 %v2945, %v3173
        %v3175 = vpop.f32.mrf.mxu0
        %v3176 = vpop.f32.mrf.mxu0
        %v3177 = vadd.f32 %v2948, %v3176
        %v3178 = vpop.f32.mrf.mxu0
        %3179 = vmatprep.mubr.bf16.mxu0 0
        %3180 = vmatmul.mubr.bf16.gmra.mxu0 %v3067
        %v3181 = vpop.f32.mrf.mxu0
        %v3182 = vadd.f32 %v2953, %v3181
        %v3183 = vpop.f32.mrf.mxu0
        %v3184 = vpop.f32.mrf.mxu0
        %v3185 = vadd.f32 %v2956, %v3184
        %v3186 = vpop.f32.mrf.mxu0
        %3187 = vmatprep.mubr.bf16.mxu0 0
        %3188 = vmatmul.mubr.bf16.gmra.mxu0 %v3069
        %v3189 = vpop.f32.mrf.mxu0
        %v3190 = vadd.f32 %v2961, %v3189
        %v3191 = vpop.f32.mrf.mxu0
        %v3192 = vpop.f32.mrf.mxu0
        %v3193 = vadd.f32 %v2964, %v3192
        %v3194 = vpop.f32.mrf.mxu0
        %3195 = vmatprep.mubr.bf16.mxu0 0
        %3196 = vmatmul.mubr.bf16.gmra.mxu0 %v3071
        %v3197 = vpop.f32.mrf.mxu0
        %v3198 = vadd.f32 %v2969, %v3197
        %v3199 = vpop.f32.mrf.mxu0
        %v3200 = vpop.f32.mrf.mxu0
        %v3201 = vadd.f32 %v2972, %v3200
        %v3202 = vpop.f32.mrf.mxu0
        %3203 = vmatprep.mubr.bf16.mxu0 0
        %3204 = vmatmul.mubr.bf16.gmra.mxu0 %v3073
        %v3205 = vpop.f32.mrf.mxu0
        %v3206 = vadd.f32 %v2977, %v3205
        %v3207 = vpop.f32.mrf.mxu0
        %v3208 = vpop.f32.mrf.mxu0
        %v3209 = vadd.f32 %v2980, %v3208
        %v3210 = vpop.f32.mrf.mxu0
        %3211 = vmatprep.mubr.bf16.mxu0 0
        %3212 = vmatmul.mubr.bf16.gmra.mxu0 %v3075
        %v3213 = vpop.f32.mrf.mxu0
        %v3214 = vadd.f32 %v2985, %v3213
        %v3215 = vpop.f32.mrf.mxu0
        %v3216 = vpop.f32.mrf.mxu0
        %v3217 = vadd.f32 %v2988, %v3216
        %v3218 = vpop.f32.mrf.mxu0
        %3219 = vmatprep.mubr.bf16.mxu0 0
        %3220 = vmatmul.mubr.bf16.gmra.mxu0 %v3077
        %v3221 = vpop.f32.mrf.mxu0
        %v3222 = vadd.f32 %v2993, %v3221
        %v3223 = vpop.f32.mrf.mxu0
        %v3224 = vpop.f32.mrf.mxu0
        %v3225 = vadd.f32 %v2996, %v3224
        %v3226 = vpop.f32.mrf.mxu0
        %3227 = vmatprep.mubr.bf16.mxu0 0
        %3228 = vmatmul.mubr.bf16.gmra.mxu0 %v3079
        %v3229 = vpop.f32.mrf.mxu0
        %v3230 = vadd.f32 %v3001, %v3229
        %v3231 = vpop.f32.mrf.mxu0
        %v3232 = vpop.f32.mrf.mxu0
        %v3233 = vadd.f32 %v3004, %v3232
        %v3234 = vpop.f32.mrf.mxu0
        %3235 = vmatprep.mubr.bf16.mxu0 0
        %3236 = vmatmul.mubr.bf16.gmra.mxu0 %v3081
        %v3237 = vpop.f32.mrf.mxu0
        %v3238 = vadd.f32 %v3009, %v3237
        %v3239 = vpop.f32.mrf.mxu0
        %v3240 = vpop.f32.mrf.mxu0
        %v3241 = vadd.f32 %v3012, %v3240
        %v3242 = vpop.f32.mrf.mxu0
        %3243 = vdwg.mxu0
        %s3244 = scalar_lea.vmem [#allocation2], 24
        %v3245 = vld [vmem:[%s3244] sm:$0xf]
        %v3246 = vld [vmem:[%s3244 + $0x4] sm:$0xf]
        %v3247 = vld [vmem:[%s3244 + $0xc] sm:$0xf]
        %v3248 = vld [vmem:[%s3244 + $0x10] sm:$0xf]
        %v3249 = vld [vmem:[%s3244 + $0x18] sm:$0xf]
        %v3250 = vld [vmem:[%s3244 + $0x1c] sm:$0xf]
        %v3251 = vld [vmem:[%s3244 + $0x24] sm:$0xf]
        %v3252 = vld [vmem:[%s3244 + $0x28] sm:$0xf]
        %v3253 = vld [vmem:[%s3244 + $0x30] sm:$0xf]
        %v3254 = vld [vmem:[%s3244 + $0x34] sm:$0xf]
        %v3255 = vld [vmem:[%s3244 + $0x3c] sm:$0xf]
        %v3256 = vld [vmem:[%s3244 + $0x40] sm:$0xf]
        %v3257 = vld [vmem:[%s3244 + $0x48] sm:$0xf]
        %v3258 = vld [vmem:[%s3244 + $0x4c] sm:$0xf]
        %v3259 = vld [vmem:[%s3244 + $0x54] sm:$0xf]
        %v3260 = vld [vmem:[%s3244 + $0x58] sm:$0xf]
        %v3261 = vld [vmem:[%s3244 + $0x60] sm:$0xf]
        %v3262 = vld [vmem:[%s3244 + $0x64] sm:$0xf]
        %v3263 = vld [vmem:[%s3244 + $0x6c] sm:$0xf]
        %v3264 = vld [vmem:[%s3244 + $0x70] sm:$0xf]
        %v3265 = vld [vmem:[%s3244 + $0x78] sm:$0xf]
        %v3266 = vld [vmem:[%s3244 + $0x7c] sm:$0xf]
        %v3267 = vld [vmem:[%s3244 + $0x84] sm:$0xf]
        %v3268 = vld [vmem:[%s3244 + $0x88] sm:$0xf]
        %v3269 = vld [vmem:[%s3244 + $0x90] sm:$0xf]
        %v3270 = vld [vmem:[%s3244 + $0x94] sm:$0xf]
        %v3271 = vld [vmem:[%s3244 + $0x9c] sm:$0xf]
        %v3272 = vld [vmem:[%s3244 + $0xa0] sm:$0xf]
        %v3273 = vld [vmem:[%s3244 + $0xa8] sm:$0xf]
        %v3274 = vld [vmem:[%s3244 + $0xac] sm:$0xf]
        %v3275 = vld [vmem:[%s3244 + $0xb4] sm:$0xf]
        %v3276 = vld [vmem:[%s3244 + $0xb8] sm:$0xf]
        %v3277 = vld [vmem:[%s3244 + $0x8] sm:$0x1]
        %v3278 = vld [vmem:[%s3244 + $0x14] sm:$0x1]
        %v3279 = vld [vmem:[%s3244 + $0x20] sm:$0x1]
        %v3280 = vld [vmem:[%s3244 + $0x2c] sm:$0x1]
        %v3281 = vld [vmem:[%s3244 + $0x38] sm:$0x1]
        %v3282 = vld [vmem:[%s3244 + $0x44] sm:$0x1]
        %v3283 = vld [vmem:[%s3244 + $0x50] sm:$0x1]
        %v3284 = vld [vmem:[%s3244 + $0x5c] sm:$0x1]
        %v3285 = vld [vmem:[%s3244 + $0x68] sm:$0x1]
        %v3286 = vld [vmem:[%s3244 + $0x74] sm:$0x1]
        %v3287 = vld [vmem:[%s3244 + $0x80] sm:$0x1]
        %v3288 = vld [vmem:[%s3244 + $0x8c] sm:$0x1]
        %v3289 = vld [vmem:[%s3244 + $0x98] sm:$0x1]
        %v3290 = vld [vmem:[%s3244 + $0xa4] sm:$0x1]
        %v3291 = vld [vmem:[%s3244 + $0xb0] sm:$0x1]
        %v3292 = vld [vmem:[%s3244 + $0xbc] sm:$0x1]
        %v3293 = vld [vmem:[%s3244] sm:$0xe]
        %v3294 = vld [vmem:[%s3244 + $0xc] sm:$0xe]
        %v3295 = vld [vmem:[%s3244 + $0x18] sm:$0xe]
        %v3296 = vld [vmem:[%s3244 + $0x24] sm:$0xe]
        %v3297 = vld [vmem:[%s3244 + $0x30] sm:$0xe]
        %v3298 = vld [vmem:[%s3244 + $0x3c] sm:$0xe]
        %v3299 = vld [vmem:[%s3244 + $0x48] sm:$0xe]
        %v3300 = vld [vmem:[%s3244 + $0x54] sm:$0xe]
        %v3301 = vld [vmem:[%s3244 + $0x60] sm:$0xe]
        %v3302 = vld [vmem:[%s3244 + $0x6c] sm:$0xe]
        %v3303 = vld [vmem:[%s3244 + $0x78] sm:$0xe]
        %v3304 = vld [vmem:[%s3244 + $0x84] sm:$0xe]
        %v3305 = vld [vmem:[%s3244 + $0x90] sm:$0xe]
        %v3306 = vld [vmem:[%s3244 + $0x9c] sm:$0xe]
        %v3307 = vld [vmem:[%s3244 + $0xa8] sm:$0xe]
        %v3308 = vld [vmem:[%s3244 + $0xb4] sm:$0xe]
        %v3341 = vunpack.c.l.b16 %v3245
        %v3342 = vunpack.c.l.b16 %v3246
        %v3343 = vunpack.c.l.b16 %v3247
        %v3344 = vunpack.c.l.b16 %v3248
        %v3345 = vunpack.c.l.b16 %v3249
        %v3346 = vunpack.c.l.b16 %v3250
        %v3347 = vunpack.c.l.b16 %v3251
        %v3348 = vunpack.c.l.b16 %v3252
        %v3349 = vunpack.c.l.b16 %v3253
        %v3350 = vunpack.c.l.b16 %v3254
        %v3351 = vunpack.c.l.b16 %v3255
        %v3352 = vunpack.c.l.b16 %v3256
        %v3353 = vunpack.c.l.b16 %v3257
        %v3354 = vunpack.c.l.b16 %v3258
        %v3355 = vunpack.c.l.b16 %v3259
        %v3356 = vunpack.c.l.b16 %v3260
        %v3357 = vunpack.c.l.b16 %v3261
        %v3358 = vunpack.c.l.b16 %v3262
        %v3359 = vunpack.c.l.b16 %v3263
        %v3360 = vunpack.c.l.b16 %v3264
        %v3361 = vunpack.c.l.b16 %v3265
        %v3362 = vunpack.c.l.b16 %v3266
        %v3363 = vunpack.c.l.b16 %v3267
        %v3364 = vunpack.c.l.b16 %v3268
        %v3365 = vunpack.c.l.b16 %v3269
        %v3366 = vunpack.c.l.b16 %v3270
        %v3367 = vunpack.c.l.b16 %v3271
        %v3368 = vunpack.c.l.b16 %v3272
        %v3369 = vunpack.c.l.b16 %v3273
        %v3370 = vunpack.c.l.b16 %v3274
        %v3371 = vunpack.c.l.b16 %v3275
        %v3372 = vunpack.c.l.b16 %v3276
        %v3373 = vpack.c.b16 %v3342, %v3341
        %v3374 = vpack.c.b16 %v3344, %v3343
        %v3375 = vpack.c.b16 %v3346, %v3345
        %v3376 = vpack.c.b16 %v3348, %v3347
        %v3377 = vpack.c.b16 %v3350, %v3349
        %v3378 = vpack.c.b16 %v3352, %v3351
        %v3379 = vpack.c.b16 %v3354, %v3353
        %v3380 = vpack.c.b16 %v3356, %v3355
        %v3381 = vpack.c.b16 %v3358, %v3357
        %v3382 = vpack.c.b16 %v3360, %v3359
        %v3383 = vpack.c.b16 %v3362, %v3361
        %v3384 = vpack.c.b16 %v3364, %v3363
        %v3385 = vpack.c.b16 %v3366, %v3365
        %v3386 = vpack.c.b16 %v3368, %v3367
        %v3387 = vpack.c.b16 %v3370, %v3369
        %v3388 = vpack.c.b16 %v3372, %v3371
        %v3405 = vunpack.c.l.b16 %v3277
        %v3406 = vunpack.c.l.b16 %v3278
        %v3407 = vunpack.c.l.b16 %v3279
        %v3408 = vunpack.c.l.b16 %v3280
        %v3409 = vunpack.c.l.b16 %v3281
        %v3410 = vunpack.c.l.b16 %v3282
        %v3411 = vunpack.c.l.b16 %v3283
        %v3412 = vunpack.c.l.b16 %v3284
        %v3413 = vunpack.c.l.b16 %v3285
        %v3414 = vunpack.c.l.b16 %v3286
        %v3415 = vunpack.c.l.b16 %v3287
        %v3416 = vunpack.c.l.b16 %v3288
        %v3417 = vunpack.c.l.b16 %v3289
        %v3418 = vunpack.c.l.b16 %v3290
        %v3419 = vunpack.c.l.b16 %v3291
        %v3420 = vunpack.c.l.b16 %v3292
        %v3421 = vpack.c.b16 %v3405, %v3405
        %v3422 = vpack.c.b16 %v3406, %v3406
        %v3423 = vpack.c.b16 %v3407, %v3407
        %v3424 = vpack.c.b16 %v3408, %v3408
        %v3425 = vpack.c.b16 %v3409, %v3409
        %v3426 = vpack.c.b16 %v3410, %v3410
        %v3427 = vpack.c.b16 %v3411, %v3411
        %v3428 = vpack.c.b16 %v3412, %v3412
        %v3429 = vpack.c.b16 %v3413, %v3413
        %v3430 = vpack.c.b16 %v3414, %v3414
        %v3431 = vpack.c.b16 %v3415, %v3415
        %v3432 = vpack.c.b16 %v3416, %v3416
        %v3433 = vpack.c.b16 %v3417, %v3417
        %v3434 = vpack.c.b16 %v3418, %v3418
        %v3435 = vpack.c.b16 %v3419, %v3419
        %v3436 = vpack.c.b16 %v3420, %v3420
        %v3438 = vshrl.u32 %v3373, 16
        %v3440 = vshll.u32 %v3373, 16
        %v3442 = vrot.slane %v3440, 1
        %v3443 = vor.u32 %v3438, %v3442
        %v3445 = vshll.u32 %v3421, 16
        %v3447 = vrot.slane %v3445, 1
        %v3448 = vsel %vm1733, %v3443, %v3447
        %v3450 = vshrl.u32 %v3374, 16
        %v3452 = vshll.u32 %v3374, 16
        %v3454 = vrot.slane %v3452, 1
        %v3455 = vor.u32 %v3450, %v3454
        %v3457 = vshll.u32 %v3422, 16
        %v3459 = vrot.slane %v3457, 1
        %v3460 = vsel %vm1733, %v3455, %v3459
        %v3462 = vshrl.u32 %v3375, 16
        %v3464 = vshll.u32 %v3375, 16
        %v3466 = vrot.slane %v3464, 1
        %v3467 = vor.u32 %v3462, %v3466
        %v3469 = vshll.u32 %v3423, 16
        %v3471 = vrot.slane %v3469, 1
        %v3472 = vsel %vm1733, %v3467, %v3471
        %v3474 = vshrl.u32 %v3376, 16
        %v3476 = vshll.u32 %v3376, 16
        %v3478 = vrot.slane %v3476, 1
        %v3479 = vor.u32 %v3474, %v3478
        %v3481 = vshll.u32 %v3424, 16
        %v3483 = vrot.slane %v3481, 1
        %v3484 = vsel %vm1733, %v3479, %v3483
        %v3486 = vshrl.u32 %v3377, 16
        %v3488 = vshll.u32 %v3377, 16
        %v3490 = vrot.slane %v3488, 1
        %v3491 = vor.u32 %v3486, %v3490
        %v3493 = vshll.u32 %v3425, 16
        %v3495 = vrot.slane %v3493, 1
        %v3496 = vsel %vm1733, %v3491, %v3495
        %v3498 = vshrl.u32 %v3378, 16
        %v3500 = vshll.u32 %v3378, 16
        %v3502 = vrot.slane %v3500, 1
        %v3503 = vor.u32 %v3498, %v3502
        %v3505 = vshll.u32 %v3426, 16
        %v3507 = vrot.slane %v3505, 1
        %v3508 = vsel %vm1733, %v3503, %v3507
        %v3510 = vshrl.u32 %v3379, 16
        %v3512 = vshll.u32 %v3379, 16
        %v3514 = vrot.slane %v3512, 1
        %v3515 = vor.u32 %v3510, %v3514
        %v3517 = vshll.u32 %v3427, 16
        %v3519 = vrot.slane %v3517, 1
        %v3520 = vsel %vm1733, %v3515, %v3519
        %v3522 = vshrl.u32 %v3380, 16
        %v3524 = vshll.u32 %v3380, 16
        %v3526 = vrot.slane %v3524, 1
        %v3527 = vor.u32 %v3522, %v3526
        %v3529 = vshll.u32 %v3428, 16
        %v3531 = vrot.slane %v3529, 1
        %v3532 = vsel %vm1733, %v3527, %v3531
        %v3534 = vshrl.u32 %v3381, 16
        %v3536 = vshll.u32 %v3381, 16
        %v3538 = vrot.slane %v3536, 1
        %v3539 = vor.u32 %v3534, %v3538
        %v3541 = vshll.u32 %v3429, 16
        %v3543 = vrot.slane %v3541, 1
        %v3544 = vsel %vm1733, %v3539, %v3543
        %v3546 = vshrl.u32 %v3382, 16
        %v3548 = vshll.u32 %v3382, 16
        %v3550 = vrot.slane %v3548, 1
        %v3551 = vor.u32 %v3546, %v3550
        %v3553 = vshll.u32 %v3430, 16
        %v3555 = vrot.slane %v3553, 1
        %v3556 = vsel %vm1733, %v3551, %v3555
        %v3558 = vshrl.u32 %v3383, 16
        %v3560 = vshll.u32 %v3383, 16
        %v3562 = vrot.slane %v3560, 1
        %v3563 = vor.u32 %v3558, %v3562
        %v3565 = vshll.u32 %v3431, 16
        %v3567 = vrot.slane %v3565, 1
        %v3568 = vsel %vm1733, %v3563, %v3567
        %v3570 = vshrl.u32 %v3384, 16
        %v3572 = vshll.u32 %v3384, 16
        %v3574 = vrot.slane %v3572, 1
        %v3575 = vor.u32 %v3570, %v3574
        %v3577 = vshll.u32 %v3432, 16
        %v3579 = vrot.slane %v3577, 1
        %v3580 = vsel %vm1733, %v3575, %v3579
        %v3582 = vshrl.u32 %v3385, 16
        %v3584 = vshll.u32 %v3385, 16
        %v3586 = vrot.slane %v3584, 1
        %v3587 = vor.u32 %v3582, %v3586
        %v3589 = vshll.u32 %v3433, 16
        %v3591 = vrot.slane %v3589, 1
        %v3592 = vsel %vm1733, %v3587, %v3591
        %v3594 = vshrl.u32 %v3386, 16
        %v3596 = vshll.u32 %v3386, 16
        %v3598 = vrot.slane %v3596, 1
        %v3599 = vor.u32 %v3594, %v3598
        %v3601 = vshll.u32 %v3434, 16
        %v3603 = vrot.slane %v3601, 1
        %v3604 = vsel %vm1733, %v3599, %v3603
        %v3606 = vshrl.u32 %v3387, 16
        %v3608 = vshll.u32 %v3387, 16
        %v3610 = vrot.slane %v3608, 1
        %v3611 = vor.u32 %v3606, %v3610
        %v3613 = vshll.u32 %v3435, 16
        %v3615 = vrot.slane %v3613, 1
        %v3616 = vsel %vm1733, %v3611, %v3615
        %v3618 = vshrl.u32 %v3388, 16
        %v3620 = vshll.u32 %v3388, 16
        %v3622 = vrot.slane %v3620, 1
        %v3623 = vor.u32 %v3618, %v3622
        %v3625 = vshll.u32 %v3436, 16
        %v3627 = vrot.slane %v3625, 1
        %v3628 = vsel %vm1733, %v3623, %v3627
        %3629 = vrot.lane.b32.xlu0 %v3448, 32
        %v3630 = vpop.permute.xlu0 %3629
        %3631 = vrot.lane.b32.xlu0 %v3460, 32
        %v3632 = vpop.permute.xlu0 %3631
        %3633 = vrot.lane.b32.xlu0 %v3472, 32
        %v3634 = vpop.permute.xlu0 %3633
        %3635 = vrot.lane.b32.xlu0 %v3484, 32
        %v3636 = vpop.permute.xlu0 %3635
        %3637 = vrot.lane.b32.xlu0 %v3496, 32
        %v3638 = vpop.permute.xlu0 %3637
        %3639 = vrot.lane.b32.xlu0 %v3508, 32
        %v3640 = vpop.permute.xlu0 %3639
        %3641 = vrot.lane.b32.xlu0 %v3520, 32
        %v3642 = vpop.permute.xlu0 %3641
        %3643 = vrot.lane.b32.xlu0 %v3532, 32
        %v3644 = vpop.permute.xlu0 %3643
        %3645 = vrot.lane.b32.xlu0 %v3544, 32
        %v3646 = vpop.permute.xlu0 %3645
        %3647 = vrot.lane.b32.xlu0 %v3556, 32
        %v3648 = vpop.permute.xlu0 %3647
        %3649 = vrot.lane.b32.xlu0 %v3568, 32
        %v3650 = vpop.permute.xlu0 %3649
        %3651 = vrot.lane.b32.xlu0 %v3580, 32
        %v3652 = vpop.permute.xlu0 %3651
        %3653 = vrot.lane.b32.xlu0 %v3592, 32
        %v3654 = vpop.permute.xlu0 %3653
        %3655 = vrot.lane.b32.xlu0 %v3604, 32
        %v3656 = vpop.permute.xlu0 %3655
        %3657 = vrot.lane.b32.xlu0 %v3616, 32
        %v3658 = vpop.permute.xlu0 %3657
        %3659 = vrot.lane.b32.xlu0 %v3628, 32
        %v3660 = vpop.permute.xlu0 %3659
        %v3677 = vunpack.c.l.b16 %v3293
        %v3678 = vunpack.c.l.b16 %v3294
        %v3679 = vunpack.c.l.b16 %v3295
        %v3680 = vunpack.c.l.b16 %v3296
        %v3681 = vunpack.c.l.b16 %v3297
        %v3682 = vunpack.c.l.b16 %v3298
        %v3683 = vunpack.c.l.b16 %v3299
        %v3684 = vunpack.c.l.b16 %v3300
        %v3685 = vunpack.c.l.b16 %v3301
        %v3686 = vunpack.c.l.b16 %v3302
        %v3687 = vunpack.c.l.b16 %v3303
        %v3688 = vunpack.c.l.b16 %v3304
        %v3689 = vunpack.c.l.b16 %v3305
        %v3690 = vunpack.c.l.b16 %v3306
        %v3691 = vunpack.c.l.b16 %v3307
        %v3692 = vunpack.c.l.b16 %v3308
        %v3693 = vpack.c.b16 %v3342, %v3677
        %v3694 = vpack.c.b16 %v3344, %v3678
        %v3695 = vpack.c.b16 %v3346, %v3679
        %v3696 = vpack.c.b16 %v3348, %v3680
        %v3697 = vpack.c.b16 %v3350, %v3681
        %v3698 = vpack.c.b16 %v3352, %v3682
        %v3699 = vpack.c.b16 %v3354, %v3683
        %v3700 = vpack.c.b16 %v3356, %v3684
        %v3701 = vpack.c.b16 %v3358, %v3685
        %v3702 = vpack.c.b16 %v3360, %v3686
        %v3703 = vpack.c.b16 %v3362, %v3687
        %v3704 = vpack.c.b16 %v3364, %v3688
        %v3705 = vpack.c.b16 %v3366, %v3689
        %v3706 = vpack.c.b16 %v3368, %v3690
        %v3707 = vpack.c.b16 %v3370, %v3691
        %v3708 = vpack.c.b16 %v3372, %v3692
        %v3709 = vrot.slane %v3693, 1
        %v3710 = vrot.slane %v3421, 1
        %v3711 = vsel %vm2006, %v3709, %v3710
        %v3712 = vrot.slane %v3694, 1
        %v3713 = vrot.slane %v3422, 1
        %v3714 = vsel %vm2006, %v3712, %v3713
        %v3715 = vrot.slane %v3695, 1
        %v3716 = vrot.slane %v3423, 1
        %v3717 = vsel %vm2006, %v3715, %v3716
        %v3718 = vrot.slane %v3696, 1
        %v3719 = vrot.slane %v3424, 1
        %v3720 = vsel %vm2006, %v3718, %v3719
        %v3721 = vrot.slane %v3697, 1
        %v3722 = vrot.slane %v3425, 1
        %v3723 = vsel %vm2006, %v3721, %v3722
        %v3724 = vrot.slane %v3698, 1
        %v3725 = vrot.slane %v3426, 1
        %v3726 = vsel %vm2006, %v3724, %v3725
        %v3727 = vrot.slane %v3699, 1
        %v3728 = vrot.slane %v3427, 1
        %v3729 = vsel %vm2006, %v3727, %v3728
        %v3730 = vrot.slane %v3700, 1
        %v3731 = vrot.slane %v3428, 1
        %v3732 = vsel %vm2006, %v3730, %v3731
        %v3733 = vrot.slane %v3701, 1
        %v3734 = vrot.slane %v3429, 1
        %v3735 = vsel %vm2006, %v3733, %v3734
        %v3736 = vrot.slane %v3702, 1
        %v3737 = vrot.slane %v3430, 1
        %v3738 = vsel %vm2006, %v3736, %v3737
        %v3739 = vrot.slane %v3703, 1
        %v3740 = vrot.slane %v3431, 1
        %v3741 = vsel %vm2006, %v3739, %v3740
        %v3742 = vrot.slane %v3704, 1
        %v3743 = vrot.slane %v3432, 1
        %v3744 = vsel %vm2006, %v3742, %v3743
        %v3745 = vrot.slane %v3705, 1
        %v3746 = vrot.slane %v3433, 1
        %v3747 = vsel %vm2006, %v3745, %v3746
        %v3748 = vrot.slane %v3706, 1
        %v3749 = vrot.slane %v3434, 1
        %v3750 = vsel %vm2006, %v3748, %v3749
        %v3751 = vrot.slane %v3707, 1
        %v3752 = vrot.slane %v3435, 1
        %v3753 = vsel %vm2006, %v3751, %v3752
        %v3754 = vrot.slane %v3708, 1
        %v3755 = vrot.slane %v3436, 1
        %v3756 = vsel %vm2006, %v3754, %v3755
        %3757 = vrot.lane.b32.xlu0 %v3711, 64
        %v3758 = vpop.permute.xlu0 %3757
        %3759 = vrot.lane.b32.xlu0 %v3714, 64
        %v3760 = vpop.permute.xlu0 %3759
        %3761 = vrot.lane.b32.xlu0 %v3717, 64
        %v3762 = vpop.permute.xlu0 %3761
        %3763 = vrot.lane.b32.xlu0 %v3720, 64
        %v3764 = vpop.permute.xlu0 %3763
        %3765 = vrot.lane.b32.xlu0 %v3723, 64
        %v3766 = vpop.permute.xlu0 %3765
        %3767 = vrot.lane.b32.xlu0 %v3726, 64
        %v3768 = vpop.permute.xlu0 %3767
        %3769 = vrot.lane.b32.xlu0 %v3729, 64
        %v3770 = vpop.permute.xlu0 %3769
        %3771 = vrot.lane.b32.xlu0 %v3732, 64
        %v3772 = vpop.permute.xlu0 %3771
        %3773 = vrot.lane.b32.xlu0 %v3735, 64
        %v3774 = vpop.permute.xlu0 %3773
        %3775 = vrot.lane.b32.xlu0 %v3738, 64
        %v3776 = vpop.permute.xlu0 %3775
        %3777 = vrot.lane.b32.xlu0 %v3741, 64
        %v3778 = vpop.permute.xlu0 %3777
        %3779 = vrot.lane.b32.xlu0 %v3744, 64
        %v3780 = vpop.permute.xlu0 %3779
        %3781 = vrot.lane.b32.xlu0 %v3747, 64
        %v3782 = vpop.permute.xlu0 %3781
        %3783 = vrot.lane.b32.xlu0 %v3750, 64
        %v3784 = vpop.permute.xlu0 %3783
        %3785 = vrot.lane.b32.xlu0 %v3753, 64
        %v3786 = vpop.permute.xlu0 %3785
        %3787 = vrot.lane.b32.xlu0 %v3756, 64
        %v3788 = vpop.permute.xlu0 %3787
        %v3790 = vsel %vm280, %v3373, %v3630
        %v3792 = vsel %vm280, %v3374, %v3632
        %v3794 = vsel %vm280, %v3375, %v3634
        %v3796 = vsel %vm280, %v3376, %v3636
        %v3798 = vsel %vm280, %v3377, %v3638
        %v3800 = vsel %vm280, %v3378, %v3640
        %v3802 = vsel %vm280, %v3379, %v3642
        %v3804 = vsel %vm280, %v3380, %v3644
        %v3806 = vsel %vm280, %v3381, %v3646
        %v3808 = vsel %vm280, %v3382, %v3648
        %v3810 = vsel %vm280, %v3383, %v3650
        %v3812 = vsel %vm280, %v3384, %v3652
        %v3814 = vsel %vm280, %v3385, %v3654
        %v3816 = vsel %vm280, %v3386, %v3656
        %v3818 = vsel %vm280, %v3387, %v3658
        %v3820 = vsel %vm280, %v3388, %v3660
        %v3822 = vsel %vm2119, %v3790, %v3758
        %v3824 = vsel %vm2119, %v3792, %v3760
        %v3826 = vsel %vm2119, %v3794, %v3762
        %v3828 = vsel %vm2119, %v3796, %v3764
        %v3830 = vsel %vm2119, %v3798, %v3766
        %v3832 = vsel %vm2119, %v3800, %v3768
        %v3834 = vsel %vm2119, %v3802, %v3770
        %v3836 = vsel %vm2119, %v3804, %v3772
        %v3838 = vsel %vm2119, %v3806, %v3774
        %v3840 = vsel %vm2119, %v3808, %v3776
        %v3842 = vsel %vm2119, %v3810, %v3778
        %v3844 = vsel %vm2119, %v3812, %v3780
        %v3846 = vsel %vm2119, %v3814, %v3782
        %v3848 = vsel %vm2119, %v3816, %v3784
        %v3850 = vsel %vm2119, %v3818, %v3786
        %v3852 = vsel %vm2119, %v3820, %v3788
        %s3853 = scalar_lea.vmem %s3, 96
        %v3854 = vld [vmem:[%s3853] sm:$0xf]
        %v3855 = vld [vmem:[%s3853 + $0x4] sm:$0xf]
        %v3856 = vld [vmem:[%s3853 + $0x8] sm:$0xf]
        %v3857 = vld [vmem:[%s3853 + $0xc] sm:$0xf]
        %v3858 = vld [vmem:[%s3853 + $0x10] sm:$0xf]
        %v3859 = vld [vmem:[%s3853 + $0x14] sm:$0xf]
        %v3860 = vld [vmem:[%s3853 + $0x18] sm:$0xf]
        %v3861 = vld [vmem:[%s3853 + $0x1c] sm:$0xf]
        %v3862 = vld [vmem:[%s3853 + $0x20] sm:$0xf]
        %v3863 = vld [vmem:[%s3853 + $0x24] sm:$0xf]
        %v3864 = vld [vmem:[%s3853 + $0x28] sm:$0xf]
        %v3865 = vld [vmem:[%s3853 + $0x2c] sm:$0xf]
        %v3878 = vunpack.c.l.b16 %v3854
        %v3879 = vunpack.c.l.b16 %v3855
        %v3880 = vunpack.c.l.b16 %v3856
        %v3881 = vunpack.c.l.b16 %v3857
        %v3882 = vunpack.c.l.b16 %v3858
        %v3883 = vunpack.c.l.b16 %v3859
        %v3884 = vunpack.c.l.b16 %v3860
        %v3885 = vunpack.c.l.b16 %v3861
        %v3886 = vunpack.c.l.b16 %v3862
        %v3887 = vunpack.c.l.b16 %v3863
        %v3888 = vunpack.c.l.b16 %v3864
        %v3889 = vunpack.c.l.b16 %v3865
        %v3890 = vpack.c.b16 %v3879, %v3878
        %v3891 = vpack.c.b16 %v3881, %v3880
        %v3892 = vpack.c.b16 %v3883, %v3882
        %v3893 = vpack.c.b16 %v3885, %v3884
        %v3894 = vpack.c.b16 %v3887, %v3886
        %v3895 = vpack.c.b16 %v3889, %v3888
        %v3902 = vsel %vm2821, %v3822, 0
        %v3904 = vsel %vm2821, %v3824, 0
        %v3906 = vsel %vm2821, %v3826, 0
        %v3908 = vsel %vm2821, %v3828, 0
        %v3910 = vsel %vm2821, %v3830, 0
        %v3912 = vsel %vm2821, %v3832, 0
        %v3914 = vsel %vm2821, %v3834, 0
        %v3916 = vsel %vm2821, %v3836, 0
        %v3918 = vsel %vm2821, %v3838, 0
        %v3920 = vsel %vm2821, %v3840, 0
        %v3922 = vsel %vm2821, %v3842, 0
        %v3924 = vsel %vm2821, %v3844, 0
        %v3926 = vsel %vm2821, %v3846, 0
        %v3928 = vsel %vm2821, %v3848, 0
        %v3930 = vsel %vm2821, %v3850, 0
        %v3932 = vsel %vm2821, %v3852, 0
        %3934 = vmatprep.subr.bf16.mxu0 0
        %3935 = vmatpush1.bf16.msra.mxu0 0
        %3936 = vmatprep.subr.bf16.mxu0 0
        %3937 = vmatpush1.bf16.msra.mxu0 0
        %3938 = vmatprep.subr.bf16.mxu0 0
        %3939 = vmatpush1.bf16.msra.mxu0 %v3895
        %3940 = vmatprep.subr.bf16.mxu0 0
        %3941 = vmatpush1.bf16.msra.mxu0 %v3894
        %3942 = vmatprep.subr.bf16.mxu0 0
        %3943 = vmatpush1.bf16.msra.mxu0 %v3893
        %3944 = vmatprep.subr.bf16.mxu0 0
        %3945 = vmatpush1.bf16.msra.mxu0 %v3892
        %3946 = vmatprep.subr.bf16.mxu0 0
        %3947 = vmatpush1.bf16.msra.mxu0 %v3891
        %3948 = vmatprep.subr.bf16.mxu0 0
        %3949 = vmatpush1.bf16.msra.mxu0 %v3890
        %3950 = vmatprep.subr.bf16.mxu0 0
        %3951 = vmatpush2.bf16.msra.mxu0 0
        %3952 = vmatprep.subr.bf16.mxu0 0
        %3953 = vmatpush2.bf16.msra.mxu0 0
        %3954 = vmatprep.subr.bf16.mxu0 0
        %3955 = vmatpush2.bf16.msra.mxu0 0
        %3956 = vmatprep.subr.bf16.mxu0 0
        %3957 = vmatpush2.bf16.msra.mxu0 0
        %3958 = vmatprep.subr.bf16.mxu0 0
        %3959 = vmatpush2.bf16.msra.mxu0 0
        %3960 = vmatprep.subr.bf16.mxu0 0
        %3961 = vmatpush2.bf16.msra.mxu0 0
        %3962 = vmatprep.subr.bf16.mxu0 0
        %3963 = vmatpush2.bf16.msra.mxu0 0
        %3964 = vmatprep.subr.bf16.mxu0 0
        %3965 = vmatpush2.bf16.msra.mxu0 0
        %3966 = vmatprep.mubr.bf16.mxu0 0
        %3967 = vmatmul.mubr.bf16.gmra.mxu0 %v3902
        %v3968 = vpop.f32.mrf.mxu0
        %v3969 = vadd.f32 0.0, %v3968
        %v3970 = vpop.f32.mrf.mxu0
        %v3971 = vpop.f32.mrf.mxu0
        %v3972 = vadd.f32 0.0, %v3971
        %v3973 = vpop.f32.mrf.mxu0
        %3974 = vmatprep.mubr.bf16.mxu0 0
        %3975 = vmatmul.mubr.bf16.gmra.mxu0 %v3904
        %v3976 = vpop.f32.mrf.mxu0
        %v3977 = vadd.f32 0.0, %v3976
        %v3978 = vpop.f32.mrf.mxu0
        %v3979 = vpop.f32.mrf.mxu0
        %v3980 = vadd.f32 0.0, %v3979
        %v3981 = vpop.f32.mrf.mxu0
        %3982 = vmatprep.mubr.bf16.mxu0 0
        %3983 = vmatmul.mubr.bf16.gmra.mxu0 %v3906
        %v3984 = vpop.f32.mrf.mxu0
        %v3985 = vadd.f32 0.0, %v3984
        %v3986 = vpop.f32.mrf.mxu0
        %v3987 = vpop.f32.mrf.mxu0
        %v3988 = vadd.f32 0.0, %v3987
        %v3989 = vpop.f32.mrf.mxu0
        %3990 = vmatprep.mubr.bf16.mxu0 0
        %3991 = vmatmul.mubr.bf16.gmra.mxu0 %v3908
        %v3992 = vpop.f32.mrf.mxu0
        %v3993 = vadd.f32 0.0, %v3992
        %v3994 = vpop.f32.mrf.mxu0
        %v3995 = vpop.f32.mrf.mxu0
        %v3996 = vadd.f32 0.0, %v3995
        %v3997 = vpop.f32.mrf.mxu0
        %3998 = vmatprep.mubr.bf16.mxu0 0
        %3999 = vmatmul.mubr.bf16.gmra.mxu0 %v3910
        %v4000 = vpop.f32.mrf.mxu0
        %v4001 = vadd.f32 0.0, %v4000
        %v4002 = vpop.f32.mrf.mxu0
        %v4003 = vpop.f32.mrf.mxu0
        %v4004 = vadd.f32 0.0, %v4003
        %v4005 = vpop.f32.mrf.mxu0
        %4006 = vmatprep.mubr.bf16.mxu0 0
        %4007 = vmatmul.mubr.bf16.gmra.mxu0 %v3912
        %v4008 = vpop.f32.mrf.mxu0
        %v4009 = vadd.f32 0.0, %v4008
        %v4010 = vpop.f32.mrf.mxu0
        %v4011 = vpop.f32.mrf.mxu0
        %v4012 = vadd.f32 0.0, %v4011
        %v4013 = vpop.f32.mrf.mxu0
        %4014 = vmatprep.mubr.bf16.mxu0 0
        %4015 = vmatmul.mubr.bf16.gmra.mxu0 %v3914
        %v4016 = vpop.f32.mrf.mxu0
        %v4017 = vadd.f32 0.0, %v4016
        %v4018 = vpop.f32.mrf.mxu0
        %v4019 = vpop.f32.mrf.mxu0
        %v4020 = vadd.f32 0.0, %v4019
        %v4021 = vpop.f32.mrf.mxu0
        %4022 = vmatprep.mubr.bf16.mxu0 0
        %4023 = vmatmul.mubr.bf16.gmra.mxu0 %v3916
        %v4024 = vpop.f32.mrf.mxu0
        %v4025 = vadd.f32 0.0, %v4024
        %v4026 = vpop.f32.mrf.mxu0
        %v4027 = vpop.f32.mrf.mxu0
        %v4028 = vadd.f32 0.0, %v4027
        %v4029 = vpop.f32.mrf.mxu0
        %4030 = vmatprep.mubr.bf16.mxu0 0
        %4031 = vmatmul.mubr.bf16.gmra.mxu0 %v3918
        %v4032 = vpop.f32.mrf.mxu0
        %v4033 = vadd.f32 0.0, %v4032
        %v4034 = vpop.f32.mrf.mxu0
        %v4035 = vpop.f32.mrf.mxu0
        %v4036 = vadd.f32 0.0, %v4035
        %v4037 = vpop.f32.mrf.mxu0
        %4038 = vmatprep.mubr.bf16.mxu0 0
        %4039 = vmatmul.mubr.bf16.gmra.mxu0 %v3920
        %v4040 = vpop.f32.mrf.mxu0
        %v4041 = vadd.f32 0.0, %v4040
        %v4042 = vpop.f32.mrf.mxu0
        %v4043 = vpop.f32.mrf.mxu0
        %v4044 = vadd.f32 0.0, %v4043
        %v4045 = vpop.f32.mrf.mxu0
        %4046 = vmatprep.mubr.bf16.mxu0 0
        %4047 = vmatmul.mubr.bf16.gmra.mxu0 %v3922
        %v4048 = vpop.f32.mrf.mxu0
        %v4049 = vadd.f32 0.0, %v4048
        %v4050 = vpop.f32.mrf.mxu0
        %v4051 = vpop.f32.mrf.mxu0
        %v4052 = vadd.f32 0.0, %v4051
        %v4053 = vpop.f32.mrf.mxu0
        %4054 = vmatprep.mubr.bf16.mxu0 0
        %4055 = vmatmul.mubr.bf16.gmra.mxu0 %v3924
        %v4056 = vpop.f32.mrf.mxu0
        %v4057 = vadd.f32 0.0, %v4056
        %v4058 = vpop.f32.mrf.mxu0
        %v4059 = vpop.f32.mrf.mxu0
        %v4060 = vadd.f32 0.0, %v4059
        %v4061 = vpop.f32.mrf.mxu0
        %4062 = vmatprep.mubr.bf16.mxu0 0
        %4063 = vmatmul.mubr.bf16.gmra.mxu0 %v3926
        %v4064 = vpop.f32.mrf.mxu0
        %v4065 = vadd.f32 0.0, %v4064
        %v4066 = vpop.f32.mrf.mxu0
        %v4067 = vpop.f32.mrf.mxu0
        %v4068 = vadd.f32 0.0, %v4067
        %v4069 = vpop.f32.mrf.mxu0
        %4070 = vmatprep.mubr.bf16.mxu0 0
        %4071 = vmatmul.mubr.bf16.gmra.mxu0 %v3928
        %v4072 = vpop.f32.mrf.mxu0
        %v4073 = vadd.f32 0.0, %v4072
        %v4074 = vpop.f32.mrf.mxu0
        %v4075 = vpop.f32.mrf.mxu0
        %v4076 = vadd.f32 0.0, %v4075
        %v4077 = vpop.f32.mrf.mxu0
        %4078 = vmatprep.mubr.bf16.mxu0 0
        %4079 = vmatmul.mubr.bf16.gmra.mxu0 %v3930
        %v4080 = vpop.f32.mrf.mxu0
        %v4081 = vadd.f32 0.0, %v4080
        %v4082 = vpop.f32.mrf.mxu0
        %v4083 = vpop.f32.mrf.mxu0
        %v4084 = vadd.f32 0.0, %v4083
        %v4085 = vpop.f32.mrf.mxu0
        %4086 = vmatprep.mubr.bf16.mxu0 0
        %4087 = vmatmul.mubr.bf16.gmra.mxu0 %v3932
        %v4088 = vpop.f32.mrf.mxu0
        %v4089 = vadd.f32 0.0, %v4088
        %v4090 = vpop.f32.mrf.mxu0
        %v4091 = vpop.f32.mrf.mxu0
        %v4092 = vadd.f32 0.0, %v4091
        %v4093 = vpop.f32.mrf.mxu0
        %4094 = vdwg.mxu0
        %v4095 = vadd.f32 %v3118, %v3969
        %v4096 = vadd.f32 %v3121, %v3972
        %v4097 = vadd.f32 %v3126, %v3977
        %v4098 = vadd.f32 %v3129, %v3980
        %v4099 = vadd.f32 %v3134, %v3985
        %v4100 = vadd.f32 %v3137, %v3988
        %v4101 = vadd.f32 %v3142, %v3993
        %v4102 = vadd.f32 %v3145, %v3996
        %v4103 = vadd.f32 %v3150, %v4001
        %v4104 = vadd.f32 %v3153, %v4004
        %v4105 = vadd.f32 %v3158, %v4009
        %v4106 = vadd.f32 %v3161, %v4012
        %v4107 = vadd.f32 %v3166, %v4017
        %v4108 = vadd.f32 %v3169, %v4020
        %v4109 = vadd.f32 %v3174, %v4025
        %v4110 = vadd.f32 %v3177, %v4028
        %v4111 = vadd.f32 %v3182, %v4033
        %v4112 = vadd.f32 %v3185, %v4036
        %v4113 = vadd.f32 %v3190, %v4041
        %v4114 = vadd.f32 %v3193, %v4044
        %v4115 = vadd.f32 %v3198, %v4049
        %v4116 = vadd.f32 %v3201, %v4052
        %v4117 = vadd.f32 %v3206, %v4057
        %v4118 = vadd.f32 %v3209, %v4060
        %v4119 = vadd.f32 %v3214, %v4065
        %v4120 = vadd.f32 %v3217, %v4068
        %v4121 = vadd.f32 %v3222, %v4073
        %v4122 = vadd.f32 %v3225, %v4076
        %v4123 = vadd.f32 %v3230, %v4081
        %v4124 = vadd.f32 %v3233, %v4084
        %v4125 = vadd.f32 %v3238, %v4089
        %v4126 = vadd.f32 %v3241, %v4092
        %v4128 = vlaneseq
        %v4129 = vshrl.u32 %v4128, 7
        %v4130 = vsub.s32 0, %v4129
        %v4131 = vrot.slane %v901, %v4130
        %v4133 = vadd.f32 %v4095, %v4131
        %v4134 = vadd.f32 %v4096, %v4131
        %v4135 = vadd.f32 %v4097, %v4131
        %v4136 = vadd.f32 %v4098, %v4131
        %v4137 = vadd.f32 %v4099, %v4131
        %v4138 = vadd.f32 %v4100, %v4131
        %v4139 = vadd.f32 %v4101, %v4131
        %v4140 = vadd.f32 %v4102, %v4131
        %v4141 = vadd.f32 %v4103, %v4131
        %v4142 = vadd.f32 %v4104, %v4131
        %v4143 = vadd.f32 %v4105, %v4131
        %v4144 = vadd.f32 %v4106, %v4131
        %v4145 = vadd.f32 %v4107, %v4131
        %v4146 = vadd.f32 %v4108, %v4131
        %v4147 = vadd.f32 %v4109, %v4131
        %v4148 = vadd.f32 %v4110, %v4131
        %v4149 = vadd.f32 %v4111, %v4131
        %v4150 = vadd.f32 %v4112, %v4131
        %v4151 = vadd.f32 %v4113, %v4131
        %v4152 = vadd.f32 %v4114, %v4131
        %v4153 = vadd.f32 %v4115, %v4131
        %v4154 = vadd.f32 %v4116, %v4131
        %v4155 = vadd.f32 %v4117, %v4131
        %v4156 = vadd.f32 %v4118, %v4131
        %v4157 = vadd.f32 %v4119, %v4131
        %v4158 = vadd.f32 %v4120, %v4131
        %v4159 = vadd.f32 %v4121, %v4131
        %v4160 = vadd.f32 %v4122, %v4131
        %v4161 = vadd.f32 %v4123, %v4131
        %v4162 = vadd.f32 %v4124, %v4131
        %v4163 = vadd.f32 %v4125, %v4131
        %v4164 = vadd.f32 %v4126, %v4131
        %v4165 = vpack.c.bf16 %v4134, %v4133
        %v4166 = vpack.c.bf16 %v4136, %v4135
        %v4167 = vpack.c.bf16 %v4138, %v4137
        %v4168 = vpack.c.bf16 %v4140, %v4139
        %v4169 = vpack.c.bf16 %v4142, %v4141
        %v4170 = vpack.c.bf16 %v4144, %v4143
        %v4171 = vpack.c.bf16 %v4146, %v4145
        %v4172 = vpack.c.bf16 %v4148, %v4147
        %v4173 = vpack.c.bf16 %v4150, %v4149
        %v4174 = vpack.c.bf16 %v4152, %v4151
        %v4175 = vpack.c.bf16 %v4154, %v4153
        %v4176 = vpack.c.bf16 %v4156, %v4155
        %v4177 = vpack.c.bf16 %v4158, %v4157
        %v4178 = vpack.c.bf16 %v4160, %v4159
        %v4179 = vpack.c.bf16 %v4162, %v4161
        %v4180 = vpack.c.bf16 %v4164, %v4163
        %v4197 = vunpack.c.l.b16 %v4165
        %v4198 = vunpack.c.h.b16 %v4165
        %v4199 = vunpack.c.l.b16 %v4166
        %v4200 = vunpack.c.h.b16 %v4166
        %v4201 = vunpack.c.l.b16 %v4167
        %v4202 = vunpack.c.h.b16 %v4167
        %v4203 = vunpack.c.l.b16 %v4168
        %v4204 = vunpack.c.h.b16 %v4168
        %v4205 = vunpack.c.l.b16 %v4169
        %v4206 = vunpack.c.h.b16 %v4169
        %v4207 = vunpack.c.l.b16 %v4170
        %v4208 = vunpack.c.h.b16 %v4170
        %v4209 = vunpack.c.l.b16 %v4171
        %v4210 = vunpack.c.h.b16 %v4171
        %v4211 = vunpack.c.l.b16 %v4172
        %v4212 = vunpack.c.h.b16 %v4172
        %v4213 = vunpack.c.l.b16 %v4173
        %v4214 = vunpack.c.h.b16 %v4173
        %v4215 = vunpack.c.l.b16 %v4174
        %v4216 = vunpack.c.h.b16 %v4174
        %v4217 = vunpack.c.l.b16 %v4175
        %v4218 = vunpack.c.h.b16 %v4175
        %v4219 = vunpack.c.l.b16 %v4176
        %v4220 = vunpack.c.h.b16 %v4176
        %v4221 = vunpack.c.l.b16 %v4177
        %v4222 = vunpack.c.h.b16 %v4177
        %v4223 = vunpack.c.l.b16 %v4178
        %v4224 = vunpack.c.h.b16 %v4178
        %v4225 = vunpack.c.l.b16 %v4179
        %v4226 = vunpack.c.h.b16 %v4179
        %v4227 = vunpack.c.l.b16 %v4180
        %v4228 = vunpack.c.h.b16 %v4180
        %v4229 = vpack.c.b16 %v4197, %v4197
        %v4230 = vpack.c.b16 %v4198, %v4198
        %v4231 = vpack.c.b16 %v4199, %v4199
        %v4232 = vpack.c.b16 %v4200, %v4200
        %v4233 = vpack.c.b16 %v4201, %v4201
        %v4234 = vpack.c.b16 %v4202, %v4202
        %v4235 = vpack.c.b16 %v4203, %v4203
        %v4236 = vpack.c.b16 %v4204, %v4204
        %v4237 = vpack.c.b16 %v4205, %v4205
        %v4238 = vpack.c.b16 %v4206, %v4206
        %v4239 = vpack.c.b16 %v4207, %v4207
        %v4240 = vpack.c.b16 %v4208, %v4208
        %v4241 = vpack.c.b16 %v4209, %v4209
        %v4242 = vpack.c.b16 %v4210, %v4210
        %v4243 = vpack.c.b16 %v4211, %v4211
        %v4244 = vpack.c.b16 %v4212, %v4212
        %v4245 = vpack.c.b16 %v4213, %v4213
        %v4246 = vpack.c.b16 %v4214, %v4214
        %v4247 = vpack.c.b16 %v4215, %v4215
        %v4248 = vpack.c.b16 %v4216, %v4216
        %v4249 = vpack.c.b16 %v4217, %v4217
        %v4250 = vpack.c.b16 %v4218, %v4218
        %v4251 = vpack.c.b16 %v4219, %v4219
        %v4252 = vpack.c.b16 %v4220, %v4220
        %v4253 = vpack.c.b16 %v4221, %v4221
        %v4254 = vpack.c.b16 %v4222, %v4222
        %v4255 = vpack.c.b16 %v4223, %v4223
        %v4256 = vpack.c.b16 %v4224, %v4224
        %v4257 = vpack.c.b16 %v4225, %v4225
        %v4258 = vpack.c.b16 %v4226, %v4226
        %v4259 = vpack.c.b16 %v4227, %v4227
        %v4260 = vpack.c.b16 %v4228, %v4228
        %vm4293 = vcmask 519168
        %4294 = vst.msk [vmem:[%s244] sm:$0xf] %vm4293, %v4229
        %4295 = vst.msk [vmem:[%s244 + $0x4] sm:$0xf] %vm4293, %v4230
        %4296 = vst.msk [vmem:[%s244 + $0x8] sm:$0xf] %vm4293, %v4231
        %4297 = vst.msk [vmem:[%s244 + $0xc] sm:$0xf] %vm4293, %v4232
        %4298 = vst.msk [vmem:[%s244 + $0x10] sm:$0xf] %vm4293, %v4233
        %4299 = vst.msk [vmem:[%s244 + $0x14] sm:$0xf] %vm4293, %v4234
        %4300 = vst.msk [vmem:[%s244 + $0x18] sm:$0xf] %vm4293, %v4235
        %4301 = vst.msk [vmem:[%s244 + $0x1c] sm:$0xf] %vm4293, %v4236
        %4302 = vst.msk [vmem:[%s244 + $0x20] sm:$0xf] %vm4293, %v4237
        %4303 = vst.msk [vmem:[%s244 + $0x24] sm:$0xf] %vm4293, %v4238
        %4304 = vst.msk [vmem:[%s244 + $0x28] sm:$0xf] %vm4293, %v4239
        %4305 = vst.msk [vmem:[%s244 + $0x2c] sm:$0xf] %vm4293, %v4240
        %4306 = vst.msk [vmem:[%s244 + $0x30] sm:$0xf] %vm4293, %v4241
        %4307 = vst.msk [vmem:[%s244 + $0x34] sm:$0xf] %vm4293, %v4242
        %4308 = vst.msk [vmem:[%s244 + $0x38] sm:$0xf] %vm4293, %v4243
        %4309 = vst.msk [vmem:[%s244 + $0x3c] sm:$0xf] %vm4293, %v4244
        %4310 = vst.msk [vmem:[%s244 + $0x40] sm:$0xf] %vm4293, %v4245
        %4311 = vst.msk [vmem:[%s244 + $0x44] sm:$0xf] %vm4293, %v4246
        %4312 = vst.msk [vmem:[%s244 + $0x48] sm:$0xf] %vm4293, %v4247
        %4313 = vst.msk [vmem:[%s244 + $0x4c] sm:$0xf] %vm4293, %v4248
        %4314 = vst.msk [vmem:[%s244 + $0x50] sm:$0xf] %vm4293, %v4249
        %4315 = vst.msk [vmem:[%s244 + $0x54] sm:$0xf] %vm4293, %v4250
        %4316 = vst.msk [vmem:[%s244 + $0x58] sm:$0xf] %vm4293, %v4251
        %4317 = vst.msk [vmem:[%s244 + $0x5c] sm:$0xf] %vm4293, %v4252
        %4318 = vst.msk [vmem:[%s244 + $0x60] sm:$0xf] %vm4293, %v4253
        %4319 = vst.msk [vmem:[%s244 + $0x64] sm:$0xf] %vm4293, %v4254
        %4320 = vst.msk [vmem:[%s244 + $0x68] sm:$0xf] %vm4293, %v4255
        %4321 = vst.msk [vmem:[%s244 + $0x6c] sm:$0xf] %vm4293, %v4256
        %4322 = vst.msk [vmem:[%s244 + $0x70] sm:$0xf] %vm4293, %v4257
        %4323 = vst.msk [vmem:[%s244 + $0x74] sm:$0xf] %vm4293, %v4258
        %4324 = vst.msk [vmem:[%s244 + $0x78] sm:$0xf] %vm4293, %v4259
        %4325 = vst.msk [vmem:[%s244 + $0x7c] sm:$0xf] %vm4293, %v4260
        %p4326 = scmp.lt.s32.totalorder %s19, 1
        %s4327 = scalar_select %p4326, %s19, 1
        %s4328 = smul.addr %s4327, 32
        %s4329 = smul.addr %s4328, 4
        %s4330 = scalar_lea.vmem %s5, %s4329
        // Predicated region
        $region45: #{resnet_block_forward.2} parent=39 // pred_check
          %p4331 = pneg %p147
        $region46: #{resnet_block_forward.2} parent=39 // pred_check_branch
          %4333 = sbr.rel (%p4331) target = $region48
        $region47: #{resnet_block_forward.2} parent=39 // pred_region
          _
        $region48: #{resnet_block_forward.2} parent=39 // pred_fallthru
          _
      $region40: #{resnet_block_forward.2} parent=5 // pred_fallthru
        _
      %p4334 = scmp.le.s32.totalorder 2, %s14
      // Predicated region
      $region49: #{resnet_block_forward.2} parent=5 // pred_check
        %p4335 = pneg %p4334
      $region50: #{resnet_block_forward.2} parent=5 // pred_check_branch
        %4337 = sbr.rel (%p4335) target = $region52
      $region51: #{resnet_block_forward.2} parent=5 // pred_region
        %s4338 = ssub.s32 %s14, 2
        // Predicated region
        $region53: #{resnet_block_forward.2} parent=51 // pred_check
          %p4339 = pneg %p153
        $region54: #{resnet_block_forward.2} parent=51 // pred_check_branch
          %4341 = sbr.rel (%p4339) target = $region56
        $region55: #{resnet_block_forward.2} parent=51 // pred_region
          %p4342 = scmp.lt.s32.totalorder %s20, 1
          %s4343 = scalar_select %p4342, %s20, 1
          %s4344 = smul.addr %s4343, 32
          %s4345 = smul.addr %s4344, 4
          %s4346 = scalar_lea.vmem %s5, %s4345
        $region56: #{resnet_block_forward.2} parent=51 // pred_fallthru
          _
      $region52: #{resnet_block_forward.2} parent=5 // pred_fallthru
        _
    $region6: #{resnet_block_forward.2} parent=1 // loop_footer
      %s18 = sadd.s32 1, %s14
    $region7: #{resnet_block_forward.2} parent=1 // loop_footer_branch
      %13 = sbr.rel target = $region3
    $region8: #{resnet_block_forward.2} parent=1 // loop_exit
      _
    %4347 = vsyncpa [#allocation4], 1
    %s4348 = scalar_lea.sflag [#allocation4], 1
    %4349 = vsyncpa %s4348, 1

// kernel: resnet_block_forward.3
$region0: #{resnet_block_forward.3}
  #allocation0 [shape = 'u32[]', space=smem, size = 0x4, offset = 0x4, fixed_abs, tag = 'smem constant byte address 0x4 - core index']
  #allocation1 [shape = 'u32[144,128]{1,0:T(1,128)}', space=vmem, size = 0x12000, scoped, tag = 'internal scratch']
  #allocation2 [shape = 'bf16[18,18,64]{2,1,0:T(8,128)(2,1)}', space=vmem, size = 0x1b000, scoped, tag = 'scratch operand']
  %s0 = inlined_call_operand.vmem [shape: bf16[2,16,16,64], index: 0, kind: input, shape index: {}]
  %s1 = inlined_call_operand.vmem [shape: f32[2,16,16,32], index: 1, kind: input, shape index: {}]
  %s2 = inlined_call_operand.vmem [shape: f32[1,64], index: 2, kind: input, shape index: {}]
  %s3 = inlined_call_operand.vmem [shape: f32[1,64], index: 3, kind: input, shape index: {}]
  %s4 = inlined_call_operand.vmem [shape: bf16[3,192,64], index: 4, kind: input, shape index: {}]
  %s5 = inlined_call_operand.vmem [shape: f32[1,64], index: 5, kind: input, shape index: {}]
  %s6 = inlined_call_operand.vmem [shape: bf16[32,64], index: 6, kind: input, shape index: {}]
  %s7 = inlined_call_operand.vmem [shape: f32[1,64], index: 7, kind: input, shape index: {}]
  %s8 = inlined_call_operand.hbm [shape: f32[2,16,16,64], index: 8, kind: output, shape index: {}]
  %s9 = sld [smem:[#allocation0]]
  $region65: #{resnet_block_forward.3} parent=0
    _
  %s11 = ssub.s32 1, %s9
  %s12 = scalar_select 0, %s11, %s9
  $region1: #{resnet_block_forward.3} parent=0
    #allocation3 [shape = 'u8[262144]{0}', space=vmem, size = 0x40000, scoped, tag = 'output window, operand 0']
    #allocation4 [shape = 's32[2]{0}', space=sflag, size = 0x8, scoped, tag = 'scoped memory for resnet_block_forward.3']
    %13 = vsyncpa [#allocation4], 0
    %s14 = scalar_lea.sflag [#allocation4], 1
    %15 = vsyncpa %s14, 0
    loop: start=0, step=1, limit=4
    $region2: #{resnet_block_forward.3} parent=1 // loop_pre_header
      _
    $region3: #{resnet_block_forward.3} parent=1 // loop_header
      %s17 = sphi 0, %s21
      %p18 = scmp.ge.s32.totalorder %s17, 4
      %s27 = sphi 0, %s29
      %s30 = sphi 0, %s27
      %s31 = sphi 0, %s30
      %s47 = sphi 0, %s31
      %s53 = sphi 0, %s55
      %s56 = sphi 0, %s53
      %s57 = sphi 0, %s56
      %s73 = sphi 0, %s57
      %s77 = sphi 0, %s77
      %s79 = sphi 0, %s77
      %s80 = sphi 0, %s79
      %s94 = sphi 0, %s80
      %s98 = sphi 0, %s98
      %s100 = sphi 0, %s98
      %s101 = sphi 0, %s100
      %s115 = sphi 0, %s101
      %s119 = sphi 0, %s119
      %s121 = sphi 0, %s119
      %s122 = sphi 0, %s121
      %s136 = sphi 0, %s122
      %s140 = sphi 0, %s140
      %s142 = sphi 0, %s140
      %s143 = sphi 0, %s142
      %s157 = sphi 0, %s143
      %s161 = sphi 0, %s161
      %s163 = sphi 0, %s161
      %s164 = sphi 0, %s163
      %s178 = sphi 0, %s164
      %s182 = sphi 0, %s182
      %s184 = sphi 0, %s182
      %s185 = sphi 0, %s184
      %s199 = sphi 0, %s185
      %s205 = sphi 0, %s207
      %s208 = sphi 0, %s205
      %s209 = sphi 0, %s208
      %s225 = sphi 0, %s209
    $region4: #{resnet_block_forward.3} parent=1 // loop_header_branch
      %20 = sbr.rel (%p18) target = $region8
    $region5: #{resnet_block_forward.3} parent=1 // loop_body
      %s22 = ssub.s32 %s17, 1
      %s23 = ssub.s32 %s17, 2
      %s24 = sadd.s32 %s17, 1
      %s25 = ssub.s32 %s17, %s24
      %p26 = scmp.eq.s32.totalorder %s25, 0
      %s28 = sadd.s32 %s27, 1
      %s29 = scalar_select %p26, %s27, %s28
      %p32 = pneg %p26
      %p33 = scmp.eq.s32.totalorder %s17, 1
      %p34 = por %p32, %p33
      %p35 = scmp.ne.s32.totalorder %s27, %s30
      %p36 = scmp.eq.s32.totalorder %s17, 0
      %p37 = por %p35, %p36
      %p38 = scmp.ne.s32.totalorder %s27, %s30
      %p39 = scmp.eq.s32.totalorder %s22, 1
      %p40 = por %p38, %p39
      %p41 = scmp.ne.s32.totalorder %s30, %s31
      %p42 = scmp.eq.s32.totalorder %s22, 0
      %p43 = por %p41, %p42
      %p44 = scmp.ne.s32.totalorder %s30, %s31
      %p45 = scmp.eq.s32.totalorder %s23, 1
      %p46 = por %p44, %p45
      %p48 = scmp.ne.s32.totalorder %s31, %s47
      %p49 = scmp.eq.s32.totalorder %s23, 0
      %p50 = por %p48, %p49
      %s51 = ssub.s32 %s17, %s24
      %p52 = scmp.eq.s32.totalorder %s51, 0
      %s54 = sadd.s32 %s53, 1
      %s55 = scalar_select %p52, %s53, %s54
      %p58 = pneg %p52
      %p59 = scmp.eq.s32.totalorder %s17, 1
      %p60 = por %p58, %p59
      %p61 = scmp.ne.s32.totalorder %s53, %s56
      %p62 = scmp.eq.s32.totalorder %s17, 0
      %p63 = por %p61, %p62
      %p64 = scmp.ne.s32.totalorder %s53, %s56
      %p65 = scmp.eq.s32.totalorder %s22, 1
      %p66 = por %p64, %p65
      %p67 = scmp.ne.s32.totalorder %s56, %s57
      %p68 = scmp.eq.s32.totalorder %s22, 0
      %p69 = por %p67, %p68
      %p70 = scmp.ne.s32.totalorder %s56, %s57
      %p71 = scmp.eq.s32.totalorder %s23, 1
      %p72 = por %p70, %p71
      %p74 = scmp.ne.s32.totalorder %s57, %s73
      %p75 = scmp.eq.s32.totalorder %s23, 0
      %p76 = por %p74, %p75
      %s78 = sadd.s32 %s77, 1
      %p81 = scmp.eq.s32.totalorder %s17, 1
      %p82 = scmp.ne.s32.totalorder %s77, %s79
      %p83 = scmp.eq.s32.totalorder %s17, 0
      %p84 = por %p82, %p83
      %p85 = scmp.ne.s32.totalorder %s77, %s79
      %p86 = scmp.eq.s32.totalorder %s22, 1
      %p87 = por %p85, %p86
      %p88 = scmp.ne.s32.totalorder %s79, %s80
      %p89 = scmp.eq.s32.totalorder %s22, 0
      %p90 = por %p88, %p89
      %p91 = scmp.ne.s32.totalorder %s79, %s80
      %p92 = scmp.eq.s32.totalorder %s23, 1
      %p93 = por %p91, %p92
      %p95 = scmp.ne.s32.totalorder %s80, %s94
      %p96 = scmp.eq.s32.totalorder %s23, 0
      %p97 = por %p95, %p96
      %s99 = sadd.s32 %s98, 1
      %p102 = scmp.eq.s32.totalorder %s17, 1
      %p103 = scmp.ne.s32.totalorder %s98, %s100
      %p104 = scmp.eq.s32.totalorder %s17, 0
      %p105 = por %p103, %p104
      %p106 = scmp.ne.s32.totalorder %s98, %s100
      %p107 = scmp.eq.s32.totalorder %s22, 1
      %p108 = por %p106, %p107
      %p109 = scmp.ne.s32.totalorder %s100, %s101
      %p110 = scmp.eq.s32.totalorder %s22, 0
      %p111 = por %p109, %p110
      %p112 = scmp.ne.s32.totalorder %s100, %s101
      %p113 = scmp.eq.s32.totalorder %s23, 1
      %p114 = por %p112, %p113
      %p116 = scmp.ne.s32.totalorder %s101, %s115
      %p117 = scmp.eq.s32.totalorder %s23, 0
      %p118 = por %p116, %p117
      %s120 = sadd.s32 %s119, 1
      %p123 = scmp.eq.s32.totalorder %s17, 1
      %p124 = scmp.ne.s32.totalorder %s119, %s121
      %p125 = scmp.eq.s32.totalorder %s17, 0
      %p126 = por %p124, %p125
      %p127 = scmp.ne.s32.totalorder %s119, %s121
      %p128 = scmp.eq.s32.totalorder %s22, 1
      %p129 = por %p127, %p128
      %p130 = scmp.ne.s32.totalorder %s121, %s122
      %p131 = scmp.eq.s32.totalorder %s22, 0
      %p132 = por %p130, %p131
      %p133 = scmp.ne.s32.totalorder %s121, %s122
      %p134 = scmp.eq.s32.totalorder %s23, 1
      %p135 = por %p133, %p134
      %p137 = scmp.ne.s32.totalorder %s122, %s136
      %p138 = scmp.eq.s32.totalorder %s23, 0
      %p139 = por %p137, %p138
      %s141 = sadd.s32 %s140, 1
      %p144 = scmp.eq.s32.totalorder %s17, 1
      %p145 = scmp.ne.s32.totalorder %s140, %s142
      %p146 = scmp.eq.s32.totalorder %s17, 0
      %p147 = por %p145, %p146
      %p148 = scmp.ne.s32.totalorder %s140, %s142
      %p149 = scmp.eq.s32.totalorder %s22, 1
      %p150 = por %p148, %p149
      %p151 = scmp.ne.s32.totalorder %s142, %s143
      %p152 = scmp.eq.s32.totalorder %s22, 0
      %p153 = por %p151, %p152
      %p154 = scmp.ne.s32.totalorder %s142, %s143
      %p155 = scmp.eq.s32.totalorder %s23, 1
      %p156 = por %p154, %p155
      %p158 = scmp.ne.s32.totalorder %s143, %s157
      %p159 = scmp.eq.s32.totalorder %s23, 0
      %p160 = por %p158, %p159
      %s162 = sadd.s32 %s161, 1
      %p165 = scmp.eq.s32.totalorder %s17, 1
      %p166 = scmp.ne.s32.totalorder %s161, %s163
      %p167 = scmp.eq.s32.totalorder %s17, 0
      %p168 = por %p166, %p167
      %p169 = scmp.ne.s32.totalorder %s161, %s163
      %p170 = scmp.eq.s32.totalorder %s22, 1
      %p171 = por %p169, %p170
      %p172 = scmp.ne.s32.totalorder %s163, %s164
      %p173 = scmp.eq.s32.totalorder %s22, 0
      %p174 = por %p172, %p173
      %p175 = scmp.ne.s32.totalorder %s163, %s164
      %p176 = scmp.eq.s32.totalorder %s23, 1
      %p177 = por %p175, %p176
      %p179 = scmp.ne.s32.totalorder %s164, %s178
      %p180 = scmp.eq.s32.totalorder %s23, 0
      %p181 = por %p179, %p180
      %s183 = sadd.s32 %s182, 1
      %p186 = scmp.eq.s32.totalorder %s17, 1
      %p187 = scmp.ne.s32.totalorder %s182, %s184
      %p188 = scmp.eq.s32.totalorder %s17, 0
      %p189 = por %p187, %p188
      %p190 = scmp.ne.s32.totalorder %s182, %s184
      %p191 = scmp.eq.s32.totalorder %s22, 1
      %p192 = por %p190, %p191
      %p193 = scmp.ne.s32.totalorder %s184, %s185
      %p194 = scmp.eq.s32.totalorder %s22, 0
      %p195 = por %p193, %p194
      %p196 = scmp.ne.s32.totalorder %s184, %s185
      %p197 = scmp.eq.s32.totalorder %s23, 1
      %p198 = por %p196, %p197
      %p200 = scmp.ne.s32.totalorder %s185, %s199
      %p201 = scmp.eq.s32.totalorder %s23, 0
      %p202 = por %p200, %p201
      %s203 = ssub.s32 %s17, %s24
      %p204 = scmp.eq.s32.totalorder %s203, 0
      %s206 = sadd.s32 %s205, 1
      %s207 = scalar_select %p204, %s205, %s206
      %p210 = pneg %p204
      %p211 = scmp.eq.s32.totalorder %s17, 1
      %p212 = por %p210, %p211
      %p213 = scmp.ne.s32.totalorder %s205, %s208
      %p214 = scmp.eq.s32.totalorder %s17, 0
      %p215 = por %p213, %p214
      %p216 = scmp.ne.s32.totalorder %s205, %s208
      %p217 = scmp.eq.s32.totalorder %s22, 1
      %p218 = por %p216, %p217
      %p219 = scmp.ne.s32.totalorder %s208, %s209
      %p220 = scmp.eq.s32.totalorder %s22, 0
      %p221 = por %p219, %p220
      %p222 = scmp.ne.s32.totalorder %s208, %s209
      %p223 = scmp.eq.s32.totalorder %s23, 1
      %p224 = por %p222, %p223
      %p226 = scmp.ne.s32.totalorder %s209, %s225
      %p227 = scmp.eq.s32.totalorder %s23, 0
      %p228 = por %p226, %p227
      %p229 = scmp.le.s32.totalorder 1, %s17
      %p230 = scmp.lt.s32.totalorder %s17, 3
      %p231 = pnand %p229, %p230
      %p232 = pneg %p231
      // Predicated region
      $region9: #{resnet_block_forward.3} parent=5 // pred_check
        _
      $region10: #{resnet_block_forward.3} parent=5 // pred_check_branch
        %234 = sbr.rel (%p231) target = $region12
      $region11: #{resnet_block_forward.3} parent=5 // pred_region
        %s235 = ssub.s32 %s17, 1
        // Predicated region
        $region13: #{resnet_block_forward.3} parent=11 // pred_check
          %p236 = pneg %p90
        $region14: #{resnet_block_forward.3} parent=11 // pred_check_branch
          %238 = sbr.rel (%p236) target = $region16
        $region15: #{resnet_block_forward.3} parent=11 // pred_region
          _
        $region16: #{resnet_block_forward.3} parent=11 // pred_fallthru
          _
        // Predicated region
        $region17: #{resnet_block_forward.3} parent=11 // pred_check
          %p239 = pneg %p111
        $region18: #{resnet_block_forward.3} parent=11 // pred_check_branch
          %241 = sbr.rel (%p239) target = $region20
        $region19: #{resnet_block_forward.3} parent=11 // pred_region
          _
        $region20: #{resnet_block_forward.3} parent=11 // pred_fallthru
          _
        // Predicated region
        $region21: #{resnet_block_forward.3} parent=11 // pred_check
          %p242 = pneg %p132
        $region22: #{resnet_block_forward.3} parent=11 // pred_check_branch
          %244 = sbr.rel (%p242) target = $region24
        $region23: #{resnet_block_forward.3} parent=11 // pred_region
          _
        $region24: #{resnet_block_forward.3} parent=11 // pred_fallthru
          _
        // Predicated region
        $region25: #{resnet_block_forward.3} parent=11 // pred_check
          %p245 = pneg %p153
        $region26: #{resnet_block_forward.3} parent=11 // pred_check_branch
          %247 = sbr.rel (%p245) target = $region28
        $region27: #{resnet_block_forward.3} parent=11 // pred_region
          _
        $region28: #{resnet_block_forward.3} parent=11 // pred_fallthru
          _
        // Predicated region
        $region29: #{resnet_block_forward.3} parent=11 // pred_check
          %p248 = pneg %p174
        $region30: #{resnet_block_forward.3} parent=11 // pred_check_branch
          %250 = sbr.rel (%p248) target = $region32
        $region31: #{resnet_block_forward.3} parent=11 // pred_region
          _
        $region32: #{resnet_block_forward.3} parent=11 // pred_fallthru
          _
        // Predicated region
        $region33: #{resnet_block_forward.3} parent=11 // pred_check
          %p251 = pneg %p195
        $region34: #{resnet_block_forward.3} parent=11 // pred_check_branch
          %253 = sbr.rel (%p251) target = $region36
        $region35: #{resnet_block_forward.3} parent=11 // pred_region
          _
        $region36: #{resnet_block_forward.3} parent=11 // pred_fallthru
          _
      $region12: #{resnet_block_forward.3} parent=5 // pred_fallthru
        _
      %p254 = scmp.lt.s32.totalorder %s17, 2
      // Predicated region
      $region37: #{resnet_block_forward.3} parent=5 // pred_check
        %p255 = pneg %p254
      $region38: #{resnet_block_forward.3} parent=5 // pred_check_branch
        %257 = sbr.rel (%p255) target = $region40
      $region39: #{resnet_block_forward.3} parent=5 // pred_region
        // Predicated region
        $region41: #{resnet_block_forward.3} parent=39 // pred_check
          %p258 = pneg %p37
        $region42: #{resnet_block_forward.3} parent=39 // pred_check_branch
          %260 = sbr.rel (%p258) target = $region44
        $region43: #{resnet_block_forward.3} parent=39 // pred_region
          %p261 = scmp.lt.s32.totalorder %s17, 1
          %s262 = scalar_select %p261, %s17, 1
          %s263 = smul.addr %s262, 32
          %s264 = smul.addr %s263, 4
          %s265 = scalar_lea.vmem %s0, %s264
        $region44: #{resnet_block_forward.3} parent=39 // pred_fallthru
          _
        // Predicated region
        $region45: #{resnet_block_forward.3} parent=39 // pred_check
          %p266 = pneg %p63
        $region46: #{resnet_block_forward.3} parent=39 // pred_check_branch
          %268 = sbr.rel (%p266) target = $region48
        $region47: #{resnet_block_forward.3} parent=39 // pred_region
          %p269 = scmp.lt.s32.totalorder %s17, 1
          %s270 = scalar_select %p269, %s17, 1
          %s271 = smul.addr %s270, 32
          %s272 = smul.addr %s271, 8
          %s273 = scalar_lea.vmem %s1, %s272
        $region48: #{resnet_block_forward.3} parent=39 // pred_fallthru
          _
      $region40: #{resnet_block_forward.3} parent=5 // pred_fallthru
        _
      %p274 = scmp.le.s32.totalorder 1, %s17
      %p275 = scmp.lt.s32.totalorder %s17, 3
      %p276 = pnand %p274, %p275
      %p277 = pneg %p276
      // Predicated region
      $region49: #{resnet_block_forward.3} parent=5 // pred_check
        _
      $region50: #{resnet_block_forward.3} parent=5 // pred_check_branch
        %279 = sbr.rel (%p276) target = $region52
      $region51: #{resnet_block_forward.3} parent=5 // pred_region
        %s280 = ssub.s32 %s17, 1
        %p281 = scmp.lt.s32.totalorder %s22, 1
        %s282 = scalar_select %p281, %s22, 1
        %s283 = smul.addr %s282, 32
        %s284 = smul.addr %s283, 4
        %s285 = scalar_lea.vmem %s0, %s284
        %p286 = pneg %p43
        %p287 = pneg %p40
        %p288 = scmp.lt.s32.totalorder %s22, 1
        %s289 = scalar_select %p288, %s22, 1
        %s290 = smul.addr %s289, 32
        %s291 = smul.addr %s290, 8
        %s292 = scalar_lea.vmem %s1, %s291
        %p293 = pneg %p69
        %p294 = pneg %p66
        %p295 = pneg %p90
        %p296 = pneg %p87
        %p297 = pneg %p111
        %p298 = pneg %p108
        %p299 = pneg %p132
        %p300 = pneg %p129
        %p301 = pneg %p153
        %p302 = pneg %p150
        %p303 = pneg %p174
        %p304 = pneg %p171
        %p305 = pneg %p195
        %p306 = pneg %p192
        %p307 = pneg %p221
        %p308 = pneg %p218
        %s309 = sand.u32 %s208, 1
        %s310 = scalar_lea.sflag [#allocation4], %s309
        %s311 = sand.u32 %s208, 1
        %s312 = smul.addr %s311, 256
        %s313 = scalar_lea.vmem [#allocation3], %s312
        %p314 = scmp.lt.s32.totalorder %s22, 1
        %s315 = scalar_select %p314, %s22, 1
        %s316 = smul.addr %s315, 32
        %s317 = smul.addr %s316, 4
        %s318 = scalar_lea.vmem %s0, %s317
        %p319 = scmp.lt.s32.totalorder %s22, 1
        %s320 = scalar_select %p319, %s22, 1
        %s321 = smul.addr %s320, 32
        %s322 = smul.addr %s321, 8
        %s323 = scalar_lea.vmem %s1, %s322
        %v325 = vld [vmem:[%s318] sm:$0xf]
        %v326 = vld [vmem:[%s318 + $0x4] sm:$0xf]
        %v327 = vld [vmem:[%s318 + $0x8] sm:$0xf]
        %v328 = vld [vmem:[%s318 + $0xc] sm:$0xf]
        %v329 = vld [vmem:[%s318 + $0x10] sm:$0xf]
        %v330 = vld [vmem:[%s318 + $0x14] sm:$0xf]
        %v331 = vld [vmem:[%s318 + $0x18] sm:$0xf]
        %v332 = vld [vmem:[%s318 + $0x1c] sm:$0xf]
        %v333 = vld [vmem:[%s318 + $0x20] sm:$0xf]
        %v334 = vld [vmem:[%s318 + $0x24] sm:$0xf]
        %v335 = vld [vmem:[%s318 + $0x28] sm:$0xf]
        %v336 = vld [vmem:[%s318 + $0x2c] sm:$0xf]
        %v337 = vld [vmem:[%s318 + $0x30] sm:$0xf]
        %v338 = vld [vmem:[%s318 + $0x34] sm:$0xf]
        %v339 = vld [vmem:[%s318 + $0x38] sm:$0xf]
        %v340 = vld [vmem:[%s318 + $0x3c] sm:$0xf]
        %v341 = vld [vmem:[%s318 + $0x40] sm:$0xf]
        %v342 = vld [vmem:[%s318 + $0x44] sm:$0xf]
        %v343 = vld [vmem:[%s318 + $0x48] sm:$0xf]
        %v344 = vld [vmem:[%s318 + $0x4c] sm:$0xf]
        %v345 = vld [vmem:[%s318 + $0x50] sm:$0xf]
        %v346 = vld [vmem:[%s318 + $0x54] sm:$0xf]
        %v347 = vld [vmem:[%s318 + $0x58] sm:$0xf]
        %v348 = vld [vmem:[%s318 + $0x5c] sm:$0xf]
        %v349 = vld [vmem:[%s318 + $0x60] sm:$0xf]
        %v350 = vld [vmem:[%s318 + $0x64] sm:$0xf]
        %v351 = vld [vmem:[%s318 + $0x68] sm:$0xf]
        %v352 = vld [vmem:[%s318 + $0x6c] sm:$0xf]
        %v353 = vld [vmem:[%s318 + $0x70] sm:$0xf]
        %v354 = vld [vmem:[%s318 + $0x74] sm:$0xf]
        %v355 = vld [vmem:[%s318 + $0x78] sm:$0xf]
        %v356 = vld [vmem:[%s318 + $0x7c] sm:$0xf]
        %v357 = vunpack.c.l.bf16 %v325
        %v358 = vunpack.c.l.bf16 %v326
        %v359 = vunpack.c.l.bf16 %v327
        %v360 = vunpack.c.l.bf16 %v328
        %v361 = vunpack.c.l.bf16 %v329
        %v362 = vunpack.c.l.bf16 %v330
        %v363 = vunpack.c.l.bf16 %v331
        %v364 = vunpack.c.l.bf16 %v332
        %v365 = vunpack.c.l.bf16 %v333
        %v366 = vunpack.c.l.bf16 %v334
        %v367 = vunpack.c.l.bf16 %v335
        %v368 = vunpack.c.l.bf16 %v336
        %v369 = vunpack.c.l.bf16 %v337
        %v370 = vunpack.c.l.bf16 %v338
        %v371 = vunpack.c.l.bf16 %v339
        %v372 = vunpack.c.l.bf16 %v340
        %v373 = vunpack.c.l.bf16 %v341
        %v374 = vunpack.c.l.bf16 %v342
        %v375 = vunpack.c.l.bf16 %v343
        %v376 = vunpack.c.l.bf16 %v344
        %v377 = vunpack.c.l.bf16 %v345
        %v378 = vunpack.c.l.bf16 %v346
        %v379 = vunpack.c.l.bf16 %v347
        %v380 = vunpack.c.l.bf16 %v348
        %v381 = vunpack.c.l.bf16 %v349
        %v382 = vunpack.c.l.bf16 %v350
        %v383 = vunpack.c.l.bf16 %v351
        %v384 = vunpack.c.l.bf16 %v352
        %v385 = vunpack.c.l.bf16 %v353
        %v386 = vunpack.c.l.bf16 %v354
        %v387 = vunpack.c.l.bf16 %v355
        %v388 = vunpack.c.l.bf16 %v356
        %v389 = vld [vmem:[%s2] sm:$0x1]
        %v390 = vld [vmem:[%s3] sm:$0x1]
        %vm391 = vcmask 523264
        %v392 = vsel %vm391, %v357, 0.0
        %v393 = vsel %vm391, %v358, 0.0
        %v394 = vadd.f32 %v392, %v393
        %v395 = vsel %vm391, %v359, 0.0
        %v396 = vadd.f32 %v394, %v395
        %v397 = vsel %vm391, %v360, 0.0
        %v398 = vadd.f32 %v396, %v397
        %v399 = vsel %vm391, %v361, 0.0
        %v400 = vadd.f32 %v398, %v399
        %v401 = vsel %vm391, %v362, 0.0
        %v402 = vadd.f32 %v400, %v401
        %v403 = vsel %vm391, %v363, 0.0
        %v404 = vadd.f32 %v402, %v403
        %v405 = vsel %vm391, %v364, 0.0
        %v406 = vadd.f32 %v404, %v405
        %v407 = vsel %vm391, %v365, 0.0
        %v408 = vadd.f32 %v406, %v407
        %v409 = vsel %vm391, %v366, 0.0
        %v410 = vadd.f32 %v408, %v409
        %v411 = vsel %vm391, %v367, 0.0
        %v412 = vadd.f32 %v410, %v411
        %v413 = vsel %vm391, %v368, 0.0
        %v414 = vadd.f32 %v412, %v413
        %v415 = vsel %vm391, %v369, 0.0
        %v416 = vadd.f32 %v414, %v415
        %v417 = vsel %vm391, %v370, 0.0
        %v418 = vadd.f32 %v416, %v417
        %v419 = vsel %vm391, %v371, 0.0
        %v420 = vadd.f32 %v418, %v419
        %v421 = vsel %vm391, %v372, 0.0
        %v422 = vadd.f32 %v420, %v421
        %v423 = vsel %vm391, %v373, 0.0
        %v424 = vadd.f32 %v422, %v423
        %v425 = vsel %vm391, %v374, 0.0
        %v426 = vadd.f32 %v424, %v425
        %v427 = vsel %vm391, %v375, 0.0
        %v428 = vadd.f32 %v426, %v427
        %v429 = vsel %vm391, %v376, 0.0
        %v430 = vadd.f32 %v428, %v429
        %v431 = vsel %vm391, %v377, 0.0
        %v432 = vadd.f32 %v430, %v431
        %v433 = vsel %vm391, %v378, 0.0
        %v434 = vadd.f32 %v432, %v433
        %v435 = vsel %vm391, %v379, 0.0
        %v436 = vadd.f32 %v434, %v435
        %v437 = vsel %vm391, %v380, 0.0
        %v438 = vadd.f32 %v436, %v437
        %v439 = vsel %vm391, %v381, 0.0
        %v440 = vadd.f32 %v438, %v439
        %v441 = vsel %vm391, %v382, 0.0
        %v442 = vadd.f32 %v440, %v441
        %v443 = vsel %vm391, %v383, 0.0
        %v444 = vadd.f32 %v442, %v443
        %v445 = vsel %vm391, %v384, 0.0
        %v446 = vadd.f32 %v444, %v445
        %v447 = vsel %vm391, %v385, 0.0
        %v448 = vadd.f32 %v446, %v447
        %v449 = vsel %vm391, %v386, 0.0
        %v450 = vadd.f32 %v448, %v449
        %v451 = vsel %vm391, %v387, 0.0
        %v452 = vadd.f32 %v450, %v451
        %v453 = vsel %vm391, %v388, 0.0
        %v454 = vadd.f32 %v452, %v453
        %v455 = vrot.slane %v454, 4
        %v456 = vadd.f32 %v454, %v455
        %v457 = vrot.slane %v456, 2
        %v458 = vadd.f32 %v456, %v457
        %v459 = vrot.slane %v458, 1
        %v460 = vadd.f32 %v458, %v459
        %v461 = vmul.f32 %v357, %v357
        %v462 = vmul.f32 %v358, %v358
        %v463 = vmul.f32 %v359, %v359
        %v464 = vmul.f32 %v360, %v360
        %v465 = vmul.f32 %v361, %v361
        %v466 = vmul.f32 %v362, %v362
        %v467 = vmul.f32 %v363, %v363
        %v468 = vmul.f32 %v364, %v364
        %v469 = vmul.f32 %v365, %v365
        %v470 = vmul.f32 %v366, %v366
        %v471 = vmul.f32 %v367, %v367
        %v472 = vmul.f32 %v368, %v368
        %v473 = vmul.f32 %v369, %v369
        %v474 = vmul.f32 %v370, %v370
        %v475 = vmul.f32 %v371, %v371
        %v476 = vmul.f32 %v372, %v372
        %v477 = vmul.f32 %v373, %v373
        %v478 = vmul.f32 %v374, %v374
        %v479 = vmul.f32 %v375, %v375
        %v480 = vmul.f32 %v376, %v376
        %v481 = vmul.f32 %v377, %v377
        %v482 = vmul.f32 %v378, %v378
        %v483 = vmul.f32 %v379, %v379
        %v484 = vmul.f32 %v380, %v380
        %v485 = vmul.f32 %v381, %v381
        %v486 = vmul.f32 %v382, %v382
        %v487 = vmul.f32 %v383, %v383
        %v488 = vmul.f32 %v384, %v384
        %v489 = vmul.f32 %v385, %v385
        %v490 = vmul.f32 %v386, %v386
        %v491 = vmul.f32 %v387, %v387
        %v492 = vmul.f32 %v388, %v388
        %v493 = vsel %vm391, %v461, 0.0
        %v494 = vsel %vm391, %v462, 0.0
        %v495 = vadd.f32 %v493, %v494
        %v496 = vsel %vm391, %v463, 0.0
        %v497 = vadd.f32 %v495, %v496
        %v498 = vsel %vm391, %v464, 0.0
        %v499 = vadd.f32 %v497, %v498
        %v500 = vsel %vm391, %v465, 0.0
        %v501 = vadd.f32 %v499, %v500
        %v502 = vsel %vm391, %v466, 0.0
        %v503 = vadd.f32 %v501, %v502
        %v504 = vsel %vm391, %v467, 0.0
        %v505 = vadd.f32 %v503, %v504
        %v506 = vsel %vm391, %v468, 0.0
        %v507 = vadd.f32 %v505, %v506
        %v508 = vsel %vm391, %v469, 0.0
        %v509 = vadd.f32 %v507, %v508
        %v510 = vsel %vm391, %v470, 0.0
        %v511 = vadd.f32 %v509, %v510
        %v512 = vsel %vm391, %v471, 0.0
        %v513 = vadd.f32 %v511, %v512
        %v514 = vsel %vm391, %v472, 0.0
        %v515 = vadd.f32 %v513, %v514
        %v516 = vsel %vm391, %v473, 0.0
        %v517 = vadd.f32 %v515, %v516
        %v518 = vsel %vm391, %v474, 0.0
        %v519 = vadd.f32 %v517, %v518
        %v520 = vsel %vm391, %v475, 0.0
        %v521 = vadd.f32 %v519, %v520
        %v522 = vsel %vm391, %v476, 0.0
        %v523 = vadd.f32 %v521, %v522
        %v524 = vsel %vm391, %v477, 0.0
        %v525 = vadd.f32 %v523, %v524
        %v526 = vsel %vm391, %v478, 0.0
        %v527 = vadd.f32 %v525, %v526
        %v528 = vsel %vm391, %v479, 0.0
        %v529 = vadd.f32 %v527, %v528
        %v530 = vsel %vm391, %v480, 0.0
        %v531 = vadd.f32 %v529, %v530
        %v532 = vsel %vm391, %v481, 0.0
        %v533 = vadd.f32 %v531, %v532
        %v534 = vsel %vm391, %v482, 0.0
        %v535 = vadd.f32 %v533, %v534
        %v536 = vsel %vm391, %v483, 0.0
        %v537 = vadd.f32 %v535, %v536
        %v538 = vsel %vm391, %v484, 0.0
        %v539 = vadd.f32 %v537, %v538
        %v540 = vsel %vm391, %v485, 0.0
        %v541 = vadd.f32 %v539, %v540
        %v542 = vsel %vm391, %v486, 0.0
        %v543 = vadd.f32 %v541, %v542
        %v544 = vsel %vm391, %v487, 0.0
        %v545 = vadd.f32 %v543, %v544
        %v546 = vsel %vm391, %v488, 0.0
        %v547 = vadd.f32 %v545, %v546
        %v548 = vsel %vm391, %v489, 0.0
        %v549 = vadd.f32 %v547, %v548
        %v550 = vsel %vm391, %v490, 0.0
        %v551 = vadd.f32 %v549, %v550
        %v552 = vsel %vm391, %v491, 0.0
        %v553 = vadd.f32 %v551, %v552
        %v554 = vsel %vm391, %v492, 0.0
        %v555 = vadd.f32 %v553, %v554
        %v556 = vrot.slane %v555, 4
        %v557 = vadd.f32 %v555, %v556
        %v558 = vrot.slane %v557, 2
        %v559 = vadd.f32 %v557, %v558
        %v560 = vrot.slane %v559, 1
        %v561 = vadd.f32 %v559, %v560
        %vm562 = vcmask 1040384
        %v563 = vsel %vm562, %v460, %v561
        %v564 = vlaneseq
        %v565 = vshrl.u32 %v564, 7
        %v566 = vadd.s32 %v565, 8
        %v567 = vadd.s32 %v565, 16
        %v568 = vadd.s32 %v565, 24
        %v569 = vadd.s32 %v565, 32
        %v570 = vadd.s32 %v565, 40
        %v571 = vadd.s32 %v565, 48
        %v572 = vadd.s32 %v565, 56
        %v573 = vcvt.s32.f32 %v565
        %v574 = vcvt.s32.f32 %v566
        %v575 = vcvt.s32.f32 %v567
        %v576 = vcvt.s32.f32 %v568
        %v577 = vcvt.s32.f32 %v569
        %v578 = vcvt.s32.f32 %v570
        %v579 = vcvt.s32.f32 %v571
        %v580 = vcvt.s32.f32 %v572
        %v581 = vlaneseq
        %v582 = vand.u32 %v581, 127
        %v583 = vcvt.s32.f32 %v582
        %v584 = vadd.f32 %v573, 0.5
        %v585 = vadd.f32 %v574, 0.5
        %v586 = vadd.f32 %v575, 0.5
        %v587 = vadd.f32 %v576, 0.5
        %v588 = vadd.f32 %v577, 0.5
        %v589 = vadd.f32 %v578, 0.5
        %v590 = vadd.f32 %v579, 0.5
        %v591 = vadd.f32 %v580, 0.5
        %v592 = vmul.f32 %v584, 0.125
        %v593 = vmul.f32 %v585, 0.125
        %v594 = vmul.f32 %v586, 0.125
        %v595 = vmul.f32 %v587, 0.125
        %v596 = vmul.f32 %v588, 0.125
        %v597 = vmul.f32 %v589, 0.125
        %v598 = vmul.f32 %v590, 0.125
        %v599 = vmul.f32 %v591, 0.125
        %v600 = vfloor.f32 %v592
        %v601 = vfloor.f32 %v593
        %v602 = vfloor.f32 %v594
        %v603 = vfloor.f32 %v595
        %v604 = vfloor.f32 %v596
        %v605 = vfloor.f32 %v597
        %v606 = vfloor.f32 %v598
        %v607 = vfloor.f32 %v599
        %v608 = vadd.f32 %v583, 0.5
        %v609 = vmul.f32 %v608, 0.125
        %v610 = vfloor.f32 %v609
        %vm611 = vcmp.eq.f32.partialorder %v600, %v610
        %vm612 = vcmp.eq.f32.partialorder %v601, %v610
        %vm613 = vcmp.eq.f32.partialorder %v602, %v610
        %vm614 = vcmp.eq.f32.partialorder %v603, %v610
        %vm615 = vcmp.eq.f32.partialorder %v604, %v610
        %vm616 = vcmp.eq.f32.partialorder %v605, %v610
        %vm617 = vcmp.eq.f32.partialorder %v606, %v610
        %vm618 = vcmp.eq.f32.partialorder %v607, %v610
        %v619 = vsel %vm611, 1, 0
        %v620 = vsel %vm612, 1, 0
        %v621 = vsel %vm613, 1, 0
        %v622 = vsel %vm614, 1, 0
        %v623 = vsel %vm615, 1, 0
        %v624 = vsel %vm616, 1, 0
        %v625 = vsel %vm617, 1, 0
        %v626 = vsel %vm618, 1, 0
        %v627 = vcvt.s32.f32 %v619
        %v628 = vcvt.s32.f32 %v620
        %v629 = vcvt.s32.f32 %v621
        %v630 = vcvt.s32.f32 %v622
        %v631 = vcvt.s32.f32 %v623
        %v632 = vcvt.s32.f32 %v624
        %v633 = vcvt.s32.f32 %v625
        %v634 = vcvt.s32.f32 %v626
        %v635 = vmul.f32 %v627, 0.00048828125
        %v636 = vmul.f32 %v628, 0.00048828125
        %v637 = vmul.f32 %v629, 0.00048828125
        %v638 = vmul.f32 %v630, 0.00048828125
        %v639 = vmul.f32 %v631, 0.00048828125
        %v640 = vmul.f32 %v632, 0.00048828125
        %v641 = vmul.f32 %v633, 0.00048828125
        %v642 = vmul.f32 %v634, 0.00048828125
        %v644 = vsel %vm391, %v563, 0
        %646 = vmatprep.subr.mxu0 0.0
        %647 = vmatpush1.msra.mxu0 0.0
        %648 = vmatprep.subr.mxu0 0.0
        %649 = vmatpush1.msra.mxu0 0.0
        %650 = vmatprep.subr.mxu0 0.0
        %651 = vmatpush1.msra.mxu0 0.0
        %652 = vmatprep.subr.mxu0 0.0
        %653 = vmatpush1.msra.mxu0 0.0
        %654 = vmatprep.subr.mxu0 0.0
        %655 = vmatpush1.msra.mxu0 0.0
        %656 = vmatprep.subr.mxu0 0.0
        %657 = vmatpush1.msra.mxu0 0.0
        %658 = vmatprep.subr.mxu0 0.0
        %659 = vmatpush1.msra.mxu0 0.0
        %660 = vmatprep.subr.mxu0 0.0
        %661 = vmatpush1.msra.mxu0 0.0
        %662 = vmatprep.subr.mxu0 0.0
        %663 = vmatpush1.msra.mxu0 %v642
        %664 = vmatprep.subr.mxu0 0.0
        %665 = vmatpush1.msra.mxu0 %v641
        %666 = vmatprep.subr.mxu0 0.0
        %667 = vmatpush1.msra.mxu0 %v640
        %668 = vmatprep.subr.mxu0 0.0
        %669 = vmatpush1.msra.mxu0 %v639
        %670 = vmatprep.subr.mxu0 0.0
        %671 = vmatpush1.msra.mxu0 %v638
        %672 = vmatprep.subr.mxu0 0.0
        %673 = vmatpush1.msra.mxu0 %v637
        %674 = vmatprep.subr.mxu0 0.0
        %675 = vmatpush1.msra.mxu0 %v636
        %676 = vmatprep.subr.mxu0 0.0
        %677 = vmatpush1.msra.mxu0 %v635
        %678 = vmatprep.subr.mxu0 0.0
        %679 = vmatpush2.msra.mxu0 0.0
        %680 = vmatprep.subr.mxu0 0.0
        %681 = vmatpush2.msra.mxu0 0.0
        %682 = vmatprep.subr.mxu0 0.0
        %683 = vmatpush2.msra.mxu0 0.0
        %684 = vmatprep.subr.mxu0 0.0
        %685 = vmatpush2.msra.mxu0 0.0
        %686 = vmatprep.subr.mxu0 0.0
        %687 = vmatpush2.msra.mxu0 0.0
        %688 = vmatprep.subr.mxu0 0.0
        %689 = vmatpush2.msra.mxu0 0.0
        %690 = vmatprep.subr.mxu0 0.0
        %691 = vmatpush2.msra.mxu0 0.0
        %692 = vmatprep.subr.mxu0 0.0
        %693 = vmatpush2.msra.mxu0 0.0
        %694 = vmatprep.subr.mxu0 0.0
        %695 = vmatpush2.msra.mxu0 0.0
        %696 = vmatprep.subr.mxu0 0.0
        %697 = vmatpush2.msra.mxu0 0.0
        %698 = vmatprep.subr.mxu0 0.0
        %699 = vmatpush2.msra.mxu0 0.0
        %700 = vmatprep.subr.mxu0 0.0
        %701 = vmatpush2.msra.mxu0 0.0
        %702 = vmatprep.subr.mxu0 0.0
        %703 = vmatpush2.msra.mxu0 0.0
        %704 = vmatprep.subr.mxu0 0.0
        %705 = vmatpush2.msra.mxu0 0.0
        %706 = vmatprep.subr.mxu0 0.0
        %707 = vmatpush2.msra.mxu0 0.0
        %708 = vmatprep.subr.mxu0 0.0
        %709 = vmatpush2.msra.mxu0 0.0
        %710 = vmatprep.mubr.f32.mxu0 0.0
        %711 = vmatmul.mubr.f32.gmra.mxu0 %v644
        %v712 = vpop.f32.mrf.mxu0
        %v713 = vadd.f32 0.0, %v712
        %v714 = vpop.f32.mrf.mxu0
        %715 = vdwg.mxu0
        %v716 = vmul.f32 %v713, %v713
        %v718 = vrot.slane %v716, 7
        %v720 = vsub.f32 %v713, %v718
        %v721 = vadd.f32 %v720, 1e-06
        %v722 = vrsqrt.pop %v721
        %v723 = vlaneseq
        %v724 = vshrl.u32 %v723, 7
        %v725 = vsub.s32 0, %v724
        %v726 = vrot.slane %v713, %v725
        %v727 = vsub.f32 %v357, %v726
        %v728 = vsub.f32 %v358, %v726
        %v729 = vsub.f32 %v359, %v726
        %v730 = vsub.f32 %v360, %v726
        %v731 = vsub.f32 %v361, %v726
        %v732 = vsub.f32 %v362, %v726
        %v733 = vsub.f32 %v363, %v726
        %v734 = vsub.f32 %v364, %v726
        %v735 = vsub.f32 %v365, %v726
        %v736 = vsub.f32 %v366, %v726
        %v737 = vsub.f32 %v367, %v726
        %v738 = vsub.f32 %v368, %v726
        %v739 = vsub.f32 %v369, %v726
        %v740 = vsub.f32 %v370, %v726
        %v741 = vsub.f32 %v371, %v726
        %v742 = vsub.f32 %v372, %v726
        %v743 = vsub.f32 %v373, %v726
        %v744 = vsub.f32 %v374, %v726
        %v745 = vsub.f32 %v375, %v726
        %v746 = vsub.f32 %v376, %v726
        %v747 = vsub.f32 %v377, %v726
        %v748 = vsub.f32 %v378, %v726
        %v749 = vsub.f32 %v379, %v726
        %v750 = vsub.f32 %v380, %v726
        %v751 = vsub.f32 %v381, %v726
        %v752 = vsub.f32 %v382, %v726
        %v753 = vsub.f32 %v383, %v726
        %v754 = vsub.f32 %v384, %v726
        %v755 = vsub.f32 %v385, %v726
        %v756 = vsub.f32 %v386, %v726
        %v757 = vsub.f32 %v387, %v726
        %v758 = vsub.f32 %v388, %v726
        %v760 = vlaneseq
        %v761 = vshrl.u32 %v760, 7
        %v762 = vsub.s32 0, %v761
        %v763 = vrot.slane %v389, %v762
        %v765 = vmul.f32 %v722, %v763
        %v766 = vlaneseq
        %v767 = vshrl.u32 %v766, 7
        %v768 = vsub.s32 1, %v767
        %v769 = vrot.slane %v765, %v768
        %v770 = vmul.f32 %v727, %v769
        %v771 = vmul.f32 %v728, %v769
        %v772 = vmul.f32 %v729, %v769
        %v773 = vmul.f32 %v730, %v769
        %v774 = vmul.f32 %v731, %v769
        %v775 = vmul.f32 %v732, %v769
        %v776 = vmul.f32 %v733, %v769
        %v777 = vmul.f32 %v734, %v769
        %v778 = vmul.f32 %v735, %v769
        %v779 = vmul.f32 %v736, %v769
        %v780 = vmul.f32 %v737, %v769
        %v781 = vmul.f32 %v738, %v769
        %v782 = vmul.f32 %v739, %v769
        %v783 = vmul.f32 %v740, %v769
        %v784 = vmul.f32 %v741, %v769
        %v785 = vmul.f32 %v742, %v769
        %v786 = vmul.f32 %v743, %v769
        %v787 = vmul.f32 %v744, %v769
        %v788 = vmul.f32 %v745, %v769
        %v789 = vmul.f32 %v746, %v769
        %v790 = vmul.f32 %v747, %v769
        %v791 = vmul.f32 %v748, %v769
        %v792 = vmul.f32 %v749, %v769
        %v793 = vmul.f32 %v750, %v769
        %v794 = vmul.f32 %v751, %v769
        %v795 = vmul.f32 %v752, %v769
        %v796 = vmul.f32 %v753, %v769
        %v797 = vmul.f32 %v754, %v769
        %v798 = vmul.f32 %v755, %v769
        %v799 = vmul.f32 %v756, %v769
        %v800 = vmul.f32 %v757, %v769
        %v801 = vmul.f32 %v758, %v769
        %v803 = vlaneseq
        %v804 = vshrl.u32 %v803, 7
        %v805 = vsub.s32 0, %v804
        %v806 = vrot.slane %v390, %v805
        %v808 = vadd.f32 %v770, %v806
        %v809 = vadd.f32 %v771, %v806
        %v810 = vadd.f32 %v772, %v806
        %v811 = vadd.f32 %v773, %v806
        %v812 = vadd.f32 %v774, %v806
        %v813 = vadd.f32 %v775, %v806
        %v814 = vadd.f32 %v776, %v806
        %v815 = vadd.f32 %v777, %v806
        %v816 = vadd.f32 %v778, %v806
        %v817 = vadd.f32 %v779, %v806
        %v818 = vadd.f32 %v780, %v806
        %v819 = vadd.f32 %v781, %v806
        %v820 = vadd.f32 %v782, %v806
        %v821 = vadd.f32 %v783, %v806
        %v822 = vadd.f32 %v784, %v806
        %v823 = vadd.f32 %v785, %v806
        %v824 = vadd.f32 %v786, %v806
        %v825 = vadd.f32 %v787, %v806
        %v826 = vadd.f32 %v788, %v806
        %v827 = vadd.f32 %v789, %v806
        %v828 = vadd.f32 %v790, %v806
        %v829 = vadd.f32 %v791, %v806
        %v830 = vadd.f32 %v792, %v806
        %v831 = vadd.f32 %v793, %v806
        %v832 = vadd.f32 %v794, %v806
        %v833 = vadd.f32 %v795, %v806
        %v834 = vadd.f32 %v796, %v806
        %v835 = vadd.f32 %v797, %v806
        %v836 = vadd.f32 %v798, %v806
        %v837 = vadd.f32 %v799, %v806
        %v838 = vadd.f32 %v800, %v806
        %v839 = vadd.f32 %v801, %v806
        %v840 = vsub.f32 0.0, %v808
        %v841 = vsub.f32 0.0, %v809
        %v842 = vsub.f32 0.0, %v810
        %v843 = vsub.f32 0.0, %v811
        %v844 = vsub.f32 0.0, %v812
        %v845 = vsub.f32 0.0, %v813
        %v846 = vsub.f32 0.0, %v814
        %v847 = vsub.f32 0.0, %v815
        %v848 = vsub.f32 0.0, %v816
        %v849 = vsub.f32 0.0, %v817
        %v850 = vsub.f32 0.0, %v818
        %v851 = vsub.f32 0.0, %v819
        %v852 = vsub.f32 0.0, %v820
        %v853 = vsub.f32 0.0, %v821
        %v854 = vsub.f32 0.0, %v822
        %v855 = vsub.f32 0.0, %v823
        %v856 = vsub.f32 0.0, %v824
        %v857 = vsub.f32 0.0, %v825
        %v858 = vsub.f32 0.0, %v826
        %v859 = vsub.f32 0.0, %v827
        %v860 = vsub.f32 0.0, %v828
        %v861 = vsub.f32 0.0, %v829
        %v862 = vsub.f32 0.0, %v830
        %v863 = vsub.f32 0.0, %v831
        %v864 = vsub.f32 0.0, %v832
        %v865 = vsub.f32 0.0, %v833
        %v866 = vsub.f32 0.0, %v834
        %v867 = vsub.f32 0.0, %v835
        %v868 = vsub.f32 0.0, %v836
        %v869 = vsub.f32 0.0, %v837
        %v870 = vsub.f32 0.0, %v838
        %v871 = vsub.f32 0.0, %v839
        %v872 = vmul.f32 %v840, 1.442695
        %v873 = vpow.pop %v872
        %v874 = vmul.f32 %v841, 1.442695
        %v875 = vpow.pop %v874
        %v876 = vmul.f32 %v842, 1.442695
        %v877 = vpow.pop %v876
        %v878 = vmul.f32 %v843, 1.442695
        %v879 = vpow.pop %v878
        %v880 = vmul.f32 %v844, 1.442695
        %v881 = vpow.pop %v880
        %v882 = vmul.f32 %v845, 1.442695
        %v883 = vpow.pop %v882
        %v884 = vmul.f32 %v846, 1.442695
        %v885 = vpow.pop %v884
        %v886 = vmul.f32 %v847, 1.442695
        %v887 = vpow.pop %v886
        %v888 = vmul.f32 %v848, 1.442695
        %v889 = vpow.pop %v888
        %v890 = vmul.f32 %v849, 1.442695
        %v891 = vpow.pop %v890
        %v892 = vmul.f32 %v850, 1.442695
        %v893 = vpow.pop %v892
        %v894 = vmul.f32 %v851, 1.442695
        %v895 = vpow.pop %v894
        %v896 = vmul.f32 %v852, 1.442695
        %v897 = vpow.pop %v896
        %v898 = vmul.f32 %v853, 1.442695
        %v899 = vpow.pop %v898
        %v900 = vmul.f32 %v854, 1.442695
        %v901 = vpow.pop %v900
        %v902 = vmul.f32 %v855, 1.442695
        %v903 = vpow.pop %v902
        %v904 = vmul.f32 %v856, 1.442695
        %v905 = vpow.pop %v904
        %v906 = vmul.f32 %v857, 1.442695
        %v907 = vpow.pop %v906
        %v908 = vmul.f32 %v858, 1.442695
        %v909 = vpow.pop %v908
        %v910 = vmul.f32 %v859, 1.442695
        %v911 = vpow.pop %v910
        %v912 = vmul.f32 %v860, 1.442695
        %v913 = vpow.pop %v912
        %v914 = vmul.f32 %v861, 1.442695
        %v915 = vpow.pop %v914
        %v916 = vmul.f32 %v862, 1.442695
        %v917 = vpow.pop %v916
        %v918 = vmul.f32 %v863, 1.442695
        %v919 = vpow.pop %v918
        %v920 = vmul.f32 %v864, 1.442695
        %v921 = vpow.pop %v920
        %v922 = vmul.f32 %v865, 1.442695
        %v923 = vpow.pop %v922
        %v924 = vmul.f32 %v866, 1.442695
        %v925 = vpow.pop %v924
        %v926 = vmul.f32 %v867, 1.442695
        %v927 = vpow.pop %v926
        %v928 = vmul.f32 %v868, 1.442695
        %v929 = vpow.pop %v928
        %v930 = vmul.f32 %v869, 1.442695
        %v931 = vpow.pop %v930
        %v932 = vmul.f32 %v870, 1.442695
        %v933 = vpow.pop %v932
        %v934 = vmul.f32 %v871, 1.442695
        %v935 = vpow.pop %v934
        %v936 = vadd.f32 %v873, 1.0
        %v937 = vadd.f32 %v875, 1.0
        %v938 = vadd.f32 %v877, 1.0
        %v939 = vadd.f32 %v879, 1.0
        %v940 = vadd.f32 %v881, 1.0
        %v941 = vadd.f32 %v883, 1.0
        %v942 = vadd.f32 %v885, 1.0
        %v943 = vadd.f32 %v887, 1.0
        %v944 = vadd.f32 %v889, 1.0
        %v945 = vadd.f32 %v891, 1.0
        %v946 = vadd.f32 %v893, 1.0
        %v947 = vadd.f32 %v895, 1.0
        %v948 = vadd.f32 %v897, 1.0
        %v949 = vadd.f32 %v899, 1.0
        %v950 = vadd.f32 %v901, 1.0
        %v951 = vadd.f32 %v903, 1.0
        %v952 = vadd.f32 %v905, 1.0
        %v953 = vadd.f32 %v907, 1.0
        %v954 = vadd.f32 %v909, 1.0
        %v955 = vadd.f32 %v911, 1.0
        %v956 = vadd.f32 %v913, 1.0
        %v957 = vadd.f32 %v915, 1.0
        %v958 = vadd.f32 %v917, 1.0
        %v959 = vadd.f32 %v919, 1.0
        %v960 = vadd.f32 %v921, 1.0
        %v961 = vadd.f32 %v923, 1.0
        %v962 = vadd.f32 %v925, 1.0
        %v963 = vadd.f32 %v927, 1.0
        %v964 = vadd.f32 %v929, 1.0
        %v965 = vadd.f32 %v931, 1.0
        %v966 = vadd.f32 %v933, 1.0
        %v967 = vadd.f32 %v935, 1.0
        %v968 = vrcp.pop %v936
        %v969 = vrcp.pop %v937
        %v970 = vrcp.pop %v938
        %v971 = vrcp.pop %v939
        %v972 = vrcp.pop %v940
        %v973 = vrcp.pop %v941
        %v974 = vrcp.pop %v942
        %v975 = vrcp.pop %v943
        %v976 = vrcp.pop %v944
        %v977 = vrcp.pop %v945
        %v978 = vrcp.pop %v946
        %v979 = vrcp.pop %v947
        %v980 = vrcp.pop %v948
        %v981 = vrcp.pop %v949
        %v982 = vrcp.pop %v950
        %v983 = vrcp.pop %v951
        %v984 = vrcp.pop %v952
        %v985 = vrcp.pop %v953
        %v986 = vrcp.pop %v954
        %v987 = vrcp.pop %v955
        %v988 = vrcp.pop %v956
        %v989 = vrcp.pop %v957
        %v990 = vrcp.pop %v958
        %v991 = vrcp.pop %v959
        %v992 = vrcp.pop %v960
        %v993 = vrcp.pop %v961
        %v994 = vrcp.pop %v962
        %v995 = vrcp.pop %v963
        %v996 = vrcp.pop %v964
        %v997 = vrcp.pop %v965
        %v998 = vrcp.pop %v966
        %v999 = vrcp.pop %v967
        %v1000 = vmul.f32 %v808, %v968
        %v1001 = vmul.f32 %v809, %v969
        %v1002 = vmul.f32 %v810, %v970
        %v1003 = vmul.f32 %v811, %v971
        %v1004 = vmul.f32 %v812, %v972
        %v1005 = vmul.f32 %v813, %v973
        %v1006 = vmul.f32 %v814, %v974
        %v1007 = vmul.f32 %v815, %v975
        %v1008 = vmul.f32 %v816, %v976
        %v1009 = vmul.f32 %v817, %v977
        %v1010 = vmul.f32 %v818, %v978
        %v1011 = vmul.f32 %v819, %v979
        %v1012 = vmul.f32 %v820, %v980
        %v1013 = vmul.f32 %v821, %v981
        %v1014 = vmul.f32 %v822, %v982
        %v1015 = vmul.f32 %v823, %v983
        %v1016 = vmul.f32 %v824, %v984
        %v1017 = vmul.f32 %v825, %v985
        %v1018 = vmul.f32 %v826, %v986
        %v1019 = vmul.f32 %v827, %v987
        %v1020 = vmul.f32 %v828, %v988
        %v1021 = vmul.f32 %v829, %v989
        %v1022 = vmul.f32 %v830, %v990
        %v1023 = vmul.f32 %v831, %v991
        %v1024 = vmul.f32 %v832, %v992
        %v1025 = vmul.f32 %v833, %v993
        %v1026 = vmul.f32 %v834, %v994
        %v1027 = vmul.f32 %v835, %v995
        %v1028 = vmul.f32 %v836, %v996
        %v1029 = vmul.f32 %v837, %v997
        %v1030 = vmul.f32 %v838, %v998
        %v1031 = vmul.f32 %v839, %v999
        %v1032 = vpack.c.bf16 %v1001, %v1000
        %v1033 = vpack.c.bf16 %v1003, %v1002
        %v1034 = vpack.c.bf16 %v1005, %v1004
        %v1035 = vpack.c.bf16 %v1007, %v1006
        %v1036 = vpack.c.bf16 %v1009, %v1008
        %v1037 = vpack.c.bf16 %v1011, %v1010
        %v1038 = vpack.c.bf16 %v1013, %v1012
        %v1039 = vpack.c.bf16 %v1015, %v1014
        %v1040 = vpack.c.bf16 %v1017, %v1016
        %v1041 = vpack.c.bf16 %v1019, %v1018
        %v1042 = vpack.c.bf16 %v1021, %v1020
        %v1043 = vpack.c.bf16 %v1023, %v1022
        %v1044 = vpack.c.bf16 %v1025, %v1024
        %v1045 = vpack.c.bf16 %v1027, %v1026
        %v1046 = vpack.c.bf16 %v1029, %v1028
        %v1047 = vpack.c.bf16 %v1031, %v1030
        %v1048 = vld [vmem:[%s5] sm:$0x1]
        %vm1049 = vcmask 519168
        %1050 = vst.msk [vmem:[#allocation2] sm:$0xf] %vm1049, 0
        %1051 = vst.msk [vmem:[#allocation2 + $0x4] sm:$0xf] %vm1049, 0
        %vm1052 = vcmask 516096
        %1053 = vst.msk [vmem:[#allocation2 + $0x8] sm:$0x1] %vm1052, 0
        %s1054 = scalar_lea.vmem [#allocation2], 204
        %1055 = vst.msk [vmem:[%s1054] sm:$0xf] %vm1049, 0
        %1056 = vst.msk [vmem:[%s1054 + $0x4] sm:$0xf] %vm1049, 0
        %1057 = vst.msk [vmem:[%s1054 + $0x8] sm:$0x1] %vm1052, 0
        %vm1058 = vcmask 516096
        %vm1059 = vsmask.f32 256
        %vm1060 = vmand %vm1058, %vm1059
        %v1061 = vld [vmem:[#allocation2] sm:$0x1]
        %v1062 = vsel %vm1060, 0, %v1061
        %1063 = vst [vmem:[#allocation2] sm:$0x1] %v1062
        %v1064 = vld [vmem:[#allocation2 + $0xc] sm:$0x1]
        %v1065 = vsel %vm1060, 0, %v1064
        %1066 = vst [vmem:[#allocation2 + $0xc] sm:$0x1] %v1065
        %v1067 = vld [vmem:[#allocation2 + $0x18] sm:$0x1]
        %v1068 = vsel %vm1060, 0, %v1067
        %1069 = vst [vmem:[#allocation2 + $0x18] sm:$0x1] %v1068
        %v1070 = vld [vmem:[#allocation2 + $0x24] sm:$0x1]
        %v1071 = vsel %vm1060, 0, %v1070
        %1072 = vst [vmem:[#allocation2 + $0x24] sm:$0x1] %v1071
        %v1073 = vld [vmem:[#allocation2 + $0x30] sm:$0x1]
        %v1074 = vsel %vm1060, 0, %v1073
        %1075 = vst [vmem:[#allocation2 + $0x30] sm:$0x1] %v1074
        %v1076 = vld [vmem:[#allocation2 + $0x3c] sm:$0x1]
        %v1077 = vsel %vm1060, 0, %v1076
        %1078 = vst [vmem:[#allocation2 + $0x3c] sm:$0x1] %v1077
        %v1079 = vld [vmem:[#allocation2 + $0x48] sm:$0x1]
        %v1080 = vsel %vm1060, 0, %v1079
        %1081 = vst [vmem:[#allocation2 + $0x48] sm:$0x1] %v1080
        %v1082 = vld [vmem:[#allocation2 + $0x54] sm:$0x1]
        %v1083 = vsel %vm1060, 0, %v1082
        %1084 = vst [vmem:[#allocation2 + $0x54] sm:$0x1] %v1083
        %v1085 = vld [vmem:[#allocation2 + $0x60] sm:$0x1]
        %v1086 = vsel %vm1060, 0, %v1085
        %1087 = vst [vmem:[#allocation2 + $0x60] sm:$0x1] %v1086
        %v1088 = vld [vmem:[#allocation2 + $0x6c] sm:$0x1]
        %v1089 = vsel %vm1060, 0, %v1088
        %1090 = vst [vmem:[#allocation2 + $0x6c] sm:$0x1] %v1089
        %v1091 = vld [vmem:[#allocation2 + $0x78] sm:$0x1]
        %v1092 = vsel %vm1060, 0, %v1091
        %1093 = vst [vmem:[#allocation2 + $0x78] sm:$0x1] %v1092
        %v1094 = vld [vmem:[#allocation2 + $0x84] sm:$0x1]
        %v1095 = vsel %vm1060, 0, %v1094
        %1096 = vst [vmem:[#allocation2 + $0x84] sm:$0x1] %v1095
        %v1097 = vld [vmem:[#allocation2 + $0x90] sm:$0x1]
        %v1098 = vsel %vm1060, 0, %v1097
        %1099 = vst [vmem:[#allocation2 + $0x90] sm:$0x1] %v1098
        %v1100 = vld [vmem:[#allocation2 + $0x9c] sm:$0x1]
        %v1101 = vsel %vm1060, 0, %v1100
        %1102 = vst [vmem:[#allocation2 + $0x9c] sm:$0x1] %v1101
        %v1103 = vld [vmem:[#allocation2 + $0xa8] sm:$0x1]
        %v1104 = vsel %vm1060, 0, %v1103
        %1105 = vst [vmem:[#allocation2 + $0xa8] sm:$0x1] %v1104
        %v1106 = vld [vmem:[#allocation2 + $0xb4] sm:$0x1]
        %v1107 = vsel %vm1060, 0, %v1106
        %1108 = vst [vmem:[#allocation2 + $0xb4] sm:$0x1] %v1107
        %v1109 = vld [vmem:[#allocation2 + $0xc0] sm:$0x1]
        %v1110 = vsel %vm1060, 0, %v1109
        %1111 = vst [vmem:[#allocation2 + $0xc0] sm:$0x1] %v1110
        %v1112 = vld [vmem:[#allocation2 + $0xcc] sm:$0x1]
        %v1113 = vsel %vm1060, 0, %v1112
        %1114 = vst [vmem:[#allocation2 + $0xcc] sm:$0x1] %v1113
        %vm1115 = vsmask.f32 7938
        %vm1116 = vmand %vm1058, %vm1115
        %v1117 = vld [vmem:[#allocation2 + $0x8] sm:$0x1]
        %v1118 = vsel %vm1116, 0, %v1117
        %1119 = vst [vmem:[#allocation2 + $0x8] sm:$0x1] %v1118
        %v1120 = vld [vmem:[#allocation2 + $0x14] sm:$0x1]
        %v1121 = vsel %vm1116, 0, %v1120
        %1122 = vst [vmem:[#allocation2 + $0x14] sm:$0x1] %v1121
        %v1123 = vld [vmem:[#allocation2 + $0x20] sm:$0x1]
        %v1124 = vsel %vm1116, 0, %v1123
        %1125 = vst [vmem:[#allocation2 + $0x20] sm:$0x1] %v1124
        %v1126 = vld [vmem:[#allocation2 + $0x2c] sm:$0x1]
        %v1127 = vsel %vm1116, 0, %v1126
        %1128 = vst [vmem:[#allocation2 + $0x2c] sm:$0x1] %v1127
        %v1129 = vld [vmem:[#allocation2 + $0x38] sm:$0x1]
        %v1130 = vsel %vm1116, 0, %v1129
        %1131 = vst [vmem:[#allocation2 + $0x38] sm:$0x1] %v1130
        %v1132 = vld [vmem:[#allocation2 + $0x44] sm:$0x1]
        %v1133 = vsel %vm1116, 0, %v1132
        %1134 = vst [vmem:[#allocation2 + $0x44] sm:$0x1] %v1133
        %v1135 = vld [vmem:[#allocation2 + $0x50] sm:$0x1]
        %v1136 = vsel %vm1116, 0, %v1135
        %1137 = vst [vmem:[#allocation2 + $0x50] sm:$0x1] %v1136
        %v1138 = vld [vmem:[#allocation2 + $0x5c] sm:$0x1]
        %v1139 = vsel %vm1116, 0, %v1138
        %1140 = vst [vmem:[#allocation2 + $0x5c] sm:$0x1] %v1139
        %v1141 = vld [vmem:[#allocation2 + $0x68] sm:$0x1]
        %v1142 = vsel %vm1116, 0, %v1141
        %1143 = vst [vmem:[#allocation2 + $0x68] sm:$0x1] %v1142
        %v1144 = vld [vmem:[#allocation2 + $0x74] sm:$0x1]
        %v1145 = vsel %vm1116, 0, %v1144
        %1146 = vst [vmem:[#allocation2 + $0x74] sm:$0x1] %v1145
        %v1147 = vld [vmem:[#allocation2 + $0x80] sm:$0x1]
        %v1148 = vsel %vm1116, 0, %v1147
        %1149 = vst [vmem:[#allocation2 + $0x80] sm:$0x1] %v1148
        %v1150 = vld [vmem:[#allocation2 + $0x8c] sm:$0x1]
        %v1151 = vsel %vm1116, 0, %v1150
        %1152 = vst [vmem:[#allocation2 + $0x8c] sm:$0x1] %v1151
        %v1153 = vld [vmem:[#allocation2 + $0x98] sm:$0x1]
        %v1154 = vsel %vm1116, 0, %v1153
        %1155 = vst [vmem:[#allocation2 + $0x98] sm:$0x1] %v1154
        %v1156 = vld [vmem:[#allocation2 + $0xa4] sm:$0x1]
        %v1157 = vsel %vm1116, 0, %v1156
        %1158 = vst [vmem:[#allocation2 + $0xa4] sm:$0x1] %v1157
        %v1159 = vld [vmem:[#allocation2 + $0xb0] sm:$0x1]
        %v1160 = vsel %vm1116, 0, %v1159
        %1161 = vst [vmem:[#allocation2 + $0xb0] sm:$0x1] %v1160
        %v1162 = vld [vmem:[#allocation2 + $0xbc] sm:$0x1]
        %v1163 = vsel %vm1116, 0, %v1162
        %1164 = vst [vmem:[#allocation2 + $0xbc] sm:$0x1] %v1163
        %v1165 = vld [vmem:[#allocation2 + $0xc8] sm:$0x1]
        %v1166 = vsel %vm1116, 0, %v1165
        %1167 = vst [vmem:[#allocation2 + $0xc8] sm:$0x1] %v1166
        %v1168 = vld [vmem:[#allocation2 + $0xd4] sm:$0x1]
        %v1169 = vsel %vm1116, 0, %v1168
        %1170 = vst [vmem:[#allocation2 + $0xd4] sm:$0x1] %v1169
        %v1187 = vunpack.c.l.b16 %v1032
        %v1188 = vunpack.c.h.b16 %v1032
        %v1189 = vunpack.c.l.b16 %v1033
        %v1190 = vunpack.c.h.b16 %v1033
        %v1191 = vunpack.c.l.b16 %v1034
        %v1192 = vunpack.c.h.b16 %v1034
        %v1193 = vunpack.c.l.b16 %v1035
        %v1194 = vunpack.c.h.b16 %v1035
        %v1195 = vunpack.c.l.b16 %v1036
        %v1196 = vunpack.c.h.b16 %v1036
        %v1197 = vunpack.c.l.b16 %v1037
        %v1198 = vunpack.c.h.b16 %v1037
        %v1199 = vunpack.c.l.b16 %v1038
        %v1200 = vunpack.c.h.b16 %v1038
        %v1201 = vunpack.c.l.b16 %v1039
        %v1202 = vunpack.c.h.b16 %v1039
        %v1203 = vunpack.c.l.b16 %v1040
        %v1204 = vunpack.c.h.b16 %v1040
        %v1205 = vunpack.c.l.b16 %v1041
        %v1206 = vunpack.c.h.b16 %v1041
        %v1207 = vunpack.c.l.b16 %v1042
        %v1208 = vunpack.c.h.b16 %v1042
        %v1209 = vunpack.c.l.b16 %v1043
        %v1210 = vunpack.c.h.b16 %v1043
        %v1211 = vunpack.c.l.b16 %v1044
        %v1212 = vunpack.c.h.b16 %v1044
        %v1213 = vunpack.c.l.b16 %v1045
        %v1214 = vunpack.c.h.b16 %v1045
        %v1215 = vunpack.c.l.b16 %v1046
        %v1216 = vunpack.c.h.b16 %v1046
        %v1217 = vunpack.c.l.b16 %v1047
        %v1218 = vunpack.c.h.b16 %v1047
        %v1219 = vpack.c.b16 %v1187, %v1187
        %v1220 = vpack.c.b16 %v1188, %v1188
        %v1221 = vpack.c.b16 %v1189, %v1189
        %v1222 = vpack.c.b16 %v1190, %v1190
        %v1223 = vpack.c.b16 %v1191, %v1191
        %v1224 = vpack.c.b16 %v1192, %v1192
        %v1225 = vpack.c.b16 %v1193, %v1193
        %v1226 = vpack.c.b16 %v1194, %v1194
        %v1227 = vpack.c.b16 %v1195, %v1195
        %v1228 = vpack.c.b16 %v1196, %v1196
        %v1229 = vpack.c.b16 %v1197, %v1197
        %v1230 = vpack.c.b16 %v1198, %v1198
        %v1231 = vpack.c.b16 %v1199, %v1199
        %v1232 = vpack.c.b16 %v1200, %v1200
        %v1233 = vpack.c.b16 %v1201, %v1201
        %v1234 = vpack.c.b16 %v1202, %v1202
        %v1235 = vpack.c.b16 %v1203, %v1203
        %v1236 = vpack.c.b16 %v1204, %v1204
        %v1237 = vpack.c.b16 %v1205, %v1205
        %v1238 = vpack.c.b16 %v1206, %v1206
        %v1239 = vpack.c.b16 %v1207, %v1207
        %v1240 = vpack.c.b16 %v1208, %v1208
        %v1241 = vpack.c.b16 %v1209, %v1209
        %v1242 = vpack.c.b16 %v1210, %v1210
        %v1243 = vpack.c.b16 %v1211, %v1211
        %v1244 = vpack.c.b16 %v1212, %v1212
        %v1245 = vpack.c.b16 %v1213, %v1213
        %v1246 = vpack.c.b16 %v1214, %v1214
        %v1247 = vpack.c.b16 %v1215, %v1215
        %v1248 = vpack.c.b16 %v1216, %v1216
        %v1249 = vpack.c.b16 %v1217, %v1217
        %v1250 = vpack.c.b16 %v1218, %v1218
        %vm1251 = vsmask.f32 4368
        %vm1252 = vmor %vm1059, %vm1251
        %v1254 = vshrl.u32 %v1219, 16
        %v1256 = vrot.slane %v1254, 7
        %v1257 = vshll.u32 %v1219, 16
        %v1259 = vor.u32 %v1256, %v1257
        %v1260 = vrot.slane %v1256, 4
        %v1262 = vshrl.u32 %v1220, 16
        %v1264 = vrot.slane %v1262, 7
        %v1265 = vshll.u32 %v1220, 16
        %v1267 = vor.u32 %v1264, %v1265
        %v1268 = vsel %vm1252, %v1260, %v1267
        %v1269 = vrot.slane %v1264, 4
        %v1271 = vshrl.u32 %v1221, 16
        %v1273 = vrot.slane %v1271, 7
        %v1274 = vshll.u32 %v1221, 16
        %v1276 = vor.u32 %v1273, %v1274
        %v1277 = vrot.slane %v1273, 4
        %v1279 = vshrl.u32 %v1222, 16
        %v1281 = vrot.slane %v1279, 7
        %v1282 = vshll.u32 %v1222, 16
        %v1284 = vor.u32 %v1281, %v1282
        %v1285 = vsel %vm1252, %v1277, %v1284
        %v1286 = vrot.slane %v1281, 4
        %v1288 = vshrl.u32 %v1223, 16
        %v1290 = vrot.slane %v1288, 7
        %v1291 = vshll.u32 %v1223, 16
        %v1293 = vor.u32 %v1290, %v1291
        %v1294 = vrot.slane %v1290, 4
        %v1296 = vshrl.u32 %v1224, 16
        %v1298 = vrot.slane %v1296, 7
        %v1299 = vshll.u32 %v1224, 16
        %v1301 = vor.u32 %v1298, %v1299
        %v1302 = vsel %vm1252, %v1294, %v1301
        %v1303 = vrot.slane %v1298, 4
        %v1305 = vshrl.u32 %v1225, 16
        %v1307 = vrot.slane %v1305, 7
        %v1308 = vshll.u32 %v1225, 16
        %v1310 = vor.u32 %v1307, %v1308
        %v1311 = vrot.slane %v1307, 4
        %v1313 = vshrl.u32 %v1226, 16
        %v1315 = vrot.slane %v1313, 7
        %v1316 = vshll.u32 %v1226, 16
        %v1318 = vor.u32 %v1315, %v1316
        %v1319 = vsel %vm1252, %v1311, %v1318
        %v1320 = vrot.slane %v1315, 4
        %v1322 = vshrl.u32 %v1227, 16
        %v1324 = vrot.slane %v1322, 7
        %v1325 = vshll.u32 %v1227, 16
        %v1327 = vor.u32 %v1324, %v1325
        %v1328 = vrot.slane %v1324, 4
        %v1330 = vshrl.u32 %v1228, 16
        %v1332 = vrot.slane %v1330, 7
        %v1333 = vshll.u32 %v1228, 16
        %v1335 = vor.u32 %v1332, %v1333
        %v1336 = vsel %vm1252, %v1328, %v1335
        %v1337 = vrot.slane %v1332, 4
        %v1339 = vshrl.u32 %v1229, 16
        %v1341 = vrot.slane %v1339, 7
        %v1342 = vshll.u32 %v1229, 16
        %v1344 = vor.u32 %v1341, %v1342
        %v1345 = vrot.slane %v1341, 4
        %v1347 = vshrl.u32 %v1230, 16
        %v1349 = vrot.slane %v1347, 7
        %v1350 = vshll.u32 %v1230, 16
        %v1352 = vor.u32 %v1349, %v1350
        %v1353 = vsel %vm1252, %v1345, %v1352
        %v1354 = vrot.slane %v1349, 4
        %v1356 = vshrl.u32 %v1231, 16
        %v1358 = vrot.slane %v1356, 7
        %v1359 = vshll.u32 %v1231, 16
        %v1361 = vor.u32 %v1358, %v1359
        %v1362 = vrot.slane %v1358, 4
        %v1364 = vshrl.u32 %v1232, 16
        %v1366 = vrot.slane %v1364, 7
        %v1367 = vshll.u32 %v1232, 16
        %v1369 = vor.u32 %v1366, %v1367
        %v1370 = vsel %vm1252, %v1362, %v1369
        %v1371 = vrot.slane %v1366, 4
        %v1373 = vshrl.u32 %v1233, 16
        %v1375 = vrot.slane %v1373, 7
        %v1376 = vshll.u32 %v1233, 16
        %v1378 = vor.u32 %v1375, %v1376
        %v1379 = vrot.slane %v1375, 4
        %v1381 = vshrl.u32 %v1234, 16
        %v1383 = vrot.slane %v1381, 7
        %v1384 = vshll.u32 %v1234, 16
        %v1386 = vor.u32 %v1383, %v1384
        %v1387 = vsel %vm1252, %v1379, %v1386
        %v1388 = vrot.slane %v1383, 4
        %v1390 = vshrl.u32 %v1235, 16
        %v1392 = vrot.slane %v1390, 7
        %v1393 = vshll.u32 %v1235, 16
        %v1395 = vor.u32 %v1392, %v1393
        %v1396 = vrot.slane %v1392, 4
        %v1398 = vshrl.u32 %v1236, 16
        %v1400 = vrot.slane %v1398, 7
        %v1401 = vshll.u32 %v1236, 16
        %v1403 = vor.u32 %v1400, %v1401
        %v1404 = vsel %vm1252, %v1396, %v1403
        %v1405 = vrot.slane %v1400, 4
        %v1407 = vshrl.u32 %v1237, 16
        %v1409 = vrot.slane %v1407, 7
        %v1410 = vshll.u32 %v1237, 16
        %v1412 = vor.u32 %v1409, %v1410
        %v1413 = vrot.slane %v1409, 4
        %v1415 = vshrl.u32 %v1238, 16
        %v1417 = vrot.slane %v1415, 7
        %v1418 = vshll.u32 %v1238, 16
        %v1420 = vor.u32 %v1417, %v1418
        %v1421 = vsel %vm1252, %v1413, %v1420
        %v1422 = vrot.slane %v1417, 4
        %v1424 = vshrl.u32 %v1239, 16
        %v1426 = vrot.slane %v1424, 7
        %v1427 = vshll.u32 %v1239, 16
        %v1429 = vor.u32 %v1426, %v1427
        %v1430 = vrot.slane %v1426, 4
        %v1432 = vshrl.u32 %v1240, 16
        %v1434 = vrot.slane %v1432, 7
        %v1435 = vshll.u32 %v1240, 16
        %v1437 = vor.u32 %v1434, %v1435
        %v1438 = vsel %vm1252, %v1430, %v1437
        %v1439 = vrot.slane %v1434, 4
        %v1441 = vshrl.u32 %v1241, 16
        %v1443 = vrot.slane %v1441, 7
        %v1444 = vshll.u32 %v1241, 16
        %v1446 = vor.u32 %v1443, %v1444
        %v1447 = vrot.slane %v1443, 4
        %v1449 = vshrl.u32 %v1242, 16
        %v1451 = vrot.slane %v1449, 7
        %v1452 = vshll.u32 %v1242, 16
        %v1454 = vor.u32 %v1451, %v1452
        %v1455 = vsel %vm1252, %v1447, %v1454
        %v1456 = vrot.slane %v1451, 4
        %v1458 = vshrl.u32 %v1243, 16
        %v1460 = vrot.slane %v1458, 7
        %v1461 = vshll.u32 %v1243, 16
        %v1463 = vor.u32 %v1460, %v1461
        %v1464 = vrot.slane %v1460, 4
        %v1466 = vshrl.u32 %v1244, 16
        %v1468 = vrot.slane %v1466, 7
        %v1469 = vshll.u32 %v1244, 16
        %v1471 = vor.u32 %v1468, %v1469
        %v1472 = vsel %vm1252, %v1464, %v1471
        %v1473 = vrot.slane %v1468, 4
        %v1475 = vshrl.u32 %v1245, 16
        %v1477 = vrot.slane %v1475, 7
        %v1478 = vshll.u32 %v1245, 16
        %v1480 = vor.u32 %v1477, %v1478
        %v1481 = vrot.slane %v1477, 4
        %v1483 = vshrl.u32 %v1246, 16
        %v1485 = vrot.slane %v1483, 7
        %v1486 = vshll.u32 %v1246, 16
        %v1488 = vor.u32 %v1485, %v1486
        %v1489 = vsel %vm1252, %v1481, %v1488
        %v1490 = vrot.slane %v1485, 4
        %v1492 = vshrl.u32 %v1247, 16
        %v1494 = vrot.slane %v1492, 7
        %v1495 = vshll.u32 %v1247, 16
        %v1497 = vor.u32 %v1494, %v1495
        %v1498 = vrot.slane %v1494, 4
        %v1500 = vshrl.u32 %v1248, 16
        %v1502 = vrot.slane %v1500, 7
        %v1503 = vshll.u32 %v1248, 16
        %v1505 = vor.u32 %v1502, %v1503
        %v1506 = vsel %vm1252, %v1498, %v1505
        %v1507 = vrot.slane %v1502, 4
        %v1509 = vshrl.u32 %v1249, 16
        %v1511 = vrot.slane %v1509, 7
        %v1512 = vshll.u32 %v1249, 16
        %v1514 = vor.u32 %v1511, %v1512
        %v1515 = vrot.slane %v1511, 4
        %v1517 = vshrl.u32 %v1250, 16
        %v1519 = vrot.slane %v1517, 7
        %v1520 = vshll.u32 %v1250, 16
        %v1522 = vor.u32 %v1519, %v1520
        %v1523 = vsel %vm1252, %v1515, %v1522
        %v1524 = vrot.slane %v1519, 4
        %s1573 = scalar_lea.vmem [#allocation2], 12
        %vm1574 = vcmask 519168
        %vm1575 = vmand %vm1574, %vm1115
        %v1576 = vld [vmem:[%s1573] sm:$0xf]
        %v1577 = vsel %vm1575, %v1259, %v1576
        %1578 = vst [vmem:[%s1573] sm:$0xf] %v1577
        %1579 = vst.msk [vmem:[%s1573 + $0x4] sm:$0xf] %vm1049, %v1268
        %v1580 = vld [vmem:[%s1573 + $0x8] sm:$0x1]
        %v1581 = vsel %vm1060, %v1269, %v1580
        %1582 = vst [vmem:[%s1573 + $0x8] sm:$0x1] %v1581
        %v1583 = vld [vmem:[%s1573 + $0xc] sm:$0xf]
        %v1584 = vsel %vm1575, %v1276, %v1583
        %1585 = vst [vmem:[%s1573 + $0xc] sm:$0xf] %v1584
        %1586 = vst.msk [vmem:[%s1573 + $0x10] sm:$0xf] %vm1049, %v1285
        %v1587 = vld [vmem:[%s1573 + $0x14] sm:$0x1]
        %v1588 = vsel %vm1060, %v1286, %v1587
        %1589 = vst [vmem:[%s1573 + $0x14] sm:$0x1] %v1588
        %v1590 = vld [vmem:[%s1573 + $0x18] sm:$0xf]
        %v1591 = vsel %vm1575, %v1293, %v1590
        %1592 = vst [vmem:[%s1573 + $0x18] sm:$0xf] %v1591
        %1593 = vst.msk [vmem:[%s1573 + $0x1c] sm:$0xf] %vm1049, %v1302
        %v1594 = vld [vmem:[%s1573 + $0x20] sm:$0x1]
        %v1595 = vsel %vm1060, %v1303, %v1594
        %1596 = vst [vmem:[%s1573 + $0x20] sm:$0x1] %v1595
        %v1597 = vld [vmem:[%s1573 + $0x24] sm:$0xf]
        %v1598 = vsel %vm1575, %v1310, %v1597
        %1599 = vst [vmem:[%s1573 + $0x24] sm:$0xf] %v1598
        %1600 = vst.msk [vmem:[%s1573 + $0x28] sm:$0xf] %vm1049, %v1319
        %v1601 = vld [vmem:[%s1573 + $0x2c] sm:$0x1]
        %v1602 = vsel %vm1060, %v1320, %v1601
        %1603 = vst [vmem:[%s1573 + $0x2c] sm:$0x1] %v1602
        %v1604 = vld [vmem:[%s1573 + $0x30] sm:$0xf]
        %v1605 = vsel %vm1575, %v1327, %v1604
        %1606 = vst [vmem:[%s1573 + $0x30] sm:$0xf] %v1605
        %1607 = vst.msk [vmem:[%s1573 + $0x34] sm:$0xf] %vm1049, %v1336
        %v1608 = vld [vmem:[%s1573 + $0x38] sm:$0x1]
        %v1609 = vsel %vm1060, %v1337, %v1608
        %1610 = vst [vmem:[%s1573 + $0x38] sm:$0x1] %v1609
        %v1611 = vld [vmem:[%s1573 + $0x3c] sm:$0xf]
        %v1612 = vsel %vm1575, %v1344, %v1611
        %1613 = vst [vmem:[%s1573 + $0x3c] sm:$0xf] %v1612
        %1614 = vst.msk [vmem:[%s1573 + $0x40] sm:$0xf] %vm1049, %v1353
        %v1615 = vld [vmem:[%s1573 + $0x44] sm:$0x1]
        %v1616 = vsel %vm1060, %v1354, %v1615
        %1617 = vst [vmem:[%s1573 + $0x44] sm:$0x1] %v1616
        %v1618 = vld [vmem:[%s1573 + $0x48] sm:$0xf]
        %v1619 = vsel %vm1575, %v1361, %v1618
        %1620 = vst [vmem:[%s1573 + $0x48] sm:$0xf] %v1619
        %1621 = vst.msk [vmem:[%s1573 + $0x4c] sm:$0xf] %vm1049, %v1370
        %v1622 = vld [vmem:[%s1573 + $0x50] sm:$0x1]
        %v1623 = vsel %vm1060, %v1371, %v1622
        %1624 = vst [vmem:[%s1573 + $0x50] sm:$0x1] %v1623
        %v1625 = vld [vmem:[%s1573 + $0x54] sm:$0xf]
        %v1626 = vsel %vm1575, %v1378, %v1625
        %1627 = vst [vmem:[%s1573 + $0x54] sm:$0xf] %v1626
        %1628 = vst.msk [vmem:[%s1573 + $0x58] sm:$0xf] %vm1049, %v1387
        %v1629 = vld [vmem:[%s1573 + $0x5c] sm:$0x1]
        %v1630 = vsel %vm1060, %v1388, %v1629
        %1631 = vst [vmem:[%s1573 + $0x5c] sm:$0x1] %v1630
        %v1632 = vld [vmem:[%s1573 + $0x60] sm:$0xf]
        %v1633 = vsel %vm1575, %v1395, %v1632
        %1634 = vst [vmem:[%s1573 + $0x60] sm:$0xf] %v1633
        %1635 = vst.msk [vmem:[%s1573 + $0x64] sm:$0xf] %vm1049, %v1404
        %v1636 = vld [vmem:[%s1573 + $0x68] sm:$0x1]
        %v1637 = vsel %vm1060, %v1405, %v1636
        %1638 = vst [vmem:[%s1573 + $0x68] sm:$0x1] %v1637
        %v1639 = vld [vmem:[%s1573 + $0x6c] sm:$0xf]
        %v1640 = vsel %vm1575, %v1412, %v1639
        %1641 = vst [vmem:[%s1573 + $0x6c] sm:$0xf] %v1640
        %1642 = vst.msk [vmem:[%s1573 + $0x70] sm:$0xf] %vm1049, %v1421
        %v1643 = vld [vmem:[%s1573 + $0x74] sm:$0x1]
        %v1644 = vsel %vm1060, %v1422, %v1643
        %1645 = vst [vmem:[%s1573 + $0x74] sm:$0x1] %v1644
        %v1646 = vld [vmem:[%s1573 + $0x78] sm:$0xf]
        %v1647 = vsel %vm1575, %v1429, %v1646
        %1648 = vst [vmem:[%s1573 + $0x78] sm:$0xf] %v1647
        %1649 = vst.msk [vmem:[%s1573 + $0x7c] sm:$0xf] %vm1049, %v1438
        %v1650 = vld [vmem:[%s1573 + $0x80] sm:$0x1]
        %v1651 = vsel %vm1060, %v1439, %v1650
        %1652 = vst [vmem:[%s1573 + $0x80] sm:$0x1] %v1651
        %v1653 = vld [vmem:[%s1573 + $0x84] sm:$0xf]
        %v1654 = vsel %vm1575, %v1446, %v1653
        %1655 = vst [vmem:[%s1573 + $0x84] sm:$0xf] %v1654
        %1656 = vst.msk [vmem:[%s1573 + $0x88] sm:$0xf] %vm1049, %v1455
        %v1657 = vld [vmem:[%s1573 + $0x8c] sm:$0x1]
        %v1658 = vsel %vm1060, %v1456, %v1657
        %1659 = vst [vmem:[%s1573 + $0x8c] sm:$0x1] %v1658
        %v1660 = vld [vmem:[%s1573 + $0x90] sm:$0xf]
        %v1661 = vsel %vm1575, %v1463, %v1660
        %1662 = vst [vmem:[%s1573 + $0x90] sm:$0xf] %v1661
        %1663 = vst.msk [vmem:[%s1573 + $0x94] sm:$0xf] %vm1049, %v1472
        %v1664 = vld [vmem:[%s1573 + $0x98] sm:$0x1]
        %v1665 = vsel %vm1060, %v1473, %v1664
        %1666 = vst [vmem:[%s1573 + $0x98] sm:$0x1] %v1665
        %v1667 = vld [vmem:[%s1573 + $0x9c] sm:$0xf]
        %v1668 = vsel %vm1575, %v1480, %v1667
        %1669 = vst [vmem:[%s1573 + $0x9c] sm:$0xf] %v1668
        %1670 = vst.msk [vmem:[%s1573 + $0xa0] sm:$0xf] %vm1049, %v1489
        %v1671 = vld [vmem:[%s1573 + $0xa4] sm:$0x1]
        %v1672 = vsel %vm1060, %v1490, %v1671
        %1673 = vst [vmem:[%s1573 + $0xa4] sm:$0x1] %v1672
        %v1674 = vld [vmem:[%s1573 + $0xa8] sm:$0xf]
        %v1675 = vsel %vm1575, %v1497, %v1674
        %1676 = vst [vmem:[%s1573 + $0xa8] sm:$0xf] %v1675
        %1677 = vst.msk [vmem:[%s1573 + $0xac] sm:$0xf] %vm1049, %v1506
        %v1678 = vld [vmem:[%s1573 + $0xb0] sm:$0x1]
        %v1679 = vsel %vm1060, %v1507, %v1678
        %1680 = vst [vmem:[%s1573 + $0xb0] sm:$0x1] %v1679
        %v1681 = vld [vmem:[%s1573 + $0xb4] sm:$0xf]
        %v1682 = vsel %vm1575, %v1514, %v1681
        %1683 = vst [vmem:[%s1573 + $0xb4] sm:$0xf] %v1682
        %1684 = vst.msk [vmem:[%s1573 + $0xb8] sm:$0xf] %vm1049, %v1523
        %v1685 = vld [vmem:[%s1573 + $0xbc] sm:$0x1]
        %v1686 = vsel %vm1060, %v1524, %v1685
        %1687 = vst [vmem:[%s1573 + $0xbc] sm:$0x1] %v1686
        %v1688 = vld [vmem:[#allocation2] sm:$0xf]
        %v1689 = vld [vmem:[#allocation2 + $0x4] sm:$0xf]
        %v1690 = vld [vmem:[#allocation2 + $0xc] sm:$0xf]
        %v1691 = vld [vmem:[#allocation2 + $0x10] sm:$0xf]
        %v1692 = vld [vmem:[#allocation2 + $0x18] sm:$0xf]
        %v1693 = vld [vmem:[#allocation2 + $0x1c] sm:$0xf]
        %v1694 = vld [vmem:[#allocation2 + $0x24] sm:$0xf]
        %v1695 = vld [vmem:[#allocation2 + $0x28] sm:$0xf]
        %v1696 = vld [vmem:[#allocation2 + $0x30] sm:$0xf]
        %v1697 = vld [vmem:[#allocation2 + $0x34] sm:$0xf]
        %v1698 = vld [vmem:[#allocation2 + $0x3c] sm:$0xf]
        %v1699 = vld [vmem:[#allocation2 + $0x40] sm:$0xf]
        %v1700 = vld [vmem:[#allocation2 + $0x48] sm:$0xf]
        %v1701 = vld [vmem:[#allocation2 + $0x4c] sm:$0xf]
        %v1702 = vld [vmem:[#allocation2 + $0x54] sm:$0xf]
        %v1703 = vld [vmem:[#allocation2 + $0x58] sm:$0xf]
        %v1704 = vld [vmem:[#allocation2 + $0x60] sm:$0xf]
        %v1705 = vld [vmem:[#allocation2 + $0x64] sm:$0xf]
        %v1706 = vld [vmem:[#allocation2 + $0x6c] sm:$0xf]
        %v1707 = vld [vmem:[#allocation2 + $0x70] sm:$0xf]
        %v1708 = vld [vmem:[#allocation2 + $0x78] sm:$0xf]
        %v1709 = vld [vmem:[#allocation2 + $0x7c] sm:$0xf]
        %v1710 = vld [vmem:[#allocation2 + $0x84] sm:$0xf]
        %v1711 = vld [vmem:[#allocation2 + $0x88] sm:$0xf]
        %v1712 = vld [vmem:[#allocation2 + $0x90] sm:$0xf]
        %v1713 = vld [vmem:[#allocation2 + $0x94] sm:$0xf]
        %v1714 = vld [vmem:[#allocation2 + $0x9c] sm:$0xf]
        %v1715 = vld [vmem:[#allocation2 + $0xa0] sm:$0xf]
        %v1716 = vld [vmem:[#allocation2 + $0xa8] sm:$0xf]
        %v1717 = vld [vmem:[#allocation2 + $0xac] sm:$0xf]
        %v1718 = vld [vmem:[#allocation2 + $0xb4] sm:$0xf]
        %v1719 = vld [vmem:[#allocation2 + $0xb8] sm:$0xf]
        %v1720 = vld [vmem:[#allocation2 + $0x8] sm:$0x1]
        %v1721 = vld [vmem:[#allocation2 + $0x14] sm:$0x1]
        %v1722 = vld [vmem:[#allocation2 + $0x20] sm:$0x1]
        %v1723 = vld [vmem:[#allocation2 + $0x2c] sm:$0x1]
        %v1724 = vld [vmem:[#allocation2 + $0x38] sm:$0x1]
        %v1725 = vld [vmem:[#allocation2 + $0x44] sm:$0x1]
        %v1726 = vld [vmem:[#allocation2 + $0x50] sm:$0x1]
        %v1727 = vld [vmem:[#allocation2 + $0x5c] sm:$0x1]
        %v1728 = vld [vmem:[#allocation2 + $0x68] sm:$0x1]
        %v1729 = vld [vmem:[#allocation2 + $0x74] sm:$0x1]
        %v1730 = vld [vmem:[#allocation2 + $0x80] sm:$0x1]
        %v1731 = vld [vmem:[#allocation2 + $0x8c] sm:$0x1]
        %v1732 = vld [vmem:[#allocation2 + $0x98] sm:$0x1]
        %v1733 = vld [vmem:[#allocation2 + $0xa4] sm:$0x1]
        %v1734 = vld [vmem:[#allocation2 + $0xb0] sm:$0x1]
        %v1735 = vld [vmem:[#allocation2 + $0xbc] sm:$0x1]
        %v1736 = vld [vmem:[#allocation2] sm:$0xe]
        %v1737 = vld [vmem:[#allocation2 + $0xc] sm:$0xe]
        %v1738 = vld [vmem:[#allocation2 + $0x18] sm:$0xe]
        %v1739 = vld [vmem:[#allocation2 + $0x24] sm:$0xe]
        %v1740 = vld [vmem:[#allocation2 + $0x30] sm:$0xe]
        %v1741 = vld [vmem:[#allocation2 + $0x3c] sm:$0xe]
        %v1742 = vld [vmem:[#allocation2 + $0x48] sm:$0xe]
        %v1743 = vld [vmem:[#allocation2 + $0x54] sm:$0xe]
        %v1744 = vld [vmem:[#allocation2 + $0x60] sm:$0xe]
        %v1745 = vld [vmem:[#allocation2 + $0x6c] sm:$0xe]
        %v1746 = vld [vmem:[#allocation2 + $0x78] sm:$0xe]
        %v1747 = vld [vmem:[#allocation2 + $0x84] sm:$0xe]
        %v1748 = vld [vmem:[#allocation2 + $0x90] sm:$0xe]
        %v1749 = vld [vmem:[#allocation2 + $0x9c] sm:$0xe]
        %v1750 = vld [vmem:[#allocation2 + $0xa8] sm:$0xe]
        %v1751 = vld [vmem:[#allocation2 + $0xb4] sm:$0xe]
        %v1784 = vunpack.c.l.b16 %v1688
        %v1785 = vunpack.c.l.b16 %v1689
        %v1786 = vunpack.c.l.b16 %v1690
        %v1787 = vunpack.c.l.b16 %v1691
        %v1788 = vunpack.c.l.b16 %v1692
        %v1789 = vunpack.c.l.b16 %v1693
        %v1790 = vunpack.c.l.b16 %v1694
        %v1791 = vunpack.c.l.b16 %v1695
        %v1792 = vunpack.c.l.b16 %v1696
        %v1793 = vunpack.c.l.b16 %v1697
        %v1794 = vunpack.c.l.b16 %v1698
        %v1795 = vunpack.c.l.b16 %v1699
        %v1796 = vunpack.c.l.b16 %v1700
        %v1797 = vunpack.c.l.b16 %v1701
        %v1798 = vunpack.c.l.b16 %v1702
        %v1799 = vunpack.c.l.b16 %v1703
        %v1800 = vunpack.c.l.b16 %v1704
        %v1801 = vunpack.c.l.b16 %v1705
        %v1802 = vunpack.c.l.b16 %v1706
        %v1803 = vunpack.c.l.b16 %v1707
        %v1804 = vunpack.c.l.b16 %v1708
        %v1805 = vunpack.c.l.b16 %v1709
        %v1806 = vunpack.c.l.b16 %v1710
        %v1807 = vunpack.c.l.b16 %v1711
        %v1808 = vunpack.c.l.b16 %v1712
        %v1809 = vunpack.c.l.b16 %v1713
        %v1810 = vunpack.c.l.b16 %v1714
        %v1811 = vunpack.c.l.b16 %v1715
        %v1812 = vunpack.c.l.b16 %v1716
        %v1813 = vunpack.c.l.b16 %v1717
        %v1814 = vunpack.c.l.b16 %v1718
        %v1815 = vunpack.c.l.b16 %v1719
        %v1816 = vpack.c.b16 %v1785, %v1784
        %v1817 = vpack.c.b16 %v1787, %v1786
        %v1818 = vpack.c.b16 %v1789, %v1788
        %v1819 = vpack.c.b16 %v1791, %v1790
        %v1820 = vpack.c.b16 %v1793, %v1792
        %v1821 = vpack.c.b16 %v1795, %v1794
        %v1822 = vpack.c.b16 %v1797, %v1796
        %v1823 = vpack.c.b16 %v1799, %v1798
        %v1824 = vpack.c.b16 %v1801, %v1800
        %v1825 = vpack.c.b16 %v1803, %v1802
        %v1826 = vpack.c.b16 %v1805, %v1804
        %v1827 = vpack.c.b16 %v1807, %v1806
        %v1828 = vpack.c.b16 %v1809, %v1808
        %v1829 = vpack.c.b16 %v1811, %v1810
        %v1830 = vpack.c.b16 %v1813, %v1812
        %v1831 = vpack.c.b16 %v1815, %v1814
        %v1848 = vunpack.c.l.b16 %v1720
        %v1849 = vunpack.c.l.b16 %v1721
        %v1850 = vunpack.c.l.b16 %v1722
        %v1851 = vunpack.c.l.b16 %v1723
        %v1852 = vunpack.c.l.b16 %v1724
        %v1853 = vunpack.c.l.b16 %v1725
        %v1854 = vunpack.c.l.b16 %v1726
        %v1855 = vunpack.c.l.b16 %v1727
        %v1856 = vunpack.c.l.b16 %v1728
        %v1857 = vunpack.c.l.b16 %v1729
        %v1858 = vunpack.c.l.b16 %v1730
        %v1859 = vunpack.c.l.b16 %v1731
        %v1860 = vunpack.c.l.b16 %v1732
        %v1861 = vunpack.c.l.b16 %v1733
        %v1862 = vunpack.c.l.b16 %v1734
        %v1863 = vunpack.c.l.b16 %v1735
        %v1864 = vpack.c.b16 %v1848, %v1848
        %v1865 = vpack.c.b16 %v1849, %v1849
        %v1866 = vpack.c.b16 %v1850, %v1850
        %v1867 = vpack.c.b16 %v1851, %v1851
        %v1868 = vpack.c.b16 %v1852, %v1852
        %v1869 = vpack.c.b16 %v1853, %v1853
        %v1870 = vpack.c.b16 %v1854, %v1854
        %v1871 = vpack.c.b16 %v1855, %v1855
        %v1872 = vpack.c.b16 %v1856, %v1856
        %v1873 = vpack.c.b16 %v1857, %v1857
        %v1874 = vpack.c.b16 %v1858, %v1858
        %v1875 = vpack.c.b16 %v1859, %v1859
        %v1876 = vpack.c.b16 %v1860, %v1860
        %v1877 = vpack.c.b16 %v1861, %v1861
        %v1878 = vpack.c.b16 %v1862, %v1862
        %v1879 = vpack.c.b16 %v1863, %v1863
        %vm1880 = vsmask.f32 7424
        %v1882 = vshrl.u32 %v1816, 16
        %v1884 = vshll.u32 %v1816, 16
        %v1886 = vrot.slane %v1884, 1
        %v1887 = vor.u32 %v1882, %v1886
        %v1889 = vshll.u32 %v1864, 16
        %v1891 = vrot.slane %v1889, 1
        %v1892 = vsel %vm1880, %v1887, %v1891
        %v1894 = vshrl.u32 %v1817, 16
        %v1896 = vshll.u32 %v1817, 16
        %v1898 = vrot.slane %v1896, 1
        %v1899 = vor.u32 %v1894, %v1898
        %v1901 = vshll.u32 %v1865, 16
        %v1903 = vrot.slane %v1901, 1
        %v1904 = vsel %vm1880, %v1899, %v1903
        %v1906 = vshrl.u32 %v1818, 16
        %v1908 = vshll.u32 %v1818, 16
        %v1910 = vrot.slane %v1908, 1
        %v1911 = vor.u32 %v1906, %v1910
        %v1913 = vshll.u32 %v1866, 16
        %v1915 = vrot.slane %v1913, 1
        %v1916 = vsel %vm1880, %v1911, %v1915
        %v1918 = vshrl.u32 %v1819, 16
        %v1920 = vshll.u32 %v1819, 16
        %v1922 = vrot.slane %v1920, 1
        %v1923 = vor.u32 %v1918, %v1922
        %v1925 = vshll.u32 %v1867, 16
        %v1927 = vrot.slane %v1925, 1
        %v1928 = vsel %vm1880, %v1923, %v1927
        %v1930 = vshrl.u32 %v1820, 16
        %v1932 = vshll.u32 %v1820, 16
        %v1934 = vrot.slane %v1932, 1
        %v1935 = vor.u32 %v1930, %v1934
        %v1937 = vshll.u32 %v1868, 16
        %v1939 = vrot.slane %v1937, 1
        %v1940 = vsel %vm1880, %v1935, %v1939
        %v1942 = vshrl.u32 %v1821, 16
        %v1944 = vshll.u32 %v1821, 16
        %v1946 = vrot.slane %v1944, 1
        %v1947 = vor.u32 %v1942, %v1946
        %v1949 = vshll.u32 %v1869, 16
        %v1951 = vrot.slane %v1949, 1
        %v1952 = vsel %vm1880, %v1947, %v1951
        %v1954 = vshrl.u32 %v1822, 16
        %v1956 = vshll.u32 %v1822, 16
        %v1958 = vrot.slane %v1956, 1
        %v1959 = vor.u32 %v1954, %v1958
        %v1961 = vshll.u32 %v1870, 16
        %v1963 = vrot.slane %v1961, 1
        %v1964 = vsel %vm1880, %v1959, %v1963
        %v1966 = vshrl.u32 %v1823, 16
        %v1968 = vshll.u32 %v1823, 16
        %v1970 = vrot.slane %v1968, 1
        %v1971 = vor.u32 %v1966, %v1970
        %v1973 = vshll.u32 %v1871, 16
        %v1975 = vrot.slane %v1973, 1
        %v1976 = vsel %vm1880, %v1971, %v1975
        %v1978 = vshrl.u32 %v1824, 16
        %v1980 = vshll.u32 %v1824, 16
        %v1982 = vrot.slane %v1980, 1
        %v1983 = vor.u32 %v1978, %v1982
        %v1985 = vshll.u32 %v1872, 16
        %v1987 = vrot.slane %v1985, 1
        %v1988 = vsel %vm1880, %v1983, %v1987
        %v1990 = vshrl.u32 %v1825, 16
        %v1992 = vshll.u32 %v1825, 16
        %v1994 = vrot.slane %v1992, 1
        %v1995 = vor.u32 %v1990, %v1994
        %v1997 = vshll.u32 %v1873, 16
        %v1999 = vrot.slane %v1997, 1
        %v2000 = vsel %vm1880, %v1995, %v1999
        %v2002 = vshrl.u32 %v1826, 16
        %v2004 = vshll.u32 %v1826, 16
        %v2006 = vrot.slane %v2004, 1
        %v2007 = vor.u32 %v2002, %v2006
        %v2009 = vshll.u32 %v1874, 16
        %v2011 = vrot.slane %v2009, 1
        %v2012 = vsel %vm1880, %v2007, %v2011
        %v2014 = vshrl.u32 %v1827, 16
        %v2016 = vshll.u32 %v1827, 16
        %v2018 = vrot.slane %v2016, 1
        %v2019 = vor.u32 %v2014, %v2018
        %v2021 = vshll.u32 %v1875, 16
        %v2023 = vrot.slane %v2021, 1
        %v2024 = vsel %vm1880, %v2019, %v2023
        %v2026 = vshrl.u32 %v1828, 16
        %v2028 = vshll.u32 %v1828, 16
        %v2030 = vrot.slane %v2028, 1
        %v2031 = vor.u32 %v2026, %v2030
        %v2033 = vshll.u32 %v1876, 16
        %v2035 = vrot.slane %v2033, 1
        %v2036 = vsel %vm1880, %v2031, %v2035
        %v2038 = vshrl.u32 %v1829, 16
        %v2040 = vshll.u32 %v1829, 16
        %v2042 = vrot.slane %v2040, 1
        %v2043 = vor.u32 %v2038, %v2042
        %v2045 = vshll.u32 %v1877, 16
        %v2047 = vrot.slane %v2045, 1
        %v2048 = vsel %vm1880, %v2043, %v2047
        %v2050 = vshrl.u32 %v1830, 16
        %v2052 = vshll.u32 %v1830, 16
        %v2054 = vrot.slane %v2052, 1
        %v2055 = vor.u32 %v2050, %v2054
        %v2057 = vshll.u32 %v1878, 16
        %v2059 = vrot.slane %v2057, 1
        %v2060 = vsel %vm1880, %v2055, %v2059
        %v2062 = vshrl.u32 %v1831, 16
        %v2064 = vshll.u32 %v1831, 16
        %v2066 = vrot.slane %v2064, 1
        %v2067 = vor.u32 %v2062, %v2066
        %v2069 = vshll.u32 %v1879, 16
        %v2071 = vrot.slane %v2069, 1
        %v2072 = vsel %vm1880, %v2067, %v2071
        %2073 = vrot.lane.b32.xlu0 %v1892, 64
        %v2074 = vpop.permute.xlu0 %2073
        %2075 = vrot.lane.b32.xlu0 %v1904, 64
        %v2076 = vpop.permute.xlu0 %2075
        %2077 = vrot.lane.b32.xlu0 %v1916, 64
        %v2078 = vpop.permute.xlu0 %2077
        %2079 = vrot.lane.b32.xlu0 %v1928, 64
        %v2080 = vpop.permute.xlu0 %2079
        %2081 = vrot.lane.b32.xlu0 %v1940, 64
        %v2082 = vpop.permute.xlu0 %2081
        %2083 = vrot.lane.b32.xlu0 %v1952, 64
        %v2084 = vpop.permute.xlu0 %2083
        %2085 = vrot.lane.b32.xlu0 %v1964, 64
        %v2086 = vpop.permute.xlu0 %2085
        %2087 = vrot.lane.b32.xlu0 %v1976, 64
        %v2088 = vpop.permute.xlu0 %2087
        %2089 = vrot.lane.b32.xlu0 %v1988, 64
        %v2090 = vpop.permute.xlu0 %2089
        %2091 = vrot.lane.b32.xlu0 %v2000, 64
        %v2092 = vpop.permute.xlu0 %2091
        %2093 = vrot.lane.b32.xlu0 %v2012, 64
        %v2094 = vpop.permute.xlu0 %2093
        %2095 = vrot.lane.b32.xlu0 %v2024, 64
        %v2096 = vpop.permute.xlu0 %2095
        %2097 = vrot.lane.b32.xlu0 %v2036, 64
        %v2098 = vpop.permute.xlu0 %2097
        %2099 = vrot.lane.b32.xlu0 %v2048, 64
        %v2100 = vpop.permute.xlu0 %2099
        %2101 = vrot.lane.b32.xlu0 %v2060, 64
        %v2102 = vpop.permute.xlu0 %2101
        %2103 = vrot.lane.b32.xlu0 %v2072, 64
        %v2104 = vpop.permute.xlu0 %2103
        %v2121 = vunpack.c.l.b16 %v1736
        %v2122 = vunpack.c.l.b16 %v1737
        %v2123 = vunpack.c.l.b16 %v1738
        %v2124 = vunpack.c.l.b16 %v1739
        %v2125 = vunpack.c.l.b16 %v1740
        %v2126 = vunpack.c.l.b16 %v1741
        %v2127 = vunpack.c.l.b16 %v1742
        %v2128 = vunpack.c.l.b16 %v1743
        %v2129 = vunpack.c.l.b16 %v1744
        %v2130 = vunpack.c.l.b16 %v1745
        %v2131 = vunpack.c.l.b16 %v1746
        %v2132 = vunpack.c.l.b16 %v1747
        %v2133 = vunpack.c.l.b16 %v1748
        %v2134 = vunpack.c.l.b16 %v1749
        %v2135 = vunpack.c.l.b16 %v1750
        %v2136 = vunpack.c.l.b16 %v1751
        %v2137 = vpack.c.b16 %v1785, %v2121
        %v2138 = vpack.c.b16 %v1787, %v2122
        %v2139 = vpack.c.b16 %v1789, %v2123
        %v2140 = vpack.c.b16 %v1791, %v2124
        %v2141 = vpack.c.b16 %v1793, %v2125
        %v2142 = vpack.c.b16 %v1795, %v2126
        %v2143 = vpack.c.b16 %v1797, %v2127
        %v2144 = vpack.c.b16 %v1799, %v2128
        %v2145 = vpack.c.b16 %v1801, %v2129
        %v2146 = vpack.c.b16 %v1803, %v2130
        %v2147 = vpack.c.b16 %v1805, %v2131
        %v2148 = vpack.c.b16 %v1807, %v2132
        %v2149 = vpack.c.b16 %v1809, %v2133
        %v2150 = vpack.c.b16 %v1811, %v2134
        %v2151 = vpack.c.b16 %v1813, %v2135
        %v2152 = vpack.c.b16 %v1815, %v2136
        %vm2153 = vcmask 1046528
        %v2154 = vrot.slane %v2137, 1
        %v2155 = vrot.slane %v1864, 1
        %v2156 = vsel %vm2153, %v2154, %v2155
        %v2157 = vrot.slane %v2138, 1
        %v2158 = vrot.slane %v1865, 1
        %v2159 = vsel %vm2153, %v2157, %v2158
        %v2160 = vrot.slane %v2139, 1
        %v2161 = vrot.slane %v1866, 1
        %v2162 = vsel %vm2153, %v2160, %v2161
        %v2163 = vrot.slane %v2140, 1
        %v2164 = vrot.slane %v1867, 1
        %v2165 = vsel %vm2153, %v2163, %v2164
        %v2166 = vrot.slane %v2141, 1
        %v2167 = vrot.slane %v1868, 1
        %v2168 = vsel %vm2153, %v2166, %v2167
        %v2169 = vrot.slane %v2142, 1
        %v2170 = vrot.slane %v1869, 1
        %v2171 = vsel %vm2153, %v2169, %v2170
        %v2172 = vrot.slane %v2143, 1
        %v2173 = vrot.slane %v1870, 1
        %v2174 = vsel %vm2153, %v2172, %v2173
        %v2175 = vrot.slane %v2144, 1
        %v2176 = vrot.slane %v1871, 1
        %v2177 = vsel %vm2153, %v2175, %v2176
        %v2178 = vrot.slane %v2145, 1
        %v2179 = vrot.slane %v1872, 1
        %v2180 = vsel %vm2153, %v2178, %v2179
        %v2181 = vrot.slane %v2146, 1
        %v2182 = vrot.slane %v1873, 1
        %v2183 = vsel %vm2153, %v2181, %v2182
        %v2184 = vrot.slane %v2147, 1
        %v2185 = vrot.slane %v1874, 1
        %v2186 = vsel %vm2153, %v2184, %v2185
        %v2187 = vrot.slane %v2148, 1
        %v2188 = vrot.slane %v1875, 1
        %v2189 = vsel %vm2153, %v2187, %v2188
        %v2190 = vrot.slane %v2149, 1
        %v2191 = vrot.slane %v1876, 1
        %v2192 = vsel %vm2153, %v2190, %v2191
        %v2193 = vrot.slane %v2150, 1
        %v2194 = vrot.slane %v1877, 1
        %v2195 = vsel %vm2153, %v2193, %v2194
        %v2196 = vrot.slane %v2151, 1
        %v2197 = vrot.slane %v1878, 1
        %v2198 = vsel %vm2153, %v2196, %v2197
        %v2199 = vrot.slane %v2152, 1
        %v2200 = vrot.slane %v1879, 1
        %v2201 = vsel %vm2153, %v2199, %v2200
        %v2203 = vsel %vm391, %v1816, %v2074
        %v2206 = vsel %vm391, %v1817, %v2076
        %v2209 = vsel %vm391, %v1818, %v2078
        %v2212 = vsel %vm391, %v1819, %v2080
        %v2215 = vsel %vm391, %v1820, %v2082
        %v2218 = vsel %vm391, %v1821, %v2084
        %v2221 = vsel %vm391, %v1822, %v2086
        %v2224 = vsel %vm391, %v1823, %v2088
        %v2227 = vsel %vm391, %v1824, %v2090
        %v2230 = vsel %vm391, %v1825, %v2092
        %v2233 = vsel %vm391, %v1826, %v2094
        %v2236 = vsel %vm391, %v1827, %v2096
        %v2239 = vsel %vm391, %v1828, %v2098
        %v2242 = vsel %vm391, %v1829, %v2100
        %v2245 = vsel %vm391, %v1830, %v2102
        %v2248 = vsel %vm391, %v1831, %v2104
        %v2250 = vld [vmem:[%s4] sm:$0xf]
        %v2251 = vld [vmem:[%s4 + $0x4] sm:$0xf]
        %v2252 = vld [vmem:[%s4 + $0x8] sm:$0xf]
        %v2253 = vld [vmem:[%s4 + $0xc] sm:$0xf]
        %v2254 = vld [vmem:[%s4 + $0x10] sm:$0xf]
        %v2255 = vld [vmem:[%s4 + $0x14] sm:$0xf]
        %v2256 = vld [vmem:[%s4 + $0x18] sm:$0xf]
        %v2257 = vld [vmem:[%s4 + $0x1c] sm:$0xf]
        %v2258 = vld [vmem:[%s4 + $0x20] sm:$0xf]
        %v2259 = vld [vmem:[%s4 + $0x24] sm:$0xf]
        %v2260 = vld [vmem:[%s4 + $0x28] sm:$0xf]
        %v2261 = vld [vmem:[%s4 + $0x2c] sm:$0xf]
        %v2262 = vld [vmem:[%s4 + $0x30] sm:$0xf]
        %v2263 = vld [vmem:[%s4 + $0x34] sm:$0xf]
        %v2264 = vld [vmem:[%s4 + $0x38] sm:$0xf]
        %v2265 = vld [vmem:[%s4 + $0x3c] sm:$0xf]
        %v2266 = vld [vmem:[%s4 + $0x40] sm:$0xf]
        %v2267 = vld [vmem:[%s4 + $0x44] sm:$0xf]
        %v2268 = vld [vmem:[%s4 + $0x48] sm:$0xf]
        %v2269 = vld [vmem:[%s4 + $0x4c] sm:$0xf]
        %v2270 = vld [vmem:[%s4 + $0x50] sm:$0xf]
        %v2271 = vld [vmem:[%s4 + $0x54] sm:$0xf]
        %v2272 = vld [vmem:[%s4 + $0x58] sm:$0xf]
        %v2273 = vld [vmem:[%s4 + $0x5c] sm:$0xf]
        %v2274 = vld [vmem:[%s1573] sm:$0xf]
        %v2275 = vld [vmem:[%s1573 + $0x4] sm:$0xf]
        %v2276 = vld [vmem:[%s1573 + $0xc] sm:$0xf]
        %v2277 = vld [vmem:[%s1573 + $0x10] sm:$0xf]
        %v2278 = vld [vmem:[%s1573 + $0x18] sm:$0xf]
        %v2279 = vld [vmem:[%s1573 + $0x1c] sm:$0xf]
        %v2280 = vld [vmem:[%s1573 + $0x24] sm:$0xf]
        %v2281 = vld [vmem:[%s1573 + $0x28] sm:$0xf]
        %v2282 = vld [vmem:[%s1573 + $0x30] sm:$0xf]
        %v2283 = vld [vmem:[%s1573 + $0x34] sm:$0xf]
        %v2284 = vld [vmem:[%s1573 + $0x3c] sm:$0xf]
        %v2285 = vld [vmem:[%s1573 + $0x40] sm:$0xf]
        %v2286 = vld [vmem:[%s1573 + $0x48] sm:$0xf]
        %v2287 = vld [vmem:[%s1573 + $0x4c] sm:$0xf]
        %v2288 = vld [vmem:[%s1573 + $0x54] sm:$0xf]
        %v2289 = vld [vmem:[%s1573 + $0x58] sm:$0xf]
        %v2290 = vld [vmem:[%s1573 + $0x60] sm:$0xf]
        %v2291 = vld [vmem:[%s1573 + $0x64] sm:$0xf]
        %v2292 = vld [vmem:[%s1573 + $0x6c] sm:$0xf]
        %v2293 = vld [vmem:[%s1573 + $0x70] sm:$0xf]
        %v2294 = vld [vmem:[%s1573 + $0x78] sm:$0xf]
        %v2295 = vld [vmem:[%s1573 + $0x7c] sm:$0xf]
        %v2296 = vld [vmem:[%s1573 + $0x84] sm:$0xf]
        %v2297 = vld [vmem:[%s1573 + $0x88] sm:$0xf]
        %v2298 = vld [vmem:[%s1573 + $0x90] sm:$0xf]
        %v2299 = vld [vmem:[%s1573 + $0x94] sm:$0xf]
        %v2300 = vld [vmem:[%s1573 + $0x9c] sm:$0xf]
        %v2301 = vld [vmem:[%s1573 + $0xa0] sm:$0xf]
        %v2302 = vld [vmem:[%s1573 + $0xa8] sm:$0xf]
        %v2303 = vld [vmem:[%s1573 + $0xac] sm:$0xf]
        %v2304 = vld [vmem:[%s1573 + $0xb4] sm:$0xf]
        %v2305 = vld [vmem:[%s1573 + $0xb8] sm:$0xf]
        %v2306 = vld [vmem:[%s1573 + $0x8] sm:$0x1]
        %v2307 = vld [vmem:[%s1573 + $0x14] sm:$0x1]
        %v2308 = vld [vmem:[%s1573 + $0x20] sm:$0x1]
        %v2309 = vld [vmem:[%s1573 + $0x2c] sm:$0x1]
        %v2310 = vld [vmem:[%s1573 + $0x38] sm:$0x1]
        %v2311 = vld [vmem:[%s1573 + $0x44] sm:$0x1]
        %v2312 = vld [vmem:[%s1573 + $0x50] sm:$0x1]
        %v2313 = vld [vmem:[%s1573 + $0x5c] sm:$0x1]
        %v2314 = vld [vmem:[%s1573 + $0x68] sm:$0x1]
        %v2315 = vld [vmem:[%s1573 + $0x74] sm:$0x1]
        %v2316 = vld [vmem:[%s1573 + $0x80] sm:$0x1]
        %v2317 = vld [vmem:[%s1573 + $0x8c] sm:$0x1]
        %v2318 = vld [vmem:[%s1573 + $0x98] sm:$0x1]
        %v2319 = vld [vmem:[%s1573 + $0xa4] sm:$0x1]
        %v2320 = vld [vmem:[%s1573 + $0xb0] sm:$0x1]
        %v2321 = vld [vmem:[%s1573 + $0xbc] sm:$0x1]
        %v2322 = vld [vmem:[%s1573] sm:$0xe]
        %v2323 = vld [vmem:[%s1573 + $0xc] sm:$0xe]
        %v2324 = vld [vmem:[%s1573 + $0x18] sm:$0xe]
        %v2325 = vld [vmem:[%s1573 + $0x24] sm:$0xe]
        %v2326 = vld [vmem:[%s1573 + $0x30] sm:$0xe]
        %v2327 = vld [vmem:[%s1573 + $0x3c] sm:$0xe]
        %v2328 = vld [vmem:[%s1573 + $0x48] sm:$0xe]
        %v2329 = vld [vmem:[%s1573 + $0x54] sm:$0xe]
        %v2330 = vld [vmem:[%s1573 + $0x60] sm:$0xe]
        %v2331 = vld [vmem:[%s1573 + $0x6c] sm:$0xe]
        %v2332 = vld [vmem:[%s1573 + $0x78] sm:$0xe]
        %v2333 = vld [vmem:[%s1573 + $0x84] sm:$0xe]
        %v2334 = vld [vmem:[%s1573 + $0x90] sm:$0xe]
        %v2335 = vld [vmem:[%s1573 + $0x9c] sm:$0xe]
        %v2336 = vld [vmem:[%s1573 + $0xa8] sm:$0xe]
        %v2337 = vld [vmem:[%s1573 + $0xb4] sm:$0xe]
        %v2370 = vunpack.c.l.b16 %v2274
        %v2371 = vunpack.c.l.b16 %v2275
        %v2372 = vunpack.c.l.b16 %v2276
        %v2373 = vunpack.c.l.b16 %v2277
        %v2374 = vunpack.c.l.b16 %v2278
        %v2375 = vunpack.c.l.b16 %v2279
        %v2376 = vunpack.c.l.b16 %v2280
        %v2377 = vunpack.c.l.b16 %v2281
        %v2378 = vunpack.c.l.b16 %v2282
        %v2379 = vunpack.c.l.b16 %v2283
        %v2380 = vunpack.c.l.b16 %v2284
        %v2381 = vunpack.c.l.b16 %v2285
        %v2382 = vunpack.c.l.b16 %v2286
        %v2383 = vunpack.c.l.b16 %v2287
        %v2384 = vunpack.c.l.b16 %v2288
        %v2385 = vunpack.c.l.b16 %v2289
        %v2386 = vunpack.c.l.b16 %v2290
        %v2387 = vunpack.c.l.b16 %v2291
        %v2388 = vunpack.c.l.b16 %v2292
        %v2389 = vunpack.c.l.b16 %v2293
        %v2390 = vunpack.c.l.b16 %v2294
        %v2391 = vunpack.c.l.b16 %v2295
        %v2392 = vunpack.c.l.b16 %v2296
        %v2393 = vunpack.c.l.b16 %v2297
        %v2394 = vunpack.c.l.b16 %v2298
        %v2395 = vunpack.c.l.b16 %v2299
        %v2396 = vunpack.c.l.b16 %v2300
        %v2397 = vunpack.c.l.b16 %v2301
        %v2398 = vunpack.c.l.b16 %v2302
        %v2399 = vunpack.c.l.b16 %v2303
        %v2400 = vunpack.c.l.b16 %v2304
        %v2401 = vunpack.c.l.b16 %v2305
        %v2402 = vpack.c.b16 %v2371, %v2370
        %v2403 = vpack.c.b16 %v2373, %v2372
        %v2404 = vpack.c.b16 %v2375, %v2374
        %v2405 = vpack.c.b16 %v2377, %v2376
        %v2406 = vpack.c.b16 %v2379, %v2378
        %v2407 = vpack.c.b16 %v2381, %v2380
        %v2408 = vpack.c.b16 %v2383, %v2382
        %v2409 = vpack.c.b16 %v2385, %v2384
        %v2410 = vpack.c.b16 %v2387, %v2386
        %v2411 = vpack.c.b16 %v2389, %v2388
        %v2412 = vpack.c.b16 %v2391, %v2390
        %v2413 = vpack.c.b16 %v2393, %v2392
        %v2414 = vpack.c.b16 %v2395, %v2394
        %v2415 = vpack.c.b16 %v2397, %v2396
        %v2416 = vpack.c.b16 %v2399, %v2398
        %v2417 = vpack.c.b16 %v2401, %v2400
        %v2434 = vunpack.c.l.b16 %v2306
        %v2435 = vunpack.c.l.b16 %v2307
        %v2436 = vunpack.c.l.b16 %v2308
        %v2437 = vunpack.c.l.b16 %v2309
        %v2438 = vunpack.c.l.b16 %v2310
        %v2439 = vunpack.c.l.b16 %v2311
        %v2440 = vunpack.c.l.b16 %v2312
        %v2441 = vunpack.c.l.b16 %v2313
        %v2442 = vunpack.c.l.b16 %v2314
        %v2443 = vunpack.c.l.b16 %v2315
        %v2444 = vunpack.c.l.b16 %v2316
        %v2445 = vunpack.c.l.b16 %v2317
        %v2446 = vunpack.c.l.b16 %v2318
        %v2447 = vunpack.c.l.b16 %v2319
        %v2448 = vunpack.c.l.b16 %v2320
        %v2449 = vunpack.c.l.b16 %v2321
        %v2450 = vpack.c.b16 %v2434, %v2434
        %v2451 = vpack.c.b16 %v2435, %v2435
        %v2452 = vpack.c.b16 %v2436, %v2436
        %v2453 = vpack.c.b16 %v2437, %v2437
        %v2454 = vpack.c.b16 %v2438, %v2438
        %v2455 = vpack.c.b16 %v2439, %v2439
        %v2456 = vpack.c.b16 %v2440, %v2440
        %v2457 = vpack.c.b16 %v2441, %v2441
        %v2458 = vpack.c.b16 %v2442, %v2442
        %v2459 = vpack.c.b16 %v2443, %v2443
        %v2460 = vpack.c.b16 %v2444, %v2444
        %v2461 = vpack.c.b16 %v2445, %v2445
        %v2462 = vpack.c.b16 %v2446, %v2446
        %v2463 = vpack.c.b16 %v2447, %v2447
        %v2464 = vpack.c.b16 %v2448, %v2448
        %v2465 = vpack.c.b16 %v2449, %v2449
        %v2467 = vshrl.u32 %v2402, 16
        %v2469 = vshll.u32 %v2402, 16
        %v2471 = vrot.slane %v2469, 1
        %v2472 = vor.u32 %v2467, %v2471
        %v2474 = vshll.u32 %v2450, 16
        %v2476 = vrot.slane %v2474, 1
        %v2477 = vsel %vm1880, %v2472, %v2476
        %v2479 = vshrl.u32 %v2403, 16
        %v2481 = vshll.u32 %v2403, 16
        %v2483 = vrot.slane %v2481, 1
        %v2484 = vor.u32 %v2479, %v2483
        %v2486 = vshll.u32 %v2451, 16
        %v2488 = vrot.slane %v2486, 1
        %v2489 = vsel %vm1880, %v2484, %v2488
        %v2491 = vshrl.u32 %v2404, 16
        %v2493 = vshll.u32 %v2404, 16
        %v2495 = vrot.slane %v2493, 1
        %v2496 = vor.u32 %v2491, %v2495
        %v2498 = vshll.u32 %v2452, 16
        %v2500 = vrot.slane %v2498, 1
        %v2501 = vsel %vm1880, %v2496, %v2500
        %v2503 = vshrl.u32 %v2405, 16
        %v2505 = vshll.u32 %v2405, 16
        %v2507 = vrot.slane %v2505, 1
        %v2508 = vor.u32 %v2503, %v2507
        %v2510 = vshll.u32 %v2453, 16
        %v2512 = vrot.slane %v2510, 1
        %v2513 = vsel %vm1880, %v2508, %v2512
        %v2515 = vshrl.u32 %v2406, 16
        %v2517 = vshll.u32 %v2406, 16
        %v2519 = vrot.slane %v2517, 1
        %v2520 = vor.u32 %v2515, %v2519
        %v2522 = vshll.u32 %v2454, 16
        %v2524 = vrot.slane %v2522, 1
        %v2525 = vsel %vm1880, %v2520, %v2524
        %v2527 = vshrl.u32 %v2407, 16
        %v2529 = vshll.u32 %v2407, 16
        %v2531 = vrot.slane %v2529, 1
        %v2532 = vor.u32 %v2527, %v2531
        %v2534 = vshll.u32 %v2455, 16
        %v2536 = vrot.slane %v2534, 1
        %v2537 = vsel %vm1880, %v2532, %v2536
        %v2539 = vshrl.u32 %v2408, 16
        %v2541 = vshll.u32 %v2408, 16
        %v2543 = vrot.slane %v2541, 1
        %v2544 = vor.u32 %v2539, %v2543
        %v2546 = vshll.u32 %v2456, 16
        %v2548 = vrot.slane %v2546, 1
        %v2549 = vsel %vm1880, %v2544, %v2548
        %v2551 = vshrl.u32 %v2409, 16
        %v2553 = vshll.u32 %v2409, 16
        %v2555 = vrot.slane %v2553, 1
        %v2556 = vor.u32 %v2551, %v2555
        %v2558 = vshll.u32 %v2457, 16
        %v2560 = vrot.slane %v2558, 1
        %v2561 = vsel %vm1880, %v2556, %v2560
        %v2563 = vshrl.u32 %v2410, 16
        %v2565 = vshll.u32 %v2410, 16
        %v2567 = vrot.slane %v2565, 1
        %v2568 = vor.u32 %v2563, %v2567
        %v2570 = vshll.u32 %v2458, 16
        %v2572 = vrot.slane %v2570, 1
        %v2573 = vsel %vm1880, %v2568, %v2572
        %v2575 = vshrl.u32 %v2411, 16
        %v2577 = vshll.u32 %v2411, 16
        %v2579 = vrot.slane %v2577, 1
        %v2580 = vor.u32 %v2575, %v2579
        %v2582 = vshll.u32 %v2459, 16
        %v2584 = vrot.slane %v2582, 1
        %v2585 = vsel %vm1880, %v2580, %v2584
        %v2587 = vshrl.u32 %v2412, 16
        %v2589 = vshll.u32 %v2412, 16
        %v2591 = vrot.slane %v2589, 1
        %v2592 = vor.u32 %v2587, %v2591
        %v2594 = vshll.u32 %v2460, 16
        %v2596 = vrot.slane %v2594, 1
        %v2597 = vsel %vm1880, %v2592, %v2596
        %v2599 = vshrl.u32 %v2413, 16
        %v2601 = vshll.u32 %v2413, 16
        %v2603 = vrot.slane %v2601, 1
        %v2604 = vor.u32 %v2599, %v2603
        %v2606 = vshll.u32 %v2461, 16
        %v2608 = vrot.slane %v2606, 1
        %v2609 = vsel %vm1880, %v2604, %v2608
        %v2611 = vshrl.u32 %v2414, 16
        %v2613 = vshll.u32 %v2414, 16
        %v2615 = vrot.slane %v2613, 1
        %v2616 = vor.u32 %v2611, %v2615
        %v2618 = vshll.u32 %v2462, 16
        %v2620 = vrot.slane %v2618, 1
        %v2621 = vsel %vm1880, %v2616, %v2620
        %v2623 = vshrl.u32 %v2415, 16
        %v2625 = vshll.u32 %v2415, 16
        %v2627 = vrot.slane %v2625, 1
        %v2628 = vor.u32 %v2623, %v2627
        %v2630 = vshll.u32 %v2463, 16
        %v2632 = vrot.slane %v2630, 1
        %v2633 = vsel %vm1880, %v2628, %v2632
        %v2635 = vshrl.u32 %v2416, 16
        %v2637 = vshll.u32 %v2416, 16
        %v2639 = vrot.slane %v2637, 1
        %v2640 = vor.u32 %v2635, %v2639
        %v2642 = vshll.u32 %v2464, 16
        %v2644 = vrot.slane %v2642, 1
        %v2645 = vsel %vm1880, %v2640, %v2644
        %v2647 = vshrl.u32 %v2417, 16
        %v2649 = vshll.u32 %v2417, 16
        %v2651 = vrot.slane %v2649, 1
        %v2652 = vor.u32 %v2647, %v2651
        %v2654 = vshll.u32 %v2465, 16
        %v2656 = vrot.slane %v2654, 1
        %v2657 = vsel %vm1880, %v2652, %v2656
        %2658 = vrot.lane.b32.xlu0 %v2477, 64
        %v2659 = vpop.permute.xlu0 %2658
        %2660 = vrot.lane.b32.xlu0 %v2489, 64
        %v2661 = vpop.permute.xlu0 %2660
        %2662 = vrot.lane.b32.xlu0 %v2501, 64
        %v2663 = vpop.permute.xlu0 %2662
        %2664 = vrot.lane.b32.xlu0 %v2513, 64
        %v2665 = vpop.permute.xlu0 %2664
        %2666 = vrot.lane.b32.xlu0 %v2525, 64
        %v2667 = vpop.permute.xlu0 %2666
        %2668 = vrot.lane.b32.xlu0 %v2537, 64
        %v2669 = vpop.permute.xlu0 %2668
        %2670 = vrot.lane.b32.xlu0 %v2549, 64
        %v2671 = vpop.permute.xlu0 %2670
        %2672 = vrot.lane.b32.xlu0 %v2561, 64
        %v2673 = vpop.permute.xlu0 %2672
        %2674 = vrot.lane.b32.xlu0 %v2573, 64
        %v2675 = vpop.permute.xlu0 %2674
        %2676 = vrot.lane.b32.xlu0 %v2585, 64
        %v2677 = vpop.permute.xlu0 %2676
        %2678 = vrot.lane.b32.xlu0 %v2597, 64
        %v2679 = vpop.permute.xlu0 %2678
        %2680 = vrot.lane.b32.xlu0 %v2609, 64
        %v2681 = vpop.permute.xlu0 %2680
        %2682 = vrot.lane.b32.xlu0 %v2621, 64
        %v2683 = vpop.permute.xlu0 %2682
        %2684 = vrot.lane.b32.xlu0 %v2633, 64
        %v2685 = vpop.permute.xlu0 %2684
        %2686 = vrot.lane.b32.xlu0 %v2645, 64
        %v2687 = vpop.permute.xlu0 %2686
        %2688 = vrot.lane.b32.xlu0 %v2657, 64
        %v2689 = vpop.permute.xlu0 %2688
        %v2706 = vunpack.c.l.b16 %v2322
        %v2707 = vunpack.c.l.b16 %v2323
        %v2708 = vunpack.c.l.b16 %v2324
        %v2709 = vunpack.c.l.b16 %v2325
        %v2710 = vunpack.c.l.b16 %v2326
        %v2711 = vunpack.c.l.b16 %v2327
        %v2712 = vunpack.c.l.b16 %v2328
        %v2713 = vunpack.c.l.b16 %v2329
        %v2714 = vunpack.c.l.b16 %v2330
        %v2715 = vunpack.c.l.b16 %v2331
        %v2716 = vunpack.c.l.b16 %v2332
        %v2717 = vunpack.c.l.b16 %v2333
        %v2718 = vunpack.c.l.b16 %v2334
        %v2719 = vunpack.c.l.b16 %v2335
        %v2720 = vunpack.c.l.b16 %v2336
        %v2721 = vunpack.c.l.b16 %v2337
        %v2722 = vpack.c.b16 %v2371, %v2706
        %v2723 = vpack.c.b16 %v2373, %v2707
        %v2724 = vpack.c.b16 %v2375, %v2708
        %v2725 = vpack.c.b16 %v2377, %v2709
        %v2726 = vpack.c.b16 %v2379, %v2710
        %v2727 = vpack.c.b16 %v2381, %v2711
        %v2728 = vpack.c.b16 %v2383, %v2712
        %v2729 = vpack.c.b16 %v2385, %v2713
        %v2730 = vpack.c.b16 %v2387, %v2714
        %v2731 = vpack.c.b16 %v2389, %v2715
        %v2732 = vpack.c.b16 %v2391, %v2716
        %v2733 = vpack.c.b16 %v2393, %v2717
        %v2734 = vpack.c.b16 %v2395, %v2718
        %v2735 = vpack.c.b16 %v2397, %v2719
        %v2736 = vpack.c.b16 %v2399, %v2720
        %v2737 = vpack.c.b16 %v2401, %v2721
        %v2738 = vrot.slane %v2722, 1
        %v2739 = vrot.slane %v2450, 1
        %v2740 = vsel %vm2153, %v2738, %v2739
        %v2741 = vrot.slane %v2723, 1
        %v2742 = vrot.slane %v2451, 1
        %v2743 = vsel %vm2153, %v2741, %v2742
        %v2744 = vrot.slane %v2724, 1
        %v2745 = vrot.slane %v2452, 1
        %v2746 = vsel %vm2153, %v2744, %v2745
        %v2747 = vrot.slane %v2725, 1
        %v2748 = vrot.slane %v2453, 1
        %v2749 = vsel %vm2153, %v2747, %v2748
        %v2750 = vrot.slane %v2726, 1
        %v2751 = vrot.slane %v2454, 1
        %v2752 = vsel %vm2153, %v2750, %v2751
        %v2753 = vrot.slane %v2727, 1
        %v2754 = vrot.slane %v2455, 1
        %v2755 = vsel %vm2153, %v2753, %v2754
        %v2756 = vrot.slane %v2728, 1
        %v2757 = vrot.slane %v2456, 1
        %v2758 = vsel %vm2153, %v2756, %v2757
        %v2759 = vrot.slane %v2729, 1
        %v2760 = vrot.slane %v2457, 1
        %v2761 = vsel %vm2153, %v2759, %v2760
        %v2762 = vrot.slane %v2730, 1
        %v2763 = vrot.slane %v2458, 1
        %v2764 = vsel %vm2153, %v2762, %v2763
        %v2765 = vrot.slane %v2731, 1
        %v2766 = vrot.slane %v2459, 1
        %v2767 = vsel %vm2153, %v2765, %v2766
        %v2768 = vrot.slane %v2732, 1
        %v2769 = vrot.slane %v2460, 1
        %v2770 = vsel %vm2153, %v2768, %v2769
        %v2771 = vrot.slane %v2733, 1
        %v2772 = vrot.slane %v2461, 1
        %v2773 = vsel %vm2153, %v2771, %v2772
        %v2774 = vrot.slane %v2734, 1
        %v2775 = vrot.slane %v2462, 1
        %v2776 = vsel %vm2153, %v2774, %v2775
        %v2777 = vrot.slane %v2735, 1
        %v2778 = vrot.slane %v2463, 1
        %v2779 = vsel %vm2153, %v2777, %v2778
        %v2780 = vrot.slane %v2736, 1
        %v2781 = vrot.slane %v2464, 1
        %v2782 = vsel %vm2153, %v2780, %v2781
        %v2783 = vrot.slane %v2737, 1
        %v2784 = vrot.slane %v2465, 1
        %v2785 = vsel %vm2153, %v2783, %v2784
        %v2787 = vsel %vm391, %v2402, %v2659
        %v2790 = vsel %vm391, %v2403, %v2661
        %v2793 = vsel %vm391, %v2404, %v2663
        %v2796 = vsel %vm391, %v2405, %v2665
        %v2799 = vsel %vm391, %v2406, %v2667
        %v2802 = vsel %vm391, %v2407, %v2669
        %v2805 = vsel %vm391, %v2408, %v2671
        %v2808 = vsel %vm391, %v2409, %v2673
        %v2811 = vsel %vm391, %v2410, %v2675
        %v2814 = vsel %vm391, %v2411, %v2677
        %v2817 = vsel %vm391, %v2412, %v2679
        %v2820 = vsel %vm391, %v2413, %v2681
        %v2823 = vsel %vm391, %v2414, %v2683
        %v2826 = vsel %vm391, %v2415, %v2685
        %v2829 = vsel %vm391, %v2416, %v2687
        %v2832 = vsel %vm391, %v2417, %v2689
        %s2834 = scalar_lea.vmem %s4, 96
        %v2835 = vld [vmem:[%s2834] sm:$0xf]
        %v2836 = vld [vmem:[%s2834 + $0x4] sm:$0xf]
        %v2837 = vld [vmem:[%s2834 + $0x8] sm:$0xf]
        %v2838 = vld [vmem:[%s2834 + $0xc] sm:$0xf]
        %v2839 = vld [vmem:[%s2834 + $0x10] sm:$0xf]
        %v2840 = vld [vmem:[%s2834 + $0x14] sm:$0xf]
        %v2841 = vld [vmem:[%s2834 + $0x18] sm:$0xf]
        %v2842 = vld [vmem:[%s2834 + $0x1c] sm:$0xf]
        %v2843 = vld [vmem:[%s2834 + $0x20] sm:$0xf]
        %v2844 = vld [vmem:[%s2834 + $0x24] sm:$0xf]
        %v2845 = vld [vmem:[%s2834 + $0x28] sm:$0xf]
        %v2846 = vld [vmem:[%s2834 + $0x2c] sm:$0xf]
        %v2847 = vld [vmem:[%s2834 + $0x30] sm:$0xf]
        %v2848 = vld [vmem:[%s2834 + $0x34] sm:$0xf]
        %v2849 = vld [vmem:[%s2834 + $0x38] sm:$0xf]
        %v2850 = vld [vmem:[%s2834 + $0x3c] sm:$0xf]
        %v2851 = vld [vmem:[%s2834 + $0x40] sm:$0xf]
        %v2852 = vld [vmem:[%s2834 + $0x44] sm:$0xf]
        %v2853 = vld [vmem:[%s2834 + $0x48] sm:$0xf]
        %v2854 = vld [vmem:[%s2834 + $0x4c] sm:$0xf]
        %v2855 = vld [vmem:[%s2834 + $0x50] sm:$0xf]
        %v2856 = vld [vmem:[%s2834 + $0x54] sm:$0xf]
        %v2857 = vld [vmem:[%s2834 + $0x58] sm:$0xf]
        %v2858 = vld [vmem:[%s2834 + $0x5c] sm:$0xf]
        %v2883 = vunpack.c.l.b16 %v2835
        %v2884 = vunpack.c.l.b16 %v2836
        %v2885 = vunpack.c.l.b16 %v2837
        %v2886 = vunpack.c.l.b16 %v2838
        %v2887 = vunpack.c.l.b16 %v2839
        %v2888 = vunpack.c.l.b16 %v2840
        %v2889 = vunpack.c.l.b16 %v2841
        %v2890 = vunpack.c.l.b16 %v2842
        %v2891 = vunpack.c.l.b16 %v2843
        %v2892 = vunpack.c.l.b16 %v2844
        %v2893 = vunpack.c.l.b16 %v2845
        %v2894 = vunpack.c.l.b16 %v2846
        %v2895 = vunpack.c.l.b16 %v2847
        %v2896 = vunpack.c.l.b16 %v2848
        %v2897 = vunpack.c.l.b16 %v2849
        %v2898 = vunpack.c.l.b16 %v2850
        %v2899 = vunpack.c.l.b16 %v2851
        %v2900 = vunpack.c.l.b16 %v2852
        %v2901 = vunpack.c.l.b16 %v2853
        %v2902 = vunpack.c.l.b16 %v2854
        %v2903 = vunpack.c.l.b16 %v2855
        %v2904 = vunpack.c.l.b16 %v2856
        %v2905 = vunpack.c.l.b16 %v2857
        %v2906 = vunpack.c.l.b16 %v2858
        %v2907 = vpack.c.b16 %v2884, %v2883
        %v2908 = vpack.c.b16 %v2886, %v2885
        %v2909 = vpack.c.b16 %v2888, %v2887
        %v2910 = vpack.c.b16 %v2890, %v2889
        %v2911 = vpack.c.b16 %v2892, %v2891
        %v2912 = vpack.c.b16 %v2894, %v2893
        %v2913 = vpack.c.b16 %v2896, %v2895
        %v2914 = vpack.c.b16 %v2898, %v2897
        %v2915 = vpack.c.b16 %v2900, %v2899
        %v2916 = vpack.c.b16 %v2902, %v2901
        %v2917 = vpack.c.b16 %v2904, %v2903
        %v2918 = vpack.c.b16 %v2906, %v2905
        %v2932 = vsel %vm391, %v2740, 0
        %v2935 = vsel %vm391, %v2743, 0
        %v2938 = vsel %vm391, %v2746, 0
        %v2941 = vsel %vm391, %v2749, 0
        %v2944 = vsel %vm391, %v2752, 0
        %v2947 = vsel %vm391, %v2755, 0
        %v2950 = vsel %vm391, %v2758, 0
        %v2953 = vsel %vm391, %v2761, 0
        %v2956 = vsel %vm391, %v2764, 0
        %v2959 = vsel %vm391, %v2767, 0
        %v2962 = vsel %vm391, %v2770, 0
        %v2965 = vsel %vm391, %v2773, 0
        %v2968 = vsel %vm391, %v2776, 0
        %v2971 = vsel %vm391, %v2779, 0
        %v2974 = vsel %vm391, %v2782, 0
        %v2977 = vsel %vm391, %v2785, 0
        %2979 = vmatprep.subr.bf16.mxu0 0
        %2980 = vmatpush1.bf16.msra.mxu0 %v2914
        %2981 = vmatprep.subr.bf16.mxu0 0
        %2982 = vmatpush1.bf16.msra.mxu0 %v2913
        %2983 = vmatprep.subr.bf16.mxu0 0
        %2984 = vmatpush1.bf16.msra.mxu0 %v2912
        %2985 = vmatprep.subr.bf16.mxu0 0
        %2986 = vmatpush1.bf16.msra.mxu0 %v2911
        %2987 = vmatprep.subr.bf16.mxu0 0
        %2988 = vmatpush1.bf16.msra.mxu0 %v2910
        %2989 = vmatprep.subr.bf16.mxu0 0
        %2990 = vmatpush1.bf16.msra.mxu0 %v2909
        %2991 = vmatprep.subr.bf16.mxu0 0
        %2992 = vmatpush1.bf16.msra.mxu0 %v2908
        %2993 = vmatprep.subr.bf16.mxu0 0
        %2994 = vmatpush1.bf16.msra.mxu0 %v2907
        %2995 = vmatprep.subr.bf16.mxu0 0
        %2996 = vmatpush2.bf16.msra.mxu0 0
        %2997 = vmatprep.subr.bf16.mxu0 0
        %2998 = vmatpush2.bf16.msra.mxu0 0
        %2999 = vmatprep.subr.bf16.mxu0 0
        %3000 = vmatpush2.bf16.msra.mxu0 0
        %3001 = vmatprep.subr.bf16.mxu0 0
        %3002 = vmatpush2.bf16.msra.mxu0 0
        %3003 = vmatprep.subr.bf16.mxu0 0
        %3004 = vmatpush2.bf16.msra.mxu0 %v2918
        %3005 = vmatprep.subr.bf16.mxu0 0
        %3006 = vmatpush2.bf16.msra.mxu0 %v2917
        %3007 = vmatprep.subr.bf16.mxu0 0
        %3008 = vmatpush2.bf16.msra.mxu0 %v2916
        %3009 = vmatprep.subr.bf16.mxu0 0
        %3010 = vmatpush2.bf16.msra.mxu0 %v2915
        %3011 = vmatprep.mubr.bf16.mxu0 %v2932
        %3012 = vmatmul.mubr.bf16.gmra.mxu0 %v2787
        %v3013 = vpop.f32.mrf.mxu0
        %v3014 = vadd.f32 0.0, %v3013
        %v3015 = vpop.f32.mrf.mxu0
        %v3016 = vpop.f32.mrf.mxu0
        %v3017 = vadd.f32 0.0, %v3016
        %v3018 = vpop.f32.mrf.mxu0
        %3019 = vmatprep.mubr.bf16.mxu0 %v2935
        %3020 = vmatmul.mubr.bf16.gmra.mxu0 %v2790
        %v3021 = vpop.f32.mrf.mxu0
        %v3022 = vadd.f32 0.0, %v3021
        %v3023 = vpop.f32.mrf.mxu0
        %v3024 = vpop.f32.mrf.mxu0
        %v3025 = vadd.f32 0.0, %v3024
        %v3026 = vpop.f32.mrf.mxu0
        %3027 = vmatprep.mubr.bf16.mxu0 %v2938
        %3028 = vmatmul.mubr.bf16.gmra.mxu0 %v2793
        %v3029 = vpop.f32.mrf.mxu0
        %v3030 = vadd.f32 0.0, %v3029
        %v3031 = vpop.f32.mrf.mxu0
        %v3032 = vpop.f32.mrf.mxu0
        %v3033 = vadd.f32 0.0, %v3032
        %v3034 = vpop.f32.mrf.mxu0
        %3035 = vmatprep.mubr.bf16.mxu0 %v2941
        %3036 = vmatmul.mubr.bf16.gmra.mxu0 %v2796
        %v3037 = vpop.f32.mrf.mxu0
        %v3038 = vadd.f32 0.0, %v3037
        %v3039 = vpop.f32.mrf.mxu0
        %v3040 = vpop.f32.mrf.mxu0
        %v3041 = vadd.f32 0.0, %v3040
        %v3042 = vpop.f32.mrf.mxu0
        %3043 = vmatprep.mubr.bf16.mxu0 %v2944
        %3044 = vmatmul.mubr.bf16.gmra.mxu0 %v2799
        %v3045 = vpop.f32.mrf.mxu0
        %v3046 = vadd.f32 0.0, %v3045
        %v3047 = vpop.f32.mrf.mxu0
        %v3048 = vpop.f32.mrf.mxu0
        %v3049 = vadd.f32 0.0, %v3048
        %v3050 = vpop.f32.mrf.mxu0
        %3051 = vmatprep.mubr.bf16.mxu0 %v2947
        %3052 = vmatmul.mubr.bf16.gmra.mxu0 %v2802
        %v3053 = vpop.f32.mrf.mxu0
        %v3054 = vadd.f32 0.0, %v3053
        %v3055 = vpop.f32.mrf.mxu0
        %v3056 = vpop.f32.mrf.mxu0
        %v3057 = vadd.f32 0.0, %v3056
        %v3058 = vpop.f32.mrf.mxu0
        %3059 = vmatprep.mubr.bf16.mxu0 %v2950
        %3060 = vmatmul.mubr.bf16.gmra.mxu0 %v2805
        %v3061 = vpop.f32.mrf.mxu0
        %v3062 = vadd.f32 0.0, %v3061
        %v3063 = vpop.f32.mrf.mxu0
        %v3064 = vpop.f32.mrf.mxu0
        %v3065 = vadd.f32 0.0, %v3064
        %v3066 = vpop.f32.mrf.mxu0
        %3067 = vmatprep.mubr.bf16.mxu0 %v2953
        %3068 = vmatmul.mubr.bf16.gmra.mxu0 %v2808
        %v3069 = vpop.f32.mrf.mxu0
        %v3070 = vadd.f32 0.0, %v3069
        %v3071 = vpop.f32.mrf.mxu0
        %v3072 = vpop.f32.mrf.mxu0
        %v3073 = vadd.f32 0.0, %v3072
        %v3074 = vpop.f32.mrf.mxu0
        %3075 = vmatprep.mubr.bf16.mxu0 %v2956
        %3076 = vmatmul.mubr.bf16.gmra.mxu0 %v2811
        %v3077 = vpop.f32.mrf.mxu0
        %v3078 = vadd.f32 0.0, %v3077
        %v3079 = vpop.f32.mrf.mxu0
        %v3080 = vpop.f32.mrf.mxu0
        %v3081 = vadd.f32 0.0, %v3080
        %v3082 = vpop.f32.mrf.mxu0
        %3083 = vmatprep.mubr.bf16.mxu0 %v2959
        %3084 = vmatmul.mubr.bf16.gmra.mxu0 %v2814
        %v3085 = vpop.f32.mrf.mxu0
        %v3086 = vadd.f32 0.0, %v3085
        %v3087 = vpop.f32.mrf.mxu0
        %v3088 = vpop.f32.mrf.mxu0
        %v3089 = vadd.f32 0.0, %v3088
        %v3090 = vpop.f32.mrf.mxu0
        %3091 = vmatprep.mubr.bf16.mxu0 %v2962
        %3092 = vmatmul.mubr.bf16.gmra.mxu0 %v2817
        %v3093 = vpop.f32.mrf.mxu0
        %v3094 = vadd.f32 0.0, %v3093
        %v3095 = vpop.f32.mrf.mxu0
        %v3096 = vpop.f32.mrf.mxu0
        %v3097 = vadd.f32 0.0, %v3096
        %v3098 = vpop.f32.mrf.mxu0
        %3099 = vmatprep.mubr.bf16.mxu0 %v2965
        %3100 = vmatmul.mubr.bf16.gmra.mxu0 %v2820
        %v3101 = vpop.f32.mrf.mxu0
        %v3102 = vadd.f32 0.0, %v3101
        %v3103 = vpop.f32.mrf.mxu0
        %v3104 = vpop.f32.mrf.mxu0
        %v3105 = vadd.f32 0.0, %v3104
        %v3106 = vpop.f32.mrf.mxu0
        %3107 = vmatprep.mubr.bf16.mxu0 %v2968
        %3108 = vmatmul.mubr.bf16.gmra.mxu0 %v2823
        %v3109 = vpop.f32.mrf.mxu0
        %v3110 = vadd.f32 0.0, %v3109
        %v3111 = vpop.f32.mrf.mxu0
        %v3112 = vpop.f32.mrf.mxu0
        %v3113 = vadd.f32 0.0, %v3112
        %v3114 = vpop.f32.mrf.mxu0
        %3115 = vmatprep.mubr.bf16.mxu0 %v2971
        %3116 = vmatmul.mubr.bf16.gmra.mxu0 %v2826
        %v3117 = vpop.f32.mrf.mxu0
        %v3118 = vadd.f32 0.0, %v3117
        %v3119 = vpop.f32.mrf.mxu0
        %v3120 = vpop.f32.mrf.mxu0
        %v3121 = vadd.f32 0.0, %v3120
        %v3122 = vpop.f32.mrf.mxu0
        %3123 = vmatprep.mubr.bf16.mxu0 %v2974
        %3124 = vmatmul.mubr.bf16.gmra.mxu0 %v2829
        %v3125 = vpop.f32.mrf.mxu0
        %v3126 = vadd.f32 0.0, %v3125
        %v3127 = vpop.f32.mrf.mxu0
        %v3128 = vpop.f32.mrf.mxu0
        %v3129 = vadd.f32 0.0, %v3128
        %v3130 = vpop.f32.mrf.mxu0
        %3131 = vmatprep.mubr.bf16.mxu0 %v2977
        %3132 = vmatmul.mubr.bf16.gmra.mxu0 %v2832
        %v3133 = vpop.f32.mrf.mxu0
        %v3134 = vadd.f32 0.0, %v3133
        %v3135 = vpop.f32.mrf.mxu0
        %v3136 = vpop.f32.mrf.mxu0
        %v3137 = vadd.f32 0.0, %v3136
        %v3138 = vpop.f32.mrf.mxu0
        %3139 = vdwg.mxu0
        %v3164 = vunpack.c.l.b16 %v2250
        %v3165 = vunpack.c.l.b16 %v2251
        %v3166 = vunpack.c.l.b16 %v2252
        %v3167 = vunpack.c.l.b16 %v2253
        %v3168 = vunpack.c.l.b16 %v2254
        %v3169 = vunpack.c.l.b16 %v2255
        %v3170 = vunpack.c.l.b16 %v2256
        %v3171 = vunpack.c.l.b16 %v2257
        %v3172 = vunpack.c.l.b16 %v2258
        %v3173 = vunpack.c.l.b16 %v2259
        %v3174 = vunpack.c.l.b16 %v2260
        %v3175 = vunpack.c.l.b16 %v2261
        %v3176 = vunpack.c.l.b16 %v2262
        %v3177 = vunpack.c.l.b16 %v2263
        %v3178 = vunpack.c.l.b16 %v2264
        %v3179 = vunpack.c.l.b16 %v2265
        %v3180 = vunpack.c.l.b16 %v2266
        %v3181 = vunpack.c.l.b16 %v2267
        %v3182 = vunpack.c.l.b16 %v2268
        %v3183 = vunpack.c.l.b16 %v2269
        %v3184 = vunpack.c.l.b16 %v2270
        %v3185 = vunpack.c.l.b16 %v2271
        %v3186 = vunpack.c.l.b16 %v2272
        %v3187 = vunpack.c.l.b16 %v2273
        %v3188 = vpack.c.b16 %v3165, %v3164
        %v3189 = vpack.c.b16 %v3167, %v3166
        %v3190 = vpack.c.b16 %v3169, %v3168
        %v3191 = vpack.c.b16 %v3171, %v3170
        %v3192 = vpack.c.b16 %v3173, %v3172
        %v3193 = vpack.c.b16 %v3175, %v3174
        %v3194 = vpack.c.b16 %v3177, %v3176
        %v3195 = vpack.c.b16 %v3179, %v3178
        %v3196 = vpack.c.b16 %v3181, %v3180
        %v3197 = vpack.c.b16 %v3183, %v3182
        %v3198 = vpack.c.b16 %v3185, %v3184
        %v3199 = vpack.c.b16 %v3187, %v3186
        %v3213 = vsel %vm391, %v2156, 0
        %v3216 = vsel %vm391, %v2159, 0
        %v3219 = vsel %vm391, %v2162, 0
        %v3222 = vsel %vm391, %v2165, 0
        %v3225 = vsel %vm391, %v2168, 0
        %v3228 = vsel %vm391, %v2171, 0
        %v3231 = vsel %vm391, %v2174, 0
        %v3234 = vsel %vm391, %v2177, 0
        %v3237 = vsel %vm391, %v2180, 0
        %v3240 = vsel %vm391, %v2183, 0
        %v3243 = vsel %vm391, %v2186, 0
        %v3246 = vsel %vm391, %v2189, 0
        %v3249 = vsel %vm391, %v2192, 0
        %v3252 = vsel %vm391, %v2195, 0
        %v3255 = vsel %vm391, %v2198, 0
        %v3258 = vsel %vm391, %v2201, 0
        %3260 = vmatprep.subr.bf16.mxu0 0
        %3261 = vmatpush1.bf16.msra.mxu0 %v3195
        %3262 = vmatprep.subr.bf16.mxu0 0
        %3263 = vmatpush1.bf16.msra.mxu0 %v3194
        %3264 = vmatprep.subr.bf16.mxu0 0
        %3265 = vmatpush1.bf16.msra.mxu0 %v3193
        %3266 = vmatprep.subr.bf16.mxu0 0
        %3267 = vmatpush1.bf16.msra.mxu0 %v3192
        %3268 = vmatprep.subr.bf16.mxu0 0
        %3269 = vmatpush1.bf16.msra.mxu0 %v3191
        %3270 = vmatprep.subr.bf16.mxu0 0
        %3271 = vmatpush1.bf16.msra.mxu0 %v3190
        %3272 = vmatprep.subr.bf16.mxu0 0
        %3273 = vmatpush1.bf16.msra.mxu0 %v3189
        %3274 = vmatprep.subr.bf16.mxu0 0
        %3275 = vmatpush1.bf16.msra.mxu0 %v3188
        %3276 = vmatprep.subr.bf16.mxu0 0
        %3277 = vmatpush2.bf16.msra.mxu0 0
        %3278 = vmatprep.subr.bf16.mxu0 0
        %3279 = vmatpush2.bf16.msra.mxu0 0
        %3280 = vmatprep.subr.bf16.mxu0 0
        %3281 = vmatpush2.bf16.msra.mxu0 0
        %3282 = vmatprep.subr.bf16.mxu0 0
        %3283 = vmatpush2.bf16.msra.mxu0 0
        %3284 = vmatprep.subr.bf16.mxu0 0
        %3285 = vmatpush2.bf16.msra.mxu0 %v3199
        %3286 = vmatprep.subr.bf16.mxu0 0
        %3287 = vmatpush2.bf16.msra.mxu0 %v3198
        %3288 = vmatprep.subr.bf16.mxu0 0
        %3289 = vmatpush2.bf16.msra.mxu0 %v3197
        %3290 = vmatprep.subr.bf16.mxu0 0
        %3291 = vmatpush2.bf16.msra.mxu0 %v3196
        %3292 = vmatprep.mubr.bf16.mxu0 %v3213
        %3293 = vmatmul.mubr.bf16.gmra.mxu0 %v2203
        %v3294 = vpop.f32.mrf.mxu0
        %v3295 = vadd.f32 %v3014, %v3294
        %v3296 = vpop.f32.mrf.mxu0
        %v3297 = vpop.f32.mrf.mxu0
        %v3298 = vadd.f32 %v3017, %v3297
        %v3299 = vpop.f32.mrf.mxu0
        %3300 = vmatprep.mubr.bf16.mxu0 %v3216
        %3301 = vmatmul.mubr.bf16.gmra.mxu0 %v2206
        %v3302 = vpop.f32.mrf.mxu0
        %v3303 = vadd.f32 %v3022, %v3302
        %v3304 = vpop.f32.mrf.mxu0
        %v3305 = vpop.f32.mrf.mxu0
        %v3306 = vadd.f32 %v3025, %v3305
        %v3307 = vpop.f32.mrf.mxu0
        %3308 = vmatprep.mubr.bf16.mxu0 %v3219
        %3309 = vmatmul.mubr.bf16.gmra.mxu0 %v2209
        %v3310 = vpop.f32.mrf.mxu0
        %v3311 = vadd.f32 %v3030, %v3310
        %v3312 = vpop.f32.mrf.mxu0
        %v3313 = vpop.f32.mrf.mxu0
        %v3314 = vadd.f32 %v3033, %v3313
        %v3315 = vpop.f32.mrf.mxu0
        %3316 = vmatprep.mubr.bf16.mxu0 %v3222
        %3317 = vmatmul.mubr.bf16.gmra.mxu0 %v2212
        %v3318 = vpop.f32.mrf.mxu0
        %v3319 = vadd.f32 %v3038, %v3318
        %v3320 = vpop.f32.mrf.mxu0
        %v3321 = vpop.f32.mrf.mxu0
        %v3322 = vadd.f32 %v3041, %v3321
        %v3323 = vpop.f32.mrf.mxu0
        %3324 = vmatprep.mubr.bf16.mxu0 %v3225
        %3325 = vmatmul.mubr.bf16.gmra.mxu0 %v2215
        %v3326 = vpop.f32.mrf.mxu0
        %v3327 = vadd.f32 %v3046, %v3326
        %v3328 = vpop.f32.mrf.mxu0
        %v3329 = vpop.f32.mrf.mxu0
        %v3330 = vadd.f32 %v3049, %v3329
        %v3331 = vpop.f32.mrf.mxu0
        %3332 = vmatprep.mubr.bf16.mxu0 %v3228
        %3333 = vmatmul.mubr.bf16.gmra.mxu0 %v2218
        %v3334 = vpop.f32.mrf.mxu0
        %v3335 = vadd.f32 %v3054, %v3334
        %v3336 = vpop.f32.mrf.mxu0
        %v3337 = vpop.f32.mrf.mxu0
        %v3338 = vadd.f32 %v3057, %v3337
        %v3339 = vpop.f32.mrf.mxu0
        %3340 = vmatprep.mubr.bf16.mxu0 %v3231
        %3341 = vmatmul.mubr.bf16.gmra.mxu0 %v2221
        %v3342 = vpop.f32.mrf.mxu0
        %v3343 = vadd.f32 %v3062, %v3342
        %v3344 = vpop.f32.mrf.mxu0
        %v3345 = vpop.f32.mrf.mxu0
        %v3346 = vadd.f32 %v3065, %v3345
        %v3347 = vpop.f32.mrf.mxu0
        %3348 = vmatprep.mubr.bf16.mxu0 %v3234
        %3349 = vmatmul.mubr.bf16.gmra.mxu0 %v2224
        %v3350 = vpop.f32.mrf.mxu0
        %v3351 = vadd.f32 %v3070, %v3350
        %v3352 = vpop.f32.mrf.mxu0
        %v3353 = vpop.f32.mrf.mxu0
        %v3354 = vadd.f32 %v3073, %v3353
        %v3355 = vpop.f32.mrf.mxu0
        %3356 = vmatprep.mubr.bf16.mxu0 %v3237
        %3357 = vmatmul.mubr.bf16.gmra.mxu0 %v2227
        %v3358 = vpop.f32.mrf.mxu0
        %v3359 = vadd.f32 %v3078, %v3358
        %v3360 = vpop.f32.mrf.mxu0
        %v3361 = vpop.f32.mrf.mxu0
        %v3362 = vadd.f32 %v3081, %v3361
        %v3363 = vpop.f32.mrf.mxu0
        %3364 = vmatprep.mubr.bf16.mxu0 %v3240
        %3365 = vmatmul.mubr.bf16.gmra.mxu0 %v2230
        %v3366 = vpop.f32.mrf.mxu0
        %v3367 = vadd.f32 %v3086, %v3366
        %v3368 = vpop.f32.mrf.mxu0
        %v3369 = vpop.f32.mrf.mxu0
        %v3370 = vadd.f32 %v3089, %v3369
        %v3371 = vpop.f32.mrf.mxu0
        %3372 = vmatprep.mubr.bf16.mxu0 %v3243
        %3373 = vmatmul.mubr.bf16.gmra.mxu0 %v2233
        %v3374 = vpop.f32.mrf.mxu0
        %v3375 = vadd.f32 %v3094, %v3374
        %v3376 = vpop.f32.mrf.mxu0
        %v3377 = vpop.f32.mrf.mxu0
        %v3378 = vadd.f32 %v3097, %v3377
        %v3379 = vpop.f32.mrf.mxu0
        %3380 = vmatprep.mubr.bf16.mxu0 %v3246
        %3381 = vmatmul.mubr.bf16.gmra.mxu0 %v2236
        %v3382 = vpop.f32.mrf.mxu0
        %v3383 = vadd.f32 %v3102, %v3382
        %v3384 = vpop.f32.mrf.mxu0
        %v3385 = vpop.f32.mrf.mxu0
        %v3386 = vadd.f32 %v3105, %v3385
        %v3387 = vpop.f32.mrf.mxu0
        %3388 = vmatprep.mubr.bf16.mxu0 %v3249
        %3389 = vmatmul.mubr.bf16.gmra.mxu0 %v2239
        %v3390 = vpop.f32.mrf.mxu0
        %v3391 = vadd.f32 %v3110, %v3390
        %v3392 = vpop.f32.mrf.mxu0
        %v3393 = vpop.f32.mrf.mxu0
        %v3394 = vadd.f32 %v3113, %v3393
        %v3395 = vpop.f32.mrf.mxu0
        %3396 = vmatprep.mubr.bf16.mxu0 %v3252
        %3397 = vmatmul.mubr.bf16.gmra.mxu0 %v2242
        %v3398 = vpop.f32.mrf.mxu0
        %v3399 = vadd.f32 %v3118, %v3398
        %v3400 = vpop.f32.mrf.mxu0
        %v3401 = vpop.f32.mrf.mxu0
        %v3402 = vadd.f32 %v3121, %v3401
        %v3403 = vpop.f32.mrf.mxu0
        %3404 = vmatprep.mubr.bf16.mxu0 %v3255
        %3405 = vmatmul.mubr.bf16.gmra.mxu0 %v2245
        %v3406 = vpop.f32.mrf.mxu0
        %v3407 = vadd.f32 %v3126, %v3406
        %v3408 = vpop.f32.mrf.mxu0
        %v3409 = vpop.f32.mrf.mxu0
        %v3410 = vadd.f32 %v3129, %v3409
        %v3411 = vpop.f32.mrf.mxu0
        %3412 = vmatprep.mubr.bf16.mxu0 %v3258
        %3413 = vmatmul.mubr.bf16.gmra.mxu0 %v2248
        %v3414 = vpop.f32.mrf.mxu0
        %v3415 = vadd.f32 %v3134, %v3414
        %v3416 = vpop.f32.mrf.mxu0
        %v3417 = vpop.f32.mrf.mxu0
        %v3418 = vadd.f32 %v3137, %v3417
        %v3419 = vpop.f32.mrf.mxu0
        %3420 = vdwg.mxu0
        %s3421 = scalar_lea.vmem [#allocation2], 24
        %v3422 = vld [vmem:[%s3421] sm:$0xf]
        %v3423 = vld [vmem:[%s3421 + $0x4] sm:$0xf]
        %v3424 = vld [vmem:[%s3421 + $0xc] sm:$0xf]
        %v3425 = vld [vmem:[%s3421 + $0x10] sm:$0xf]
        %v3426 = vld [vmem:[%s3421 + $0x18] sm:$0xf]
        %v3427 = vld [vmem:[%s3421 + $0x1c] sm:$0xf]
        %v3428 = vld [vmem:[%s3421 + $0x24] sm:$0xf]
        %v3429 = vld [vmem:[%s3421 + $0x28] sm:$0xf]
        %v3430 = vld [vmem:[%s3421 + $0x30] sm:$0xf]
        %v3431 = vld [vmem:[%s3421 + $0x34] sm:$0xf]
        %v3432 = vld [vmem:[%s3421 + $0x3c] sm:$0xf]
        %v3433 = vld [vmem:[%s3421 + $0x40] sm:$0xf]
        %v3434 = vld [vmem:[%s3421 + $0x48] sm:$0xf]
        %v3435 = vld [vmem:[%s3421 + $0x4c] sm:$0xf]
        %v3436 = vld [vmem:[%s3421 + $0x54] sm:$0xf]
        %v3437 = vld [vmem:[%s3421 + $0x58] sm:$0xf]
        %v3438 = vld [vmem:[%s3421 + $0x60] sm:$0xf]
        %v3439 = vld [vmem:[%s3421 + $0x64] sm:$0xf]
        %v3440 = vld [vmem:[%s3421 + $0x6c] sm:$0xf]
        %v3441 = vld [vmem:[%s3421 + $0x70] sm:$0xf]
        %v3442 = vld [vmem:[%s3421 + $0x78] sm:$0xf]
        %v3443 = vld [vmem:[%s3421 + $0x7c] sm:$0xf]
        %v3444 = vld [vmem:[%s3421 + $0x84] sm:$0xf]
        %v3445 = vld [vmem:[%s3421 + $0x88] sm:$0xf]
        %v3446 = vld [vmem:[%s3421 + $0x90] sm:$0xf]
        %v3447 = vld [vmem:[%s3421 + $0x94] sm:$0xf]
        %v3448 = vld [vmem:[%s3421 + $0x9c] sm:$0xf]
        %v3449 = vld [vmem:[%s3421 + $0xa0] sm:$0xf]
        %v3450 = vld [vmem:[%s3421 + $0xa8] sm:$0xf]
        %v3451 = vld [vmem:[%s3421 + $0xac] sm:$0xf]
        %v3452 = vld [vmem:[%s3421 + $0xb4] sm:$0xf]
        %v3453 = vld [vmem:[%s3421 + $0xb8] sm:$0xf]
        %v3454 = vld [vmem:[%s3421 + $0x8] sm:$0x1]
        %v3455 = vld [vmem:[%s3421 + $0x14] sm:$0x1]
        %v3456 = vld [vmem:[%s3421 + $0x20] sm:$0x1]
        %v3457 = vld [vmem:[%s3421 + $0x2c] sm:$0x1]
        %v3458 = vld [vmem:[%s3421 + $0x38] sm:$0x1]
        %v3459 = vld [vmem:[%s3421 + $0x44] sm:$0x1]
        %v3460 = vld [vmem:[%s3421 + $0x50] sm:$0x1]
        %v3461 = vld [vmem:[%s3421 + $0x5c] sm:$0x1]
        %v3462 = vld [vmem:[%s3421 + $0x68] sm:$0x1]
        %v3463 = vld [vmem:[%s3421 + $0x74] sm:$0x1]
        %v3464 = vld [vmem:[%s3421 + $0x80] sm:$0x1]
        %v3465 = vld [vmem:[%s3421 + $0x8c] sm:$0x1]
        %v3466 = vld [vmem:[%s3421 + $0x98] sm:$0x1]
        %v3467 = vld [vmem:[%s3421 + $0xa4] sm:$0x1]
        %v3468 = vld [vmem:[%s3421 + $0xb0] sm:$0x1]
        %v3469 = vld [vmem:[%s3421 + $0xbc] sm:$0x1]
        %v3470 = vld [vmem:[%s3421] sm:$0xe]
        %v3471 = vld [vmem:[%s3421 + $0xc] sm:$0xe]
        %v3472 = vld [vmem:[%s3421 + $0x18] sm:$0xe]
        %v3473 = vld [vmem:[%s3421 + $0x24] sm:$0xe]
        %v3474 = vld [vmem:[%s3421 + $0x30] sm:$0xe]
        %v3475 = vld [vmem:[%s3421 + $0x3c] sm:$0xe]
        %v3476 = vld [vmem:[%s3421 + $0x48] sm:$0xe]
        %v3477 = vld [vmem:[%s3421 + $0x54] sm:$0xe]
        %v3478 = vld [vmem:[%s3421 + $0x60] sm:$0xe]
        %v3479 = vld [vmem:[%s3421 + $0x6c] sm:$0xe]
        %v3480 = vld [vmem:[%s3421 + $0x78] sm:$0xe]
        %v3481 = vld [vmem:[%s3421 + $0x84] sm:$0xe]
        %v3482 = vld [vmem:[%s3421 + $0x90] sm:$0xe]
        %v3483 = vld [vmem:[%s3421 + $0x9c] sm:$0xe]
        %v3484 = vld [vmem:[%s3421 + $0xa8] sm:$0xe]
        %v3485 = vld [vmem:[%s3421 + $0xb4] sm:$0xe]
        %v3518 = vunpack.c.l.b16 %v3422
        %v3519 = vunpack.c.l.b16 %v3423
        %v3520 = vunpack.c.l.b16 %v3424
        %v3521 = vunpack.c.l.b16 %v3425
        %v3522 = vunpack.c.l.b16 %v3426
        %v3523 = vunpack.c.l.b16 %v3427
        %v3524 = vunpack.c.l.b16 %v3428
        %v3525 = vunpack.c.l.b16 %v3429
        %v3526 = vunpack.c.l.b16 %v3430
        %v3527 = vunpack.c.l.b16 %v3431
        %v3528 = vunpack.c.l.b16 %v3432
        %v3529 = vunpack.c.l.b16 %v3433
        %v3530 = vunpack.c.l.b16 %v3434
        %v3531 = vunpack.c.l.b16 %v3435
        %v3532 = vunpack.c.l.b16 %v3436
        %v3533 = vunpack.c.l.b16 %v3437
        %v3534 = vunpack.c.l.b16 %v3438
        %v3535 = vunpack.c.l.b16 %v3439
        %v3536 = vunpack.c.l.b16 %v3440
        %v3537 = vunpack.c.l.b16 %v3441
        %v3538 = vunpack.c.l.b16 %v3442
        %v3539 = vunpack.c.l.b16 %v3443
        %v3540 = vunpack.c.l.b16 %v3444
        %v3541 = vunpack.c.l.b16 %v3445
        %v3542 = vunpack.c.l.b16 %v3446
        %v3543 = vunpack.c.l.b16 %v3447
        %v3544 = vunpack.c.l.b16 %v3448
        %v3545 = vunpack.c.l.b16 %v3449
        %v3546 = vunpack.c.l.b16 %v3450
        %v3547 = vunpack.c.l.b16 %v3451
        %v3548 = vunpack.c.l.b16 %v3452
        %v3549 = vunpack.c.l.b16 %v3453
        %v3550 = vpack.c.b16 %v3519, %v3518
        %v3551 = vpack.c.b16 %v3521, %v3520
        %v3552 = vpack.c.b16 %v3523, %v3522
        %v3553 = vpack.c.b16 %v3525, %v3524
        %v3554 = vpack.c.b16 %v3527, %v3526
        %v3555 = vpack.c.b16 %v3529, %v3528
        %v3556 = vpack.c.b16 %v3531, %v3530
        %v3557 = vpack.c.b16 %v3533, %v3532
        %v3558 = vpack.c.b16 %v3535, %v3534
        %v3559 = vpack.c.b16 %v3537, %v3536
        %v3560 = vpack.c.b16 %v3539, %v3538
        %v3561 = vpack.c.b16 %v3541, %v3540
        %v3562 = vpack.c.b16 %v3543, %v3542
        %v3563 = vpack.c.b16 %v3545, %v3544
        %v3564 = vpack.c.b16 %v3547, %v3546
        %v3565 = vpack.c.b16 %v3549, %v3548
        %v3582 = vunpack.c.l.b16 %v3454
        %v3583 = vunpack.c.l.b16 %v3455
        %v3584 = vunpack.c.l.b16 %v3456
        %v3585 = vunpack.c.l.b16 %v3457
        %v3586 = vunpack.c.l.b16 %v3458
        %v3587 = vunpack.c.l.b16 %v3459
        %v3588 = vunpack.c.l.b16 %v3460
        %v3589 = vunpack.c.l.b16 %v3461
        %v3590 = vunpack.c.l.b16 %v3462
        %v3591 = vunpack.c.l.b16 %v3463
        %v3592 = vunpack.c.l.b16 %v3464
        %v3593 = vunpack.c.l.b16 %v3465
        %v3594 = vunpack.c.l.b16 %v3466
        %v3595 = vunpack.c.l.b16 %v3467
        %v3596 = vunpack.c.l.b16 %v3468
        %v3597 = vunpack.c.l.b16 %v3469
        %v3598 = vpack.c.b16 %v3582, %v3582
        %v3599 = vpack.c.b16 %v3583, %v3583
        %v3600 = vpack.c.b16 %v3584, %v3584
        %v3601 = vpack.c.b16 %v3585, %v3585
        %v3602 = vpack.c.b16 %v3586, %v3586
        %v3603 = vpack.c.b16 %v3587, %v3587
        %v3604 = vpack.c.b16 %v3588, %v3588
        %v3605 = vpack.c.b16 %v3589, %v3589
        %v3606 = vpack.c.b16 %v3590, %v3590
        %v3607 = vpack.c.b16 %v3591, %v3591
        %v3608 = vpack.c.b16 %v3592, %v3592
        %v3609 = vpack.c.b16 %v3593, %v3593
        %v3610 = vpack.c.b16 %v3594, %v3594
        %v3611 = vpack.c.b16 %v3595, %v3595
        %v3612 = vpack.c.b16 %v3596, %v3596
        %v3613 = vpack.c.b16 %v3597, %v3597
        %v3615 = vshrl.u32 %v3550, 16
        %v3617 = vshll.u32 %v3550, 16
        %v3619 = vrot.slane %v3617, 1
        %v3620 = vor.u32 %v3615, %v3619
        %v3622 = vshll.u32 %v3598, 16
        %v3624 = vrot.slane %v3622, 1
        %v3625 = vsel %vm1880, %v3620, %v3624
        %v3627 = vshrl.u32 %v3551, 16
        %v3629 = vshll.u32 %v3551, 16
        %v3631 = vrot.slane %v3629, 1
        %v3632 = vor.u32 %v3627, %v3631
        %v3634 = vshll.u32 %v3599, 16
        %v3636 = vrot.slane %v3634, 1
        %v3637 = vsel %vm1880, %v3632, %v3636
        %v3639 = vshrl.u32 %v3552, 16
        %v3641 = vshll.u32 %v3552, 16
        %v3643 = vrot.slane %v3641, 1
        %v3644 = vor.u32 %v3639, %v3643
        %v3646 = vshll.u32 %v3600, 16
        %v3648 = vrot.slane %v3646, 1
        %v3649 = vsel %vm1880, %v3644, %v3648
        %v3651 = vshrl.u32 %v3553, 16
        %v3653 = vshll.u32 %v3553, 16
        %v3655 = vrot.slane %v3653, 1
        %v3656 = vor.u32 %v3651, %v3655
        %v3658 = vshll.u32 %v3601, 16
        %v3660 = vrot.slane %v3658, 1
        %v3661 = vsel %vm1880, %v3656, %v3660
        %v3663 = vshrl.u32 %v3554, 16
        %v3665 = vshll.u32 %v3554, 16
        %v3667 = vrot.slane %v3665, 1
        %v3668 = vor.u32 %v3663, %v3667
        %v3670 = vshll.u32 %v3602, 16
        %v3672 = vrot.slane %v3670, 1
        %v3673 = vsel %vm1880, %v3668, %v3672
        %v3675 = vshrl.u32 %v3555, 16
        %v3677 = vshll.u32 %v3555, 16
        %v3679 = vrot.slane %v3677, 1
        %v3680 = vor.u32 %v3675, %v3679
        %v3682 = vshll.u32 %v3603, 16
        %v3684 = vrot.slane %v3682, 1
        %v3685 = vsel %vm1880, %v3680, %v3684
        %v3687 = vshrl.u32 %v3556, 16
        %v3689 = vshll.u32 %v3556, 16
        %v3691 = vrot.slane %v3689, 1
        %v3692 = vor.u32 %v3687, %v3691
        %v3694 = vshll.u32 %v3604, 16
        %v3696 = vrot.slane %v3694, 1
        %v3697 = vsel %vm1880, %v3692, %v3696
        %v3699 = vshrl.u32 %v3557, 16
        %v3701 = vshll.u32 %v3557, 16
        %v3703 = vrot.slane %v3701, 1
        %v3704 = vor.u32 %v3699, %v3703
        %v3706 = vshll.u32 %v3605, 16
        %v3708 = vrot.slane %v3706, 1
        %v3709 = vsel %vm1880, %v3704, %v3708
        %v3711 = vshrl.u32 %v3558, 16
        %v3713 = vshll.u32 %v3558, 16
        %v3715 = vrot.slane %v3713, 1
        %v3716 = vor.u32 %v3711, %v3715
        %v3718 = vshll.u32 %v3606, 16
        %v3720 = vrot.slane %v3718, 1
        %v3721 = vsel %vm1880, %v3716, %v3720
        %v3723 = vshrl.u32 %v3559, 16
        %v3725 = vshll.u32 %v3559, 16
        %v3727 = vrot.slane %v3725, 1
        %v3728 = vor.u32 %v3723, %v3727
        %v3730 = vshll.u32 %v3607, 16
        %v3732 = vrot.slane %v3730, 1
        %v3733 = vsel %vm1880, %v3728, %v3732
        %v3735 = vshrl.u32 %v3560, 16
        %v3737 = vshll.u32 %v3560, 16
        %v3739 = vrot.slane %v3737, 1
        %v3740 = vor.u32 %v3735, %v3739
        %v3742 = vshll.u32 %v3608, 16
        %v3744 = vrot.slane %v3742, 1
        %v3745 = vsel %vm1880, %v3740, %v3744
        %v3747 = vshrl.u32 %v3561, 16
        %v3749 = vshll.u32 %v3561, 16
        %v3751 = vrot.slane %v3749, 1
        %v3752 = vor.u32 %v3747, %v3751
        %v3754 = vshll.u32 %v3609, 16
        %v3756 = vrot.slane %v3754, 1
        %v3757 = vsel %vm1880, %v3752, %v3756
        %v3759 = vshrl.u32 %v3562, 16
        %v3761 = vshll.u32 %v3562, 16
        %v3763 = vrot.slane %v3761, 1
        %v3764 = vor.u32 %v3759, %v3763
        %v3766 = vshll.u32 %v3610, 16
        %v3768 = vrot.slane %v3766, 1
        %v3769 = vsel %vm1880, %v3764, %v3768
        %v3771 = vshrl.u32 %v3563, 16
        %v3773 = vshll.u32 %v3563, 16
        %v3775 = vrot.slane %v3773, 1
        %v3776 = vor.u32 %v3771, %v3775
        %v3778 = vshll.u32 %v3611, 16
        %v3780 = vrot.slane %v3778, 1
        %v3781 = vsel %vm1880, %v3776, %v3780
        %v3783 = vshrl.u32 %v3564, 16
        %v3785 = vshll.u32 %v3564, 16
        %v3787 = vrot.slane %v3785, 1
        %v3788 = vor.u32 %v3783, %v3787
        %v3790 = vshll.u32 %v3612, 16
        %v3792 = vrot.slane %v3790, 1
        %v3793 = vsel %vm1880, %v3788, %v3792
        %v3795 = vshrl.u32 %v3565, 16
        %v3797 = vshll.u32 %v3565, 16
        %v3799 = vrot.slane %v3797, 1
        %v3800 = vor.u32 %v3795, %v3799
        %v3802 = vshll.u32 %v3613, 16
        %v3804 = vrot.slane %v3802, 1
        %v3805 = vsel %vm1880, %v3800, %v3804
        %3806 = vrot.lane.b32.xlu0 %v3625, 64
        %v3807 = vpop.permute.xlu0 %3806
        %3808 = vrot.lane.b32.xlu0 %v3637, 64
        %v3809 = vpop.permute.xlu0 %3808
        %3810 = vrot.lane.b32.xlu0 %v3649, 64
        %v3811 = vpop.permute.xlu0 %3810
        %3812 = vrot.lane.b32.xlu0 %v3661, 64
        %v3813 = vpop.permute.xlu0 %3812
        %3814 = vrot.lane.b32.xlu0 %v3673, 64
        %v3815 = vpop.permute.xlu0 %3814
        %3816 = vrot.lane.b32.xlu0 %v3685, 64
        %v3817 = vpop.permute.xlu0 %3816
        %3818 = vrot.lane.b32.xlu0 %v3697, 64
        %v3819 = vpop.permute.xlu0 %3818
        %3820 = vrot.lane.b32.xlu0 %v3709, 64
        %v3821 = vpop.permute.xlu0 %3820
        %3822 = vrot.lane.b32.xlu0 %v3721, 64
        %v3823 = vpop.permute.xlu0 %3822
        %3824 = vrot.lane.b32.xlu0 %v3733, 64
        %v3825 = vpop.permute.xlu0 %3824
        %3826 = vrot.lane.b32.xlu0 %v3745, 64
        %v3827 = vpop.permute.xlu0 %3826
        %3828 = vrot.lane.b32.xlu0 %v3757, 64
        %v3829 = vpop.permute.xlu0 %3828
        %3830 = vrot.lane.b32.xlu0 %v3769, 64
        %v3831 = vpop.permute.xlu0 %3830
        %3832 = vrot.lane.b32.xlu0 %v3781, 64
        %v3833 = vpop.permute.xlu0 %3832
        %3834 = vrot.lane.b32.xlu0 %v3793, 64
        %v3835 = vpop.permute.xlu0 %3834
        %3836 = vrot.lane.b32.xlu0 %v3805, 64
        %v3837 = vpop.permute.xlu0 %3836
        %v3854 = vunpack.c.l.b16 %v3470
        %v3855 = vunpack.c.l.b16 %v3471
        %v3856 = vunpack.c.l.b16 %v3472
        %v3857 = vunpack.c.l.b16 %v3473
        %v3858 = vunpack.c.l.b16 %v3474
        %v3859 = vunpack.c.l.b16 %v3475
        %v3860 = vunpack.c.l.b16 %v3476
        %v3861 = vunpack.c.l.b16 %v3477
        %v3862 = vunpack.c.l.b16 %v3478
        %v3863 = vunpack.c.l.b16 %v3479
        %v3864 = vunpack.c.l.b16 %v3480
        %v3865 = vunpack.c.l.b16 %v3481
        %v3866 = vunpack.c.l.b16 %v3482
        %v3867 = vunpack.c.l.b16 %v3483
        %v3868 = vunpack.c.l.b16 %v3484
        %v3869 = vunpack.c.l.b16 %v3485
        %v3870 = vpack.c.b16 %v3519, %v3854
        %v3871 = vpack.c.b16 %v3521, %v3855
        %v3872 = vpack.c.b16 %v3523, %v3856
        %v3873 = vpack.c.b16 %v3525, %v3857
        %v3874 = vpack.c.b16 %v3527, %v3858
        %v3875 = vpack.c.b16 %v3529, %v3859
        %v3876 = vpack.c.b16 %v3531, %v3860
        %v3877 = vpack.c.b16 %v3533, %v3861
        %v3878 = vpack.c.b16 %v3535, %v3862
        %v3879 = vpack.c.b16 %v3537, %v3863
        %v3880 = vpack.c.b16 %v3539, %v3864
        %v3881 = vpack.c.b16 %v3541, %v3865
        %v3882 = vpack.c.b16 %v3543, %v3866
        %v3883 = vpack.c.b16 %v3545, %v3867
        %v3884 = vpack.c.b16 %v3547, %v3868
        %v3885 = vpack.c.b16 %v3549, %v3869
        %v3886 = vrot.slane %v3870, 1
        %v3887 = vrot.slane %v3598, 1
        %v3888 = vsel %vm2153, %v3886, %v3887
        %v3889 = vrot.slane %v3871, 1
        %v3890 = vrot.slane %v3599, 1
        %v3891 = vsel %vm2153, %v3889, %v3890
        %v3892 = vrot.slane %v3872, 1
        %v3893 = vrot.slane %v3600, 1
        %v3894 = vsel %vm2153, %v3892, %v3893
        %v3895 = vrot.slane %v3873, 1
        %v3896 = vrot.slane %v3601, 1
        %v3897 = vsel %vm2153, %v3895, %v3896
        %v3898 = vrot.slane %v3874, 1
        %v3899 = vrot.slane %v3602, 1
        %v3900 = vsel %vm2153, %v3898, %v3899
        %v3901 = vrot.slane %v3875, 1
        %v3902 = vrot.slane %v3603, 1
        %v3903 = vsel %vm2153, %v3901, %v3902
        %v3904 = vrot.slane %v3876, 1
        %v3905 = vrot.slane %v3604, 1
        %v3906 = vsel %vm2153, %v3904, %v3905
        %v3907 = vrot.slane %v3877, 1
        %v3908 = vrot.slane %v3605, 1
        %v3909 = vsel %vm2153, %v3907, %v3908
        %v3910 = vrot.slane %v3878, 1
        %v3911 = vrot.slane %v3606, 1
        %v3912 = vsel %vm2153, %v3910, %v3911
        %v3913 = vrot.slane %v3879, 1
        %v3914 = vrot.slane %v3607, 1
        %v3915 = vsel %vm2153, %v3913, %v3914
        %v3916 = vrot.slane %v3880, 1
        %v3917 = vrot.slane %v3608, 1
        %v3918 = vsel %vm2153, %v3916, %v3917
        %v3919 = vrot.slane %v3881, 1
        %v3920 = vrot.slane %v3609, 1
        %v3921 = vsel %vm2153, %v3919, %v3920
        %v3922 = vrot.slane %v3882, 1
        %v3923 = vrot.slane %v3610, 1
        %v3924 = vsel %vm2153, %v3922, %v3923
        %v3925 = vrot.slane %v3883, 1
        %v3926 = vrot.slane %v3611, 1
        %v3927 = vsel %vm2153, %v3925, %v3926
        %v3928 = vrot.slane %v3884, 1
        %v3929 = vrot.slane %v3612, 1
        %v3930 = vsel %vm2153, %v3928, %v3929
        %v3931 = vrot.slane %v3885, 1
        %v3932 = vrot.slane %v3613, 1
        %v3933 = vsel %vm2153, %v3931, %v3932
        %v3935 = vsel %vm391, %v3550, %v3807
        %v3938 = vsel %vm391, %v3551, %v3809
        %v3941 = vsel %vm391, %v3552, %v3811
        %v3944 = vsel %vm391, %v3553, %v3813
        %v3947 = vsel %vm391, %v3554, %v3815
        %v3950 = vsel %vm391, %v3555, %v3817
        %v3953 = vsel %vm391, %v3556, %v3819
        %v3956 = vsel %vm391, %v3557, %v3821
        %v3959 = vsel %vm391, %v3558, %v3823
        %v3962 = vsel %vm391, %v3559, %v3825
        %v3965 = vsel %vm391, %v3560, %v3827
        %v3968 = vsel %vm391, %v3561, %v3829
        %v3971 = vsel %vm391, %v3562, %v3831
        %v3974 = vsel %vm391, %v3563, %v3833
        %v3977 = vsel %vm391, %v3564, %v3835
        %v3980 = vsel %vm391, %v3565, %v3837
        %s3982 = scalar_lea.vmem %s4, 192
        %v3983 = vld [vmem:[%s3982] sm:$0xf]
        %v3984 = vld [vmem:[%s3982 + $0x4] sm:$0xf]
        %v3985 = vld [vmem:[%s3982 + $0x8] sm:$0xf]
        %v3986 = vld [vmem:[%s3982 + $0xc] sm:$0xf]
        %v3987 = vld [vmem:[%s3982 + $0x10] sm:$0xf]
        %v3988 = vld [vmem:[%s3982 + $0x14] sm:$0xf]
        %v3989 = vld [vmem:[%s3982 + $0x18] sm:$0xf]
        %v3990 = vld [vmem:[%s3982 + $0x1c] sm:$0xf]
        %v3991 = vld [vmem:[%s3982 + $0x20] sm:$0xf]
        %v3992 = vld [vmem:[%s3982 + $0x24] sm:$0xf]
        %v3993 = vld [vmem:[%s3982 + $0x28] sm:$0xf]
        %v3994 = vld [vmem:[%s3982 + $0x2c] sm:$0xf]
        %v3995 = vld [vmem:[%s3982 + $0x30] sm:$0xf]
        %v3996 = vld [vmem:[%s3982 + $0x34] sm:$0xf]
        %v3997 = vld [vmem:[%s3982 + $0x38] sm:$0xf]
        %v3998 = vld [vmem:[%s3982 + $0x3c] sm:$0xf]
        %v3999 = vld [vmem:[%s3982 + $0x40] sm:$0xf]
        %v4000 = vld [vmem:[%s3982 + $0x44] sm:$0xf]
        %v4001 = vld [vmem:[%s3982 + $0x48] sm:$0xf]
        %v4002 = vld [vmem:[%s3982 + $0x4c] sm:$0xf]
        %v4003 = vld [vmem:[%s3982 + $0x50] sm:$0xf]
        %v4004 = vld [vmem:[%s3982 + $0x54] sm:$0xf]
        %v4005 = vld [vmem:[%s3982 + $0x58] sm:$0xf]
        %v4006 = vld [vmem:[%s3982 + $0x5c] sm:$0xf]
        %v4031 = vunpack.c.l.b16 %v3983
        %v4032 = vunpack.c.l.b16 %v3984
        %v4033 = vunpack.c.l.b16 %v3985
        %v4034 = vunpack.c.l.b16 %v3986
        %v4035 = vunpack.c.l.b16 %v3987
        %v4036 = vunpack.c.l.b16 %v3988
        %v4037 = vunpack.c.l.b16 %v3989
        %v4038 = vunpack.c.l.b16 %v3990
        %v4039 = vunpack.c.l.b16 %v3991
        %v4040 = vunpack.c.l.b16 %v3992
        %v4041 = vunpack.c.l.b16 %v3993
        %v4042 = vunpack.c.l.b16 %v3994
        %v4043 = vunpack.c.l.b16 %v3995
        %v4044 = vunpack.c.l.b16 %v3996
        %v4045 = vunpack.c.l.b16 %v3997
        %v4046 = vunpack.c.l.b16 %v3998
        %v4047 = vunpack.c.l.b16 %v3999
        %v4048 = vunpack.c.l.b16 %v4000
        %v4049 = vunpack.c.l.b16 %v4001
        %v4050 = vunpack.c.l.b16 %v4002
        %v4051 = vunpack.c.l.b16 %v4003
        %v4052 = vunpack.c.l.b16 %v4004
        %v4053 = vunpack.c.l.b16 %v4005
        %v4054 = vunpack.c.l.b16 %v4006
        %v4055 = vpack.c.b16 %v4032, %v4031
        %v4056 = vpack.c.b16 %v4034, %v4033
        %v4057 = vpack.c.b16 %v4036, %v4035
        %v4058 = vpack.c.b16 %v4038, %v4037
        %v4059 = vpack.c.b16 %v4040, %v4039
        %v4060 = vpack.c.b16 %v4042, %v4041
        %v4061 = vpack.c.b16 %v4044, %v4043
        %v4062 = vpack.c.b16 %v4046, %v4045
        %v4063 = vpack.c.b16 %v4048, %v4047
        %v4064 = vpack.c.b16 %v4050, %v4049
        %v4065 = vpack.c.b16 %v4052, %v4051
        %v4066 = vpack.c.b16 %v4054, %v4053
        %v4080 = vsel %vm391, %v3888, 0
        %v4083 = vsel %vm391, %v3891, 0
        %v4086 = vsel %vm391, %v3894, 0
        %v4089 = vsel %vm391, %v3897, 0
        %v4092 = vsel %vm391, %v3900, 0
        %v4095 = vsel %vm391, %v3903, 0
        %v4098 = vsel %vm391, %v3906, 0
        %v4101 = vsel %vm391, %v3909, 0
        %v4104 = vsel %vm391, %v3912, 0
        %v4107 = vsel %vm391, %v3915, 0
        %v4110 = vsel %vm391, %v3918, 0
        %v4113 = vsel %vm391, %v3921, 0
        %v4116 = vsel %vm391, %v3924, 0
        %v4119 = vsel %vm391, %v3927, 0
        %v4122 = vsel %vm391, %v3930, 0
        %v4125 = vsel %vm391, %v3933, 0
        %4127 = vmatprep.subr.bf16.mxu0 0
        %4128 = vmatpush1.bf16.msra.mxu0 %v4062
        %4129 = vmatprep.subr.bf16.mxu0 0
        %4130 = vmatpush1.bf16.msra.mxu0 %v4061
        %4131 = vmatprep.subr.bf16.mxu0 0
        %4132 = vmatpush1.bf16.msra.mxu0 %v4060
        %4133 = vmatprep.subr.bf16.mxu0 0
        %4134 = vmatpush1.bf16.msra.mxu0 %v4059
        %4135 = vmatprep.subr.bf16.mxu0 0
        %4136 = vmatpush1.bf16.msra.mxu0 %v4058
        %4137 = vmatprep.subr.bf16.mxu0 0
        %4138 = vmatpush1.bf16.msra.mxu0 %v4057
        %4139 = vmatprep.subr.bf16.mxu0 0
        %4140 = vmatpush1.bf16.msra.mxu0 %v4056
        %4141 = vmatprep.subr.bf16.mxu0 0
        %4142 = vmatpush1.bf16.msra.mxu0 %v4055
        %4143 = vmatprep.subr.bf16.mxu0 0
        %4144 = vmatpush2.bf16.msra.mxu0 0
        %4145 = vmatprep.subr.bf16.mxu0 0
        %4146 = vmatpush2.bf16.msra.mxu0 0
        %4147 = vmatprep.subr.bf16.mxu0 0
        %4148 = vmatpush2.bf16.msra.mxu0 0
        %4149 = vmatprep.subr.bf16.mxu0 0
        %4150 = vmatpush2.bf16.msra.mxu0 0
        %4151 = vmatprep.subr.bf16.mxu0 0
        %4152 = vmatpush2.bf16.msra.mxu0 %v4066
        %4153 = vmatprep.subr.bf16.mxu0 0
        %4154 = vmatpush2.bf16.msra.mxu0 %v4065
        %4155 = vmatprep.subr.bf16.mxu0 0
        %4156 = vmatpush2.bf16.msra.mxu0 %v4064
        %4157 = vmatprep.subr.bf16.mxu0 0
        %4158 = vmatpush2.bf16.msra.mxu0 %v4063
        %4159 = vmatprep.mubr.bf16.mxu0 %v4080
        %4160 = vmatmul.mubr.bf16.gmra.mxu0 %v3935
        %v4161 = vpop.f32.mrf.mxu0
        %v4162 = vadd.f32 0.0, %v4161
        %v4163 = vpop.f32.mrf.mxu0
        %v4164 = vpop.f32.mrf.mxu0
        %v4165 = vadd.f32 0.0, %v4164
        %v4166 = vpop.f32.mrf.mxu0
        %4167 = vmatprep.mubr.bf16.mxu0 %v4083
        %4168 = vmatmul.mubr.bf16.gmra.mxu0 %v3938
        %v4169 = vpop.f32.mrf.mxu0
        %v4170 = vadd.f32 0.0, %v4169
        %v4171 = vpop.f32.mrf.mxu0
        %v4172 = vpop.f32.mrf.mxu0
        %v4173 = vadd.f32 0.0, %v4172
        %v4174 = vpop.f32.mrf.mxu0
        %4175 = vmatprep.mubr.bf16.mxu0 %v4086
        %4176 = vmatmul.mubr.bf16.gmra.mxu0 %v3941
        %v4177 = vpop.f32.mrf.mxu0
        %v4178 = vadd.f32 0.0, %v4177
        %v4179 = vpop.f32.mrf.mxu0
        %v4180 = vpop.f32.mrf.mxu0
        %v4181 = vadd.f32 0.0, %v4180
        %v4182 = vpop.f32.mrf.mxu0
        %4183 = vmatprep.mubr.bf16.mxu0 %v4089
        %4184 = vmatmul.mubr.bf16.gmra.mxu0 %v3944
        %v4185 = vpop.f32.mrf.mxu0
        %v4186 = vadd.f32 0.0, %v4185
        %v4187 = vpop.f32.mrf.mxu0
        %v4188 = vpop.f32.mrf.mxu0
        %v4189 = vadd.f32 0.0, %v4188
        %v4190 = vpop.f32.mrf.mxu0
        %4191 = vmatprep.mubr.bf16.mxu0 %v4092
        %4192 = vmatmul.mubr.bf16.gmra.mxu0 %v3947
        %v4193 = vpop.f32.mrf.mxu0
        %v4194 = vadd.f32 0.0, %v4193
        %v4195 = vpop.f32.mrf.mxu0
        %v4196 = vpop.f32.mrf.mxu0
        %v4197 = vadd.f32 0.0, %v4196
        %v4198 = vpop.f32.mrf.mxu0
        %4199 = vmatprep.mubr.bf16.mxu0 %v4095
        %4200 = vmatmul.mubr.bf16.gmra.mxu0 %v3950
        %v4201 = vpop.f32.mrf.mxu0
        %v4202 = vadd.f32 0.0, %v4201
        %v4203 = vpop.f32.mrf.mxu0
        %v4204 = vpop.f32.mrf.mxu0
        %v4205 = vadd.f32 0.0, %v4204
        %v4206 = vpop.f32.mrf.mxu0
        %4207 = vmatprep.mubr.bf16.mxu0 %v4098
        %4208 = vmatmul.mubr.bf16.gmra.mxu0 %v3953
        %v4209 = vpop.f32.mrf.mxu0
        %v4210 = vadd.f32 0.0, %v4209
        %v4211 = vpop.f32.mrf.mxu0
        %v4212 = vpop.f32.mrf.mxu0
        %v4213 = vadd.f32 0.0, %v4212
        %v4214 = vpop.f32.mrf.mxu0
        %4215 = vmatprep.mubr.bf16.mxu0 %v4101
        %4216 = vmatmul.mubr.bf16.gmra.mxu0 %v3956
        %v4217 = vpop.f32.mrf.mxu0
        %v4218 = vadd.f32 0.0, %v4217
        %v4219 = vpop.f32.mrf.mxu0
        %v4220 = vpop.f32.mrf.mxu0
        %v4221 = vadd.f32 0.0, %v4220
        %v4222 = vpop.f32.mrf.mxu0
        %4223 = vmatprep.mubr.bf16.mxu0 %v4104
        %4224 = vmatmul.mubr.bf16.gmra.mxu0 %v3959
        %v4225 = vpop.f32.mrf.mxu0
        %v4226 = vadd.f32 0.0, %v4225
        %v4227 = vpop.f32.mrf.mxu0
        %v4228 = vpop.f32.mrf.mxu0
        %v4229 = vadd.f32 0.0, %v4228
        %v4230 = vpop.f32.mrf.mxu0
        %4231 = vmatprep.mubr.bf16.mxu0 %v4107
        %4232 = vmatmul.mubr.bf16.gmra.mxu0 %v3962
        %v4233 = vpop.f32.mrf.mxu0
        %v4234 = vadd.f32 0.0, %v4233
        %v4235 = vpop.f32.mrf.mxu0
        %v4236 = vpop.f32.mrf.mxu0
        %v4237 = vadd.f32 0.0, %v4236
        %v4238 = vpop.f32.mrf.mxu0
        %4239 = vmatprep.mubr.bf16.mxu0 %v4110
        %4240 = vmatmul.mubr.bf16.gmra.mxu0 %v3965
        %v4241 = vpop.f32.mrf.mxu0
        %v4242 = vadd.f32 0.0, %v4241
        %v4243 = vpop.f32.mrf.mxu0
        %v4244 = vpop.f32.mrf.mxu0
        %v4245 = vadd.f32 0.0, %v4244
        %v4246 = vpop.f32.mrf.mxu0
        %4247 = vmatprep.mubr.bf16.mxu0 %v4113
        %4248 = vmatmul.mubr.bf16.gmra.mxu0 %v3968
        %v4249 = vpop.f32.mrf.mxu0
        %v4250 = vadd.f32 0.0, %v4249
        %v4251 = vpop.f32.mrf.mxu0
        %v4252 = vpop.f32.mrf.mxu0
        %v4253 = vadd.f32 0.0, %v4252
        %v4254 = vpop.f32.mrf.mxu0
        %4255 = vmatprep.mubr.bf16.mxu0 %v4116
        %4256 = vmatmul.mubr.bf16.gmra.mxu0 %v3971
        %v4257 = vpop.f32.mrf.mxu0
        %v4258 = vadd.f32 0.0, %v4257
        %v4259 = vpop.f32.mrf.mxu0
        %v4260 = vpop.f32.mrf.mxu0
        %v4261 = vadd.f32 0.0, %v4260
        %v4262 = vpop.f32.mrf.mxu0
        %4263 = vmatprep.mubr.bf16.mxu0 %v4119
        %4264 = vmatmul.mubr.bf16.gmra.mxu0 %v3974
        %v4265 = vpop.f32.mrf.mxu0
        %v4266 = vadd.f32 0.0, %v4265
        %v4267 = vpop.f32.mrf.mxu0
        %v4268 = vpop.f32.mrf.mxu0
        %v4269 = vadd.f32 0.0, %v4268
        %v4270 = vpop.f32.mrf.mxu0
        %4271 = vmatprep.mubr.bf16.mxu0 %v4122
        %4272 = vmatmul.mubr.bf16.gmra.mxu0 %v3977
        %v4273 = vpop.f32.mrf.mxu0
        %v4274 = vadd.f32 0.0, %v4273
        %v4275 = vpop.f32.mrf.mxu0
        %v4276 = vpop.f32.mrf.mxu0
        %v4277 = vadd.f32 0.0, %v4276
        %v4278 = vpop.f32.mrf.mxu0
        %4279 = vmatprep.mubr.bf16.mxu0 %v4125
        %4280 = vmatmul.mubr.bf16.gmra.mxu0 %v3980
        %v4281 = vpop.f32.mrf.mxu0
        %v4282 = vadd.f32 0.0, %v4281
        %v4283 = vpop.f32.mrf.mxu0
        %v4284 = vpop.f32.mrf.mxu0
        %v4285 = vadd.f32 0.0, %v4284
        %v4286 = vpop.f32.mrf.mxu0
        %4287 = vdwg.mxu0
        %v4288 = vadd.f32 %v3295, %v4162
        %v4289 = vadd.f32 %v3298, %v4165
        %v4290 = vadd.f32 %v3303, %v4170
        %v4291 = vadd.f32 %v3306, %v4173
        %v4292 = vadd.f32 %v3311, %v4178
        %v4293 = vadd.f32 %v3314, %v4181
        %v4294 = vadd.f32 %v3319, %v4186
        %v4295 = vadd.f32 %v3322, %v4189
        %v4296 = vadd.f32 %v3327, %v4194
        %v4297 = vadd.f32 %v3330, %v4197
        %v4298 = vadd.f32 %v3335, %v4202
        %v4299 = vadd.f32 %v3338, %v4205
        %v4300 = vadd.f32 %v3343, %v4210
        %v4301 = vadd.f32 %v3346, %v4213
        %v4302 = vadd.f32 %v3351, %v4218
        %v4303 = vadd.f32 %v3354, %v4221
        %v4304 = vadd.f32 %v3359, %v4226
        %v4305 = vadd.f32 %v3362, %v4229
        %v4306 = vadd.f32 %v3367, %v4234
        %v4307 = vadd.f32 %v3370, %v4237
        %v4308 = vadd.f32 %v3375, %v4242
        %v4309 = vadd.f32 %v3378, %v4245
        %v4310 = vadd.f32 %v3383, %v4250
        %v4311 = vadd.f32 %v3386, %v4253
        %v4312 = vadd.f32 %v3391, %v4258
        %v4313 = vadd.f32 %v3394, %v4261
        %v4314 = vadd.f32 %v3399, %v4266
        %v4315 = vadd.f32 %v3402, %v4269
        %v4316 = vadd.f32 %v3407, %v4274
        %v4317 = vadd.f32 %v3410, %v4277
        %v4318 = vadd.f32 %v3415, %v4282
        %v4319 = vadd.f32 %v3418, %v4285
        %v4321 = vlaneseq
        %v4322 = vshrl.u32 %v4321, 7
        %v4323 = vsub.s32 0, %v4322
        %v4324 = vrot.slane %v1048, %v4323
        %v4326 = vadd.f32 %v4288, %v4324
        %v4327 = vadd.f32 %v4289, %v4324
        %v4328 = vadd.f32 %v4290, %v4324
        %v4329 = vadd.f32 %v4291, %v4324
        %v4330 = vadd.f32 %v4292, %v4324
        %v4331 = vadd.f32 %v4293, %v4324
        %v4332 = vadd.f32 %v4294, %v4324
        %v4333 = vadd.f32 %v4295, %v4324
        %v4334 = vadd.f32 %v4296, %v4324
        %v4335 = vadd.f32 %v4297, %v4324
        %v4336 = vadd.f32 %v4298, %v4324
        %v4337 = vadd.f32 %v4299, %v4324
        %v4338 = vadd.f32 %v4300, %v4324
        %v4339 = vadd.f32 %v4301, %v4324
        %v4340 = vadd.f32 %v4302, %v4324
        %v4341 = vadd.f32 %v4303, %v4324
        %v4342 = vadd.f32 %v4304, %v4324
        %v4343 = vadd.f32 %v4305, %v4324
        %v4344 = vadd.f32 %v4306, %v4324
        %v4345 = vadd.f32 %v4307, %v4324
        %v4346 = vadd.f32 %v4308, %v4324
        %v4347 = vadd.f32 %v4309, %v4324
        %v4348 = vadd.f32 %v4310, %v4324
        %v4349 = vadd.f32 %v4311, %v4324
        %v4350 = vadd.f32 %v4312, %v4324
        %v4351 = vadd.f32 %v4313, %v4324
        %v4352 = vadd.f32 %v4314, %v4324
        %v4353 = vadd.f32 %v4315, %v4324
        %v4354 = vadd.f32 %v4316, %v4324
        %v4355 = vadd.f32 %v4317, %v4324
        %v4356 = vadd.f32 %v4318, %v4324
        %v4357 = vadd.f32 %v4319, %v4324
        %v4358 = vld [vmem:[%s323] sm:$0xff]
        %v4359 = vld [vmem:[%s323 + $0x8] sm:$0xff]
        %v4360 = vld [vmem:[%s323 + $0x10] sm:$0xff]
        %v4361 = vld [vmem:[%s323 + $0x18] sm:$0xff]
        %v4362 = vld [vmem:[%s323 + $0x20] sm:$0xff]
        %v4363 = vld [vmem:[%s323 + $0x28] sm:$0xff]
        %v4364 = vld [vmem:[%s323 + $0x30] sm:$0xff]
        %v4365 = vld [vmem:[%s323 + $0x38] sm:$0xff]
        %v4366 = vld [vmem:[%s323 + $0x40] sm:$0xff]
        %v4367 = vld [vmem:[%s323 + $0x48] sm:$0xff]
        %v4368 = vld [vmem:[%s323 + $0x50] sm:$0xff]
        %v4369 = vld [vmem:[%s323 + $0x58] sm:$0xff]
        %v4370 = vld [vmem:[%s323 + $0x60] sm:$0xff]
        %v4371 = vld [vmem:[%s323 + $0x68] sm:$0xff]
        %v4372 = vld [vmem:[%s323 + $0x70] sm:$0xff]
        %v4373 = vld [vmem:[%s323 + $0x78] sm:$0xff]
        %v4374 = vld [vmem:[%s323 + $0x80] sm:$0xff]
        %v4375 = vld [vmem:[%s323 + $0x88] sm:$0xff]
        %v4376 = vld [vmem:[%s323 + $0x90] sm:$0xff]
        %v4377 = vld [vmem:[%s323 + $0x98] sm:$0xff]
        %v4378 = vld [vmem:[%s323 + $0xa0] sm:$0xff]
        %v4379 = vld [vmem:[%s323 + $0xa8] sm:$0xff]
        %v4380 = vld [vmem:[%s323 + $0xb0] sm:$0xff]
        %v4381 = vld [vmem:[%s323 + $0xb8] sm:$0xff]
        %v4382 = vld [vmem:[%s323 + $0xc0] sm:$0xff]
        %v4383 = vld [vmem:[%s323 + $0xc8] sm:$0xff]
        %v4384 = vld [vmem:[%s323 + $0xd0] sm:$0xff]
        %v4385 = vld [vmem:[%s323 + $0xd8] sm:$0xff]
        %v4386 = vld [vmem:[%s323 + $0xe0] sm:$0xff]
        %v4387 = vld [vmem:[%s323 + $0xe8] sm:$0xff]
        %v4388 = vld [vmem:[%s323 + $0xf0] sm:$0xff]
        %v4389 = vld [vmem:[%s323 + $0xf8] sm:$0xff]
        %v4390 = vpack.c.bf16 %v4359, %v4358
        %v4391 = vpack.c.bf16 %v4361, %v4360
        %v4392 = vpack.c.bf16 %v4363, %v4362
        %v4393 = vpack.c.bf16 %v4365, %v4364
        %v4394 = vpack.c.bf16 %v4367, %v4366
        %v4395 = vpack.c.bf16 %v4369, %v4368
        %v4396 = vpack.c.bf16 %v4371, %v4370
        %v4397 = vpack.c.bf16 %v4373, %v4372
        %v4398 = vpack.c.bf16 %v4375, %v4374
        %v4399 = vpack.c.bf16 %v4377, %v4376
        %v4400 = vpack.c.bf16 %v4379, %v4378
        %v4401 = vpack.c.bf16 %v4381, %v4380
        %v4402 = vpack.c.bf16 %v4383, %v4382
        %v4403 = vpack.c.bf16 %v4385, %v4384
        %v4404 = vpack.c.bf16 %v4387, %v4386
        %v4405 = vpack.c.bf16 %v4389, %v4388
        %v4406 = vld [vmem:[%s6] sm:$0xf]
        %v4407 = vld [vmem:[%s6 + $0x4] sm:$0xf]
        %v4408 = vld [vmem:[%s6 + $0x8] sm:$0xf]
        %v4409 = vld [vmem:[%s6 + $0xc] sm:$0xf]
        %v4410 = vld [vmem:[%s7] sm:$0x1]
        %v4412 = vlaneseq
        %v4413 = vshrl.u32 %v4412, 7
        %v4414 = vsub.s32 0, %v4413
        %v4415 = vrot.slane %v4410, %v4414
        %v4421 = vunpack.c.l.b16 %v4406
        %v4422 = vunpack.c.l.b16 %v4407
        %v4423 = vunpack.c.l.b16 %v4408
        %v4424 = vunpack.c.l.b16 %v4409
        %v4425 = vpack.c.b16 %v4422, %v4421
        %v4426 = vpack.c.b16 %v4424, %v4423
        %vm4429 = vcmask 261120
        %v4431 = vsel %vm4429, %v4390, 0
        %v4434 = vsel %vm4429, %v4391, 0
        %v4437 = vsel %vm4429, %v4392, 0
        %v4440 = vsel %vm4429, %v4393, 0
        %v4443 = vsel %vm4429, %v4394, 0
        %v4446 = vsel %vm4429, %v4395, 0
        %v4449 = vsel %vm4429, %v4396, 0
        %v4452 = vsel %vm4429, %v4397, 0
        %v4455 = vsel %vm4429, %v4398, 0
        %v4458 = vsel %vm4429, %v4399, 0
        %v4461 = vsel %vm4429, %v4400, 0
        %v4464 = vsel %vm4429, %v4401, 0
        %v4467 = vsel %vm4429, %v4402, 0
        %v4470 = vsel %vm4429, %v4403, 0
        %v4473 = vsel %vm4429, %v4404, 0
        %v4476 = vsel %vm4429, %v4405, 0
        %4478 = vmatprep.subr.bf16.mxu0 0
        %4479 = vmatpush1.bf16.msra.mxu0 0
        %4480 = vmatprep.subr.bf16.mxu0 0
        %4481 = vmatpush1.bf16.msra.mxu0 0
        %4482 = vmatprep.subr.bf16.mxu0 0
        %4483 = vmatpush1.bf16.msra.mxu0 0
        %4484 = vmatprep.subr.bf16.mxu0 0
        %4485 = vmatpush1.bf16.msra.mxu0 0
        %4486 = vmatprep.subr.bf16.mxu0 0
        %4487 = vmatpush1.bf16.msra.mxu0 0
        %4488 = vmatprep.subr.bf16.mxu0 0
        %4489 = vmatpush1.bf16.msra.mxu0 0
        %4490 = vmatprep.subr.bf16.mxu0 0
        %4491 = vmatpush1.bf16.msra.mxu0 %v4426
        %4492 = vmatprep.subr.bf16.mxu0 0
        %4493 = vmatpush1.bf16.msra.mxu0 %v4425
        %4494 = vmatprep.subr.bf16.mxu0 0
        %4495 = vmatpush2.bf16.msra.mxu0 0
        %4496 = vmatprep.subr.bf16.mxu0 0
        %4497 = vmatpush2.bf16.msra.mxu0 0
        %4498 = vmatprep.subr.bf16.mxu0 0
        %4499 = vmatpush2.bf16.msra.mxu0 0
        %4500 = vmatprep.subr.bf16.mxu0 0
        %4501 = vmatpush2.bf16.msra.mxu0 0
        %4502 = vmatprep.subr.bf16.mxu0 0
        %4503 = vmatpush2.bf16.msra.mxu0 0
        %4504 = vmatprep.subr.bf16.mxu0 0
        %4505 = vmatpush2.bf16.msra.mxu0 0
        %4506 = vmatprep.subr.bf16.mxu0 0
        %4507 = vmatpush2.bf16.msra.mxu0 0
        %4508 = vmatprep.subr.bf16.mxu0 0
        %4509 = vmatpush2.bf16.msra.mxu0 0
        %4510 = vmatprep.mubr.bf16.mxu0 0
        %4511 = vmatmul.mubr.bf16.gmra.mxu0 %v4431
        %v4512 = vpop.f32.mrf.mxu0
        %v4513 = vadd.f32 %v4415, %v4512
        %v4514 = vpop.f32.mrf.mxu0
        %v4515 = vpop.f32.mrf.mxu0
        %v4516 = vadd.f32 %v4415, %v4515
        %v4517 = vpop.f32.mrf.mxu0
        %4518 = vmatprep.mubr.bf16.mxu0 0
        %4519 = vmatmul.mubr.bf16.gmra.mxu0 %v4434
        %v4520 = vpop.f32.mrf.mxu0
        %v4521 = vadd.f32 %v4415, %v4520
        %v4522 = vpop.f32.mrf.mxu0
        %v4523 = vpop.f32.mrf.mxu0
        %v4524 = vadd.f32 %v4415, %v4523
        %v4525 = vpop.f32.mrf.mxu0
        %4526 = vmatprep.mubr.bf16.mxu0 0
        %4527 = vmatmul.mubr.bf16.gmra.mxu0 %v4437
        %v4528 = vpop.f32.mrf.mxu0
        %v4529 = vadd.f32 %v4415, %v4528
        %v4530 = vpop.f32.mrf.mxu0
        %v4531 = vpop.f32.mrf.mxu0
        %v4532 = vadd.f32 %v4415, %v4531
        %v4533 = vpop.f32.mrf.mxu0
        %4534 = vmatprep.mubr.bf16.mxu0 0
        %4535 = vmatmul.mubr.bf16.gmra.mxu0 %v4440
        %v4536 = vpop.f32.mrf.mxu0
        %v4537 = vadd.f32 %v4415, %v4536
        %v4538 = vpop.f32.mrf.mxu0
        %v4539 = vpop.f32.mrf.mxu0
        %v4540 = vadd.f32 %v4415, %v4539
        %v4541 = vpop.f32.mrf.mxu0
        %4542 = vmatprep.mubr.bf16.mxu0 0
        %4543 = vmatmul.mubr.bf16.gmra.mxu0 %v4443
        %v4544 = vpop.f32.mrf.mxu0
        %v4545 = vadd.f32 %v4415, %v4544
        %v4546 = vpop.f32.mrf.mxu0
        %v4547 = vpop.f32.mrf.mxu0
        %v4548 = vadd.f32 %v4415, %v4547
        %v4549 = vpop.f32.mrf.mxu0
        %4550 = vmatprep.mubr.bf16.mxu0 0
        %4551 = vmatmul.mubr.bf16.gmra.mxu0 %v4446
        %v4552 = vpop.f32.mrf.mxu0
        %v4553 = vadd.f32 %v4415, %v4552
        %v4554 = vpop.f32.mrf.mxu0
        %v4555 = vpop.f32.mrf.mxu0
        %v4556 = vadd.f32 %v4415, %v4555
        %v4557 = vpop.f32.mrf.mxu0
        %4558 = vmatprep.mubr.bf16.mxu0 0
        %4559 = vmatmul.mubr.bf16.gmra.mxu0 %v4449
        %v4560 = vpop.f32.mrf.mxu0
        %v4561 = vadd.f32 %v4415, %v4560
        %v4562 = vpop.f32.mrf.mxu0
        %v4563 = vpop.f32.mrf.mxu0
        %v4564 = vadd.f32 %v4415, %v4563
        %v4565 = vpop.f32.mrf.mxu0
        %4566 = vmatprep.mubr.bf16.mxu0 0
        %4567 = vmatmul.mubr.bf16.gmra.mxu0 %v4452
        %v4568 = vpop.f32.mrf.mxu0
        %v4569 = vadd.f32 %v4415, %v4568
        %v4570 = vpop.f32.mrf.mxu0
        %v4571 = vpop.f32.mrf.mxu0
        %v4572 = vadd.f32 %v4415, %v4571
        %v4573 = vpop.f32.mrf.mxu0
        %4574 = vmatprep.mubr.bf16.mxu0 0
        %4575 = vmatmul.mubr.bf16.gmra.mxu0 %v4455
        %v4576 = vpop.f32.mrf.mxu0
        %v4577 = vadd.f32 %v4415, %v4576
        %v4578 = vpop.f32.mrf.mxu0
        %v4579 = vpop.f32.mrf.mxu0
        %v4580 = vadd.f32 %v4415, %v4579
        %v4581 = vpop.f32.mrf.mxu0
        %4582 = vmatprep.mubr.bf16.mxu0 0
        %4583 = vmatmul.mubr.bf16.gmra.mxu0 %v4458
        %v4584 = vpop.f32.mrf.mxu0
        %v4585 = vadd.f32 %v4415, %v4584
        %v4586 = vpop.f32.mrf.mxu0
        %v4587 = vpop.f32.mrf.mxu0
        %v4588 = vadd.f32 %v4415, %v4587
        %v4589 = vpop.f32.mrf.mxu0
        %4590 = vmatprep.mubr.bf16.mxu0 0
        %4591 = vmatmul.mubr.bf16.gmra.mxu0 %v4461
        %v4592 = vpop.f32.mrf.mxu0
        %v4593 = vadd.f32 %v4415, %v4592
        %v4594 = vpop.f32.mrf.mxu0
        %v4595 = vpop.f32.mrf.mxu0
        %v4596 = vadd.f32 %v4415, %v4595
        %v4597 = vpop.f32.mrf.mxu0
        %4598 = vmatprep.mubr.bf16.mxu0 0
        %4599 = vmatmul.mubr.bf16.gmra.mxu0 %v4464
        %v4600 = vpop.f32.mrf.mxu0
        %v4601 = vadd.f32 %v4415, %v4600
        %v4602 = vpop.f32.mrf.mxu0
        %v4603 = vpop.f32.mrf.mxu0
        %v4604 = vadd.f32 %v4415, %v4603
        %v4605 = vpop.f32.mrf.mxu0
        %4606 = vmatprep.mubr.bf16.mxu0 0
        %4607 = vmatmul.mubr.bf16.gmra.mxu0 %v4467
        %v4608 = vpop.f32.mrf.mxu0
        %v4609 = vadd.f32 %v4415, %v4608
        %v4610 = vpop.f32.mrf.mxu0
        %v4611 = vpop.f32.mrf.mxu0
        %v4612 = vadd.f32 %v4415, %v4611
        %v4613 = vpop.f32.mrf.mxu0
        %4614 = vmatprep.mubr.bf16.mxu0 0
        %4615 = vmatmul.mubr.bf16.gmra.mxu0 %v4470
        %v4616 = vpop.f32.mrf.mxu0
        %v4617 = vadd.f32 %v4415, %v4616
        %v4618 = vpop.f32.mrf.mxu0
        %v4619 = vpop.f32.mrf.mxu0
        %v4620 = vadd.f32 %v4415, %v4619
        %v4621 = vpop.f32.mrf.mxu0
        %4622 = vmatprep.mubr.bf16.mxu0 0
        %4623 = vmatmul.mubr.bf16.gmra.mxu0 %v4473
        %v4624 = vpop.f32.mrf.mxu0
        %v4625 = vadd.f32 %v4415, %v4624
        %v4626 = vpop.f32.mrf.mxu0
        %v4627 = vpop.f32.mrf.mxu0
        %v4628 = vadd.f32 %v4415, %v4627
        %v4629 = vpop.f32.mrf.mxu0
        %4630 = vmatprep.mubr.bf16.mxu0 0
        %4631 = vmatmul.mubr.bf16.gmra.mxu0 %v4476
        %v4632 = vpop.f32.mrf.mxu0
        %v4633 = vadd.f32 %v4415, %v4632
        %v4634 = vpop.f32.mrf.mxu0
        %v4635 = vpop.f32.mrf.mxu0
        %v4636 = vadd.f32 %v4415, %v4635
        %v4637 = vpop.f32.mrf.mxu0
        %4638 = vdwg.mxu0
        %v4639 = vadd.f32 %v4326, %v4513
        %v4640 = vadd.f32 %v4327, %v4516
        %v4641 = vadd.f32 %v4328, %v4521
        %v4642 = vadd.f32 %v4329, %v4524
        %v4643 = vadd.f32 %v4330, %v4529
        %v4644 = vadd.f32 %v4331, %v4532
        %v4645 = vadd.f32 %v4332, %v4537
        %v4646 = vadd.f32 %v4333, %v4540
        %v4647 = vadd.f32 %v4334, %v4545
        %v4648 = vadd.f32 %v4335, %v4548
        %v4649 = vadd.f32 %v4336, %v4553
        %v4650 = vadd.f32 %v4337, %v4556
        %v4651 = vadd.f32 %v4338, %v4561
        %v4652 = vadd.f32 %v4339, %v4564
        %v4653 = vadd.f32 %v4340, %v4569
        %v4654 = vadd.f32 %v4341, %v4572
        %v4655 = vadd.f32 %v4342, %v4577
        %v4656 = vadd.f32 %v4343, %v4580
        %v4657 = vadd.f32 %v4344, %v4585
        %v4658 = vadd.f32 %v4345, %v4588
        %v4659 = vadd.f32 %v4346, %v4593
        %v4660 = vadd.f32 %v4347, %v4596
        %v4661 = vadd.f32 %v4348, %v4601
        %v4662 = vadd.f32 %v4349, %v4604
        %v4663 = vadd.f32 %v4350, %v4609
        %v4664 = vadd.f32 %v4351, %v4612
        %v4665 = vadd.f32 %v4352, %v4617
        %v4666 = vadd.f32 %v4353, %v4620
        %v4667 = vadd.f32 %v4354, %v4625
        %v4668 = vadd.f32 %v4355, %v4628
        %v4669 = vadd.f32 %v4356, %v4633
        %v4670 = vadd.f32 %v4357, %v4636
        %4671 = vst.msk [vmem:[%s313] sm:$0xff] %vm391, %v4639
        %4672 = vst.msk [vmem:[%s313 + $0x8] sm:$0xff] %vm391, %v4640
        %4673 = vst.msk [vmem:[%s313 + $0x10] sm:$0xff] %vm391, %v4641
        %4674 = vst.msk [vmem:[%s313 + $0x18] sm:$0xff] %vm391, %v4642
        %4675 = vst.msk [vmem:[%s313 + $0x20] sm:$0xff] %vm391, %v4643
        %4676 = vst.msk [vmem:[%s313 + $0x28] sm:$0xff] %vm391, %v4644
        %4677 = vst.msk [vmem:[%s313 + $0x30] sm:$0xff] %vm391, %v4645
        %4678 = vst.msk [vmem:[%s313 + $0x38] sm:$0xff] %vm391, %v4646
        %4679 = vst.msk [vmem:[%s313 + $0x40] sm:$0xff] %vm391, %v4647
        %4680 = vst.msk [vmem:[%s313 + $0x48] sm:$0xff] %vm391, %v4648
        %4681 = vst.msk [vmem:[%s313 + $0x50] sm:$0xff] %vm391, %v4649
        %4682 = vst.msk [vmem:[%s313 + $0x58] sm:$0xff] %vm391, %v4650
        %4683 = vst.msk [vmem:[%s313 + $0x60] sm:$0xff] %vm391, %v4651
        %4684 = vst.msk [vmem:[%s313 + $0x68] sm:$0xff] %vm391, %v4652
        %4685 = vst.msk [vmem:[%s313 + $0x70] sm:$0xff] %vm391, %v4653
        %4686 = vst.msk [vmem:[%s313 + $0x78] sm:$0xff] %vm391, %v4654
        %4687 = vst.msk [vmem:[%s313 + $0x80] sm:$0xff] %vm391, %v4655
        %4688 = vst.msk [vmem:[%s313 + $0x88] sm:$0xff] %vm391, %v4656
        %4689 = vst.msk [vmem:[%s313 + $0x90] sm:$0xff] %vm391, %v4657
        %4690 = vst.msk [vmem:[%s313 + $0x98] sm:$0xff] %vm391, %v4658
        %4691 = vst.msk [vmem:[%s313 + $0xa0] sm:$0xff] %vm391, %v4659
        %4692 = vst.msk [vmem:[%s313 + $0xa8] sm:$0xff] %vm391, %v4660
        %4693 = vst.msk [vmem:[%s313 + $0xb0] sm:$0xff] %vm391, %v4661
        %4694 = vst.msk [vmem:[%s313 + $0xb8] sm:$0xff] %vm391, %v4662
        %4695 = vst.msk [vmem:[%s313 + $0xc0] sm:$0xff] %vm391, %v4663
        %4696 = vst.msk [vmem:[%s313 + $0xc8] sm:$0xff] %vm391, %v4664
        %4697 = vst.msk [vmem:[%s313 + $0xd0] sm:$0xff] %vm391, %v4665
        %4698 = vst.msk [vmem:[%s313 + $0xd8] sm:$0xff] %vm391, %v4666
        %4699 = vst.msk [vmem:[%s313 + $0xe0] sm:$0xff] %vm391, %v4667
        %4700 = vst.msk [vmem:[%s313 + $0xe8] sm:$0xff] %vm391, %v4668
        %4701 = vst.msk [vmem:[%s313 + $0xf0] sm:$0xff] %vm391, %v4669
        %4702 = vst.msk [vmem:[%s313 + $0xf8] sm:$0xff] %vm391, %v4670
        %s4703 = sand.u32 %s208, 1
        %s4704 = scalar_lea.sflag [#allocation4], %s4703
        %s4705 = sand.u32 %s208, 1
        %s4706 = smul.addr %s4705, 256
        %s4707 = scalar_lea.vmem [#allocation3], %s4706
        // Predicated region
        $region53: #{resnet_block_forward.3} parent=51 // pred_check
          %p4708 = pneg %p218
        $region54: #{resnet_block_forward.3} parent=51 // pred_check_branch
          %4710 = sbr.rel (%p4708) target = $region56
        $region55: #{resnet_block_forward.3} parent=51 // pred_region
          %s4712 = ssub.s32 4096, 4096
          %4713 = vsyncadd %s4704, %s4712
          %s4714 = smul.addr %s22, 32
          %s4715 = smul.addr %s4714, 128
          %s4716 = scalar_lea.hbm %s8, %s4715
          %s4717 = sshll.u32 %s4707, 4
          %s4718 = int_to_ptr.vmem [resolvable:$true] %s4717
          %4723 = dma.vmem_to_hbm [thread:$0]  %s4718, 4096, %s4716, %s4704, 128, 128, 8
        $region56: #{resnet_block_forward.3} parent=51 // pred_fallthru
          _
      $region52: #{resnet_block_forward.3} parent=5 // pred_fallthru
        _
      %p4724 = scmp.le.s32.totalorder 2, %s17
      // Predicated region
      $region57: #{resnet_block_forward.3} parent=5 // pred_check
        %p4725 = pneg %p4724
      $region58: #{resnet_block_forward.3} parent=5 // pred_check_branch
        %4727 = sbr.rel (%p4725) target = $region60
      $region59: #{resnet_block_forward.3} parent=5 // pred_region
        %s4728 = ssub.s32 %s17, 2
        // Predicated region
        $region61: #{resnet_block_forward.3} parent=59 // pred_check
          %p4729 = pneg %p224
        $region62: #{resnet_block_forward.3} parent=59 // pred_check_branch
          %4731 = sbr.rel (%p4729) target = $region64
        $region63: #{resnet_block_forward.3} parent=59 // pred_region
          %s4732 = sand.u32 %s209, 1
          %s4733 = scalar_lea.sflag [#allocation4], %s4732
          %s4734 = sand.u32 %s209, 1
          %s4735 = smul.addr %s4734, 256
          %s4736 = scalar_lea.vmem [#allocation3], %s4735
          %4737 = dma.done %s4733, 4096
        $region64: #{resnet_block_forward.3} parent=59 // pred_fallthru
          _
      $region60: #{resnet_block_forward.3} parent=5 // pred_fallthru
        _
    $region6: #{resnet_block_forward.3} parent=1 // loop_footer
      %s21 = sadd.s32 1, %s17
    $region7: #{resnet_block_forward.3} parent=1 // loop_footer_branch
      %16 = sbr.rel target = $region3
    $region8: #{resnet_block_forward.3} parent=1 // loop_exit
      _
    %4738 = vsyncpa [#allocation4], 1
    %s4739 = scalar_lea.sflag [#allocation4], 1
    %4740 = vsyncpa %s4739, 1

</llo_original>
